<compile_context>
chip_gen: v7x
topology: tpu7x:2x2x1
jax: 0.10.0
libtpu: 0.0.40
codegen_flags: <defaults>
</compile_context>

<pallas_src>
import numpy as np

import jax
import jax.numpy as jnp
from jax.experimental import pallas as pl
from jax.experimental.pallas import tpu as pltpu


_BN_EPS = 1e-5

# Sub-pixel decomposition of ConvTranspose2d(k=3, s=2, p=1, op=1):
# for output parity (ry, rx): list of (input shift (di, dj), equivalent
# stride-1 conv tap (ky, kx)) where the conv weight is the flipped/transposed
# ConvTranspose2d weight.
_PHASES = ((0, 0), (0, 1), (1, 0), (1, 1))
_PHASE_TAPS = {
    (0, 0): (((0, 0), (1, 1)),),
    (0, 1): (((0, 0), (1, 0)), ((0, 1), (1, 2))),
    (1, 0): (((0, 0), (0, 1)), ((1, 0), (2, 1))),
    (1, 1): (((0, 0), (0, 0)), ((0, 1), (0, 2)),
             ((1, 0), (2, 0)), ((1, 1), (2, 2))),
}


# ---------------------------------------------------------------------------
# selection-matrix constants (built host-side with numpy, passed as bf16)
# ---------------------------------------------------------------------------

def _gather_stack_conv3x3(H, W):
    """(9*H*W, H*W) 0/1 row-gather for a 3x3 'same' conv (zero pad = zero row)."""
    HW = H * W
    g = np.zeros((9 * HW, HW), np.float32)
    for ky in range(3):
        for kx in range(3):
            t = ky * 3 + kx
            dy, dx = ky - 1, kx - 1
            for h in range(H):
                for w in range(W):
                    sh, sw = h + dy, w + dx
                    if 0 <= sh < H and 0 <= sw < W:
                        g[t * HW + h * W + w, sh * W + sw] = 1.0
    return g


def _gather_stack_convt(H, W):
    """(4*H*W, H*W) 0/1 row-gather for shifts (di,dj) in {0,1}^2 (b/r zero pad)."""
    HW = H * W
    g = np.zeros((4 * HW, HW), np.float32)
    for di in range(2):
        for dj in range(2):
            q = di * 2 + dj
            for h in range(H):
                for w in range(W):
                    sh, sw = h + di, w + dj
                    if sh < H and sw < W:
                        g[q * HW + h * W + w, sh * W + sw] = 1.0
    return g


def _pool_stack(H, W):
    """(H*W, H*W): rows [q*HW/4 + r'] select corner q of output pixel r' (2x2 pool)."""
    HWo = (H // 2) * (W // 2)
    p = np.zeros((4 * HWo, H * W), np.float32)
    for q, (dy, dx) in enumerate(((0, 0), (0, 1), (1, 0), (1, 1))):
        for hh in range(H // 2):
            for ww in range(W // 2):
                p[q * HWo + hh * (W // 2) + ww,
                  (2 * hh + dy) * W + (2 * ww + dx)] = 1.0
    return p


def _scatter_phases(H, W):
    """(4, 4*H*W, H*W): scatter phase p=(2ry+rx) rows to (2H, 2W) row-major."""
    HW = H * W
    s = np.zeros((4, 4 * HW, HW), np.float32)
    for p, (ry, rx) in enumerate(_PHASES):
        for h in range(H):
            for w in range(W):
                s[p, (2 * h + ry) * (2 * W) + (2 * w + rx), h * W + w] = 1.0
    return s


# ---------------------------------------------------------------------------
# kernel helpers (all values are 2-D (rows, lanes))
# ---------------------------------------------------------------------------

def _bn_relu(acc, s_ref, b_ref):
    return jnp.maximum(acc * s_ref[...] + b_ref[...], 0.0)


def _conv_block(x, g_ref, w_ref, s_ref, b_ref, hw, taps):
    """x: (hw, Cin) bf16, spatial row-major.  One stacked row-gather matmul,
    lane-concat into the im2col patch, one deep-K conv matmul, BN+ReLU (f32)."""
    rows = jnp.dot(g_ref[...], x, preferred_element_type=jnp.float32)
    rows = rows.astype(jnp.bfloat16)  # exact: 0/1 selection of bf16 values
    patch = jnp.concatenate(
        [rows[t * hw:(t + 1) * hw, :] for t in range(taps)], axis=-1)
    acc = jnp.dot(patch, w_ref[...], preferred_element_type=jnp.float32)
    return _bn_relu(acc, s_ref, b_ref)


def _max_pool(y, p_ref, hw_out):
    """2x2 max-pool via stacked corner-selection matmul + 3 elementwise maxes."""
    sel = jnp.dot(p_ref[...], y.astype(jnp.bfloat16),
                  preferred_element_type=jnp.float32)
    c0 = sel[0 * hw_out:1 * hw_out, :]
    c1 = sel[1 * hw_out:2 * hw_out, :]
    c2 = sel[2 * hw_out:3 * hw_out, :]
    c3 = sel[3 * hw_out:4 * hw_out, :]
    return jnp.maximum(jnp.maximum(c0, c1),
                       jnp.maximum(c2, c3)).astype(jnp.bfloat16)


def _interleave(y, s_ref, cout):
    """Phase-major (hw, 4*cout) decoder output -> depth-to-space (4*hw, cout)
    bf16 via 4 scatter matmuls (disjoint row supports -> sum)."""
    yb = y.astype(jnp.bfloat16)
    acc = jnp.dot(s_ref[0], yb[:, 0:cout], preferred_element_type=jnp.float32)
    for p in range(1, 4):
        acc = acc + jnp.dot(s_ref[p], yb[:, p * cout:(p + 1) * cout],
                            preferred_element_type=jnp.float32)
    return acc.astype(jnp.bfloat16)


# ---------------------------------------------------------------------------
# fused whole-network kernel (one image per grid step)
# ---------------------------------------------------------------------------

def _fused_kernel(
    p1_ref,                                   # (1, 256, 32) encode1 im2col patches
    w1_ref, s1_ref, b1_ref, pool1_ref,        # encode1
    g2_ref, w2_ref, s2_ref, b2_ref, pool2_ref,  # encode2
    g3_ref, w3a_ref, s3a_ref, b3a_ref,        # encode3 conv a
    w3b_ref, s3b_ref, b3b_ref, pool3_ref,     # encode3 conv b + pool
    gd1_ref, wd1_ref, sd1_ref, bd1_ref, scd1_ref,  # decode1
    gd2_ref, wd2_ref, sd2_ref, bd2_ref, scd2_ref,  # decode2
    gd3_ref, wd3_ref, sd3_ref, bd3_ref, scd3_ref,  # decode3
    wc_ref, bc_ref,                           # classifier (padded to 128 lanes)
    o_ref,
):
    f32 = jnp.float32

    # encode1: single 32-deep (27 padded) im2col matmul + BN + ReLU + pool
    y = jnp.dot(p1_ref[0], w1_ref[...], preferred_element_type=f32)      # (256, 64)
    y = _bn_relu(y, s1_ref, b1_ref)
    x = _max_pool(y, pool1_ref, 64)                                      # (64, 64)   8x8

    # encode2
    y = _conv_block(x, g2_ref, w2_ref, s2_ref, b2_ref, hw=64, taps=9)    # (64, 128)
    x = _max_pool(y, pool2_ref, 16)                                      # (16, 128)  4x4

    # encode3: conv, conv, pool
    y = _conv_block(x, g3_ref, w3a_ref, s3a_ref, b3a_ref, hw=16, taps=9)
    x = y.astype(jnp.bfloat16)                                           # (16, 256)
    y = _conv_block(x, g3_ref, w3b_ref, s3b_ref, b3b_ref, hw=16, taps=9)
    x = _max_pool(y, pool3_ref, 4)                                       # (4, 256)   2x2

    # decode1..3: ConvTranspose2d(3,2,1,1) as one 4-shift matmul per layer,
    # phases placed into row-major spatial order by scatter matmuls
    y = _conv_block(x, gd1_ref, wd1_ref, sd1_ref, bd1_ref, hw=4, taps=4)   # (4, 512)
    x = _interleave(y, scd1_ref, 128)                                      # (16, 128)  4x4

    y = _conv_block(x, gd2_ref, wd2_ref, sd2_ref, bd2_ref, hw=16, taps=4)  # (16, 256)
    x = _interleave(y, scd2_ref, 64)                                       # (64, 64)   8x8

    y = _conv_block(x, gd3_ref, wd3_ref, sd3_ref, bd3_ref, hw=64, taps=4)  # (64, 128)
    x = _interleave(y, scd3_ref, 32)                                       # (256, 32)  16x16

    # fused 1x1 classifier; 2 logits padded to 128 lanes -> unmasked f32 store
    logits = jnp.dot(x, wc_ref[...], preferred_element_type=f32) + bc_ref[...]
    o_ref[0] = logits


# ---------------------------------------------------------------------------
# deterministic parameter construction
# ---------------------------------------------------------------------------

def _fold_bn(conv_bias, cout):
    gamma = jnp.ones((cout,), jnp.float32)
    beta = jnp.zeros((cout,), jnp.float32)
    mean = jnp.zeros((cout,), jnp.float32)
    var = jnp.ones((cout,), jnp.float32)
    scale = gamma / jnp.sqrt(var + _BN_EPS)
    bias = beta + scale * (conv_bias - mean)
    return scale.reshape(1, cout), bias.reshape(1, cout)


def _make_conv1(key, cin, cout, k_pad=32):
    kw, kb = jax.random.split(key)
    w = jax.random.normal(kw, (3, 3, cin, cout), jnp.float32) * 0.1
    b = jax.random.normal(kb, (cout,), jnp.float32) * 0.01
    wf = jnp.pad(w.reshape(9 * cin, cout), ((0, k_pad - 9 * cin), (0, 0)))
    scale, bias = _fold_bn(b, cout)
    return dict(w=wf.astype(jnp.bfloat16), scale=scale, bias=bias)


def _make_conv(key, cin, cout):
    kw, kb = jax.random.split(key)
    w = jax.random.normal(kw, (3, 3, cin, cout), jnp.float32) * 0.1
    b = jax.random.normal(kb, (cout,), jnp.float32) * 0.01
    scale, bias = _fold_bn(b, cout)
    return dict(w=w.reshape(9 * cin, cout).astype(jnp.bfloat16),
                scale=scale, bias=bias)


def _make_convt(key, cin, cout):
    kw, kb = jax.random.split(key)
    # PyTorch ConvTranspose2d weight layout: (cin, cout, k, k)
    wt = jax.random.normal(kw, (cin, cout, 3, 3), jnp.float32) * 0.1
    b = jax.random.normal(kb, (cout,), jnp.float32) * 0.01
    # equivalent stride-1 conv weight: channel swap + spatial flip
    wconv = np.transpose(np.asarray(wt)[:, :, ::-1, ::-1], (2, 3, 0, 1))
    wdec = np.zeros((4 * cin, 4 * cout), np.float32)
    for p, phase in enumerate(_PHASES):
        for (di, dj), (ky, kx) in _PHASE_TAPS[phase]:
            q = 2 * di + dj
            wdec[q * cin:(q + 1) * cin, p * cout:(p + 1) * cout] = wconv[ky, kx]
    scale, bias = _fold_bn(b, cout)
    return dict(w=jnp.asarray(wdec).astype(jnp.bfloat16),
                scale=jnp.tile(scale, (1, 4)), bias=jnp.tile(bias, (1, 4)))


def _make_cls(key, cin, cout, pad_to=128):
    kw, kb = jax.random.split(key)
    w = jax.random.normal(kw, (cin, cout), jnp.float32) * 0.1
    b = jax.random.normal(kb, (cout,), jnp.float32) * 0.01
    w = jnp.pad(w, ((0, 0), (0, pad_to - cout))).astype(jnp.bfloat16)
    b = jnp.pad(b, (0, pad_to - cout)).reshape(1, pad_to)
    return dict(w=w, bias=b, cout=cout)


def init_params(key):
    ks = jax.random.split(key, 8)
    params = dict(
        e1=_make_conv1(ks[0], 3, 64),
        e2=_make_conv(ks[1], 64, 128),
        e3a=_make_conv(ks[2], 128, 256),
        e3b=_make_conv(ks[3], 256, 256),
        d1=_make_convt(ks[4], 256, 128),
        d2=_make_convt(ks[5], 128, 64),
        d3=_make_convt(ks[6], 64, 32),
        cls=_make_cls(ks[7], 32, 2),
    )
    bf = lambda a: jnp.asarray(a, jnp.bfloat16)
    params["sel"] = dict(
        pool1=bf(_pool_stack(16, 16)),
        g2=bf(_gather_stack_conv3x3(8, 8)),
        pool2=bf(_pool_stack(8, 8)),
        g3=bf(_gather_stack_conv3x3(4, 4)),
        pool3=bf(_pool_stack(4, 4)),
        gd1=bf(_gather_stack_convt(2, 2)),
        scd1=bf(_scatter_phases(2, 2)),
        gd2=bf(_gather_stack_convt(4, 4)),
        scd2=bf(_scatter_phases(4, 4)),
        gd3=bf(_gather_stack_convt(8, 8)),
        scd3=bf(_scatter_phases(8, 8)),
    )
    return params


# ---------------------------------------------------------------------------
# wrapper
# ---------------------------------------------------------------------------

def _im2col_e1(x_nhwc, k_pad=32):
    """(N, 16, 16, 3) -> (N, 256, 32) bf16 im2col patches (K padded 27->32)."""
    N, H, W, C = x_nhwc.shape
    xp = jnp.pad(x_nhwc, ((0, 0), (1, 1), (1, 1), (0, 0)))
    cols = [xp[:, ky:ky + H, kx:kx + W, :] for ky in range(3) for kx in range(3)]
    p = jnp.concatenate(cols, axis=-1).reshape(N, H * W, 9 * C)
    p = jnp.pad(p, ((0, 0), (0, 0), (0, k_pad - 9 * C)))
    return p.astype(jnp.bfloat16)


def _const_index_map(ndim):
    def index_map(n):
        del n
        return (0,) * ndim
    return index_map


def forward(x_nchw, params):
    N, _, H, W = x_nchw.shape
    assert (H, W) == (16, 16), "selection constants are built for 16x16 inputs"

    x = jnp.transpose(x_nchw, (0, 2, 3, 1))        # NCHW -> NHWC
    patches = _im2col_e1(x)                        # (N, 256, 32) bf16

    sel = params["sel"]
    e1, e2, e3a, e3b = params["e1"], params["e2"], params["e3a"], params["e3b"]
    d1, d2, d3, cls = params["d1"], params["d2"], params["d3"], params["cls"]

    operands = [
        patches,
        e1["w"], e1["scale"], e1["bias"], sel["pool1"],
        sel["g2"], e2["w"], e2["scale"], e2["bias"], sel["pool2"],
        sel["g3"], e3a["w"], e3a["scale"], e3a["bias"],
        e3b["w"], e3b["scale"], e3b["bias"], sel["pool3"],
        sel["gd1"], d1["w"], d1["scale"], d1["bias"], sel["scd1"],
        sel["gd2"], d2["w"], d2["scale"], d2["bias"], sel["scd2"],
        sel["gd3"], d3["w"], d3["scale"], d3["bias"], sel["scd3"],
        cls["w"], cls["bias"],
    ]

    in_specs = [pl.BlockSpec((1,) + tuple(patches.shape[1:]),
                             lambda n: (n, 0, 0))]
    for op in operands[1:]:
        in_specs.append(pl.BlockSpec(tuple(op.shape), _const_index_map(op.ndim)))

    out_shape = jax.ShapeDtypeStruct((N, 256, 128), jnp.float32)
    out_specs = pl.BlockSpec((1, 256, 128), lambda n: (n, 0, 0))

    bytes_accessed = int(sum(int(np.prod(o.shape)) * o.dtype.itemsize
                             for o in operands) + N * 256 * 128 * 4)
    flops = int(2 * 34_000_000 * N)   # real convs + selection matmuls, rough

    out = pl.pallas_call(
        _fused_kernel,
        grid=(N,),
        in_specs=in_specs,
        out_specs=out_specs,
        out_shape=out_shape,
        compiler_params=pltpu.CompilerParams(
            dimension_semantics=("parallel",),
            vmem_limit_bytes=32 * 1024 * 1024,
        ),
        cost_estimate=pl.CostEstimate(flops=flops, transcendentals=0,
                                      bytes_accessed=bytes_accessed),
    )(*operands)

    logits = out[..., :cls["cout"]].reshape(N, 16, 16, cls["cout"])
    return jnp.transpose(logits, (0, 3, 1, 2))     # NHWC -> NCHW


if __name__ == "__main__":
    key = jax.random.PRNGKey(0)
    pkey, xkey = jax.random.split(key)
    params = init_params(pkey)

    x = jax.random.normal(xkey, (2, 3, 16, 16), jnp.float32)   # NCHW like PyTorch

    fwd = jax.jit(lambda inp: forward(inp, params))
    out = jax.block_until_ready(fwd(x))

    assert out.shape == (2, 2, 16, 16), out.shape
    assert out.dtype == jnp.float32
    assert bool(jnp.all(jnp.isfinite(out)))
    print("KERNEL_OK")
</pallas_src>

<mosaic_0001>
module attributes {stable_mosaic.version = 11 : i64} {
  func.func @_fused_kernel(%arg0: i32, %arg1: memref<1x256x32xbf16, #tpu.memory_space<vmem>>, %arg2: memref<32x64xbf16, #tpu.memory_space<vmem>>, %arg3: memref<1x64xf32, #tpu.memory_space<vmem>>, %arg4: memref<1x64xf32, #tpu.memory_space<vmem>>, %arg5: memref<256x256xbf16, #tpu.memory_space<vmem>>, %arg6: memref<576x64xbf16, #tpu.memory_space<vmem>>, %arg7: memref<576x128xbf16, #tpu.memory_space<vmem>>, %arg8: memref<1x128xf32, #tpu.memory_space<vmem>>, %arg9: memref<1x128xf32, #tpu.memory_space<vmem>>, %arg10: memref<64x64xbf16, #tpu.memory_space<vmem>>, %arg11: memref<144x16xbf16, #tpu.memory_space<vmem>>, %arg12: memref<1152x256xbf16, #tpu.memory_space<vmem>>, %arg13: memref<1x256xf32, #tpu.memory_space<vmem>>, %arg14: memref<1x256xf32, #tpu.memory_space<vmem>>, %arg15: memref<2304x256xbf16, #tpu.memory_space<vmem>>, %arg16: memref<1x256xf32, #tpu.memory_space<vmem>>, %arg17: memref<1x256xf32, #tpu.memory_space<vmem>>, %arg18: memref<16x16xbf16, #tpu.memory_space<vmem>>, %arg19: memref<16x4xbf16, #tpu.memory_space<vmem>>, %arg20: memref<1024x512xbf16, #tpu.memory_space<vmem>>, %arg21: memref<1x512xf32, #tpu.memory_space<vmem>>, %arg22: memref<1x512xf32, #tpu.memory_space<vmem>>, %arg23: memref<4x16x4xbf16, #tpu.memory_space<vmem>>, %arg24: memref<64x16xbf16, #tpu.memory_space<vmem>>, %arg25: memref<512x256xbf16, #tpu.memory_space<vmem>>, %arg26: memref<1x256xf32, #tpu.memory_space<vmem>>, %arg27: memref<1x256xf32, #tpu.memory_space<vmem>>, %arg28: memref<4x64x16xbf16, #tpu.memory_space<vmem>>, %arg29: memref<256x64xbf16, #tpu.memory_space<vmem>>, %arg30: memref<256x128xbf16, #tpu.memory_space<vmem>>, %arg31: memref<1x128xf32, #tpu.memory_space<vmem>>, %arg32: memref<1x128xf32, #tpu.memory_space<vmem>>, %arg33: memref<4x256x64xbf16, #tpu.memory_space<vmem>>, %arg34: memref<32x128xbf16, #tpu.memory_space<vmem>>, %arg35: memref<1x128xf32, #tpu.memory_space<vmem>>, %arg36: memref<1x256x128xf32, #tpu.memory_space<vmem>>) attributes {dimension_semantics = [#tpu.dimension_semantics<parallel>], iteration_bounds = array<i64: 2>, scalar_prefetch = 0 : i64, scratch_operands = 0 : i64, tpu.core_type = #tpu.core_type<tc>, window_params = [{transform_indices = @transform_0, window_bounds = array<i64: 1, 256, 32>}, {pipeline_mode = #tpu.pipeline_mode<synchronous>, transform_indices = @transform_1, window_bounds = array<i64: 32, 64>}, {pipeline_mode = #tpu.pipeline_mode<synchronous>, transform_indices = @transform_2, window_bounds = array<i64: 1, 64>}, {pipeline_mode = #tpu.pipeline_mode<synchronous>, transform_indices = @transform_3, window_bounds = array<i64: 1, 64>}, {pipeline_mode = #tpu.pipeline_mode<synchronous>, transform_indices = @transform_4, window_bounds = array<i64: 256, 256>}, {pipeline_mode = #tpu.pipeline_mode<synchronous>, transform_indices = @transform_5, window_bounds = array<i64: 576, 64>}, {pipeline_mode = #tpu.pipeline_mode<synchronous>, transform_indices = @transform_6, window_bounds = array<i64: 576, 128>}, {pipeline_mode = #tpu.pipeline_mode<synchronous>, transform_indices = @transform_7, window_bounds = array<i64: 1, 128>}, {pipeline_mode = #tpu.pipeline_mode<synchronous>, transform_indices = @transform_8, window_bounds = array<i64: 1, 128>}, {pipeline_mode = #tpu.pipeline_mode<synchronous>, transform_indices = @transform_9, window_bounds = array<i64: 64, 64>}, {pipeline_mode = #tpu.pipeline_mode<synchronous>, transform_indices = @transform_10, window_bounds = array<i64: 144, 16>}, {pipeline_mode = #tpu.pipeline_mode<synchronous>, transform_indices = @transform_11, window_bounds = array<i64: 1152, 256>}, {pipeline_mode = #tpu.pipeline_mode<synchronous>, transform_indices = @transform_12, window_bounds = array<i64: 1, 256>}, {pipeline_mode = #tpu.pipeline_mode<synchronous>, transform_indices = @transform_13, window_bounds = array<i64: 1, 256>}, {pipeline_mode = #tpu.pipeline_mode<synchronous>, transform_indices = @transform_14, window_bounds = array<i64: 2304, 256>}, {pipeline_mode = #tpu.pipeline_mode<synchronous>, transform_indices = @transform_15, window_bounds = array<i64: 1, 256>}, {pipeline_mode = #tpu.pipeline_mode<synchronous>, transform_indices = @transform_16, window_bounds = array<i64: 1, 256>}, {pipeline_mode = #tpu.pipeline_mode<synchronous>, transform_indices = @transform_17, window_bounds = array<i64: 16, 16>}, {pipeline_mode = #tpu.pipeline_mode<synchronous>, transform_indices = @transform_18, window_bounds = array<i64: 16, 4>}, {pipeline_mode = #tpu.pipeline_mode<synchronous>, transform_indices = @transform_19, window_bounds = array<i64: 1024, 512>}, {pipeline_mode = #tpu.pipeline_mode<synchronous>, transform_indices = @transform_20, window_bounds = array<i64: 1, 512>}, {pipeline_mode = #tpu.pipeline_mode<synchronous>, transform_indices = @transform_21, window_bounds = array<i64: 1, 512>}, {pipeline_mode = #tpu.pipeline_mode<synchronous>, transform_indices = @transform_22, window_bounds = array<i64: 4, 16, 4>}, {pipeline_mode = #tpu.pipeline_mode<synchronous>, transform_indices = @transform_23, window_bounds = array<i64: 64, 16>}, {pipeline_mode = #tpu.pipeline_mode<synchronous>, transform_indices = @transform_24, window_bounds = array<i64: 512, 256>}, {pipeline_mode = #tpu.pipeline_mode<synchronous>, transform_indices = @transform_25, window_bounds = array<i64: 1, 256>}, {pipeline_mode = #tpu.pipeline_mode<synchronous>, transform_indices = @transform_26, window_bounds = array<i64: 1, 256>}, {pipeline_mode = #tpu.pipeline_mode<synchronous>, transform_indices = @transform_27, window_bounds = array<i64: 4, 64, 16>}, {pipeline_mode = #tpu.pipeline_mode<synchronous>, transform_indices = @transform_28, window_bounds = array<i64: 256, 64>}, {pipeline_mode = #tpu.pipeline_mode<synchronous>, transform_indices = @transform_29, window_bounds = array<i64: 256, 128>}, {pipeline_mode = #tpu.pipeline_mode<synchronous>, transform_indices = @transform_30, window_bounds = array<i64: 1, 128>}, {pipeline_mode = #tpu.pipeline_mode<synchronous>, transform_indices = @transform_31, window_bounds = array<i64: 1, 128>}, {pipeline_mode = #tpu.pipeline_mode<synchronous>, transform_indices = @transform_32, window_bounds = array<i64: 4, 256, 64>}, {pipeline_mode = #tpu.pipeline_mode<synchronous>, transform_indices = @transform_33, window_bounds = array<i64: 32, 128>}, {pipeline_mode = #tpu.pipeline_mode<synchronous>, transform_indices = @transform_34, window_bounds = array<i64: 1, 128>}, {transform_indices = @transform_35, window_bounds = array<i64: 1, 256, 128>}]} {
    %c0 = arith.constant 0 : index
    %c0_0 = arith.constant 0 : index
    %c0_1 = arith.constant 0 : index
    %0 = vector.load %arg1[%c0, %c0_0, %c0_1] : memref<1x256x32xbf16, #tpu.memory_space<vmem>>, vector<1x256x32xbf16>
    %1 = vector.shape_cast %0 : vector<1x256x32xbf16> to vector<256x32xbf16>
    %c0_2 = arith.constant 0 : index
    %c0_3 = arith.constant 0 : index
    %2 = vector.load %arg2[%c0_2, %c0_3] : memref<32x64xbf16, #tpu.memory_space<vmem>>, vector<32x64xbf16>
    %cst = arith.constant dense<0.000000e+00> : vector<256x64xf32>
    %3 = tpu.matmul %1, %2, %cst {dimension_numbers = #tpu.dot_dimension_numbers<[1], [0], [0], [1], [0, 0, 1, 1], [], []>} : vector<256x32xbf16>, vector<32x64xbf16>, vector<256x64xf32> -> vector<256x64xf32>
    %c0_4 = arith.constant 0 : index
    %c0_5 = arith.constant 0 : index
    %4 = vector.load %arg3[%c0_4, %c0_5] : memref<1x64xf32, #tpu.memory_space<vmem>>, vector<1x64xf32>
    %5 = vector.broadcast %4 : vector<1x64xf32> to vector<256x64xf32>
    %6 = arith.mulf %3, %5 : vector<256x64xf32>
    %c0_6 = arith.constant 0 : index
    %c0_7 = arith.constant 0 : index
    %7 = vector.load %arg4[%c0_6, %c0_7] : memref<1x64xf32, #tpu.memory_space<vmem>>, vector<1x64xf32>
    %8 = vector.broadcast %7 : vector<1x64xf32> to vector<256x64xf32>
    %9 = arith.addf %6, %8 : vector<256x64xf32>
    %cst_8 = arith.constant 0.000000e+00 : f32
    %10 = vector.broadcast %cst_8 : f32 to vector<256x64xf32>
    %11 = arith.maximumf %9, %10 : vector<256x64xf32>
    %c0_9 = arith.constant 0 : index
    %c0_10 = arith.constant 0 : index
    %12 = vector.load %arg5[%c0_9, %c0_10] : memref<256x256xbf16, #tpu.memory_space<vmem>>, vector<256x256xbf16>
    %13 = arith.truncf %11 : vector<256x64xf32> to vector<256x64xbf16>
    %cst_11 = arith.constant dense<0.000000e+00> : vector<256x64xf32>
    %14 = tpu.matmul %12, %13, %cst_11 {dimension_numbers = #tpu.dot_dimension_numbers<[1], [0], [0], [1], [0, 0, 1, 1], [], []>} : vector<256x256xbf16>, vector<256x64xbf16>, vector<256x64xf32> -> vector<256x64xf32>
    %15 = vector.extract_strided_slice %14 {offsets = [0, 0], sizes = [64, 64], strides = [1, 1]} : vector<256x64xf32> to vector<64x64xf32>
    %16 = vector.extract_strided_slice %14 {offsets = [64, 0], sizes = [64, 64], strides = [1, 1]} : vector<256x64xf32> to vector<64x64xf32>
    %17 = vector.extract_strided_slice %14 {offsets = [128, 0], sizes = [64, 64], strides = [1, 1]} : vector<256x64xf32> to vector<64x64xf32>
    %18 = vector.extract_strided_slice %14 {offsets = [192, 0], sizes = [64, 64], strides = [1, 1]} : vector<256x64xf32> to vector<64x64xf32>
    %19 = arith.maximumf %15, %16 : vector<64x64xf32>
    %20 = arith.maximumf %17, %18 : vector<64x64xf32>
    %21 = arith.maximumf %19, %20 : vector<64x64xf32>
    %22 = arith.truncf %21 : vector<64x64xf32> to vector<64x64xbf16>
    %c0_12 = arith.constant 0 : index
    %c0_13 = arith.constant 0 : index
    %23 = vector.load %arg6[%c0_12, %c0_13] : memref<576x64xbf16, #tpu.memory_space<vmem>>, vector<576x64xbf16>
    %cst_14 = arith.constant dense<0.000000e+00> : vector<576x64xf32>
    %24 = tpu.matmul %23, %22, %cst_14 {dimension_numbers = #tpu.dot_dimension_numbers<[1], [0], [0], [1], [0, 0, 1, 1], [], []>} : vector<576x64xbf16>, vector<64x64xbf16>, vector<576x64xf32> -> vector<576x64xf32>
    %25 = arith.truncf %24 : vector<576x64xf32> to vector<576x64xbf16>
    %26 = vector.extract_strided_slice %25 {offsets = [0, 0], sizes = [64, 64], strides = [1, 1]} : vector<576x64xbf16> to vector<64x64xbf16>
    %27 = vector.extract_strided_slice %25 {offsets = [64, 0], sizes = [64, 64], strides = [1, 1]} : vector<576x64xbf16> to vector<64x64xbf16>
    %28 = vector.extract_strided_slice %25 {offsets = [128, 0], sizes = [64, 64], strides = [1, 1]} : vector<576x64xbf16> to vector<64x64xbf16>
    %29 = vector.extract_strided_slice %25 {offsets = [192, 0], sizes = [64, 64], strides = [1, 1]} : vector<576x64xbf16> to vector<64x64xbf16>
    %30 = vector.extract_strided_slice %25 {offsets = [256, 0], sizes = [64, 64], strides = [1, 1]} : vector<576x64xbf16> to vector<64x64xbf16>
    %31 = vector.extract_strided_slice %25 {offsets = [320, 0], sizes = [64, 64], strides = [1, 1]} : vector<576x64xbf16> to vector<64x64xbf16>
    %32 = vector.extract_strided_slice %25 {offsets = [384, 0], sizes = [64, 64], strides = [1, 1]} : vector<576x64xbf16> to vector<64x64xbf16>
    %33 = vector.extract_strided_slice %25 {offsets = [448, 0], sizes = [64, 64], strides = [1, 1]} : vector<576x64xbf16> to vector<64x64xbf16>
    %34 = vector.extract_strided_slice %25 {offsets = [512, 0], sizes = [64, 64], strides = [1, 1]} : vector<576x64xbf16> to vector<64x64xbf16>
    %35 = tpu.concatenate %26, %27, %28, %29, %30, %31, %32, %33, %34 in 1 : vector<64x64xbf16>, vector<64x64xbf16>, vector<64x64xbf16>, vector<64x64xbf16>, vector<64x64xbf16>, vector<64x64xbf16>, vector<64x64xbf16>, vector<64x64xbf16>, vector<64x64xbf16> -> vector<64x576xbf16>
    %c0_15 = arith.constant 0 : index
    %c0_16 = arith.constant 0 : index
    %36 = vector.load %arg7[%c0_15, %c0_16] : memref<576x128xbf16, #tpu.memory_space<vmem>>, vector<576x128xbf16>
    %cst_17 = arith.constant dense<0.000000e+00> : vector<64x128xf32>
    %37 = tpu.matmul %35, %36, %cst_17 {dimension_numbers = #tpu.dot_dimension_numbers<[1], [0], [0], [1], [0, 0, 1, 1], [], []>} : vector<64x576xbf16>, vector<576x128xbf16>, vector<64x128xf32> -> vector<64x128xf32>
    %c0_18 = arith.constant 0 : index
    %c0_19 = arith.constant 0 : index
    %38 = vector.load %arg8[%c0_18, %c0_19] : memref<1x128xf32, #tpu.memory_space<vmem>>, vector<1x128xf32>
    %39 = vector.broadcast %38 : vector<1x128xf32> to vector<64x128xf32>
    %40 = arith.mulf %37, %39 : vector<64x128xf32>
    %c0_20 = arith.constant 0 : index
    %c0_21 = arith.constant 0 : index
    %41 = vector.load %arg9[%c0_20, %c0_21] : memref<1x128xf32, #tpu.memory_space<vmem>>, vector<1x128xf32>
    %42 = vector.broadcast %41 : vector<1x128xf32> to vector<64x128xf32>
    %43 = arith.addf %40, %42 : vector<64x128xf32>
    %cst_22 = arith.constant 0.000000e+00 : f32
    %44 = vector.broadcast %cst_22 : f32 to vector<64x128xf32>
    %45 = arith.maximumf %43, %44 : vector<64x128xf32>
    %c0_23 = arith.constant 0 : index
    %c0_24 = arith.constant 0 : index
    %46 = vector.load %arg10[%c0_23, %c0_24] : memref<64x64xbf16, #tpu.memory_space<vmem>>, vector<64x64xbf16>
    %47 = arith.truncf %45 : vector<64x128xf32> to vector<64x128xbf16>
    %cst_25 = arith.constant dense<0.000000e+00> : vector<64x128xf32>
    %48 = tpu.matmul %46, %47, %cst_25 {dimension_numbers = #tpu.dot_dimension_numbers<[1], [0], [0], [1], [0, 0, 1, 1], [], []>} : vector<64x64xbf16>, vector<64x128xbf16>, vector<64x128xf32> -> vector<64x128xf32>
    %49 = vector.extract_strided_slice %48 {offsets = [0, 0], sizes = [16, 128], strides = [1, 1]} : vector<64x128xf32> to vector<16x128xf32>
    %50 = vector.extract_strided_slice %48 {offsets = [16, 0], sizes = [16, 128], strides = [1, 1]} : vector<64x128xf32> to vector<16x128xf32>
    %51 = vector.extract_strided_slice %48 {offsets = [32, 0], sizes = [16, 128], strides = [1, 1]} : vector<64x128xf32> to vector<16x128xf32>
    %52 = vector.extract_strided_slice %48 {offsets = [48, 0], sizes = [16, 128], strides = [1, 1]} : vector<64x128xf32> to vector<16x128xf32>
    %53 = arith.maximumf %49, %50 : vector<16x128xf32>
    %54 = arith.maximumf %51, %52 : vector<16x128xf32>
    %55 = arith.maximumf %53, %54 : vector<16x128xf32>
    %56 = arith.truncf %55 : vector<16x128xf32> to vector<16x128xbf16>
    %c0_26 = arith.constant 0 : index
    %c0_27 = arith.constant 0 : index
    %57 = vector.load %arg11[%c0_26, %c0_27] : memref<144x16xbf16, #tpu.memory_space<vmem>>, vector<144x16xbf16>
    %cst_28 = arith.constant dense<0.000000e+00> : vector<144x128xf32>
    %58 = tpu.matmul %57, %56, %cst_28 {dimension_numbers = #tpu.dot_dimension_numbers<[1], [0], [0], [1], [0, 0, 1, 1], [], []>} : vector<144x16xbf16>, vector<16x128xbf16>, vector<144x128xf32> -> vector<144x128xf32>
    %59 = arith.truncf %58 : vector<144x128xf32> to vector<144x128xbf16>
    %60 = vector.extract_strided_slice %59 {offsets = [0, 0], sizes = [16, 128], strides = [1, 1]} : vector<144x128xbf16> to vector<16x128xbf16>
    %61 = vector.extract_strided_slice %59 {offsets = [16, 0], sizes = [16, 128], strides = [1, 1]} : vector<144x128xbf16> to vector<16x128xbf16>
    %62 = vector.extract_strided_slice %59 {offsets = [32, 0], sizes = [16, 128], strides = [1, 1]} : vector<144x128xbf16> to vector<16x128xbf16>
    %63 = vector.extract_strided_slice %59 {offsets = [48, 0], sizes = [16, 128], strides = [1, 1]} : vector<144x128xbf16> to vector<16x128xbf16>
    %64 = vector.extract_strided_slice %59 {offsets = [64, 0], sizes = [16, 128], strides = [1, 1]} : vector<144x128xbf16> to vector<16x128xbf16>
    %65 = vector.extract_strided_slice %59 {offsets = [80, 0], sizes = [16, 128], strides = [1, 1]} : vector<144x128xbf16> to vector<16x128xbf16>
    %66 = vector.extract_strided_slice %59 {offsets = [96, 0], sizes = [16, 128], strides = [1, 1]} : vector<144x128xbf16> to vector<16x128xbf16>
    %67 = vector.extract_strided_slice %59 {offsets = [112, 0], sizes = [16, 128], strides = [1, 1]} : vector<144x128xbf16> to vector<16x128xbf16>
    %68 = vector.extract_strided_slice %59 {offsets = [128, 0], sizes = [16, 128], strides = [1, 1]} : vector<144x128xbf16> to vector<16x128xbf16>
    %69 = tpu.concatenate %60, %61, %62, %63, %64, %65, %66, %67, %68 in 1 : vector<16x128xbf16>, vector<16x128xbf16>, vector<16x128xbf16>, vector<16x128xbf16>, vector<16x128xbf16>, vector<16x128xbf16>, vector<16x128xbf16>, vector<16x128xbf16>, vector<16x128xbf16> -> vector<16x1152xbf16>
    %c0_29 = arith.constant 0 : index
    %c0_30 = arith.constant 0 : index
    %70 = vector.load %arg12[%c0_29, %c0_30] : memref<1152x256xbf16, #tpu.memory_space<vmem>>, vector<1152x256xbf16>
    %cst_31 = arith.constant dense<0.000000e+00> : vector<16x256xf32>
    %71 = tpu.matmul %69, %70, %cst_31 {dimension_numbers = #tpu.dot_dimension_numbers<[1], [0], [0], [1], [0, 0, 1, 1], [], []>} : vector<16x1152xbf16>, vector<1152x256xbf16>, vector<16x256xf32> -> vector<16x256xf32>
    %c0_32 = arith.constant 0 : index
    %c0_33 = arith.constant 0 : index
    %72 = vector.load %arg13[%c0_32, %c0_33] : memref<1x256xf32, #tpu.memory_space<vmem>>, vector<1x256xf32>
    %73 = vector.broadcast %72 : vector<1x256xf32> to vector<16x256xf32>
    %74 = arith.mulf %71, %73 : vector<16x256xf32>
    %c0_34 = arith.constant 0 : index
    %c0_35 = arith.constant 0 : index
    %75 = vector.load %arg14[%c0_34, %c0_35] : memref<1x256xf32, #tpu.memory_space<vmem>>, vector<1x256xf32>
    %76 = vector.broadcast %75 : vector<1x256xf32> to vector<16x256xf32>
    %77 = arith.addf %74, %76 : vector<16x256xf32>
    %cst_36 = arith.constant 0.000000e+00 : f32
    %78 = vector.broadcast %cst_36 : f32 to vector<16x256xf32>
    %79 = arith.maximumf %77, %78 : vector<16x256xf32>
    %80 = arith.truncf %79 : vector<16x256xf32> to vector<16x256xbf16>
    %c0_37 = arith.constant 0 : index
    %c0_38 = arith.constant 0 : index
    %81 = vector.load %arg11[%c0_37, %c0_38] : memref<144x16xbf16, #tpu.memory_space<vmem>>, vector<144x16xbf16>
    %cst_39 = arith.constant dense<0.000000e+00> : vector<144x256xf32>
    %82 = tpu.matmul %81, %80, %cst_39 {dimension_numbers = #tpu.dot_dimension_numbers<[1], [0], [0], [1], [0, 0, 1, 1], [], []>} : vector<144x16xbf16>, vector<16x256xbf16>, vector<144x256xf32> -> vector<144x256xf32>
    %83 = arith.truncf %82 : vector<144x256xf32> to vector<144x256xbf16>
    %84 = vector.extract_strided_slice %83 {offsets = [0, 0], sizes = [16, 256], strides = [1, 1]} : vector<144x256xbf16> to vector<16x256xbf16>
    %85 = vector.extract_strided_slice %83 {offsets = [16, 0], sizes = [16, 256], strides = [1, 1]} : vector<144x256xbf16> to vector<16x256xbf16>
    %86 = vector.extract_strided_slice %83 {offsets = [32, 0], sizes = [16, 256], strides = [1, 1]} : vector<144x256xbf16> to vector<16x256xbf16>
    %87 = vector.extract_strided_slice %83 {offsets = [48, 0], sizes = [16, 256], strides = [1, 1]} : vector<144x256xbf16> to vector<16x256xbf16>
    %88 = vector.extract_strided_slice %83 {offsets = [64, 0], sizes = [16, 256], strides = [1, 1]} : vector<144x256xbf16> to vector<16x256xbf16>
    %89 = vector.extract_strided_slice %83 {offsets = [80, 0], sizes = [16, 256], strides = [1, 1]} : vector<144x256xbf16> to vector<16x256xbf16>
    %90 = vector.extract_strided_slice %83 {offsets = [96, 0], sizes = [16, 256], strides = [1, 1]} : vector<144x256xbf16> to vector<16x256xbf16>
    %91 = vector.extract_strided_slice %83 {offsets = [112, 0], sizes = [16, 256], strides = [1, 1]} : vector<144x256xbf16> to vector<16x256xbf16>
    %92 = vector.extract_strided_slice %83 {offsets = [128, 0], sizes = [16, 256], strides = [1, 1]} : vector<144x256xbf16> to vector<16x256xbf16>
    %93 = tpu.concatenate %84, %85, %86, %87, %88, %89, %90, %91, %92 in 1 : vector<16x256xbf16>, vector<16x256xbf16>, vector<16x256xbf16>, vector<16x256xbf16>, vector<16x256xbf16>, vector<16x256xbf16>, vector<16x256xbf16>, vector<16x256xbf16>, vector<16x256xbf16> -> vector<16x2304xbf16>
    %c0_40 = arith.constant 0 : index
    %c0_41 = arith.constant 0 : index
    %94 = vector.load %arg15[%c0_40, %c0_41] : memref<2304x256xbf16, #tpu.memory_space<vmem>>, vector<2304x256xbf16>
    %cst_42 = arith.constant dense<0.000000e+00> : vector<16x256xf32>
    %95 = tpu.matmul %93, %94, %cst_42 {dimension_numbers = #tpu.dot_dimension_numbers<[1], [0], [0], [1], [0, 0, 1, 1], [], []>} : vector<16x2304xbf16>, vector<2304x256xbf16>, vector<16x256xf32> -> vector<16x256xf32>
    %c0_43 = arith.constant 0 : index
    %c0_44 = arith.constant 0 : index
    %96 = vector.load %arg16[%c0_43, %c0_44] : memref<1x256xf32, #tpu.memory_space<vmem>>, vector<1x256xf32>
    %97 = vector.broadcast %96 : vector<1x256xf32> to vector<16x256xf32>
    %98 = arith.mulf %95, %97 : vector<16x256xf32>
    %c0_45 = arith.constant 0 : index
    %c0_46 = arith.constant 0 : index
    %99 = vector.load %arg17[%c0_45, %c0_46] : memref<1x256xf32, #tpu.memory_space<vmem>>, vector<1x256xf32>
    %100 = vector.broadcast %99 : vector<1x256xf32> to vector<16x256xf32>
    %101 = arith.addf %98, %100 : vector<16x256xf32>
    %cst_47 = arith.constant 0.000000e+00 : f32
    %102 = vector.broadcast %cst_47 : f32 to vector<16x256xf32>
    %103 = arith.maximumf %101, %102 : vector<16x256xf32>
    %c0_48 = arith.constant 0 : index
    %c0_49 = arith.constant 0 : index
    %104 = vector.load %arg18[%c0_48, %c0_49] : memref<16x16xbf16, #tpu.memory_space<vmem>>, vector<16x16xbf16>
    %105 = arith.truncf %103 : vector<16x256xf32> to vector<16x256xbf16>
    %cst_50 = arith.constant dense<0.000000e+00> : vector<16x256xf32>
    %106 = tpu.matmul %104, %105, %cst_50 {dimension_numbers = #tpu.dot_dimension_numbers<[1], [0], [0], [1], [0, 0, 1, 1], [], []>} : vector<16x16xbf16>, vector<16x256xbf16>, vector<16x256xf32> -> vector<16x256xf32>
    %107 = vector.extract_strided_slice %106 {offsets = [0, 0], sizes = [4, 256], strides = [1, 1]} : vector<16x256xf32> to vector<4x256xf32>
    %108 = vector.extract_strided_slice %106 {offsets = [4, 0], sizes = [4, 256], strides = [1, 1]} : vector<16x256xf32> to vector<4x256xf32>
    %109 = vector.extract_strided_slice %106 {offsets = [8, 0], sizes = [4, 256], strides = [1, 1]} : vector<16x256xf32> to vector<4x256xf32>
    %110 = vector.extract_strided_slice %106 {offsets = [12, 0], sizes = [4, 256], strides = [1, 1]} : vector<16x256xf32> to vector<4x256xf32>
    %111 = arith.maximumf %107, %108 : vector<4x256xf32>
    %112 = arith.maximumf %109, %110 : vector<4x256xf32>
    %113 = arith.maximumf %111, %112 : vector<4x256xf32>
    %114 = arith.truncf %113 : vector<4x256xf32> to vector<4x256xbf16>
    %c0_51 = arith.constant 0 : index
    %c0_52 = arith.constant 0 : index
    %115 = vector.load %arg19[%c0_51, %c0_52] : memref<16x4xbf16, #tpu.memory_space<vmem>>, vector<16x4xbf16>
    %cst_53 = arith.constant dense<0.000000e+00> : vector<16x256xf32>
    %116 = tpu.matmul %115, %114, %cst_53 {dimension_numbers = #tpu.dot_dimension_numbers<[1], [0], [0], [1], [0, 0, 1, 1], [], []>} : vector<16x4xbf16>, vector<4x256xbf16>, vector<16x256xf32> -> vector<16x256xf32>
    %117 = arith.truncf %116 : vector<16x256xf32> to vector<16x256xbf16>
    %118 = vector.extract_strided_slice %117 {offsets = [0, 0], sizes = [4, 256], strides = [1, 1]} : vector<16x256xbf16> to vector<4x256xbf16>
    %119 = vector.extract_strided_slice %117 {offsets = [4, 0], sizes = [4, 256], strides = [1, 1]} : vector<16x256xbf16> to vector<4x256xbf16>
    %120 = vector.extract_strided_slice %117 {offsets = [8, 0], sizes = [4, 256], strides = [1, 1]} : vector<16x256xbf16> to vector<4x256xbf16>
    %121 = vector.extract_strided_slice %117 {offsets = [12, 0], sizes = [4, 256], strides = [1, 1]} : vector<16x256xbf16> to vector<4x256xbf16>
    %122 = tpu.concatenate %118, %119, %120, %121 in 1 : vector<4x256xbf16>, vector<4x256xbf16>, vector<4x256xbf16>, vector<4x256xbf16> -> vector<4x1024xbf16>
    %c0_54 = arith.constant 0 : index
    %c0_55 = arith.constant 0 : index
    %123 = vector.load %arg20[%c0_54, %c0_55] : memref<1024x512xbf16, #tpu.memory_space<vmem>>, vector<1024x512xbf16>
    %cst_56 = arith.constant dense<0.000000e+00> : vector<4x512xf32>
    %124 = tpu.matmul %122, %123, %cst_56 {dimension_numbers = #tpu.dot_dimension_numbers<[1], [0], [0], [1], [0, 0, 1, 1], [], []>} : vector<4x1024xbf16>, vector<1024x512xbf16>, vector<4x512xf32> -> vector<4x512xf32>
    %c0_57 = arith.constant 0 : index
    %c0_58 = arith.constant 0 : index
    %125 = vector.load %arg21[%c0_57, %c0_58] : memref<1x512xf32, #tpu.memory_space<vmem>>, vector<1x512xf32>
    %126 = vector.broadcast %125 : vector<1x512xf32> to vector<4x512xf32>
    %127 = arith.mulf %124, %126 : vector<4x512xf32>
    %c0_59 = arith.constant 0 : index
    %c0_60 = arith.constant 0 : index
    %128 = vector.load %arg22[%c0_59, %c0_60] : memref<1x512xf32, #tpu.memory_space<vmem>>, vector<1x512xf32>
    %129 = vector.broadcast %128 : vector<1x512xf32> to vector<4x512xf32>
    %130 = arith.addf %127, %129 : vector<4x512xf32>
    %cst_61 = arith.constant 0.000000e+00 : f32
    %131 = vector.broadcast %cst_61 : f32 to vector<4x512xf32>
    %132 = arith.maximumf %130, %131 : vector<4x512xf32>
    %133 = arith.truncf %132 : vector<4x512xf32> to vector<4x512xbf16>
    %c0_62 = arith.constant 0 : index
    %c0_63 = arith.constant 0 : index
    %c0_64 = arith.constant 0 : index
    %134 = vector.load %arg23[%c0_62, %c0_63, %c0_64] : memref<4x16x4xbf16, #tpu.memory_space<vmem>>, vector<1x16x4xbf16>
    %135 = vector.shape_cast %134 : vector<1x16x4xbf16> to vector<16x4xbf16>
    %136 = vector.extract_strided_slice %133 {offsets = [0, 0], sizes = [4, 128], strides = [1, 1]} : vector<4x512xbf16> to vector<4x128xbf16>
    %cst_65 = arith.constant dense<0.000000e+00> : vector<16x128xf32>
    %137 = tpu.matmul %135, %136, %cst_65 {dimension_numbers = #tpu.dot_dimension_numbers<[1], [0], [0], [1], [0, 0, 1, 1], [], []>} : vector<16x4xbf16>, vector<4x128xbf16>, vector<16x128xf32> -> vector<16x128xf32>
    %c1 = arith.constant 1 : index
    %c0_66 = arith.constant 0 : index
    %c0_67 = arith.constant 0 : index
    %138 = vector.load %arg23[%c1, %c0_66, %c0_67] : memref<4x16x4xbf16, #tpu.memory_space<vmem>>, vector<1x16x4xbf16>
    %139 = vector.shape_cast %138 : vector<1x16x4xbf16> to vector<16x4xbf16>
    %140 = vector.extract_strided_slice %133 {offsets = [0, 128], sizes = [4, 128], strides = [1, 1]} : vector<4x512xbf16> to vector<4x128xbf16>
    %cst_68 = arith.constant dense<0.000000e+00> : vector<16x128xf32>
    %141 = tpu.matmul %139, %140, %cst_68 {dimension_numbers = #tpu.dot_dimension_numbers<[1], [0], [0], [1], [0, 0, 1, 1], [], []>} : vector<16x4xbf16>, vector<4x128xbf16>, vector<16x128xf32> -> vector<16x128xf32>
    %142 = arith.addf %137, %141 : vector<16x128xf32>
    %c2 = arith.constant 2 : index
    %c0_69 = arith.constant 0 : index
    %c0_70 = arith.constant 0 : index
    %143 = vector.load %arg23[%c2, %c0_69, %c0_70] : memref<4x16x4xbf16, #tpu.memory_space<vmem>>, vector<1x16x4xbf16>
    %144 = vector.shape_cast %143 : vector<1x16x4xbf16> to vector<16x4xbf16>
    %145 = vector.extract_strided_slice %133 {offsets = [0, 256], sizes = [4, 128], strides = [1, 1]} : vector<4x512xbf16> to vector<4x128xbf16>
    %cst_71 = arith.constant dense<0.000000e+00> : vector<16x128xf32>
    %146 = tpu.matmul %144, %145, %cst_71 {dimension_numbers = #tpu.dot_dimension_numbers<[1], [0], [0], [1], [0, 0, 1, 1], [], []>} : vector<16x4xbf16>, vector<4x128xbf16>, vector<16x128xf32> -> vector<16x128xf32>
    %147 = arith.addf %142, %146 : vector<16x128xf32>
    %c3 = arith.constant 3 : index
    %c0_72 = arith.constant 0 : index
    %c0_73 = arith.constant 0 : index
    %148 = vector.load %arg23[%c3, %c0_72, %c0_73] : memref<4x16x4xbf16, #tpu.memory_space<vmem>>, vector<1x16x4xbf16>
    %149 = vector.shape_cast %148 : vector<1x16x4xbf16> to vector<16x4xbf16>
    %150 = vector.extract_strided_slice %133 {offsets = [0, 384], sizes = [4, 128], strides = [1, 1]} : vector<4x512xbf16> to vector<4x128xbf16>
    %cst_74 = arith.constant dense<0.000000e+00> : vector<16x128xf32>
    %151 = tpu.matmul %149, %150, %cst_74 {dimension_numbers = #tpu.dot_dimension_numbers<[1], [0], [0], [1], [0, 0, 1, 1], [], []>} : vector<16x4xbf16>, vector<4x128xbf16>, vector<16x128xf32> -> vector<16x128xf32>
    %152 = arith.addf %147, %151 : vector<16x128xf32>
    %153 = arith.truncf %152 : vector<16x128xf32> to vector<16x128xbf16>
    %c0_75 = arith.constant 0 : index
    %c0_76 = arith.constant 0 : index
    %154 = vector.load %arg24[%c0_75, %c0_76] : memref<64x16xbf16, #tpu.memory_space<vmem>>, vector<64x16xbf16>
    %cst_77 = arith.constant dense<0.000000e+00> : vector<64x128xf32>
    %155 = tpu.matmul %154, %153, %cst_77 {dimension_numbers = #tpu.dot_dimension_numbers<[1], [0], [0], [1], [0, 0, 1, 1], [], []>} : vector<64x16xbf16>, vector<16x128xbf16>, vector<64x128xf32> -> vector<64x128xf32>
    %156 = arith.truncf %155 : vector<64x128xf32> to vector<64x128xbf16>
    %157 = vector.extract_strided_slice %156 {offsets = [0, 0], sizes = [16, 128], strides = [1, 1]} : vector<64x128xbf16> to vector<16x128xbf16>
    %158 = vector.extract_strided_slice %156 {offsets = [16, 0], sizes = [16, 128], strides = [1, 1]} : vector<64x128xbf16> to vector<16x128xbf16>
    %159 = vector.extract_strided_slice %156 {offsets = [32, 0], sizes = [16, 128], strides = [1, 1]} : vector<64x128xbf16> to vector<16x128xbf16>
    %160 = vector.extract_strided_slice %156 {offsets = [48, 0], sizes = [16, 128], strides = [1, 1]} : vector<64x128xbf16> to vector<16x128xbf16>
    %161 = tpu.concatenate %157, %158, %159, %160 in 1 : vector<16x128xbf16>, vector<16x128xbf16>, vector<16x128xbf16>, vector<16x128xbf16> -> vector<16x512xbf16>
    %c0_78 = arith.constant 0 : index
    %c0_79 = arith.constant 0 : index
    %162 = vector.load %arg25[%c0_78, %c0_79] : memref<512x256xbf16, #tpu.memory_space<vmem>>, vector<512x256xbf16>
    %cst_80 = arith.constant dense<0.000000e+00> : vector<16x256xf32>
    %163 = tpu.matmul %161, %162, %cst_80 {dimension_numbers = #tpu.dot_dimension_numbers<[1], [0], [0], [1], [0, 0, 1, 1], [], []>} : vector<16x512xbf16>, vector<512x256xbf16>, vector<16x256xf32> -> vector<16x256xf32>
    %c0_81 = arith.constant 0 : index
    %c0_82 = arith.constant 0 : index
    %164 = vector.load %arg26[%c0_81, %c0_82] : memref<1x256xf32, #tpu.memory_space<vmem>>, vector<1x256xf32>
    %165 = vector.broadcast %164 : vector<1x256xf32> to vector<16x256xf32>
    %166 = arith.mulf %163, %165 : vector<16x256xf32>
    %c0_83 = arith.constant 0 : index
    %c0_84 = arith.constant 0 : index
    %167 = vector.load %arg27[%c0_83, %c0_84] : memref<1x256xf32, #tpu.memory_space<vmem>>, vector<1x256xf32>
    %168 = vector.broadcast %167 : vector<1x256xf32> to vector<16x256xf32>
    %169 = arith.addf %166, %168 : vector<16x256xf32>
    %cst_85 = arith.constant 0.000000e+00 : f32
    %170 = vector.broadcast %cst_85 : f32 to vector<16x256xf32>
    %171 = arith.maximumf %169, %170 : vector<16x256xf32>
    %172 = arith.truncf %171 : vector<16x256xf32> to vector<16x256xbf16>
    %c0_86 = arith.constant 0 : index
    %c0_87 = arith.constant 0 : index
    %c0_88 = arith.constant 0 : index
    %173 = vector.load %arg28[%c0_86, %c0_87, %c0_88] : memref<4x64x16xbf16, #tpu.memory_space<vmem>>, vector<1x64x16xbf16>
    %174 = vector.shape_cast %173 : vector<1x64x16xbf16> to vector<64x16xbf16>
    %175 = vector.extract_strided_slice %172 {offsets = [0, 0], sizes = [16, 64], strides = [1, 1]} : vector<16x256xbf16> to vector<16x64xbf16>
    %cst_89 = arith.constant dense<0.000000e+00> : vector<64x64xf32>
    %176 = tpu.matmul %174, %175, %cst_89 {dimension_numbers = #tpu.dot_dimension_numbers<[1], [0], [0], [1], [0, 0, 1, 1], [], []>} : vector<64x16xbf16>, vector<16x64xbf16>, vector<64x64xf32> -> vector<64x64xf32>
    %c1_90 = arith.constant 1 : index
    %c0_91 = arith.constant 0 : index
    %c0_92 = arith.constant 0 : index
    %177 = vector.load %arg28[%c1_90, %c0_91, %c0_92] : memref<4x64x16xbf16, #tpu.memory_space<vmem>>, vector<1x64x16xbf16>
    %178 = vector.shape_cast %177 : vector<1x64x16xbf16> to vector<64x16xbf16>
    %179 = vector.extract_strided_slice %172 {offsets = [0, 64], sizes = [16, 64], strides = [1, 1]} : vector<16x256xbf16> to vector<16x64xbf16>
    %cst_93 = arith.constant dense<0.000000e+00> : vector<64x64xf32>
    %180 = tpu.matmul %178, %179, %cst_93 {dimension_numbers = #tpu.dot_dimension_numbers<[1], [0], [0], [1], [0, 0, 1, 1], [], []>} : vector<64x16xbf16>, vector<16x64xbf16>, vector<64x64xf32> -> vector<64x64xf32>
    %181 = arith.addf %176, %180 : vector<64x64xf32>
    %c2_94 = arith.constant 2 : index
    %c0_95 = arith.constant 0 : index
    %c0_96 = arith.constant 0 : index
    %182 = vector.load %arg28[%c2_94, %c0_95, %c0_96] : memref<4x64x16xbf16, #tpu.memory_space<vmem>>, vector<1x64x16xbf16>
    %183 = vector.shape_cast %182 : vector<1x64x16xbf16> to vector<64x16xbf16>
    %184 = vector.extract_strided_slice %172 {offsets = [0, 128], sizes = [16, 64], strides = [1, 1]} : vector<16x256xbf16> to vector<16x64xbf16>
    %cst_97 = arith.constant dense<0.000000e+00> : vector<64x64xf32>
    %185 = tpu.matmul %183, %184, %cst_97 {dimension_numbers = #tpu.dot_dimension_numbers<[1], [0], [0], [1], [0, 0, 1, 1], [], []>} : vector<64x16xbf16>, vector<16x64xbf16>, vector<64x64xf32> -> vector<64x64xf32>
    %186 = arith.addf %181, %185 : vector<64x64xf32>
    %c3_98 = arith.constant 3 : index
    %c0_99 = arith.constant 0 : index
    %c0_100 = arith.constant 0 : index
    %187 = vector.load %arg28[%c3_98, %c0_99, %c0_100] : memref<4x64x16xbf16, #tpu.memory_space<vmem>>, vector<1x64x16xbf16>
    %188 = vector.shape_cast %187 : vector<1x64x16xbf16> to vector<64x16xbf16>
    %189 = vector.extract_strided_slice %172 {offsets = [0, 192], sizes = [16, 64], strides = [1, 1]} : vector<16x256xbf16> to vector<16x64xbf16>
    %cst_101 = arith.constant dense<0.000000e+00> : vector<64x64xf32>
    %190 = tpu.matmul %188, %189, %cst_101 {dimension_numbers = #tpu.dot_dimension_numbers<[1], [0], [0], [1], [0, 0, 1, 1], [], []>} : vector<64x16xbf16>, vector<16x64xbf16>, vector<64x64xf32> -> vector<64x64xf32>
    %191 = arith.addf %186, %190 : vector<64x64xf32>
    %192 = arith.truncf %191 : vector<64x64xf32> to vector<64x64xbf16>
    %c0_102 = arith.constant 0 : index
    %c0_103 = arith.constant 0 : index
    %193 = vector.load %arg29[%c0_102, %c0_103] : memref<256x64xbf16, #tpu.memory_space<vmem>>, vector<256x64xbf16>
    %cst_104 = arith.constant dense<0.000000e+00> : vector<256x64xf32>
    %194 = tpu.matmul %193, %192, %cst_104 {dimension_numbers = #tpu.dot_dimension_numbers<[1], [0], [0], [1], [0, 0, 1, 1], [], []>} : vector<256x64xbf16>, vector<64x64xbf16>, vector<256x64xf32> -> vector<256x64xf32>
    %195 = arith.truncf %194 : vector<256x64xf32> to vector<256x64xbf16>
    %196 = vector.extract_strided_slice %195 {offsets = [0, 0], sizes = [64, 64], strides = [1, 1]} : vector<256x64xbf16> to vector<64x64xbf16>
    %197 = vector.extract_strided_slice %195 {offsets = [64, 0], sizes = [64, 64], strides = [1, 1]} : vector<256x64xbf16> to vector<64x64xbf16>
    %198 = vector.extract_strided_slice %195 {offsets = [128, 0], sizes = [64, 64], strides = [1, 1]} : vector<256x64xbf16> to vector<64x64xbf16>
    %199 = vector.extract_strided_slice %195 {offsets = [192, 0], sizes = [64, 64], strides = [1, 1]} : vector<256x64xbf16> to vector<64x64xbf16>
    %200 = tpu.concatenate %196, %197, %198, %199 in 1 : vector<64x64xbf16>, vector<64x64xbf16>, vector<64x64xbf16>, vector<64x64xbf16> -> vector<64x256xbf16>
    %c0_105 = arith.constant 0 : index
    %c0_106 = arith.constant 0 : index
    %201 = vector.load %arg30[%c0_105, %c0_106] : memref<256x128xbf16, #tpu.memory_space<vmem>>, vector<256x128xbf16>
    %cst_107 = arith.constant dense<0.000000e+00> : vector<64x128xf32>
    %202 = tpu.matmul %200, %201, %cst_107 {dimension_numbers = #tpu.dot_dimension_numbers<[1], [0], [0], [1], [0, 0, 1, 1], [], []>} : vector<64x256xbf16>, vector<256x128xbf16>, vector<64x128xf32> -> vector<64x128xf32>
    %c0_108 = arith.constant 0 : index
    %c0_109 = arith.constant 0 : index
    %203 = vector.load %arg31[%c0_108, %c0_109] : memref<1x128xf32, #tpu.memory_space<vmem>>, vector<1x128xf32>
    %204 = vector.broadcast %203 : vector<1x128xf32> to vector<64x128xf32>
    %205 = arith.mulf %202, %204 : vector<64x128xf32>
    %c0_110 = arith.constant 0 : index
    %c0_111 = arith.constant 0 : index
    %206 = vector.load %arg32[%c0_110, %c0_111] : memref<1x128xf32, #tpu.memory_space<vmem>>, vector<1x128xf32>
    %207 = vector.broadcast %206 : vector<1x128xf32> to vector<64x128xf32>
    %208 = arith.addf %205, %207 : vector<64x128xf32>
    %cst_112 = arith.constant 0.000000e+00 : f32
    %209 = vector.broadcast %cst_112 : f32 to vector<64x128xf32>
    %210 = arith.maximumf %208, %209 : vector<64x128xf32>
    %211 = arith.truncf %210 : vector<64x128xf32> to vector<64x128xbf16>
    %c0_113 = arith.constant 0 : index
    %c0_114 = arith.constant 0 : index
    %c0_115 = arith.constant 0 : index
    %212 = vector.load %arg33[%c0_113, %c0_114, %c0_115] : memref<4x256x64xbf16, #tpu.memory_space<vmem>>, vector<1x256x64xbf16>
    %213 = vector.shape_cast %212 : vector<1x256x64xbf16> to vector<256x64xbf16>
    %214 = vector.extract_strided_slice %211 {offsets = [0, 0], sizes = [64, 32], strides = [1, 1]} : vector<64x128xbf16> to vector<64x32xbf16>
    %cst_116 = arith.constant dense<0.000000e+00> : vector<256x32xf32>
    %215 = tpu.matmul %213, %214, %cst_116 {dimension_numbers = #tpu.dot_dimension_numbers<[1], [0], [0], [1], [0, 0, 1, 1], [], []>} : vector<256x64xbf16>, vector<64x32xbf16>, vector<256x32xf32> -> vector<256x32xf32>
    %c1_117 = arith.constant 1 : index
    %c0_118 = arith.constant 0 : index
    %c0_119 = arith.constant 0 : index
    %216 = vector.load %arg33[%c1_117, %c0_118, %c0_119] : memref<4x256x64xbf16, #tpu.memory_space<vmem>>, vector<1x256x64xbf16>
    %217 = vector.shape_cast %216 : vector<1x256x64xbf16> to vector<256x64xbf16>
    %218 = vector.extract_strided_slice %211 {offsets = [0, 32], sizes = [64, 32], strides = [1, 1]} : vector<64x128xbf16> to vector<64x32xbf16>
    %cst_120 = arith.constant dense<0.000000e+00> : vector<256x32xf32>
    %219 = tpu.matmul %217, %218, %cst_120 {dimension_numbers = #tpu.dot_dimension_numbers<[1], [0], [0], [1], [0, 0, 1, 1], [], []>} : vector<256x64xbf16>, vector<64x32xbf16>, vector<256x32xf32> -> vector<256x32xf32>
    %220 = arith.addf %215, %219 : vector<256x32xf32>
    %c2_121 = arith.constant 2 : index
    %c0_122 = arith.constant 0 : index
    %c0_123 = arith.constant 0 : index
    %221 = vector.load %arg33[%c2_121, %c0_122, %c0_123] : memref<4x256x64xbf16, #tpu.memory_space<vmem>>, vector<1x256x64xbf16>
    %222 = vector.shape_cast %221 : vector<1x256x64xbf16> to vector<256x64xbf16>
    %223 = vector.extract_strided_slice %211 {offsets = [0, 64], sizes = [64, 32], strides = [1, 1]} : vector<64x128xbf16> to vector<64x32xbf16>
    %cst_124 = arith.constant dense<0.000000e+00> : vector<256x32xf32>
    %224 = tpu.matmul %222, %223, %cst_124 {dimension_numbers = #tpu.dot_dimension_numbers<[1], [0], [0], [1], [0, 0, 1, 1], [], []>} : vector<256x64xbf16>, vector<64x32xbf16>, vector<256x32xf32> -> vector<256x32xf32>
    %225 = arith.addf %220, %224 : vector<256x32xf32>
    %c3_125 = arith.constant 3 : index
    %c0_126 = arith.constant 0 : index
    %c0_127 = arith.constant 0 : index
    %226 = vector.load %arg33[%c3_125, %c0_126, %c0_127] : memref<4x256x64xbf16, #tpu.memory_space<vmem>>, vector<1x256x64xbf16>
    %227 = vector.shape_cast %226 : vector<1x256x64xbf16> to vector<256x64xbf16>
    %228 = vector.extract_strided_slice %211 {offsets = [0, 96], sizes = [64, 32], strides = [1, 1]} : vector<64x128xbf16> to vector<64x32xbf16>
    %cst_128 = arith.constant dense<0.000000e+00> : vector<256x32xf32>
    %229 = tpu.matmul %227, %228, %cst_128 {dimension_numbers = #tpu.dot_dimension_numbers<[1], [0], [0], [1], [0, 0, 1, 1], [], []>} : vector<256x64xbf16>, vector<64x32xbf16>, vector<256x32xf32> -> vector<256x32xf32>
    %230 = arith.addf %225, %229 : vector<256x32xf32>
    %231 = arith.truncf %230 : vector<256x32xf32> to vector<256x32xbf16>
    %c0_129 = arith.constant 0 : index
    %c0_130 = arith.constant 0 : index
    %232 = vector.load %arg34[%c0_129, %c0_130] : memref<32x128xbf16, #tpu.memory_space<vmem>>, vector<32x128xbf16>
    %cst_131 = arith.constant dense<0.000000e+00> : vector<256x128xf32>
    %233 = tpu.matmul %231, %232, %cst_131 {dimension_numbers = #tpu.dot_dimension_numbers<[1], [0], [0], [1], [0, 0, 1, 1], [], []>} : vector<256x32xbf16>, vector<32x128xbf16>, vector<256x128xf32> -> vector<256x128xf32>
    %c0_132 = arith.constant 0 : index
    %c0_133 = arith.constant 0 : index
    %234 = vector.load %arg35[%c0_132, %c0_133] : memref<1x128xf32, #tpu.memory_space<vmem>>, vector<1x128xf32>
    %235 = vector.broadcast %234 : vector<1x128xf32> to vector<256x128xf32>
    %236 = arith.addf %233, %235 : vector<256x128xf32>
    %c0_134 = arith.constant 0 : index
    %c0_135 = arith.constant 0 : index
    %c0_136 = arith.constant 0 : index
    %237 = vector.load %arg36[%c0_134, %c0_135, %c0_136] : memref<1x256x128xf32, #tpu.memory_space<vmem>>, vector<1x256x128xf32>
    %238 = vector.shape_cast %237 : vector<1x256x128xf32> to vector<256x128xf32>
    %239 = vector.shape_cast %236 : vector<256x128xf32> to vector<1x256x128xf32>
    tpu.vector_store %arg36[%c0_134, %c0_135, %c0_136], %239 {strides = array<i32>} : memref<1x256x128xf32, #tpu.memory_space<vmem>>, vector<1x256x128xf32>,
    return
  }
  func.func @transform_0(%arg0: i32) -> (i32, i32, i32) {
    %c0_i32 = arith.constant 0 : i32
    %c0_i32_0 = arith.constant 0 : i32
    %c0_i32_1 = arith.constant 0 : i32
    return %arg0, %c0_i32, %c0_i32_0 : i32, i32, i32
  }
  func.func @transform_1(%arg0: i32) -> (i32, i32) {
    %c0_i32 = arith.constant 0 : i32
    %c0_i32_0 = arith.constant 0 : i32
    %c0_i32_1 = arith.constant 0 : i32
    return %c0_i32, %c0_i32_0 : i32, i32
  }
  func.func @transform_2(%arg0: i32) -> (i32, i32) {
    %c0_i32 = arith.constant 0 : i32
    %c0_i32_0 = arith.constant 0 : i32
    %c0_i32_1 = arith.constant 0 : i32
    return %c0_i32, %c0_i32_0 : i32, i32
  }
  func.func @transform_3(%arg0: i32) -> (i32, i32) {
    %c0_i32 = arith.constant 0 : i32
    %c0_i32_0 = arith.constant 0 : i32
    %c0_i32_1 = arith.constant 0 : i32
    return %c0_i32, %c0_i32_0 : i32, i32
  }
  func.func @transform_4(%arg0: i32) -> (i32, i32) {
    %c0_i32 = arith.constant 0 : i32
    %c0_i32_0 = arith.constant 0 : i32
    %c0_i32_1 = arith.constant 0 : i32
    return %c0_i32, %c0_i32_0 : i32, i32
  }
  func.func @transform_5(%arg0: i32) -> (i32, i32) {
    %c0_i32 = arith.constant 0 : i32
    %c0_i32_0 = arith.constant 0 : i32
    %c0_i32_1 = arith.constant 0 : i32
    return %c0_i32, %c0_i32_0 : i32, i32
  }
  func.func @transform_6(%arg0: i32) -> (i32, i32) {
    %c0_i32 = arith.constant 0 : i32
    %c0_i32_0 = arith.constant 0 : i32
    %c0_i32_1 = arith.constant 0 : i32
    return %c0_i32, %c0_i32_0 : i32, i32
  }
  func.func @transform_7(%arg0: i32) -> (i32, i32) {
    %c0_i32 = arith.constant 0 : i32
    %c0_i32_0 = arith.constant 0 : i32
    %c0_i32_1 = arith.constant 0 : i32
    return %c0_i32, %c0_i32_0 : i32, i32
  }
  func.func @transform_8(%arg0: i32) -> (i32, i32) {
    %c0_i32 = arith.constant 0 : i32
    %c0_i32_0 = arith.constant 0 : i32
    %c0_i32_1 = arith.constant 0 : i32
    return %c0_i32, %c0_i32_0 : i32, i32
  }
  func.func @transform_9(%arg0: i32) -> (i32, i32) {
    %c0_i32 = arith.constant 0 : i32
    %c0_i32_0 = arith.constant 0 : i32
    %c0_i32_1 = arith.constant 0 : i32
    return %c0_i32, %c0_i32_0 : i32, i32
  }
  func.func @transform_10(%arg0: i32) -> (i32, i32) {
    %c0_i32 = arith.constant 0 : i32
    %c0_i32_0 = arith.constant 0 : i32
    %c0_i32_1 = arith.constant 0 : i32
    return %c0_i32, %c0_i32_0 : i32, i32
  }
  func.func @transform_11(%arg0: i32) -> (i32, i32) {
    %c0_i32 = arith.constant 0 : i32
    %c0_i32_0 = arith.constant 0 : i32
    %c0_i32_1 = arith.constant 0 : i32
    return %c0_i32, %c0_i32_0 : i32, i32
  }
  func.func @transform_12(%arg0: i32) -> (i32, i32) {
    %c0_i32 = arith.constant 0 : i32
    %c0_i32_0 = arith.constant 0 : i32
    %c0_i32_1 = arith.constant 0 : i32
    return %c0_i32, %c0_i32_0 : i32, i32
  }
  func.func @transform_13(%arg0: i32) -> (i32, i32) {
    %c0_i32 = arith.constant 0 : i32
    %c0_i32_0 = arith.constant 0 : i32
    %c0_i32_1 = arith.constant 0 : i32
    return %c0_i32, %c0_i32_0 : i32, i32
  }
  func.func @transform_14(%arg0: i32) -> (i32, i32) {
    %c0_i32 = arith.constant 0 : i32
    %c0_i32_0 = arith.constant 0 : i32
    %c0_i32_1 = arith.constant 0 : i32
    return %c0_i32, %c0_i32_0 : i32, i32
  }
  func.func @transform_15(%arg0: i32) -> (i32, i32) {
    %c0_i32 = arith.constant 0 : i32
    %c0_i32_0 = arith.constant 0 : i32
    %c0_i32_1 = arith.constant 0 : i32
    return %c0_i32, %c0_i32_0 : i32, i32
  }
  func.func @transform_16(%arg0: i32) -> (i32, i32) {
    %c0_i32 = arith.constant 0 : i32
    %c0_i32_0 = arith.constant 0 : i32
    %c0_i32_1 = arith.constant 0 : i32
    return %c0_i32, %c0_i32_0 : i32, i32
  }
  func.func @transform_17(%arg0: i32) -> (i32, i32) {
    %c0_i32 = arith.constant 0 : i32
    %c0_i32_0 = arith.constant 0 : i32
    %c0_i32_1 = arith.constant 0 : i32
    return %c0_i32, %c0_i32_0 : i32, i32
  }
  func.func @transform_18(%arg0: i32) -> (i32, i32) {
    %c0_i32 = arith.constant 0 : i32
    %c0_i32_0 = arith.constant 0 : i32
    %c0_i32_1 = arith.constant 0 : i32
    return %c0_i32, %c0_i32_0 : i32, i32
  }
  func.func @transform_19(%arg0: i32) -> (i32, i32) {
    %c0_i32 = arith.constant 0 : i32
    %c0_i32_0 = arith.constant 0 : i32
    %c0_i32_1 = arith.constant 0 : i32
    return %c0_i32, %c0_i32_0 : i32, i32
  }
  func.func @transform_20(%arg0: i32) -> (i32, i32) {
    %c0_i32 = arith.constant 0 : i32
    %c0_i32_0 = arith.constant 0 : i32
    %c0_i32_1 = arith.constant 0 : i32
    return %c0_i32, %c0_i32_0 : i32, i32
  }
  func.func @transform_21(%arg0: i32) -> (i32, i32) {
    %c0_i32 = arith.constant 0 : i32
    %c0_i32_0 = arith.constant 0 : i32
    %c0_i32_1 = arith.constant 0 : i32
    return %c0_i32, %c0_i32_0 : i32, i32
  }
  func.func @transform_22(%arg0: i32) -> (i32, i32, i32) {
    %c0_i32 = arith.constant 0 : i32
    %c0_i32_0 = arith.constant 0 : i32
    %c0_i32_1 = arith.constant 0 : i32
    %c0_i32_2 = arith.constant 0 : i32
    return %c0_i32, %c0_i32_0, %c0_i32_1 : i32, i32, i32
  }
  func.func @transform_23(%arg0: i32) -> (i32, i32) {
    %c0_i32 = arith.constant 0 : i32
    %c0_i32_0 = arith.constant 0 : i32
    %c0_i32_1 = arith.constant 0 : i32
    return %c0_i32, %c0_i32_0 : i32, i32
  }
  func.func @transform_24(%arg0: i32) -> (i32, i32) {
    %c0_i32 = arith.constant 0 : i32
    %c0_i32_0 = arith.constant 0 : i32
    %c0_i32_1 = arith.constant 0 : i32
    return %c0_i32, %c0_i32_0 : i32, i32
  }
  func.func @transform_25(%arg0: i32) -> (i32, i32) {
    %c0_i32 = arith.constant 0 : i32
    %c0_i32_0 = arith.constant 0 : i32
    %c0_i32_1 = arith.constant 0 : i32
    return %c0_i32, %c0_i32_0 : i32, i32
  }
  func.func @transform_26(%arg0: i32) -> (i32, i32) {
    %c0_i32 = arith.constant 0 : i32
    %c0_i32_0 = arith.constant 0 : i32
    %c0_i32_1 = arith.constant 0 : i32
    return %c0_i32, %c0_i32_0 : i32, i32
  }
  func.func @transform_27(%arg0: i32) -> (i32, i32, i32) {
    %c0_i32 = arith.constant 0 : i32
    %c0_i32_0 = arith.constant 0 : i32
    %c0_i32_1 = arith.constant 0 : i32
    %c0_i32_2 = arith.constant 0 : i32
    return %c0_i32, %c0_i32_0, %c0_i32_1 : i32, i32, i32
  }
  func.func @transform_28(%arg0: i32) -> (i32, i32) {
    %c0_i32 = arith.constant 0 : i32
    %c0_i32_0 = arith.constant 0 : i32
    %c0_i32_1 = arith.constant 0 : i32
    return %c0_i32, %c0_i32_0 : i32, i32
  }
  func.func @transform_29(%arg0: i32) -> (i32, i32) {
    %c0_i32 = arith.constant 0 : i32
    %c0_i32_0 = arith.constant 0 : i32
    %c0_i32_1 = arith.constant 0 : i32
    return %c0_i32, %c0_i32_0 : i32, i32
  }
  func.func @transform_30(%arg0: i32) -> (i32, i32) {
    %c0_i32 = arith.constant 0 : i32
    %c0_i32_0 = arith.constant 0 : i32
    %c0_i32_1 = arith.constant 0 : i32
    return %c0_i32, %c0_i32_0 : i32, i32
  }
  func.func @transform_31(%arg0: i32) -> (i32, i32) {
    %c0_i32 = arith.constant 0 : i32
    %c0_i32_0 = arith.constant 0 : i32
    %c0_i32_1 = arith.constant 0 : i32
    return %c0_i32, %c0_i32_0 : i32, i32
  }
  func.func @transform_32(%arg0: i32) -> (i32, i32, i32) {
    %c0_i32 = arith.constant 0 : i32
    %c0_i32_0 = arith.constant 0 : i32
    %c0_i32_1 = arith.constant 0 : i32
    %c0_i32_2 = arith.constant 0 : i32
    return %c0_i32, %c0_i32_0, %c0_i32_1 : i32, i32, i32
  }
  func.func @transform_33(%arg0: i32) -> (i32, i32) {
    %c0_i32 = arith.constant 0 : i32
    %c0_i32_0 = arith.constant 0 : i32
    %c0_i32_1 = arith.constant 0 : i32
    return %c0_i32, %c0_i32_0 : i32, i32
  }
  func.func @transform_34(%arg0: i32) -> (i32, i32) {
    %c0_i32 = arith.constant 0 : i32
    %c0_i32_0 = arith.constant 0 : i32
    %c0_i32_1 = arith.constant 0 : i32
    return %c0_i32, %c0_i32_0 : i32, i32
  }
  func.func @transform_35(%arg0: i32) -> (i32, i32, i32) {
    %c0_i32 = arith.constant 0 : i32
    %c0_i32_0 = arith.constant 0 : i32
    %c0_i32_1 = arith.constant 0 : i32
    return %arg0, %c0_i32, %c0_i32_0 : i32, i32, i32
  }
}

</mosaic_0001>

<llo_original>
// kernel: _lambda_.1
$region0: #{_lambda_.1}
  #allocation0 [shape = 'u32[]', space=smem, size = 0x4, offset = 0x4, fixed_abs, tag = 'smem constant byte address 0x4 - core index']
  #allocation1 [shape = 'u32[144,128]{1,0:T(1,128)}', space=vmem, size = 0x12000, scoped, tag = 'internal scratch']
  %s0 = inlined_call_operand.smem [shape: u32[36], index: -1, kind: input, shape index: {}]
  %s1 = sld [smem:[%s0]]
  %s2 = scalar_lea.smem %s0, 1
  %s3 = sld [smem:[%s2]]
  %s4 = scalar_lea.smem %s0, 2
  %s5 = sld [smem:[%s4]]
  %s6 = scalar_lea.smem %s0, 3
  %s7 = sld [smem:[%s6]]
  %s8 = scalar_lea.smem %s0, 4
  %s9 = sld [smem:[%s8]]
  %s10 = scalar_lea.smem %s0, 5
  %s11 = sld [smem:[%s10]]
  %s12 = scalar_lea.smem %s0, 6
  %s13 = sld [smem:[%s12]]
  %s14 = scalar_lea.smem %s0, 7
  %s15 = sld [smem:[%s14]]
  %s16 = scalar_lea.smem %s0, 8
  %s17 = sld [smem:[%s16]]
  %s18 = scalar_lea.smem %s0, 9
  %s19 = sld [smem:[%s18]]
  %s20 = scalar_lea.smem %s0, 10
  %s21 = sld [smem:[%s20]]
  %s22 = scalar_lea.smem %s0, 11
  %s23 = sld [smem:[%s22]]
  %s24 = scalar_lea.smem %s0, 12
  %s25 = sld [smem:[%s24]]
  %s26 = scalar_lea.smem %s0, 13
  %s27 = sld [smem:[%s26]]
  %s28 = scalar_lea.smem %s0, 14
  %s29 = sld [smem:[%s28]]
  %s30 = scalar_lea.smem %s0, 15
  %s31 = sld [smem:[%s30]]
  %s32 = scalar_lea.smem %s0, 16
  %s33 = sld [smem:[%s32]]
  %s34 = scalar_lea.smem %s0, 17
  %s35 = sld [smem:[%s34]]
  %s36 = scalar_lea.smem %s0, 18
  %s37 = sld [smem:[%s36]]
  %s38 = scalar_lea.smem %s0, 19
  %s39 = sld [smem:[%s38]]
  %s40 = scalar_lea.smem %s0, 20
  %s41 = sld [smem:[%s40]]
  %s42 = scalar_lea.smem %s0, 21
  %s43 = sld [smem:[%s42]]
  %s44 = scalar_lea.smem %s0, 22
  %s45 = sld [smem:[%s44]]
  %s46 = scalar_lea.smem %s0, 23
  %s47 = sld [smem:[%s46]]
  %s48 = scalar_lea.smem %s0, 24
  %s49 = sld [smem:[%s48]]
  %s50 = scalar_lea.smem %s0, 25
  %s51 = sld [smem:[%s50]]
  %s52 = scalar_lea.smem %s0, 26
  %s53 = sld [smem:[%s52]]
  %s54 = scalar_lea.smem %s0, 27
  %s55 = sld [smem:[%s54]]
  %s56 = scalar_lea.smem %s0, 28
  %s57 = sld [smem:[%s56]]
  %s58 = scalar_lea.smem %s0, 29
  %s59 = sld [smem:[%s58]]
  %s60 = scalar_lea.smem %s0, 30
  %s61 = sld [smem:[%s60]]
  %s62 = scalar_lea.smem %s0, 31
  %s63 = sld [smem:[%s62]]
  %s64 = scalar_lea.smem %s0, 32
  %s65 = sld [smem:[%s64]]
  %s66 = scalar_lea.smem %s0, 33
  %s67 = sld [smem:[%s66]]
  %s68 = scalar_lea.smem %s0, 34
  %s69 = sld [smem:[%s68]]
  %s70 = scalar_lea.smem %s0, 35
  %s71 = sld [smem:[%s70]]
  %s72 = sld [smem:[#allocation0]]
  $region173: #{_lambda_.1} parent=0
    _
  %s74 = ssub.s32 1, %s72
  %s75 = scalar_select 0, %s74, %s72
  loop: start=0, step=1, limit=4
  $region2: #{_lambda_.1} parent=0 // loop_pre_header
    _
  $region3: #{_lambda_.1} parent=0 // loop_header
    %s77 = sphi 0, %s81
    %p78 = scmp.ge.s32.totalorder %s77, 4
    %s87 = sphi 0, %s89
    %s90 = sphi 0, %s87
    %s91 = sphi 0, %s90
    %s107 = sphi 0, %s91
    %s111 = sphi 0, %s111
    %s113 = sphi 0, %s111
    %s114 = sphi 0, %s113
    %s128 = sphi 0, %s114
    %s132 = sphi 0, %s132
    %s134 = sphi 0, %s132
    %s135 = sphi 0, %s134
    %s149 = sphi 0, %s135
    %s153 = sphi 0, %s153
    %s155 = sphi 0, %s153
    %s156 = sphi 0, %s155
    %s170 = sphi 0, %s156
    %s174 = sphi 0, %s174
    %s176 = sphi 0, %s174
    %s177 = sphi 0, %s176
    %s191 = sphi 0, %s177
    %s195 = sphi 0, %s195
    %s197 = sphi 0, %s195
    %s198 = sphi 0, %s197
    %s212 = sphi 0, %s198
    %s216 = sphi 0, %s216
    %s218 = sphi 0, %s216
    %s219 = sphi 0, %s218
    %s233 = sphi 0, %s219
    %s237 = sphi 0, %s237
    %s239 = sphi 0, %s237
    %s240 = sphi 0, %s239
    %s254 = sphi 0, %s240
    %s258 = sphi 0, %s258
    %s260 = sphi 0, %s258
    %s261 = sphi 0, %s260
    %s275 = sphi 0, %s261
    %s279 = sphi 0, %s279
    %s281 = sphi 0, %s279
    %s282 = sphi 0, %s281
    %s296 = sphi 0, %s282
    %s300 = sphi 0, %s300
    %s302 = sphi 0, %s300
    %s303 = sphi 0, %s302
    %s317 = sphi 0, %s303
    %s321 = sphi 0, %s321
    %s323 = sphi 0, %s321
    %s324 = sphi 0, %s323
    %s338 = sphi 0, %s324
    %s342 = sphi 0, %s342
    %s344 = sphi 0, %s342
    %s345 = sphi 0, %s344
    %s359 = sphi 0, %s345
    %s363 = sphi 0, %s363
    %s365 = sphi 0, %s363
    %s366 = sphi 0, %s365
    %s380 = sphi 0, %s366
    %s384 = sphi 0, %s384
    %s386 = sphi 0, %s384
    %s387 = sphi 0, %s386
    %s401 = sphi 0, %s387
    %s405 = sphi 0, %s405
    %s407 = sphi 0, %s405
    %s408 = sphi 0, %s407
    %s422 = sphi 0, %s408
    %s426 = sphi 0, %s426
    %s428 = sphi 0, %s426
    %s429 = sphi 0, %s428
    %s443 = sphi 0, %s429
    %s447 = sphi 0, %s447
    %s449 = sphi 0, %s447
    %s450 = sphi 0, %s449
    %s464 = sphi 0, %s450
    %s468 = sphi 0, %s468
    %s470 = sphi 0, %s468
    %s471 = sphi 0, %s470
    %s485 = sphi 0, %s471
    %s489 = sphi 0, %s489
    %s491 = sphi 0, %s489
    %s492 = sphi 0, %s491
    %s506 = sphi 0, %s492
    %s510 = sphi 0, %s510
    %s512 = sphi 0, %s510
    %s513 = sphi 0, %s512
    %s527 = sphi 0, %s513
    %s531 = sphi 0, %s531
    %s533 = sphi 0, %s531
    %s534 = sphi 0, %s533
    %s548 = sphi 0, %s534
    %s552 = sphi 0, %s552
    %s554 = sphi 0, %s552
    %s555 = sphi 0, %s554
    %s569 = sphi 0, %s555
    %s573 = sphi 0, %s573
    %s575 = sphi 0, %s573
    %s576 = sphi 0, %s575
    %s590 = sphi 0, %s576
    %s594 = sphi 0, %s594
    %s596 = sphi 0, %s594
    %s597 = sphi 0, %s596
    %s611 = sphi 0, %s597
    %s615 = sphi 0, %s615
    %s617 = sphi 0, %s615
    %s618 = sphi 0, %s617
    %s632 = sphi 0, %s618
    %s636 = sphi 0, %s636
    %s638 = sphi 0, %s636
    %s639 = sphi 0, %s638
    %s653 = sphi 0, %s639
    %s657 = sphi 0, %s657
    %s659 = sphi 0, %s657
    %s660 = sphi 0, %s659
    %s674 = sphi 0, %s660
    %s678 = sphi 0, %s678
    %s680 = sphi 0, %s678
    %s681 = sphi 0, %s680
    %s695 = sphi 0, %s681
    %s699 = sphi 0, %s699
    %s701 = sphi 0, %s699
    %s702 = sphi 0, %s701
    %s716 = sphi 0, %s702
    %s720 = sphi 0, %s720
    %s722 = sphi 0, %s720
    %s723 = sphi 0, %s722
    %s737 = sphi 0, %s723
    %s741 = sphi 0, %s741
    %s743 = sphi 0, %s741
    %s744 = sphi 0, %s743
    %s758 = sphi 0, %s744
    %s762 = sphi 0, %s762
    %s764 = sphi 0, %s762
    %s765 = sphi 0, %s764
    %s779 = sphi 0, %s765
    %s783 = sphi 0, %s783
    %s785 = sphi 0, %s783
    %s786 = sphi 0, %s785
    %s800 = sphi 0, %s786
    %s804 = sphi 0, %s804
    %s806 = sphi 0, %s804
    %s807 = sphi 0, %s806
    %s821 = sphi 0, %s807
    %s827 = sphi 0, %s829
    %s830 = sphi 0, %s827
    %s831 = sphi 0, %s830
    %s847 = sphi 0, %s831
  $region4: #{_lambda_.1} parent=0 // loop_header_branch
    %80 = sbr.rel (%p78) target = $region8
  $region5: #{_lambda_.1} parent=0 // loop_body
    %s82 = ssub.s32 %s77, 1
    %s83 = ssub.s32 %s77, 2
    %s84 = sadd.s32 %s77, 1
    %s85 = ssub.s32 %s77, %s84
    %p86 = scmp.eq.s32.totalorder %s85, 0
    %s88 = sadd.s32 %s87, 1
    %s89 = scalar_select %p86, %s87, %s88
    %p92 = pneg %p86
    %p93 = scmp.eq.s32.totalorder %s77, 1
    %p94 = por %p92, %p93
    %p95 = scmp.ne.s32.totalorder %s87, %s90
    %p96 = scmp.eq.s32.totalorder %s77, 0
    %p97 = por %p95, %p96
    %p98 = scmp.ne.s32.totalorder %s87, %s90
    %p99 = scmp.eq.s32.totalorder %s82, 1
    %p100 = por %p98, %p99
    %p101 = scmp.ne.s32.totalorder %s90, %s91
    %p102 = scmp.eq.s32.totalorder %s82, 0
    %p103 = por %p101, %p102
    %p104 = scmp.ne.s32.totalorder %s90, %s91
    %p105 = scmp.eq.s32.totalorder %s83, 1
    %p106 = por %p104, %p105
    %p108 = scmp.ne.s32.totalorder %s91, %s107
    %p109 = scmp.eq.s32.totalorder %s83, 0
    %p110 = por %p108, %p109
    %s112 = sadd.s32 %s111, 1
    %p115 = scmp.eq.s32.totalorder %s77, 1
    %p116 = scmp.ne.s32.totalorder %s111, %s113
    %p117 = scmp.eq.s32.totalorder %s77, 0
    %p118 = por %p116, %p117
    %p119 = scmp.ne.s32.totalorder %s111, %s113
    %p120 = scmp.eq.s32.totalorder %s82, 1
    %p121 = por %p119, %p120
    %p122 = scmp.ne.s32.totalorder %s113, %s114
    %p123 = scmp.eq.s32.totalorder %s82, 0
    %p124 = por %p122, %p123
    %p125 = scmp.ne.s32.totalorder %s113, %s114
    %p126 = scmp.eq.s32.totalorder %s83, 1
    %p127 = por %p125, %p126
    %p129 = scmp.ne.s32.totalorder %s114, %s128
    %p130 = scmp.eq.s32.totalorder %s83, 0
    %p131 = por %p129, %p130
    %s133 = sadd.s32 %s132, 1
    %p136 = scmp.eq.s32.totalorder %s77, 1
    %p137 = scmp.ne.s32.totalorder %s132, %s134
    %p138 = scmp.eq.s32.totalorder %s77, 0
    %p139 = por %p137, %p138
    %p140 = scmp.ne.s32.totalorder %s132, %s134
    %p141 = scmp.eq.s32.totalorder %s82, 1
    %p142 = por %p140, %p141
    %p143 = scmp.ne.s32.totalorder %s134, %s135
    %p144 = scmp.eq.s32.totalorder %s82, 0
    %p145 = por %p143, %p144
    %p146 = scmp.ne.s32.totalorder %s134, %s135
    %p147 = scmp.eq.s32.totalorder %s83, 1
    %p148 = por %p146, %p147
    %p150 = scmp.ne.s32.totalorder %s135, %s149
    %p151 = scmp.eq.s32.totalorder %s83, 0
    %p152 = por %p150, %p151
    %s154 = sadd.s32 %s153, 1
    %p157 = scmp.eq.s32.totalorder %s77, 1
    %p158 = scmp.ne.s32.totalorder %s153, %s155
    %p159 = scmp.eq.s32.totalorder %s77, 0
    %p160 = por %p158, %p159
    %p161 = scmp.ne.s32.totalorder %s153, %s155
    %p162 = scmp.eq.s32.totalorder %s82, 1
    %p163 = por %p161, %p162
    %p164 = scmp.ne.s32.totalorder %s155, %s156
    %p165 = scmp.eq.s32.totalorder %s82, 0
    %p166 = por %p164, %p165
    %p167 = scmp.ne.s32.totalorder %s155, %s156
    %p168 = scmp.eq.s32.totalorder %s83, 1
    %p169 = por %p167, %p168
    %p171 = scmp.ne.s32.totalorder %s156, %s170
    %p172 = scmp.eq.s32.totalorder %s83, 0
    %p173 = por %p171, %p172
    %s175 = sadd.s32 %s174, 1
    %p178 = scmp.eq.s32.totalorder %s77, 1
    %p179 = scmp.ne.s32.totalorder %s174, %s176
    %p180 = scmp.eq.s32.totalorder %s77, 0
    %p181 = por %p179, %p180
    %p182 = scmp.ne.s32.totalorder %s174, %s176
    %p183 = scmp.eq.s32.totalorder %s82, 1
    %p184 = por %p182, %p183
    %p185 = scmp.ne.s32.totalorder %s176, %s177
    %p186 = scmp.eq.s32.totalorder %s82, 0
    %p187 = por %p185, %p186
    %p188 = scmp.ne.s32.totalorder %s176, %s177
    %p189 = scmp.eq.s32.totalorder %s83, 1
    %p190 = por %p188, %p189
    %p192 = scmp.ne.s32.totalorder %s177, %s191
    %p193 = scmp.eq.s32.totalorder %s83, 0
    %p194 = por %p192, %p193
    %s196 = sadd.s32 %s195, 1
    %p199 = scmp.eq.s32.totalorder %s77, 1
    %p200 = scmp.ne.s32.totalorder %s195, %s197
    %p201 = scmp.eq.s32.totalorder %s77, 0
    %p202 = por %p200, %p201
    %p203 = scmp.ne.s32.totalorder %s195, %s197
    %p204 = scmp.eq.s32.totalorder %s82, 1
    %p205 = por %p203, %p204
    %p206 = scmp.ne.s32.totalorder %s197, %s198
    %p207 = scmp.eq.s32.totalorder %s82, 0
    %p208 = por %p206, %p207
    %p209 = scmp.ne.s32.totalorder %s197, %s198
    %p210 = scmp.eq.s32.totalorder %s83, 1
    %p211 = por %p209, %p210
    %p213 = scmp.ne.s32.totalorder %s198, %s212
    %p214 = scmp.eq.s32.totalorder %s83, 0
    %p215 = por %p213, %p214
    %s217 = sadd.s32 %s216, 1
    %p220 = scmp.eq.s32.totalorder %s77, 1
    %p221 = scmp.ne.s32.totalorder %s216, %s218
    %p222 = scmp.eq.s32.totalorder %s77, 0
    %p223 = por %p221, %p222
    %p224 = scmp.ne.s32.totalorder %s216, %s218
    %p225 = scmp.eq.s32.totalorder %s82, 1
    %p226 = por %p224, %p225
    %p227 = scmp.ne.s32.totalorder %s218, %s219
    %p228 = scmp.eq.s32.totalorder %s82, 0
    %p229 = por %p227, %p228
    %p230 = scmp.ne.s32.totalorder %s218, %s219
    %p231 = scmp.eq.s32.totalorder %s83, 1
    %p232 = por %p230, %p231
    %p234 = scmp.ne.s32.totalorder %s219, %s233
    %p235 = scmp.eq.s32.totalorder %s83, 0
    %p236 = por %p234, %p235
    %s238 = sadd.s32 %s237, 1
    %p241 = scmp.eq.s32.totalorder %s77, 1
    %p242 = scmp.ne.s32.totalorder %s237, %s239
    %p243 = scmp.eq.s32.totalorder %s77, 0
    %p244 = por %p242, %p243
    %p245 = scmp.ne.s32.totalorder %s237, %s239
    %p246 = scmp.eq.s32.totalorder %s82, 1
    %p247 = por %p245, %p246
    %p248 = scmp.ne.s32.totalorder %s239, %s240
    %p249 = scmp.eq.s32.totalorder %s82, 0
    %p250 = por %p248, %p249
    %p251 = scmp.ne.s32.totalorder %s239, %s240
    %p252 = scmp.eq.s32.totalorder %s83, 1
    %p253 = por %p251, %p252
    %p255 = scmp.ne.s32.totalorder %s240, %s254
    %p256 = scmp.eq.s32.totalorder %s83, 0
    %p257 = por %p255, %p256
    %s259 = sadd.s32 %s258, 1
    %p262 = scmp.eq.s32.totalorder %s77, 1
    %p263 = scmp.ne.s32.totalorder %s258, %s260
    %p264 = scmp.eq.s32.totalorder %s77, 0
    %p265 = por %p263, %p264
    %p266 = scmp.ne.s32.totalorder %s258, %s260
    %p267 = scmp.eq.s32.totalorder %s82, 1
    %p268 = por %p266, %p267
    %p269 = scmp.ne.s32.totalorder %s260, %s261
    %p270 = scmp.eq.s32.totalorder %s82, 0
    %p271 = por %p269, %p270
    %p272 = scmp.ne.s32.totalorder %s260, %s261
    %p273 = scmp.eq.s32.totalorder %s83, 1
    %p274 = por %p272, %p273
    %p276 = scmp.ne.s32.totalorder %s261, %s275
    %p277 = scmp.eq.s32.totalorder %s83, 0
    %p278 = por %p276, %p277
    %s280 = sadd.s32 %s279, 1
    %p283 = scmp.eq.s32.totalorder %s77, 1
    %p284 = scmp.ne.s32.totalorder %s279, %s281
    %p285 = scmp.eq.s32.totalorder %s77, 0
    %p286 = por %p284, %p285
    %p287 = scmp.ne.s32.totalorder %s279, %s281
    %p288 = scmp.eq.s32.totalorder %s82, 1
    %p289 = por %p287, %p288
    %p290 = scmp.ne.s32.totalorder %s281, %s282
    %p291 = scmp.eq.s32.totalorder %s82, 0
    %p292 = por %p290, %p291
    %p293 = scmp.ne.s32.totalorder %s281, %s282
    %p294 = scmp.eq.s32.totalorder %s83, 1
    %p295 = por %p293, %p294
    %p297 = scmp.ne.s32.totalorder %s282, %s296
    %p298 = scmp.eq.s32.totalorder %s83, 0
    %p299 = por %p297, %p298
    %s301 = sadd.s32 %s300, 1
    %p304 = scmp.eq.s32.totalorder %s77, 1
    %p305 = scmp.ne.s32.totalorder %s300, %s302
    %p306 = scmp.eq.s32.totalorder %s77, 0
    %p307 = por %p305, %p306
    %p308 = scmp.ne.s32.totalorder %s300, %s302
    %p309 = scmp.eq.s32.totalorder %s82, 1
    %p310 = por %p308, %p309
    %p311 = scmp.ne.s32.totalorder %s302, %s303
    %p312 = scmp.eq.s32.totalorder %s82, 0
    %p313 = por %p311, %p312
    %p314 = scmp.ne.s32.totalorder %s302, %s303
    %p315 = scmp.eq.s32.totalorder %s83, 1
    %p316 = por %p314, %p315
    %p318 = scmp.ne.s32.totalorder %s303, %s317
    %p319 = scmp.eq.s32.totalorder %s83, 0
    %p320 = por %p318, %p319
    %s322 = sadd.s32 %s321, 1
    %p325 = scmp.eq.s32.totalorder %s77, 1
    %p326 = scmp.ne.s32.totalorder %s321, %s323
    %p327 = scmp.eq.s32.totalorder %s77, 0
    %p328 = por %p326, %p327
    %p329 = scmp.ne.s32.totalorder %s321, %s323
    %p330 = scmp.eq.s32.totalorder %s82, 1
    %p331 = por %p329, %p330
    %p332 = scmp.ne.s32.totalorder %s323, %s324
    %p333 = scmp.eq.s32.totalorder %s82, 0
    %p334 = por %p332, %p333
    %p335 = scmp.ne.s32.totalorder %s323, %s324
    %p336 = scmp.eq.s32.totalorder %s83, 1
    %p337 = por %p335, %p336
    %p339 = scmp.ne.s32.totalorder %s324, %s338
    %p340 = scmp.eq.s32.totalorder %s83, 0
    %p341 = por %p339, %p340
    %s343 = sadd.s32 %s342, 1
    %p346 = scmp.eq.s32.totalorder %s77, 1
    %p347 = scmp.ne.s32.totalorder %s342, %s344
    %p348 = scmp.eq.s32.totalorder %s77, 0
    %p349 = por %p347, %p348
    %p350 = scmp.ne.s32.totalorder %s342, %s344
    %p351 = scmp.eq.s32.totalorder %s82, 1
    %p352 = por %p350, %p351
    %p353 = scmp.ne.s32.totalorder %s344, %s345
    %p354 = scmp.eq.s32.totalorder %s82, 0
    %p355 = por %p353, %p354
    %p356 = scmp.ne.s32.totalorder %s344, %s345
    %p357 = scmp.eq.s32.totalorder %s83, 1
    %p358 = por %p356, %p357
    %p360 = scmp.ne.s32.totalorder %s345, %s359
    %p361 = scmp.eq.s32.totalorder %s83, 0
    %p362 = por %p360, %p361
    %s364 = sadd.s32 %s363, 1
    %p367 = scmp.eq.s32.totalorder %s77, 1
    %p368 = scmp.ne.s32.totalorder %s363, %s365
    %p369 = scmp.eq.s32.totalorder %s77, 0
    %p370 = por %p368, %p369
    %p371 = scmp.ne.s32.totalorder %s363, %s365
    %p372 = scmp.eq.s32.totalorder %s82, 1
    %p373 = por %p371, %p372
    %p374 = scmp.ne.s32.totalorder %s365, %s366
    %p375 = scmp.eq.s32.totalorder %s82, 0
    %p376 = por %p374, %p375
    %p377 = scmp.ne.s32.totalorder %s365, %s366
    %p378 = scmp.eq.s32.totalorder %s83, 1
    %p379 = por %p377, %p378
    %p381 = scmp.ne.s32.totalorder %s366, %s380
    %p382 = scmp.eq.s32.totalorder %s83, 0
    %p383 = por %p381, %p382
    %s385 = sadd.s32 %s384, 1
    %p388 = scmp.eq.s32.totalorder %s77, 1
    %p389 = scmp.ne.s32.totalorder %s384, %s386
    %p390 = scmp.eq.s32.totalorder %s77, 0
    %p391 = por %p389, %p390
    %p392 = scmp.ne.s32.totalorder %s384, %s386
    %p393 = scmp.eq.s32.totalorder %s82, 1
    %p394 = por %p392, %p393
    %p395 = scmp.ne.s32.totalorder %s386, %s387
    %p396 = scmp.eq.s32.totalorder %s82, 0
    %p397 = por %p395, %p396
    %p398 = scmp.ne.s32.totalorder %s386, %s387
    %p399 = scmp.eq.s32.totalorder %s83, 1
    %p400 = por %p398, %p399
    %p402 = scmp.ne.s32.totalorder %s387, %s401
    %p403 = scmp.eq.s32.totalorder %s83, 0
    %p404 = por %p402, %p403
    %s406 = sadd.s32 %s405, 1
    %p409 = scmp.eq.s32.totalorder %s77, 1
    %p410 = scmp.ne.s32.totalorder %s405, %s407
    %p411 = scmp.eq.s32.totalorder %s77, 0
    %p412 = por %p410, %p411
    %p413 = scmp.ne.s32.totalorder %s405, %s407
    %p414 = scmp.eq.s32.totalorder %s82, 1
    %p415 = por %p413, %p414
    %p416 = scmp.ne.s32.totalorder %s407, %s408
    %p417 = scmp.eq.s32.totalorder %s82, 0
    %p418 = por %p416, %p417
    %p419 = scmp.ne.s32.totalorder %s407, %s408
    %p420 = scmp.eq.s32.totalorder %s83, 1
    %p421 = por %p419, %p420
    %p423 = scmp.ne.s32.totalorder %s408, %s422
    %p424 = scmp.eq.s32.totalorder %s83, 0
    %p425 = por %p423, %p424
    %s427 = sadd.s32 %s426, 1
    %p430 = scmp.eq.s32.totalorder %s77, 1
    %p431 = scmp.ne.s32.totalorder %s426, %s428
    %p432 = scmp.eq.s32.totalorder %s77, 0
    %p433 = por %p431, %p432
    %p434 = scmp.ne.s32.totalorder %s426, %s428
    %p435 = scmp.eq.s32.totalorder %s82, 1
    %p436 = por %p434, %p435
    %p437 = scmp.ne.s32.totalorder %s428, %s429
    %p438 = scmp.eq.s32.totalorder %s82, 0
    %p439 = por %p437, %p438
    %p440 = scmp.ne.s32.totalorder %s428, %s429
    %p441 = scmp.eq.s32.totalorder %s83, 1
    %p442 = por %p440, %p441
    %p444 = scmp.ne.s32.totalorder %s429, %s443
    %p445 = scmp.eq.s32.totalorder %s83, 0
    %p446 = por %p444, %p445
    %s448 = sadd.s32 %s447, 1
    %p451 = scmp.eq.s32.totalorder %s77, 1
    %p452 = scmp.ne.s32.totalorder %s447, %s449
    %p453 = scmp.eq.s32.totalorder %s77, 0
    %p454 = por %p452, %p453
    %p455 = scmp.ne.s32.totalorder %s447, %s449
    %p456 = scmp.eq.s32.totalorder %s82, 1
    %p457 = por %p455, %p456
    %p458 = scmp.ne.s32.totalorder %s449, %s450
    %p459 = scmp.eq.s32.totalorder %s82, 0
    %p460 = por %p458, %p459
    %p461 = scmp.ne.s32.totalorder %s449, %s450
    %p462 = scmp.eq.s32.totalorder %s83, 1
    %p463 = por %p461, %p462
    %p465 = scmp.ne.s32.totalorder %s450, %s464
    %p466 = scmp.eq.s32.totalorder %s83, 0
    %p467 = por %p465, %p466
    %s469 = sadd.s32 %s468, 1
    %p472 = scmp.eq.s32.totalorder %s77, 1
    %p473 = scmp.ne.s32.totalorder %s468, %s470
    %p474 = scmp.eq.s32.totalorder %s77, 0
    %p475 = por %p473, %p474
    %p476 = scmp.ne.s32.totalorder %s468, %s470
    %p477 = scmp.eq.s32.totalorder %s82, 1
    %p478 = por %p476, %p477
    %p479 = scmp.ne.s32.totalorder %s470, %s471
    %p480 = scmp.eq.s32.totalorder %s82, 0
    %p481 = por %p479, %p480
    %p482 = scmp.ne.s32.totalorder %s470, %s471
    %p483 = scmp.eq.s32.totalorder %s83, 1
    %p484 = por %p482, %p483
    %p486 = scmp.ne.s32.totalorder %s471, %s485
    %p487 = scmp.eq.s32.totalorder %s83, 0
    %p488 = por %p486, %p487
    %s490 = sadd.s32 %s489, 1
    %p493 = scmp.eq.s32.totalorder %s77, 1
    %p494 = scmp.ne.s32.totalorder %s489, %s491
    %p495 = scmp.eq.s32.totalorder %s77, 0
    %p496 = por %p494, %p495
    %p497 = scmp.ne.s32.totalorder %s489, %s491
    %p498 = scmp.eq.s32.totalorder %s82, 1
    %p499 = por %p497, %p498
    %p500 = scmp.ne.s32.totalorder %s491, %s492
    %p501 = scmp.eq.s32.totalorder %s82, 0
    %p502 = por %p500, %p501
    %p503 = scmp.ne.s32.totalorder %s491, %s492
    %p504 = scmp.eq.s32.totalorder %s83, 1
    %p505 = por %p503, %p504
    %p507 = scmp.ne.s32.totalorder %s492, %s506
    %p508 = scmp.eq.s32.totalorder %s83, 0
    %p509 = por %p507, %p508
    %s511 = sadd.s32 %s510, 1
    %p514 = scmp.eq.s32.totalorder %s77, 1
    %p515 = scmp.ne.s32.totalorder %s510, %s512
    %p516 = scmp.eq.s32.totalorder %s77, 0
    %p517 = por %p515, %p516
    %p518 = scmp.ne.s32.totalorder %s510, %s512
    %p519 = scmp.eq.s32.totalorder %s82, 1
    %p520 = por %p518, %p519
    %p521 = scmp.ne.s32.totalorder %s512, %s513
    %p522 = scmp.eq.s32.totalorder %s82, 0
    %p523 = por %p521, %p522
    %p524 = scmp.ne.s32.totalorder %s512, %s513
    %p525 = scmp.eq.s32.totalorder %s83, 1
    %p526 = por %p524, %p525
    %p528 = scmp.ne.s32.totalorder %s513, %s527
    %p529 = scmp.eq.s32.totalorder %s83, 0
    %p530 = por %p528, %p529
    %s532 = sadd.s32 %s531, 1
    %p535 = scmp.eq.s32.totalorder %s77, 1
    %p536 = scmp.ne.s32.totalorder %s531, %s533
    %p537 = scmp.eq.s32.totalorder %s77, 0
    %p538 = por %p536, %p537
    %p539 = scmp.ne.s32.totalorder %s531, %s533
    %p540 = scmp.eq.s32.totalorder %s82, 1
    %p541 = por %p539, %p540
    %p542 = scmp.ne.s32.totalorder %s533, %s534
    %p543 = scmp.eq.s32.totalorder %s82, 0
    %p544 = por %p542, %p543
    %p545 = scmp.ne.s32.totalorder %s533, %s534
    %p546 = scmp.eq.s32.totalorder %s83, 1
    %p547 = por %p545, %p546
    %p549 = scmp.ne.s32.totalorder %s534, %s548
    %p550 = scmp.eq.s32.totalorder %s83, 0
    %p551 = por %p549, %p550
    %s553 = sadd.s32 %s552, 1
    %p556 = scmp.eq.s32.totalorder %s77, 1
    %p557 = scmp.ne.s32.totalorder %s552, %s554
    %p558 = scmp.eq.s32.totalorder %s77, 0
    %p559 = por %p557, %p558
    %p560 = scmp.ne.s32.totalorder %s552, %s554
    %p561 = scmp.eq.s32.totalorder %s82, 1
    %p562 = por %p560, %p561
    %p563 = scmp.ne.s32.totalorder %s554, %s555
    %p564 = scmp.eq.s32.totalorder %s82, 0
    %p565 = por %p563, %p564
    %p566 = scmp.ne.s32.totalorder %s554, %s555
    %p567 = scmp.eq.s32.totalorder %s83, 1
    %p568 = por %p566, %p567
    %p570 = scmp.ne.s32.totalorder %s555, %s569
    %p571 = scmp.eq.s32.totalorder %s83, 0
    %p572 = por %p570, %p571
    %s574 = sadd.s32 %s573, 1
    %p577 = scmp.eq.s32.totalorder %s77, 1
    %p578 = scmp.ne.s32.totalorder %s573, %s575
    %p579 = scmp.eq.s32.totalorder %s77, 0
    %p580 = por %p578, %p579
    %p581 = scmp.ne.s32.totalorder %s573, %s575
    %p582 = scmp.eq.s32.totalorder %s82, 1
    %p583 = por %p581, %p582
    %p584 = scmp.ne.s32.totalorder %s575, %s576
    %p585 = scmp.eq.s32.totalorder %s82, 0
    %p586 = por %p584, %p585
    %p587 = scmp.ne.s32.totalorder %s575, %s576
    %p588 = scmp.eq.s32.totalorder %s83, 1
    %p589 = por %p587, %p588
    %p591 = scmp.ne.s32.totalorder %s576, %s590
    %p592 = scmp.eq.s32.totalorder %s83, 0
    %p593 = por %p591, %p592
    %s595 = sadd.s32 %s594, 1
    %p598 = scmp.eq.s32.totalorder %s77, 1
    %p599 = scmp.ne.s32.totalorder %s594, %s596
    %p600 = scmp.eq.s32.totalorder %s77, 0
    %p601 = por %p599, %p600
    %p602 = scmp.ne.s32.totalorder %s594, %s596
    %p603 = scmp.eq.s32.totalorder %s82, 1
    %p604 = por %p602, %p603
    %p605 = scmp.ne.s32.totalorder %s596, %s597
    %p606 = scmp.eq.s32.totalorder %s82, 0
    %p607 = por %p605, %p606
    %p608 = scmp.ne.s32.totalorder %s596, %s597
    %p609 = scmp.eq.s32.totalorder %s83, 1
    %p610 = por %p608, %p609
    %p612 = scmp.ne.s32.totalorder %s597, %s611
    %p613 = scmp.eq.s32.totalorder %s83, 0
    %p614 = por %p612, %p613
    %s616 = sadd.s32 %s615, 1
    %p619 = scmp.eq.s32.totalorder %s77, 1
    %p620 = scmp.ne.s32.totalorder %s615, %s617
    %p621 = scmp.eq.s32.totalorder %s77, 0
    %p622 = por %p620, %p621
    %p623 = scmp.ne.s32.totalorder %s615, %s617
    %p624 = scmp.eq.s32.totalorder %s82, 1
    %p625 = por %p623, %p624
    %p626 = scmp.ne.s32.totalorder %s617, %s618
    %p627 = scmp.eq.s32.totalorder %s82, 0
    %p628 = por %p626, %p627
    %p629 = scmp.ne.s32.totalorder %s617, %s618
    %p630 = scmp.eq.s32.totalorder %s83, 1
    %p631 = por %p629, %p630
    %p633 = scmp.ne.s32.totalorder %s618, %s632
    %p634 = scmp.eq.s32.totalorder %s83, 0
    %p635 = por %p633, %p634
    %s637 = sadd.s32 %s636, 1
    %p640 = scmp.eq.s32.totalorder %s77, 1
    %p641 = scmp.ne.s32.totalorder %s636, %s638
    %p642 = scmp.eq.s32.totalorder %s77, 0
    %p643 = por %p641, %p642
    %p644 = scmp.ne.s32.totalorder %s636, %s638
    %p645 = scmp.eq.s32.totalorder %s82, 1
    %p646 = por %p644, %p645
    %p647 = scmp.ne.s32.totalorder %s638, %s639
    %p648 = scmp.eq.s32.totalorder %s82, 0
    %p649 = por %p647, %p648
    %p650 = scmp.ne.s32.totalorder %s638, %s639
    %p651 = scmp.eq.s32.totalorder %s83, 1
    %p652 = por %p650, %p651
    %p654 = scmp.ne.s32.totalorder %s639, %s653
    %p655 = scmp.eq.s32.totalorder %s83, 0
    %p656 = por %p654, %p655
    %s658 = sadd.s32 %s657, 1
    %p661 = scmp.eq.s32.totalorder %s77, 1
    %p662 = scmp.ne.s32.totalorder %s657, %s659
    %p663 = scmp.eq.s32.totalorder %s77, 0
    %p664 = por %p662, %p663
    %p665 = scmp.ne.s32.totalorder %s657, %s659
    %p666 = scmp.eq.s32.totalorder %s82, 1
    %p667 = por %p665, %p666
    %p668 = scmp.ne.s32.totalorder %s659, %s660
    %p669 = scmp.eq.s32.totalorder %s82, 0
    %p670 = por %p668, %p669
    %p671 = scmp.ne.s32.totalorder %s659, %s660
    %p672 = scmp.eq.s32.totalorder %s83, 1
    %p673 = por %p671, %p672
    %p675 = scmp.ne.s32.totalorder %s660, %s674
    %p676 = scmp.eq.s32.totalorder %s83, 0
    %p677 = por %p675, %p676
    %s679 = sadd.s32 %s678, 1
    %p682 = scmp.eq.s32.totalorder %s77, 1
    %p683 = scmp.ne.s32.totalorder %s678, %s680
    %p684 = scmp.eq.s32.totalorder %s77, 0
    %p685 = por %p683, %p684
    %p686 = scmp.ne.s32.totalorder %s678, %s680
    %p687 = scmp.eq.s32.totalorder %s82, 1
    %p688 = por %p686, %p687
    %p689 = scmp.ne.s32.totalorder %s680, %s681
    %p690 = scmp.eq.s32.totalorder %s82, 0
    %p691 = por %p689, %p690
    %p692 = scmp.ne.s32.totalorder %s680, %s681
    %p693 = scmp.eq.s32.totalorder %s83, 1
    %p694 = por %p692, %p693
    %p696 = scmp.ne.s32.totalorder %s681, %s695
    %p697 = scmp.eq.s32.totalorder %s83, 0
    %p698 = por %p696, %p697
    %s700 = sadd.s32 %s699, 1
    %p703 = scmp.eq.s32.totalorder %s77, 1
    %p704 = scmp.ne.s32.totalorder %s699, %s701
    %p705 = scmp.eq.s32.totalorder %s77, 0
    %p706 = por %p704, %p705
    %p707 = scmp.ne.s32.totalorder %s699, %s701
    %p708 = scmp.eq.s32.totalorder %s82, 1
    %p709 = por %p707, %p708
    %p710 = scmp.ne.s32.totalorder %s701, %s702
    %p711 = scmp.eq.s32.totalorder %s82, 0
    %p712 = por %p710, %p711
    %p713 = scmp.ne.s32.totalorder %s701, %s702
    %p714 = scmp.eq.s32.totalorder %s83, 1
    %p715 = por %p713, %p714
    %p717 = scmp.ne.s32.totalorder %s702, %s716
    %p718 = scmp.eq.s32.totalorder %s83, 0
    %p719 = por %p717, %p718
    %s721 = sadd.s32 %s720, 1
    %p724 = scmp.eq.s32.totalorder %s77, 1
    %p725 = scmp.ne.s32.totalorder %s720, %s722
    %p726 = scmp.eq.s32.totalorder %s77, 0
    %p727 = por %p725, %p726
    %p728 = scmp.ne.s32.totalorder %s720, %s722
    %p729 = scmp.eq.s32.totalorder %s82, 1
    %p730 = por %p728, %p729
    %p731 = scmp.ne.s32.totalorder %s722, %s723
    %p732 = scmp.eq.s32.totalorder %s82, 0
    %p733 = por %p731, %p732
    %p734 = scmp.ne.s32.totalorder %s722, %s723
    %p735 = scmp.eq.s32.totalorder %s83, 1
    %p736 = por %p734, %p735
    %p738 = scmp.ne.s32.totalorder %s723, %s737
    %p739 = scmp.eq.s32.totalorder %s83, 0
    %p740 = por %p738, %p739
    %s742 = sadd.s32 %s741, 1
    %p745 = scmp.eq.s32.totalorder %s77, 1
    %p746 = scmp.ne.s32.totalorder %s741, %s743
    %p747 = scmp.eq.s32.totalorder %s77, 0
    %p748 = por %p746, %p747
    %p749 = scmp.ne.s32.totalorder %s741, %s743
    %p750 = scmp.eq.s32.totalorder %s82, 1
    %p751 = por %p749, %p750
    %p752 = scmp.ne.s32.totalorder %s743, %s744
    %p753 = scmp.eq.s32.totalorder %s82, 0
    %p754 = por %p752, %p753
    %p755 = scmp.ne.s32.totalorder %s743, %s744
    %p756 = scmp.eq.s32.totalorder %s83, 1
    %p757 = por %p755, %p756
    %p759 = scmp.ne.s32.totalorder %s744, %s758
    %p760 = scmp.eq.s32.totalorder %s83, 0
    %p761 = por %p759, %p760
    %s763 = sadd.s32 %s762, 1
    %p766 = scmp.eq.s32.totalorder %s77, 1
    %p767 = scmp.ne.s32.totalorder %s762, %s764
    %p768 = scmp.eq.s32.totalorder %s77, 0
    %p769 = por %p767, %p768
    %p770 = scmp.ne.s32.totalorder %s762, %s764
    %p771 = scmp.eq.s32.totalorder %s82, 1
    %p772 = por %p770, %p771
    %p773 = scmp.ne.s32.totalorder %s764, %s765
    %p774 = scmp.eq.s32.totalorder %s82, 0
    %p775 = por %p773, %p774
    %p776 = scmp.ne.s32.totalorder %s764, %s765
    %p777 = scmp.eq.s32.totalorder %s83, 1
    %p778 = por %p776, %p777
    %p780 = scmp.ne.s32.totalorder %s765, %s779
    %p781 = scmp.eq.s32.totalorder %s83, 0
    %p782 = por %p780, %p781
    %s784 = sadd.s32 %s783, 1
    %p787 = scmp.eq.s32.totalorder %s77, 1
    %p788 = scmp.ne.s32.totalorder %s783, %s785
    %p789 = scmp.eq.s32.totalorder %s77, 0
    %p790 = por %p788, %p789
    %p791 = scmp.ne.s32.totalorder %s783, %s785
    %p792 = scmp.eq.s32.totalorder %s82, 1
    %p793 = por %p791, %p792
    %p794 = scmp.ne.s32.totalorder %s785, %s786
    %p795 = scmp.eq.s32.totalorder %s82, 0
    %p796 = por %p794, %p795
    %p797 = scmp.ne.s32.totalorder %s785, %s786
    %p798 = scmp.eq.s32.totalorder %s83, 1
    %p799 = por %p797, %p798
    %p801 = scmp.ne.s32.totalorder %s786, %s800
    %p802 = scmp.eq.s32.totalorder %s83, 0
    %p803 = por %p801, %p802
    %s805 = sadd.s32 %s804, 1
    %p808 = scmp.eq.s32.totalorder %s77, 1
    %p809 = scmp.ne.s32.totalorder %s804, %s806
    %p810 = scmp.eq.s32.totalorder %s77, 0
    %p811 = por %p809, %p810
    %p812 = scmp.ne.s32.totalorder %s804, %s806
    %p813 = scmp.eq.s32.totalorder %s82, 1
    %p814 = por %p812, %p813
    %p815 = scmp.ne.s32.totalorder %s806, %s807
    %p816 = scmp.eq.s32.totalorder %s82, 0
    %p817 = por %p815, %p816
    %p818 = scmp.ne.s32.totalorder %s806, %s807
    %p819 = scmp.eq.s32.totalorder %s83, 1
    %p820 = por %p818, %p819
    %p822 = scmp.ne.s32.totalorder %s807, %s821
    %p823 = scmp.eq.s32.totalorder %s83, 0
    %p824 = por %p822, %p823
    %s825 = ssub.s32 %s77, %s84
    %p826 = scmp.eq.s32.totalorder %s825, 0
    %s828 = sadd.s32 %s827, 1
    %s829 = scalar_select %p826, %s827, %s828
    %p832 = pneg %p826
    %p833 = scmp.eq.s32.totalorder %s77, 1
    %p834 = por %p832, %p833
    %p835 = scmp.ne.s32.totalorder %s827, %s830
    %p836 = scmp.eq.s32.totalorder %s77, 0
    %p837 = por %p835, %p836
    %p838 = scmp.ne.s32.totalorder %s827, %s830
    %p839 = scmp.eq.s32.totalorder %s82, 1
    %p840 = por %p838, %p839
    %p841 = scmp.ne.s32.totalorder %s830, %s831
    %p842 = scmp.eq.s32.totalorder %s82, 0
    %p843 = por %p841, %p842
    %p844 = scmp.ne.s32.totalorder %s830, %s831
    %p845 = scmp.eq.s32.totalorder %s83, 1
    %p846 = por %p844, %p845
    %p848 = scmp.ne.s32.totalorder %s831, %s847
    %p849 = scmp.eq.s32.totalorder %s83, 0
    %p850 = por %p848, %p849
    %p851 = scmp.le.s32.totalorder 1, %s77
    %p852 = scmp.lt.s32.totalorder %s77, 3
    %p853 = pnand %p851, %p852
    %p854 = pneg %p853
    // Predicated region
    $region9: #{_lambda_.1} parent=5 // pred_check
      _
    $region10: #{_lambda_.1} parent=5 // pred_check_branch
      %856 = sbr.rel (%p853) target = $region12
    $region11: #{_lambda_.1} parent=5 // pred_region
      %s857 = ssub.s32 %s77, 1
      // Predicated region
      $region13: #{_lambda_.1} parent=11 // pred_check
        %p858 = pneg %p124
      $region14: #{_lambda_.1} parent=11 // pred_check_branch
        %860 = sbr.rel (%p858) target = $region16
      $region15: #{_lambda_.1} parent=11 // pred_region
        _
      $region16: #{_lambda_.1} parent=11 // pred_fallthru
        _
      // Predicated region
      $region17: #{_lambda_.1} parent=11 // pred_check
        %p861 = pneg %p145
      $region18: #{_lambda_.1} parent=11 // pred_check_branch
        %863 = sbr.rel (%p861) target = $region20
      $region19: #{_lambda_.1} parent=11 // pred_region
        _
      $region20: #{_lambda_.1} parent=11 // pred_fallthru
        _
      // Predicated region
      $region21: #{_lambda_.1} parent=11 // pred_check
        %p864 = pneg %p166
      $region22: #{_lambda_.1} parent=11 // pred_check_branch
        %866 = sbr.rel (%p864) target = $region24
      $region23: #{_lambda_.1} parent=11 // pred_region
        _
      $region24: #{_lambda_.1} parent=11 // pred_fallthru
        _
      // Predicated region
      $region25: #{_lambda_.1} parent=11 // pred_check
        %p867 = pneg %p187
      $region26: #{_lambda_.1} parent=11 // pred_check_branch
        %869 = sbr.rel (%p867) target = $region28
      $region27: #{_lambda_.1} parent=11 // pred_region
        _
      $region28: #{_lambda_.1} parent=11 // pred_fallthru
        _
      // Predicated region
      $region29: #{_lambda_.1} parent=11 // pred_check
        %p870 = pneg %p208
      $region30: #{_lambda_.1} parent=11 // pred_check_branch
        %872 = sbr.rel (%p870) target = $region32
      $region31: #{_lambda_.1} parent=11 // pred_region
        _
      $region32: #{_lambda_.1} parent=11 // pred_fallthru
        _
      // Predicated region
      $region33: #{_lambda_.1} parent=11 // pred_check
        %p873 = pneg %p229
      $region34: #{_lambda_.1} parent=11 // pred_check_branch
        %875 = sbr.rel (%p873) target = $region36
      $region35: #{_lambda_.1} parent=11 // pred_region
        _
      $region36: #{_lambda_.1} parent=11 // pred_fallthru
        _
      // Predicated region
      $region37: #{_lambda_.1} parent=11 // pred_check
        %p876 = pneg %p250
      $region38: #{_lambda_.1} parent=11 // pred_check_branch
        %878 = sbr.rel (%p876) target = $region40
      $region39: #{_lambda_.1} parent=11 // pred_region
        _
      $region40: #{_lambda_.1} parent=11 // pred_fallthru
        _
      // Predicated region
      $region41: #{_lambda_.1} parent=11 // pred_check
        %p879 = pneg %p271
      $region42: #{_lambda_.1} parent=11 // pred_check_branch
        %881 = sbr.rel (%p879) target = $region44
      $region43: #{_lambda_.1} parent=11 // pred_region
        _
      $region44: #{_lambda_.1} parent=11 // pred_fallthru
        _
      // Predicated region
      $region45: #{_lambda_.1} parent=11 // pred_check
        %p882 = pneg %p292
      $region46: #{_lambda_.1} parent=11 // pred_check_branch
        %884 = sbr.rel (%p882) target = $region48
      $region47: #{_lambda_.1} parent=11 // pred_region
        _
      $region48: #{_lambda_.1} parent=11 // pred_fallthru
        _
      // Predicated region
      $region49: #{_lambda_.1} parent=11 // pred_check
        %p885 = pneg %p313
      $region50: #{_lambda_.1} parent=11 // pred_check_branch
        %887 = sbr.rel (%p885) target = $region52
      $region51: #{_lambda_.1} parent=11 // pred_region
        _
      $region52: #{_lambda_.1} parent=11 // pred_fallthru
        _
      // Predicated region
      $region53: #{_lambda_.1} parent=11 // pred_check
        %p888 = pneg %p334
      $region54: #{_lambda_.1} parent=11 // pred_check_branch
        %890 = sbr.rel (%p888) target = $region56
      $region55: #{_lambda_.1} parent=11 // pred_region
        _
      $region56: #{_lambda_.1} parent=11 // pred_fallthru
        _
      // Predicated region
      $region57: #{_lambda_.1} parent=11 // pred_check
        %p891 = pneg %p355
      $region58: #{_lambda_.1} parent=11 // pred_check_branch
        %893 = sbr.rel (%p891) target = $region60
      $region59: #{_lambda_.1} parent=11 // pred_region
        _
      $region60: #{_lambda_.1} parent=11 // pred_fallthru
        _
      // Predicated region
      $region61: #{_lambda_.1} parent=11 // pred_check
        %p894 = pneg %p376
      $region62: #{_lambda_.1} parent=11 // pred_check_branch
        %896 = sbr.rel (%p894) target = $region64
      $region63: #{_lambda_.1} parent=11 // pred_region
        _
      $region64: #{_lambda_.1} parent=11 // pred_fallthru
        _
      // Predicated region
      $region65: #{_lambda_.1} parent=11 // pred_check
        %p897 = pneg %p397
      $region66: #{_lambda_.1} parent=11 // pred_check_branch
        %899 = sbr.rel (%p897) target = $region68
      $region67: #{_lambda_.1} parent=11 // pred_region
        _
      $region68: #{_lambda_.1} parent=11 // pred_fallthru
        _
      // Predicated region
      $region69: #{_lambda_.1} parent=11 // pred_check
        %p900 = pneg %p418
      $region70: #{_lambda_.1} parent=11 // pred_check_branch
        %902 = sbr.rel (%p900) target = $region72
      $region71: #{_lambda_.1} parent=11 // pred_region
        _
      $region72: #{_lambda_.1} parent=11 // pred_fallthru
        _
      // Predicated region
      $region73: #{_lambda_.1} parent=11 // pred_check
        %p903 = pneg %p439
      $region74: #{_lambda_.1} parent=11 // pred_check_branch
        %905 = sbr.rel (%p903) target = $region76
      $region75: #{_lambda_.1} parent=11 // pred_region
        _
      $region76: #{_lambda_.1} parent=11 // pred_fallthru
        _
      // Predicated region
      $region77: #{_lambda_.1} parent=11 // pred_check
        %p906 = pneg %p460
      $region78: #{_lambda_.1} parent=11 // pred_check_branch
        %908 = sbr.rel (%p906) target = $region80
      $region79: #{_lambda_.1} parent=11 // pred_region
        _
      $region80: #{_lambda_.1} parent=11 // pred_fallthru
        _
      // Predicated region
      $region81: #{_lambda_.1} parent=11 // pred_check
        %p909 = pneg %p481
      $region82: #{_lambda_.1} parent=11 // pred_check_branch
        %911 = sbr.rel (%p909) target = $region84
      $region83: #{_lambda_.1} parent=11 // pred_region
        _
      $region84: #{_lambda_.1} parent=11 // pred_fallthru
        _
      // Predicated region
      $region85: #{_lambda_.1} parent=11 // pred_check
        %p912 = pneg %p502
      $region86: #{_lambda_.1} parent=11 // pred_check_branch
        %914 = sbr.rel (%p912) target = $region88
      $region87: #{_lambda_.1} parent=11 // pred_region
        _
      $region88: #{_lambda_.1} parent=11 // pred_fallthru
        _
      // Predicated region
      $region89: #{_lambda_.1} parent=11 // pred_check
        %p915 = pneg %p523
      $region90: #{_lambda_.1} parent=11 // pred_check_branch
        %917 = sbr.rel (%p915) target = $region92
      $region91: #{_lambda_.1} parent=11 // pred_region
        _
      $region92: #{_lambda_.1} parent=11 // pred_fallthru
        _
      // Predicated region
      $region93: #{_lambda_.1} parent=11 // pred_check
        %p918 = pneg %p544
      $region94: #{_lambda_.1} parent=11 // pred_check_branch
        %920 = sbr.rel (%p918) target = $region96
      $region95: #{_lambda_.1} parent=11 // pred_region
        _
      $region96: #{_lambda_.1} parent=11 // pred_fallthru
        _
      // Predicated region
      $region97: #{_lambda_.1} parent=11 // pred_check
        %p921 = pneg %p565
      $region98: #{_lambda_.1} parent=11 // pred_check_branch
        %923 = sbr.rel (%p921) target = $region100
      $region99: #{_lambda_.1} parent=11 // pred_region
        _
      $region100: #{_lambda_.1} parent=11 // pred_fallthru
        _
      // Predicated region
      $region101: #{_lambda_.1} parent=11 // pred_check
        %p924 = pneg %p586
      $region102: #{_lambda_.1} parent=11 // pred_check_branch
        %926 = sbr.rel (%p924) target = $region104
      $region103: #{_lambda_.1} parent=11 // pred_region
        _
      $region104: #{_lambda_.1} parent=11 // pred_fallthru
        _
      // Predicated region
      $region105: #{_lambda_.1} parent=11 // pred_check
        %p927 = pneg %p607
      $region106: #{_lambda_.1} parent=11 // pred_check_branch
        %929 = sbr.rel (%p927) target = $region108
      $region107: #{_lambda_.1} parent=11 // pred_region
        _
      $region108: #{_lambda_.1} parent=11 // pred_fallthru
        _
      // Predicated region
      $region109: #{_lambda_.1} parent=11 // pred_check
        %p930 = pneg %p628
      $region110: #{_lambda_.1} parent=11 // pred_check_branch
        %932 = sbr.rel (%p930) target = $region112
      $region111: #{_lambda_.1} parent=11 // pred_region
        _
      $region112: #{_lambda_.1} parent=11 // pred_fallthru
        _
      // Predicated region
      $region113: #{_lambda_.1} parent=11 // pred_check
        %p933 = pneg %p649
      $region114: #{_lambda_.1} parent=11 // pred_check_branch
        %935 = sbr.rel (%p933) target = $region116
      $region115: #{_lambda_.1} parent=11 // pred_region
        _
      $region116: #{_lambda_.1} parent=11 // pred_fallthru
        _
      // Predicated region
      $region117: #{_lambda_.1} parent=11 // pred_check
        %p936 = pneg %p670
      $region118: #{_lambda_.1} parent=11 // pred_check_branch
        %938 = sbr.rel (%p936) target = $region120
      $region119: #{_lambda_.1} parent=11 // pred_region
        _
      $region120: #{_lambda_.1} parent=11 // pred_fallthru
        _
      // Predicated region
      $region121: #{_lambda_.1} parent=11 // pred_check
        %p939 = pneg %p691
      $region122: #{_lambda_.1} parent=11 // pred_check_branch
        %941 = sbr.rel (%p939) target = $region124
      $region123: #{_lambda_.1} parent=11 // pred_region
        _
      $region124: #{_lambda_.1} parent=11 // pred_fallthru
        _
      // Predicated region
      $region125: #{_lambda_.1} parent=11 // pred_check
        %p942 = pneg %p712
      $region126: #{_lambda_.1} parent=11 // pred_check_branch
        %944 = sbr.rel (%p942) target = $region128
      $region127: #{_lambda_.1} parent=11 // pred_region
        _
      $region128: #{_lambda_.1} parent=11 // pred_fallthru
        _
      // Predicated region
      $region129: #{_lambda_.1} parent=11 // pred_check
        %p945 = pneg %p733
      $region130: #{_lambda_.1} parent=11 // pred_check_branch
        %947 = sbr.rel (%p945) target = $region132
      $region131: #{_lambda_.1} parent=11 // pred_region
        _
      $region132: #{_lambda_.1} parent=11 // pred_fallthru
        _
      // Predicated region
      $region133: #{_lambda_.1} parent=11 // pred_check
        %p948 = pneg %p754
      $region134: #{_lambda_.1} parent=11 // pred_check_branch
        %950 = sbr.rel (%p948) target = $region136
      $region135: #{_lambda_.1} parent=11 // pred_region
        _
      $region136: #{_lambda_.1} parent=11 // pred_fallthru
        _
      // Predicated region
      $region137: #{_lambda_.1} parent=11 // pred_check
        %p951 = pneg %p775
      $region138: #{_lambda_.1} parent=11 // pred_check_branch
        %953 = sbr.rel (%p951) target = $region140
      $region139: #{_lambda_.1} parent=11 // pred_region
        _
      $region140: #{_lambda_.1} parent=11 // pred_fallthru
        _
      // Predicated region
      $region141: #{_lambda_.1} parent=11 // pred_check
        %p954 = pneg %p796
      $region142: #{_lambda_.1} parent=11 // pred_check_branch
        %956 = sbr.rel (%p954) target = $region144
      $region143: #{_lambda_.1} parent=11 // pred_region
        _
      $region144: #{_lambda_.1} parent=11 // pred_fallthru
        _
      // Predicated region
      $region145: #{_lambda_.1} parent=11 // pred_check
        %p957 = pneg %p817
      $region146: #{_lambda_.1} parent=11 // pred_check_branch
        %959 = sbr.rel (%p957) target = $region148
      $region147: #{_lambda_.1} parent=11 // pred_region
        _
      $region148: #{_lambda_.1} parent=11 // pred_fallthru
        _
    $region12: #{_lambda_.1} parent=5 // pred_fallthru
      _
    %p960 = scmp.lt.s32.totalorder %s77, 2
    // Predicated region
    $region149: #{_lambda_.1} parent=5 // pred_check
      %p961 = pneg %p960
    $region150: #{_lambda_.1} parent=5 // pred_check_branch
      %963 = sbr.rel (%p961) target = $region152
    $region151: #{_lambda_.1} parent=5 // pred_region
      // Predicated region
      $region153: #{_lambda_.1} parent=151 // pred_check
        %p964 = pneg %p97
      $region154: #{_lambda_.1} parent=151 // pred_check_branch
        %966 = sbr.rel (%p964) target = $region156
      $region155: #{_lambda_.1} parent=151 // pred_region
        %p967 = scmp.lt.s32.totalorder %s77, 1
        %s968 = scalar_select %p967, %s77, 1
        %s969 = smul.addr %s968, 32
        %s970 = smul.addr %s969, 4
        %s971 = scalar_lea.vmem %s1, %s970
      $region156: #{_lambda_.1} parent=151 // pred_fallthru
        _
    $region152: #{_lambda_.1} parent=5 // pred_fallthru
      _
    %p972 = scmp.le.s32.totalorder 1, %s77
    %p973 = scmp.lt.s32.totalorder %s77, 3
    %p974 = pnand %p972, %p973
    %p975 = pneg %p974
    // Predicated region
    $region157: #{_lambda_.1} parent=5 // pred_check
      _
    $region158: #{_lambda_.1} parent=5 // pred_check_branch
      %977 = sbr.rel (%p974) target = $region160
    $region159: #{_lambda_.1} parent=5 // pred_region
      %s978 = ssub.s32 %s77, 1
      %p979 = scmp.lt.s32.totalorder %s82, 1
      %s980 = scalar_select %p979, %s82, 1
      %s981 = smul.addr %s980, 32
      %s982 = smul.addr %s981, 4
      %s983 = scalar_lea.vmem %s1, %s982
      %p984 = pneg %p103
      %p985 = pneg %p100
      %p986 = pneg %p124
      %p987 = pneg %p121
      %p988 = pneg %p145
      %p989 = pneg %p142
      %p990 = pneg %p166
      %p991 = pneg %p163
      %p992 = pneg %p187
      %p993 = pneg %p184
      %p994 = pneg %p208
      %p995 = pneg %p205
      %p996 = pneg %p229
      %p997 = pneg %p226
      %p998 = pneg %p250
      %p999 = pneg %p247
      %p1000 = pneg %p271
      %p1001 = pneg %p268
      %p1002 = pneg %p292
      %p1003 = pneg %p289
      %p1004 = pneg %p313
      %p1005 = pneg %p310
      %p1006 = pneg %p334
      %p1007 = pneg %p331
      %p1008 = pneg %p355
      %p1009 = pneg %p352
      %p1010 = pneg %p376
      %p1011 = pneg %p373
      %p1012 = pneg %p397
      %p1013 = pneg %p394
      %p1014 = pneg %p418
      %p1015 = pneg %p415
      %p1016 = pneg %p439
      %p1017 = pneg %p436
      %p1018 = pneg %p460
      %p1019 = pneg %p457
      %p1020 = pneg %p481
      %p1021 = pneg %p478
      %p1022 = pneg %p502
      %p1023 = pneg %p499
      %p1024 = pneg %p523
      %p1025 = pneg %p520
      %p1026 = pneg %p544
      %p1027 = pneg %p541
      %p1028 = pneg %p565
      %p1029 = pneg %p562
      %p1030 = pneg %p586
      %p1031 = pneg %p583
      %p1032 = pneg %p607
      %p1033 = pneg %p604
      %p1034 = pneg %p628
      %p1035 = pneg %p625
      %p1036 = pneg %p649
      %p1037 = pneg %p646
      %p1038 = pneg %p670
      %p1039 = pneg %p667
      %p1040 = pneg %p691
      %p1041 = pneg %p688
      %p1042 = pneg %p712
      %p1043 = pneg %p709
      %p1044 = pneg %p733
      %p1045 = pneg %p730
      %p1046 = pneg %p754
      %p1047 = pneg %p751
      %p1048 = pneg %p775
      %p1049 = pneg %p772
      %p1050 = pneg %p796
      %p1051 = pneg %p793
      %p1052 = pneg %p817
      %p1053 = pneg %p814
      %p1054 = pneg %p843
      %p1055 = pneg %p840
      %p1056 = scmp.lt.s32.totalorder %s82, 1
      %s1057 = scalar_select %p1056, %s82, 1
      %s1058 = smul.addr %s1057, 32
      %s1059 = smul.addr %s1058, 8
      %s1060 = scalar_lea.vmem %s71, %s1059
      %p1061 = scmp.lt.s32.totalorder %s82, 1
      %s1062 = scalar_select %p1061, %s82, 1
      %s1063 = smul.addr %s1062, 32
      %s1064 = smul.addr %s1063, 4
      %s1065 = scalar_lea.vmem %s1, %s1064
      %p1066 = scmp.lt.s32.totalorder %s82, 1
      %s1067 = scalar_select %p1066, %s82, 1
      %s1068 = smul.addr %s1067, 32
      %s1069 = smul.addr %s1068, 8
      %s1070 = scalar_lea.vmem %s71, %s1069
      %v1072 = vld [vmem:[%s1065] sm:$0xf]
      %v1073 = vld [vmem:[%s1065 + $0x4] sm:$0xf]
      %v1074 = vld [vmem:[%s1065 + $0x8] sm:$0xf]
      %v1075 = vld [vmem:[%s1065 + $0xc] sm:$0xf]
      %v1076 = vld [vmem:[%s1065 + $0x10] sm:$0xf]
      %v1077 = vld [vmem:[%s1065 + $0x14] sm:$0xf]
      %v1078 = vld [vmem:[%s1065 + $0x18] sm:$0xf]
      %v1079 = vld [vmem:[%s1065 + $0x1c] sm:$0xf]
      %v1080 = vld [vmem:[%s1065 + $0x20] sm:$0xf]
      %v1081 = vld [vmem:[%s1065 + $0x24] sm:$0xf]
      %v1082 = vld [vmem:[%s1065 + $0x28] sm:$0xf]
      %v1083 = vld [vmem:[%s1065 + $0x2c] sm:$0xf]
      %v1084 = vld [vmem:[%s1065 + $0x30] sm:$0xf]
      %v1085 = vld [vmem:[%s1065 + $0x34] sm:$0xf]
      %v1086 = vld [vmem:[%s1065 + $0x38] sm:$0xf]
      %v1087 = vld [vmem:[%s1065 + $0x3c] sm:$0xf]
      %v1088 = vld [vmem:[%s1065 + $0x40] sm:$0xf]
      %v1089 = vld [vmem:[%s1065 + $0x44] sm:$0xf]
      %v1090 = vld [vmem:[%s1065 + $0x48] sm:$0xf]
      %v1091 = vld [vmem:[%s1065 + $0x4c] sm:$0xf]
      %v1092 = vld [vmem:[%s1065 + $0x50] sm:$0xf]
      %v1093 = vld [vmem:[%s1065 + $0x54] sm:$0xf]
      %v1094 = vld [vmem:[%s1065 + $0x58] sm:$0xf]
      %v1095 = vld [vmem:[%s1065 + $0x5c] sm:$0xf]
      %v1096 = vld [vmem:[%s1065 + $0x60] sm:$0xf]
      %v1097 = vld [vmem:[%s1065 + $0x64] sm:$0xf]
      %v1098 = vld [vmem:[%s1065 + $0x68] sm:$0xf]
      %v1099 = vld [vmem:[%s1065 + $0x6c] sm:$0xf]
      %v1100 = vld [vmem:[%s1065 + $0x70] sm:$0xf]
      %v1101 = vld [vmem:[%s1065 + $0x74] sm:$0xf]
      %v1102 = vld [vmem:[%s1065 + $0x78] sm:$0xf]
      %v1103 = vld [vmem:[%s1065 + $0x7c] sm:$0xf]
      %v1104 = vld [vmem:[%s3] sm:$0xf]
      %v1105 = vld [vmem:[%s3 + $0x4] sm:$0xf]
      %v1106 = vld [vmem:[%s3 + $0x8] sm:$0xf]
      %v1107 = vld [vmem:[%s3 + $0xc] sm:$0xf]
      %v1140 = vunpack.c.l.b16 %v1072
      %v1141 = vunpack.c.l.b16 %v1073
      %v1142 = vunpack.c.l.b16 %v1074
      %v1143 = vunpack.c.l.b16 %v1075
      %v1144 = vunpack.c.l.b16 %v1076
      %v1145 = vunpack.c.l.b16 %v1077
      %v1146 = vunpack.c.l.b16 %v1078
      %v1147 = vunpack.c.l.b16 %v1079
      %v1148 = vunpack.c.l.b16 %v1080
      %v1149 = vunpack.c.l.b16 %v1081
      %v1150 = vunpack.c.l.b16 %v1082
      %v1151 = vunpack.c.l.b16 %v1083
      %v1152 = vunpack.c.l.b16 %v1084
      %v1153 = vunpack.c.l.b16 %v1085
      %v1154 = vunpack.c.l.b16 %v1086
      %v1155 = vunpack.c.l.b16 %v1087
      %v1156 = vunpack.c.l.b16 %v1088
      %v1157 = vunpack.c.l.b16 %v1089
      %v1158 = vunpack.c.l.b16 %v1090
      %v1159 = vunpack.c.l.b16 %v1091
      %v1160 = vunpack.c.l.b16 %v1092
      %v1161 = vunpack.c.l.b16 %v1093
      %v1162 = vunpack.c.l.b16 %v1094
      %v1163 = vunpack.c.l.b16 %v1095
      %v1164 = vunpack.c.l.b16 %v1096
      %v1165 = vunpack.c.l.b16 %v1097
      %v1166 = vunpack.c.l.b16 %v1098
      %v1167 = vunpack.c.l.b16 %v1099
      %v1168 = vunpack.c.l.b16 %v1100
      %v1169 = vunpack.c.l.b16 %v1101
      %v1170 = vunpack.c.l.b16 %v1102
      %v1171 = vunpack.c.l.b16 %v1103
      %v1172 = vpack.c.b16 %v1141, %v1140
      %v1173 = vpack.c.b16 %v1143, %v1142
      %v1174 = vpack.c.b16 %v1145, %v1144
      %v1175 = vpack.c.b16 %v1147, %v1146
      %v1176 = vpack.c.b16 %v1149, %v1148
      %v1177 = vpack.c.b16 %v1151, %v1150
      %v1178 = vpack.c.b16 %v1153, %v1152
      %v1179 = vpack.c.b16 %v1155, %v1154
      %v1180 = vpack.c.b16 %v1157, %v1156
      %v1181 = vpack.c.b16 %v1159, %v1158
      %v1182 = vpack.c.b16 %v1161, %v1160
      %v1183 = vpack.c.b16 %v1163, %v1162
      %v1184 = vpack.c.b16 %v1165, %v1164
      %v1185 = vpack.c.b16 %v1167, %v1166
      %v1186 = vpack.c.b16 %v1169, %v1168
      %v1187 = vpack.c.b16 %v1171, %v1170
      %v1192 = vunpack.c.l.b16 %v1104
      %v1193 = vunpack.c.l.b16 %v1105
      %v1194 = vunpack.c.l.b16 %v1106
      %v1195 = vunpack.c.l.b16 %v1107
      %v1196 = vpack.c.b16 %v1193, %v1192
      %v1197 = vpack.c.b16 %v1195, %v1194
      %vm1200 = vcmask 261120
      %v1202 = vsel %vm1200, %v1172, 0
      %v1205 = vsel %vm1200, %v1173, 0
      %v1208 = vsel %vm1200, %v1174, 0
      %v1211 = vsel %vm1200, %v1175, 0
      %v1214 = vsel %vm1200, %v1176, 0
      %v1217 = vsel %vm1200, %v1177, 0
      %v1220 = vsel %vm1200, %v1178, 0
      %v1223 = vsel %vm1200, %v1179, 0
      %v1226 = vsel %vm1200, %v1180, 0
      %v1229 = vsel %vm1200, %v1181, 0
      %v1232 = vsel %vm1200, %v1182, 0
      %v1235 = vsel %vm1200, %v1183, 0
      %v1238 = vsel %vm1200, %v1184, 0
      %v1241 = vsel %vm1200, %v1185, 0
      %v1244 = vsel %vm1200, %v1186, 0
      %v1247 = vsel %vm1200, %v1187, 0
      %1249 = vmatprep.subr.bf16.mxu0 0
      %1250 = vmatpush1.bf16.msra.mxu0 %v1196
      %1251 = vmatprep.subr.bf16.mxu0 0
      %1252 = vmatpush1.bf16.msra.mxu0 %v1197
      %1253 = vmatprep.subr.bf16.mxu0 0
      %1254 = vmatpush1.bf16.msra.mxu0 0
      %1255 = vmatprep.subr.bf16.mxu0 0
      %1256 = vmatpush1.bf16.msra.mxu0 0
      %1257 = vmatprep.subr.bf16.mxu0 0
      %1258 = vmatpush1.bf16.msra.mxu0 0
      %1259 = vmatprep.subr.bf16.mxu0 0
      %1260 = vmatpush1.bf16.msra.mxu0 0
      %1261 = vmatprep.subr.bf16.mxu0 0
      %1262 = vmatpush1.bf16.msra.mxu0 0
      %1263 = vmatprep.subr.bf16.mxu0 0
      %1264 = vmatpush1.bf16.msra.mxu0 0
      %1265 = vmatprep.subr.bf16.mxu0 0
      %1266 = vmatpush1.bf16.msra.mxu0 0
      %1267 = vmatprep.subr.bf16.mxu0 0
      %1268 = vmatpush1.bf16.msra.mxu0 0
      %1269 = vmatprep.subr.bf16.mxu0 0
      %1270 = vmatpush1.bf16.msra.mxu0 0
      %1271 = vmatprep.subr.bf16.mxu0 0
      %1272 = vmatpush1.bf16.msra.mxu0 0
      %1273 = vmatprep.subr.bf16.mxu0 0
      %1274 = vmatpush1.bf16.msra.mxu0 0
      %1275 = vmatprep.subr.bf16.mxu0 0
      %1276 = vmatpush1.bf16.msra.mxu0 0
      %1277 = vmatprep.subr.bf16.mxu0 0
      %1278 = vmatpush1.bf16.msra.mxu0 0
      %1279 = vmatprep.subr.bf16.mxu0 0
      %1280 = vmatpush1.bf16.msra.mxu0 0
      %1281 = vmatprep.mubr.bf16.mxu0 0
      %1282 = vmatmul.mubr.bf16.gmra.mrb[0].mxu0 %v1202
      %v1283 = vpop.f32.mrb[0].mxu0
      %v1284 = vadd.f32 0.0, %v1283
      %v1285 = vpop.f32.mrb[0].mxu0
      %v1286 = vpop.f32.mrb[0].mxu0
      %v1287 = vadd.f32 0.0, %v1286
      %v1288 = vpop.f32.mrb[0].mxu0
      %1289 = vmatprep.mubr.bf16.mxu0 0
      %1290 = vmatmul.mubr.bf16.gmra.mrb[0].mxu0 %v1205
      %v1291 = vpop.f32.mrb[0].mxu0
      %v1292 = vadd.f32 0.0, %v1291
      %v1293 = vpop.f32.mrb[0].mxu0
      %v1294 = vpop.f32.mrb[0].mxu0
      %v1295 = vadd.f32 0.0, %v1294
      %v1296 = vpop.f32.mrb[0].mxu0
      %1297 = vmatprep.mubr.bf16.mxu0 0
      %1298 = vmatmul.mubr.bf16.gmra.mrb[0].mxu0 %v1208
      %v1299 = vpop.f32.mrb[0].mxu0
      %v1300 = vadd.f32 0.0, %v1299
      %v1301 = vpop.f32.mrb[0].mxu0
      %v1302 = vpop.f32.mrb[0].mxu0
      %v1303 = vadd.f32 0.0, %v1302
      %v1304 = vpop.f32.mrb[0].mxu0
      %1305 = vmatprep.mubr.bf16.mxu0 0
      %1306 = vmatmul.mubr.bf16.gmra.mrb[0].mxu0 %v1211
      %v1307 = vpop.f32.mrb[0].mxu0
      %v1308 = vadd.f32 0.0, %v1307
      %v1309 = vpop.f32.mrb[0].mxu0
      %v1310 = vpop.f32.mrb[0].mxu0
      %v1311 = vadd.f32 0.0, %v1310
      %v1312 = vpop.f32.mrb[0].mxu0
      %1313 = vmatprep.mubr.bf16.mxu0 0
      %1314 = vmatmul.mubr.bf16.gmra.mrb[0].mxu0 %v1214
      %v1315 = vpop.f32.mrb[0].mxu0
      %v1316 = vadd.f32 0.0, %v1315
      %v1317 = vpop.f32.mrb[0].mxu0
      %v1318 = vpop.f32.mrb[0].mxu0
      %v1319 = vadd.f32 0.0, %v1318
      %v1320 = vpop.f32.mrb[0].mxu0
      %1321 = vmatprep.mubr.bf16.mxu0 0
      %1322 = vmatmul.mubr.bf16.gmra.mrb[0].mxu0 %v1217
      %v1323 = vpop.f32.mrb[0].mxu0
      %v1324 = vadd.f32 0.0, %v1323
      %v1325 = vpop.f32.mrb[0].mxu0
      %v1326 = vpop.f32.mrb[0].mxu0
      %v1327 = vadd.f32 0.0, %v1326
      %v1328 = vpop.f32.mrb[0].mxu0
      %1329 = vmatprep.mubr.bf16.mxu0 0
      %1330 = vmatmul.mubr.bf16.gmra.mrb[0].mxu0 %v1220
      %v1331 = vpop.f32.mrb[0].mxu0
      %v1332 = vadd.f32 0.0, %v1331
      %v1333 = vpop.f32.mrb[0].mxu0
      %v1334 = vpop.f32.mrb[0].mxu0
      %v1335 = vadd.f32 0.0, %v1334
      %v1336 = vpop.f32.mrb[0].mxu0
      %1337 = vmatprep.mubr.bf16.mxu0 0
      %1338 = vmatmul.mubr.bf16.gmra.mrb[0].mxu0 %v1223
      %v1339 = vpop.f32.mrb[0].mxu0
      %v1340 = vadd.f32 0.0, %v1339
      %v1341 = vpop.f32.mrb[0].mxu0
      %v1342 = vpop.f32.mrb[0].mxu0
      %v1343 = vadd.f32 0.0, %v1342
      %v1344 = vpop.f32.mrb[0].mxu0
      %1345 = vmatprep.mubr.bf16.mxu0 0
      %1346 = vmatmul.mubr.bf16.gmra.mrb[0].mxu0 %v1226
      %v1347 = vpop.f32.mrb[0].mxu0
      %v1348 = vadd.f32 0.0, %v1347
      %v1349 = vpop.f32.mrb[0].mxu0
      %v1350 = vpop.f32.mrb[0].mxu0
      %v1351 = vadd.f32 0.0, %v1350
      %v1352 = vpop.f32.mrb[0].mxu0
      %1353 = vmatprep.mubr.bf16.mxu0 0
      %1354 = vmatmul.mubr.bf16.gmra.mrb[0].mxu0 %v1229
      %v1355 = vpop.f32.mrb[0].mxu0
      %v1356 = vadd.f32 0.0, %v1355
      %v1357 = vpop.f32.mrb[0].mxu0
      %v1358 = vpop.f32.mrb[0].mxu0
      %v1359 = vadd.f32 0.0, %v1358
      %v1360 = vpop.f32.mrb[0].mxu0
      %1361 = vmatprep.mubr.bf16.mxu0 0
      %1362 = vmatmul.mubr.bf16.gmra.mrb[0].mxu0 %v1232
      %v1363 = vpop.f32.mrb[0].mxu0
      %v1364 = vadd.f32 0.0, %v1363
      %v1365 = vpop.f32.mrb[0].mxu0
      %v1366 = vpop.f32.mrb[0].mxu0
      %v1367 = vadd.f32 0.0, %v1366
      %v1368 = vpop.f32.mrb[0].mxu0
      %1369 = vmatprep.mubr.bf16.mxu0 0
      %1370 = vmatmul.mubr.bf16.gmra.mrb[0].mxu0 %v1235
      %v1371 = vpop.f32.mrb[0].mxu0
      %v1372 = vadd.f32 0.0, %v1371
      %v1373 = vpop.f32.mrb[0].mxu0
      %v1374 = vpop.f32.mrb[0].mxu0
      %v1375 = vadd.f32 0.0, %v1374
      %v1376 = vpop.f32.mrb[0].mxu0
      %1377 = vmatprep.mubr.bf16.mxu0 0
      %1378 = vmatmul.mubr.bf16.gmra.mrb[0].mxu0 %v1238
      %v1379 = vpop.f32.mrb[0].mxu0
      %v1380 = vadd.f32 0.0, %v1379
      %v1381 = vpop.f32.mrb[0].mxu0
      %v1382 = vpop.f32.mrb[0].mxu0
      %v1383 = vadd.f32 0.0, %v1382
      %v1384 = vpop.f32.mrb[0].mxu0
      %1385 = vmatprep.mubr.bf16.mxu0 0
      %1386 = vmatmul.mubr.bf16.gmra.mrb[0].mxu0 %v1241
      %v1387 = vpop.f32.mrb[0].mxu0
      %v1388 = vadd.f32 0.0, %v1387
      %v1389 = vpop.f32.mrb[0].mxu0
      %v1390 = vpop.f32.mrb[0].mxu0
      %v1391 = vadd.f32 0.0, %v1390
      %v1392 = vpop.f32.mrb[0].mxu0
      %1393 = vmatprep.mubr.bf16.mxu0 0
      %1394 = vmatmul.mubr.bf16.gmra.mrb[0].mxu0 %v1244
      %v1395 = vpop.f32.mrb[0].mxu0
      %v1396 = vadd.f32 0.0, %v1395
      %v1397 = vpop.f32.mrb[0].mxu0
      %v1398 = vpop.f32.mrb[0].mxu0
      %v1399 = vadd.f32 0.0, %v1398
      %v1400 = vpop.f32.mrb[0].mxu0
      %1401 = vmatprep.mubr.bf16.mxu0 0
      %1402 = vmatmul.mubr.bf16.gmra.mrb[0].mxu0 %v1247
      %v1403 = vpop.f32.mrb[0].mxu0
      %v1404 = vadd.f32 0.0, %v1403
      %v1405 = vpop.f32.mrb[0].mxu0
      %v1406 = vpop.f32.mrb[0].mxu0
      %v1407 = vadd.f32 0.0, %v1406
      %v1408 = vpop.f32.mrb[0].mxu0
      %1409 = vdwg.mxu0
      %v1410 = vld [vmem:[%s5] sm:$0x1]
      %v1412 = vlaneseq
      %v1413 = vshrl.u32 %v1412, 7
      %v1414 = vsub.s32 0, %v1413
      %v1415 = vrot.slane %v1410, %v1414
      %v1417 = vmul.f32 %v1284, %v1415
      %v1418 = vmul.f32 %v1287, %v1415
      %v1419 = vmul.f32 %v1292, %v1415
      %v1420 = vmul.f32 %v1295, %v1415
      %v1421 = vmul.f32 %v1300, %v1415
      %v1422 = vmul.f32 %v1303, %v1415
      %v1423 = vmul.f32 %v1308, %v1415
      %v1424 = vmul.f32 %v1311, %v1415
      %v1425 = vmul.f32 %v1316, %v1415
      %v1426 = vmul.f32 %v1319, %v1415
      %v1427 = vmul.f32 %v1324, %v1415
      %v1428 = vmul.f32 %v1327, %v1415
      %v1429 = vmul.f32 %v1332, %v1415
      %v1430 = vmul.f32 %v1335, %v1415
      %v1431 = vmul.f32 %v1340, %v1415
      %v1432 = vmul.f32 %v1343, %v1415
      %v1433 = vmul.f32 %v1348, %v1415
      %v1434 = vmul.f32 %v1351, %v1415
      %v1435 = vmul.f32 %v1356, %v1415
      %v1436 = vmul.f32 %v1359, %v1415
      %v1437 = vmul.f32 %v1364, %v1415
      %v1438 = vmul.f32 %v1367, %v1415
      %v1439 = vmul.f32 %v1372, %v1415
      %v1440 = vmul.f32 %v1375, %v1415
      %v1441 = vmul.f32 %v1380, %v1415
      %v1442 = vmul.f32 %v1383, %v1415
      %v1443 = vmul.f32 %v1388, %v1415
      %v1444 = vmul.f32 %v1391, %v1415
      %v1445 = vmul.f32 %v1396, %v1415
      %v1446 = vmul.f32 %v1399, %v1415
      %v1447 = vmul.f32 %v1404, %v1415
      %v1448 = vmul.f32 %v1407, %v1415
      %v1449 = vld [vmem:[%s7] sm:$0x1]
      %v1451 = vlaneseq
      %v1452 = vshrl.u32 %v1451, 7
      %v1453 = vsub.s32 0, %v1452
      %v1454 = vrot.slane %v1449, %v1453
      %v1456 = vadd.f32 %v1417, %v1454
      %v1457 = vadd.f32 %v1418, %v1454
      %v1458 = vadd.f32 %v1419, %v1454
      %v1459 = vadd.f32 %v1420, %v1454
      %v1460 = vadd.f32 %v1421, %v1454
      %v1461 = vadd.f32 %v1422, %v1454
      %v1462 = vadd.f32 %v1423, %v1454
      %v1463 = vadd.f32 %v1424, %v1454
      %v1464 = vadd.f32 %v1425, %v1454
      %v1465 = vadd.f32 %v1426, %v1454
      %v1466 = vadd.f32 %v1427, %v1454
      %v1467 = vadd.f32 %v1428, %v1454
      %v1468 = vadd.f32 %v1429, %v1454
      %v1469 = vadd.f32 %v1430, %v1454
      %v1470 = vadd.f32 %v1431, %v1454
      %v1471 = vadd.f32 %v1432, %v1454
      %v1472 = vadd.f32 %v1433, %v1454
      %v1473 = vadd.f32 %v1434, %v1454
      %v1474 = vadd.f32 %v1435, %v1454
      %v1475 = vadd.f32 %v1436, %v1454
      %v1476 = vadd.f32 %v1437, %v1454
      %v1477 = vadd.f32 %v1438, %v1454
      %v1478 = vadd.f32 %v1439, %v1454
      %v1479 = vadd.f32 %v1440, %v1454
      %v1480 = vadd.f32 %v1441, %v1454
      %v1481 = vadd.f32 %v1442, %v1454
      %v1482 = vadd.f32 %v1443, %v1454
      %v1483 = vadd.f32 %v1444, %v1454
      %v1484 = vadd.f32 %v1445, %v1454
      %v1485 = vadd.f32 %v1446, %v1454
      %v1486 = vadd.f32 %v1447, %v1454
      %v1487 = vadd.f32 %v1448, %v1454
      %v1488 = vmax.f32 %v1456, 0.0
      %v1489 = vmax.f32 %v1457, 0.0
      %v1490 = vmax.f32 %v1458, 0.0
      %v1491 = vmax.f32 %v1459, 0.0
      %v1492 = vmax.f32 %v1460, 0.0
      %v1493 = vmax.f32 %v1461, 0.0
      %v1494 = vmax.f32 %v1462, 0.0
      %v1495 = vmax.f32 %v1463, 0.0
      %v1496 = vmax.f32 %v1464, 0.0
      %v1497 = vmax.f32 %v1465, 0.0
      %v1498 = vmax.f32 %v1466, 0.0
      %v1499 = vmax.f32 %v1467, 0.0
      %v1500 = vmax.f32 %v1468, 0.0
      %v1501 = vmax.f32 %v1469, 0.0
      %v1502 = vmax.f32 %v1470, 0.0
      %v1503 = vmax.f32 %v1471, 0.0
      %v1504 = vmax.f32 %v1472, 0.0
      %v1505 = vmax.f32 %v1473, 0.0
      %v1506 = vmax.f32 %v1474, 0.0
      %v1507 = vmax.f32 %v1475, 0.0
      %v1508 = vmax.f32 %v1476, 0.0
      %v1509 = vmax.f32 %v1477, 0.0
      %v1510 = vmax.f32 %v1478, 0.0
      %v1511 = vmax.f32 %v1479, 0.0
      %v1512 = vmax.f32 %v1480, 0.0
      %v1513 = vmax.f32 %v1481, 0.0
      %v1514 = vmax.f32 %v1482, 0.0
      %v1515 = vmax.f32 %v1483, 0.0
      %v1516 = vmax.f32 %v1484, 0.0
      %v1517 = vmax.f32 %v1485, 0.0
      %v1518 = vmax.f32 %v1486, 0.0
      %v1519 = vmax.f32 %v1487, 0.0
      %v1520 = vld [vmem:[%s9] sm:$0xff]
      %v1521 = vld [vmem:[%s9 + $0x8] sm:$0xff]
      %v1522 = vld [vmem:[%s9 + $0x10] sm:$0xff]
      %v1523 = vld [vmem:[%s9 + $0x18] sm:$0xff]
      %v1524 = vld [vmem:[%s9 + $0x20] sm:$0xff]
      %v1525 = vld [vmem:[%s9 + $0x28] sm:$0xff]
      %v1526 = vld [vmem:[%s9 + $0x30] sm:$0xff]
      %v1527 = vld [vmem:[%s9 + $0x38] sm:$0xff]
      %v1528 = vld [vmem:[%s9 + $0x40] sm:$0xff]
      %v1529 = vld [vmem:[%s9 + $0x48] sm:$0xff]
      %v1530 = vld [vmem:[%s9 + $0x50] sm:$0xff]
      %v1531 = vld [vmem:[%s9 + $0x58] sm:$0xff]
      %v1532 = vld [vmem:[%s9 + $0x60] sm:$0xff]
      %v1533 = vld [vmem:[%s9 + $0x68] sm:$0xff]
      %v1534 = vld [vmem:[%s9 + $0x70] sm:$0xff]
      %v1535 = vld [vmem:[%s9 + $0x78] sm:$0xff]
      %v1536 = vld [vmem:[%s9 + $0x80] sm:$0xff]
      %v1537 = vld [vmem:[%s9 + $0x88] sm:$0xff]
      %v1538 = vld [vmem:[%s9 + $0x90] sm:$0xff]
      %v1539 = vld [vmem:[%s9 + $0x98] sm:$0xff]
      %v1540 = vld [vmem:[%s9 + $0xa0] sm:$0xff]
      %v1541 = vld [vmem:[%s9 + $0xa8] sm:$0xff]
      %v1542 = vld [vmem:[%s9 + $0xb0] sm:$0xff]
      %v1543 = vld [vmem:[%s9 + $0xb8] sm:$0xff]
      %v1544 = vld [vmem:[%s9 + $0xc0] sm:$0xff]
      %v1545 = vld [vmem:[%s9 + $0xc8] sm:$0xff]
      %v1546 = vld [vmem:[%s9 + $0xd0] sm:$0xff]
      %v1547 = vld [vmem:[%s9 + $0xd8] sm:$0xff]
      %v1548 = vld [vmem:[%s9 + $0xe0] sm:$0xff]
      %v1549 = vld [vmem:[%s9 + $0xe8] sm:$0xff]
      %v1550 = vld [vmem:[%s9 + $0xf0] sm:$0xff]
      %v1551 = vld [vmem:[%s9 + $0xf8] sm:$0xff]
      %v1552 = vpack.c.bf16 %v1489, %v1488
      %v1553 = vpack.c.bf16 %v1491, %v1490
      %v1554 = vpack.c.bf16 %v1493, %v1492
      %v1555 = vpack.c.bf16 %v1495, %v1494
      %v1556 = vpack.c.bf16 %v1497, %v1496
      %v1557 = vpack.c.bf16 %v1499, %v1498
      %v1558 = vpack.c.bf16 %v1501, %v1500
      %v1559 = vpack.c.bf16 %v1503, %v1502
      %v1560 = vpack.c.bf16 %v1505, %v1504
      %v1561 = vpack.c.bf16 %v1507, %v1506
      %v1562 = vpack.c.bf16 %v1509, %v1508
      %v1563 = vpack.c.bf16 %v1511, %v1510
      %v1564 = vpack.c.bf16 %v1513, %v1512
      %v1565 = vpack.c.bf16 %v1515, %v1514
      %v1566 = vpack.c.bf16 %v1517, %v1516
      %v1567 = vpack.c.bf16 %v1519, %v1518
      %v1600 = vunpack.c.l.b16 %v1520
      %v1601 = vunpack.c.h.b16 %v1520
      %v1602 = vunpack.c.l.b16 %v1521
      %v1603 = vunpack.c.h.b16 %v1521
      %v1604 = vunpack.c.l.b16 %v1522
      %v1605 = vunpack.c.h.b16 %v1522
      %v1606 = vunpack.c.l.b16 %v1523
      %v1607 = vunpack.c.h.b16 %v1523
      %v1608 = vunpack.c.l.b16 %v1524
      %v1609 = vunpack.c.h.b16 %v1524
      %v1610 = vunpack.c.l.b16 %v1525
      %v1611 = vunpack.c.h.b16 %v1525
      %v1612 = vunpack.c.l.b16 %v1526
      %v1613 = vunpack.c.h.b16 %v1526
      %v1614 = vunpack.c.l.b16 %v1527
      %v1615 = vunpack.c.h.b16 %v1527
      %v1616 = vunpack.c.l.b16 %v1528
      %v1617 = vunpack.c.h.b16 %v1528
      %v1618 = vunpack.c.l.b16 %v1529
      %v1619 = vunpack.c.h.b16 %v1529
      %v1620 = vunpack.c.l.b16 %v1530
      %v1621 = vunpack.c.h.b16 %v1530
      %v1622 = vunpack.c.l.b16 %v1531
      %v1623 = vunpack.c.h.b16 %v1531
      %v1624 = vunpack.c.l.b16 %v1532
      %v1625 = vunpack.c.h.b16 %v1532
      %v1626 = vunpack.c.l.b16 %v1533
      %v1627 = vunpack.c.h.b16 %v1533
      %v1628 = vunpack.c.l.b16 %v1534
      %v1629 = vunpack.c.h.b16 %v1534
      %v1630 = vunpack.c.l.b16 %v1535
      %v1631 = vunpack.c.h.b16 %v1535
      %v1632 = vunpack.c.l.b16 %v1536
      %v1633 = vunpack.c.h.b16 %v1536
      %v1634 = vunpack.c.l.b16 %v1537
      %v1635 = vunpack.c.h.b16 %v1537
      %v1636 = vunpack.c.l.b16 %v1538
      %v1637 = vunpack.c.h.b16 %v1538
      %v1638 = vunpack.c.l.b16 %v1539
      %v1639 = vunpack.c.h.b16 %v1539
      %v1640 = vunpack.c.l.b16 %v1540
      %v1641 = vunpack.c.h.b16 %v1540
      %v1642 = vunpack.c.l.b16 %v1541
      %v1643 = vunpack.c.h.b16 %v1541
      %v1644 = vunpack.c.l.b16 %v1542
      %v1645 = vunpack.c.h.b16 %v1542
      %v1646 = vunpack.c.l.b16 %v1543
      %v1647 = vunpack.c.h.b16 %v1543
      %v1648 = vunpack.c.l.b16 %v1544
      %v1649 = vunpack.c.h.b16 %v1544
      %v1650 = vunpack.c.l.b16 %v1545
      %v1651 = vunpack.c.h.b16 %v1545
      %v1652 = vunpack.c.l.b16 %v1546
      %v1653 = vunpack.c.h.b16 %v1546
      %v1654 = vunpack.c.l.b16 %v1547
      %v1655 = vunpack.c.h.b16 %v1547
      %v1656 = vunpack.c.l.b16 %v1548
      %v1657 = vunpack.c.h.b16 %v1548
      %v1658 = vunpack.c.l.b16 %v1549
      %v1659 = vunpack.c.h.b16 %v1549
      %v1660 = vunpack.c.l.b16 %v1550
      %v1661 = vunpack.c.h.b16 %v1550
      %v1662 = vunpack.c.l.b16 %v1551
      %v1663 = vunpack.c.h.b16 %v1551
      %v1664 = vpack.c.b16 %v1602, %v1600
      %v1665 = vpack.c.b16 %v1603, %v1601
      %v1666 = vpack.c.b16 %v1606, %v1604
      %v1667 = vpack.c.b16 %v1607, %v1605
      %v1668 = vpack.c.b16 %v1610, %v1608
      %v1669 = vpack.c.b16 %v1611, %v1609
      %v1670 = vpack.c.b16 %v1614, %v1612
      %v1671 = vpack.c.b16 %v1615, %v1613
      %v1672 = vpack.c.b16 %v1618, %v1616
      %v1673 = vpack.c.b16 %v1619, %v1617
      %v1674 = vpack.c.b16 %v1622, %v1620
      %v1675 = vpack.c.b16 %v1623, %v1621
      %v1676 = vpack.c.b16 %v1626, %v1624
      %v1677 = vpack.c.b16 %v1627, %v1625
      %v1678 = vpack.c.b16 %v1630, %v1628
      %v1679 = vpack.c.b16 %v1631, %v1629
      %v1680 = vpack.c.b16 %v1634, %v1632
      %v1681 = vpack.c.b16 %v1635, %v1633
      %v1682 = vpack.c.b16 %v1638, %v1636
      %v1683 = vpack.c.b16 %v1639, %v1637
      %v1684 = vpack.c.b16 %v1642, %v1640
      %v1685 = vpack.c.b16 %v1643, %v1641
      %v1686 = vpack.c.b16 %v1646, %v1644
      %v1687 = vpack.c.b16 %v1647, %v1645
      %v1688 = vpack.c.b16 %v1650, %v1648
      %v1689 = vpack.c.b16 %v1651, %v1649
      %v1690 = vpack.c.b16 %v1654, %v1652
      %v1691 = vpack.c.b16 %v1655, %v1653
      %v1692 = vpack.c.b16 %v1658, %v1656
      %v1693 = vpack.c.b16 %v1659, %v1657
      %v1694 = vpack.c.b16 %v1662, %v1660
      %v1695 = vpack.c.b16 %v1663, %v1661
      %1728 = vmatprep.subr.bf16.mxu0 0
      %1729 = vmatpush1.bf16.msra.mxu0 %v1552
      %1730 = vmatprep.subr.bf16.mxu0 0
      %1731 = vmatpush1.bf16.msra.mxu0 %v1553
      %1732 = vmatprep.subr.bf16.mxu0 0
      %1733 = vmatpush1.bf16.msra.mxu0 %v1554
      %1734 = vmatprep.subr.bf16.mxu0 0
      %1735 = vmatpush1.bf16.msra.mxu0 %v1555
      %1736 = vmatprep.subr.bf16.mxu0 0
      %1737 = vmatpush1.bf16.msra.mxu0 %v1556
      %1738 = vmatprep.subr.bf16.mxu0 0
      %1739 = vmatpush1.bf16.msra.mxu0 %v1557
      %1740 = vmatprep.subr.bf16.mxu0 0
      %1741 = vmatpush1.bf16.msra.mxu0 %v1558
      %1742 = vmatprep.subr.bf16.mxu0 0
      %1743 = vmatpush1.bf16.msra.mxu0 %v1559
      %1744 = vmatprep.subr.bf16.mxu0 0
      %1745 = vmatpush1.bf16.msra.mxu0 %v1560
      %1746 = vmatprep.subr.bf16.mxu0 0
      %1747 = vmatpush1.bf16.msra.mxu0 %v1561
      %1748 = vmatprep.subr.bf16.mxu0 0
      %1749 = vmatpush1.bf16.msra.mxu0 %v1562
      %1750 = vmatprep.subr.bf16.mxu0 0
      %1751 = vmatpush1.bf16.msra.mxu0 %v1563
      %1752 = vmatprep.subr.bf16.mxu0 0
      %1753 = vmatpush1.bf16.msra.mxu0 %v1564
      %1754 = vmatprep.subr.bf16.mxu0 0
      %1755 = vmatpush1.bf16.msra.mxu0 %v1565
      %1756 = vmatprep.subr.bf16.mxu0 0
      %1757 = vmatpush1.bf16.msra.mxu0 %v1566
      %1758 = vmatprep.subr.bf16.mxu0 0
      %1759 = vmatpush1.bf16.msra.mxu0 %v1567
      %1760 = vmatprep.mubr.bf16.mxu0 %v1665
      %1761 = vmatmul.mubr.bf16.gmra.mrb[0].mxu0 %v1664
      %v1762 = vpop.f32.mrb[0].mxu0
      %v1763 = vadd.f32 0.0, %v1762
      %v1764 = vpop.f32.mrb[0].mxu0
      %v1765 = vpop.f32.mrb[0].mxu0
      %v1766 = vadd.f32 0.0, %v1765
      %v1767 = vpop.f32.mrb[0].mxu0
      %1768 = vmatprep.mubr.bf16.mxu0 %v1667
      %1769 = vmatmul.mubr.bf16.gmra.mrb[0].mxu0 %v1666
      %v1770 = vpop.f32.mrb[0].mxu0
      %v1771 = vadd.f32 0.0, %v1770
      %v1772 = vpop.f32.mrb[0].mxu0
      %v1773 = vpop.f32.mrb[0].mxu0
      %v1774 = vadd.f32 0.0, %v1773
      %v1775 = vpop.f32.mrb[0].mxu0
      %1776 = vmatprep.mubr.bf16.mxu0 %v1669
      %1777 = vmatmul.mubr.bf16.gmra.mrb[0].mxu0 %v1668
      %v1778 = vpop.f32.mrb[0].mxu0
      %v1779 = vadd.f32 0.0, %v1778
      %v1780 = vpop.f32.mrb[0].mxu0
      %v1781 = vpop.f32.mrb[0].mxu0
      %v1782 = vadd.f32 0.0, %v1781
      %v1783 = vpop.f32.mrb[0].mxu0
      %1784 = vmatprep.mubr.bf16.mxu0 %v1671
      %1785 = vmatmul.mubr.bf16.gmra.mrb[0].mxu0 %v1670
      %v1786 = vpop.f32.mrb[0].mxu0
      %v1787 = vadd.f32 0.0, %v1786
      %v1788 = vpop.f32.mrb[0].mxu0
      %v1789 = vpop.f32.mrb[0].mxu0
      %v1790 = vadd.f32 0.0, %v1789
      %v1791 = vpop.f32.mrb[0].mxu0
      %1792 = vmatprep.mubr.bf16.mxu0 %v1673
      %1793 = vmatmul.mubr.bf16.gmra.mrb[0].mxu0 %v1672
      %v1794 = vpop.f32.mrb[0].mxu0
      %v1795 = vadd.f32 0.0, %v1794
      %v1796 = vpop.f32.mrb[0].mxu0
      %v1797 = vpop.f32.mrb[0].mxu0
      %v1798 = vadd.f32 0.0, %v1797
      %v1799 = vpop.f32.mrb[0].mxu0
      %1800 = vmatprep.mubr.bf16.mxu0 %v1675
      %1801 = vmatmul.mubr.bf16.gmra.mrb[0].mxu0 %v1674
      %v1802 = vpop.f32.mrb[0].mxu0
      %v1803 = vadd.f32 0.0, %v1802
      %v1804 = vpop.f32.mrb[0].mxu0
      %v1805 = vpop.f32.mrb[0].mxu0
      %v1806 = vadd.f32 0.0, %v1805
      %v1807 = vpop.f32.mrb[0].mxu0
      %1808 = vmatprep.mubr.bf16.mxu0 %v1677
      %1809 = vmatmul.mubr.bf16.gmra.mrb[0].mxu0 %v1676
      %v1810 = vpop.f32.mrb[0].mxu0
      %v1811 = vadd.f32 0.0, %v1810
      %v1812 = vpop.f32.mrb[0].mxu0
      %v1813 = vpop.f32.mrb[0].mxu0
      %v1814 = vadd.f32 0.0, %v1813
      %v1815 = vpop.f32.mrb[0].mxu0
      %1816 = vmatprep.mubr.bf16.mxu0 %v1679
      %1817 = vmatmul.mubr.bf16.gmra.mrb[0].mxu0 %v1678
      %v1818 = vpop.f32.mrb[0].mxu0
      %v1819 = vadd.f32 0.0, %v1818
      %v1820 = vpop.f32.mrb[0].mxu0
      %v1821 = vpop.f32.mrb[0].mxu0
      %v1822 = vadd.f32 0.0, %v1821
      %v1823 = vpop.f32.mrb[0].mxu0
      %1824 = vmatprep.mubr.bf16.mxu0 %v1681
      %1825 = vmatmul.mubr.bf16.gmra.mrb[0].mxu0 %v1680
      %v1826 = vpop.f32.mrb[0].mxu0
      %v1827 = vadd.f32 0.0, %v1826
      %v1828 = vpop.f32.mrb[0].mxu0
      %v1829 = vpop.f32.mrb[0].mxu0
      %v1830 = vadd.f32 0.0, %v1829
      %v1831 = vpop.f32.mrb[0].mxu0
      %1832 = vmatprep.mubr.bf16.mxu0 %v1683
      %1833 = vmatmul.mubr.bf16.gmra.mrb[0].mxu0 %v1682
      %v1834 = vpop.f32.mrb[0].mxu0
      %v1835 = vadd.f32 0.0, %v1834
      %v1836 = vpop.f32.mrb[0].mxu0
      %v1837 = vpop.f32.mrb[0].mxu0
      %v1838 = vadd.f32 0.0, %v1837
      %v1839 = vpop.f32.mrb[0].mxu0
      %1840 = vmatprep.mubr.bf16.mxu0 %v1685
      %1841 = vmatmul.mubr.bf16.gmra.mrb[0].mxu0 %v1684
      %v1842 = vpop.f32.mrb[0].mxu0
      %v1843 = vadd.f32 0.0, %v1842
      %v1844 = vpop.f32.mrb[0].mxu0
      %v1845 = vpop.f32.mrb[0].mxu0
      %v1846 = vadd.f32 0.0, %v1845
      %v1847 = vpop.f32.mrb[0].mxu0
      %1848 = vmatprep.mubr.bf16.mxu0 %v1687
      %1849 = vmatmul.mubr.bf16.gmra.mrb[0].mxu0 %v1686
      %v1850 = vpop.f32.mrb[0].mxu0
      %v1851 = vadd.f32 0.0, %v1850
      %v1852 = vpop.f32.mrb[0].mxu0
      %v1853 = vpop.f32.mrb[0].mxu0
      %v1854 = vadd.f32 0.0, %v1853
      %v1855 = vpop.f32.mrb[0].mxu0
      %1856 = vmatprep.mubr.bf16.mxu0 %v1689
      %1857 = vmatmul.mubr.bf16.gmra.mrb[0].mxu0 %v1688
      %v1858 = vpop.f32.mrb[0].mxu0
      %v1859 = vadd.f32 0.0, %v1858
      %v1860 = vpop.f32.mrb[0].mxu0
      %v1861 = vpop.f32.mrb[0].mxu0
      %v1862 = vadd.f32 0.0, %v1861
      %v1863 = vpop.f32.mrb[0].mxu0
      %1864 = vmatprep.mubr.bf16.mxu0 %v1691
      %1865 = vmatmul.mubr.bf16.gmra.mrb[0].mxu0 %v1690
      %v1866 = vpop.f32.mrb[0].mxu0
      %v1867 = vadd.f32 0.0, %v1866
      %v1868 = vpop.f32.mrb[0].mxu0
      %v1869 = vpop.f32.mrb[0].mxu0
      %v1870 = vadd.f32 0.0, %v1869
      %v1871 = vpop.f32.mrb[0].mxu0
      %1872 = vmatprep.mubr.bf16.mxu0 %v1693
      %1873 = vmatmul.mubr.bf16.gmra.mrb[0].mxu0 %v1692
      %v1874 = vpop.f32.mrb[0].mxu0
      %v1875 = vadd.f32 0.0, %v1874
      %v1876 = vpop.f32.mrb[0].mxu0
      %v1877 = vpop.f32.mrb[0].mxu0
      %v1878 = vadd.f32 0.0, %v1877
      %v1879 = vpop.f32.mrb[0].mxu0
      %1880 = vmatprep.mubr.bf16.mxu0 %v1695
      %1881 = vmatmul.mubr.bf16.gmra.mrb[0].mxu0 %v1694
      %v1882 = vpop.f32.mrb[0].mxu0
      %v1883 = vadd.f32 0.0, %v1882
      %v1884 = vpop.f32.mrb[0].mxu0
      %v1885 = vpop.f32.mrb[0].mxu0
      %v1886 = vadd.f32 0.0, %v1885
      %v1887 = vpop.f32.mrb[0].mxu0
      %1888 = vdwg.mxu0
      %v1889 = vmax.f32 %v1763, %v1795
      %v1890 = vmax.f32 %v1766, %v1798
      %v1891 = vmax.f32 %v1771, %v1803
      %v1892 = vmax.f32 %v1774, %v1806
      %v1893 = vmax.f32 %v1779, %v1811
      %v1894 = vmax.f32 %v1782, %v1814
      %v1895 = vmax.f32 %v1787, %v1819
      %v1896 = vmax.f32 %v1790, %v1822
      %v1897 = vmax.f32 %v1827, %v1859
      %v1898 = vmax.f32 %v1830, %v1862
      %v1899 = vmax.f32 %v1835, %v1867
      %v1900 = vmax.f32 %v1838, %v1870
      %v1901 = vmax.f32 %v1843, %v1875
      %v1902 = vmax.f32 %v1846, %v1878
      %v1903 = vmax.f32 %v1851, %v1883
      %v1904 = vmax.f32 %v1854, %v1886
      %v1905 = vmax.f32 %v1889, %v1897
      %v1906 = vmax.f32 %v1890, %v1898
      %v1907 = vmax.f32 %v1891, %v1899
      %v1908 = vmax.f32 %v1892, %v1900
      %v1909 = vmax.f32 %v1893, %v1901
      %v1910 = vmax.f32 %v1894, %v1902
      %v1911 = vmax.f32 %v1895, %v1903
      %v1912 = vmax.f32 %v1896, %v1904
      %v1913 = vpack.c.bf16 %v1906, %v1905
      %v1914 = vpack.c.bf16 %v1908, %v1907
      %v1915 = vpack.c.bf16 %v1910, %v1909
      %v1916 = vpack.c.bf16 %v1912, %v1911
      %v1917 = vld [vmem:[%s11] sm:$0xf]
      %v1918 = vld [vmem:[%s11 + $0x4] sm:$0xf]
      %v1919 = vld [vmem:[%s11 + $0x8] sm:$0xf]
      %v1920 = vld [vmem:[%s11 + $0xc] sm:$0xf]
      %v1921 = vld [vmem:[%s11 + $0x10] sm:$0xf]
      %v1922 = vld [vmem:[%s11 + $0x14] sm:$0xf]
      %v1923 = vld [vmem:[%s11 + $0x18] sm:$0xf]
      %v1924 = vld [vmem:[%s11 + $0x1c] sm:$0xf]
      %v1925 = vld [vmem:[%s11 + $0x20] sm:$0xf]
      %v1926 = vld [vmem:[%s11 + $0x24] sm:$0xf]
      %v1927 = vld [vmem:[%s11 + $0x28] sm:$0xf]
      %v1928 = vld [vmem:[%s11 + $0x2c] sm:$0xf]
      %v1929 = vld [vmem:[%s11 + $0x30] sm:$0xf]
      %v1930 = vld [vmem:[%s11 + $0x34] sm:$0xf]
      %v1931 = vld [vmem:[%s11 + $0x38] sm:$0xf]
      %v1932 = vld [vmem:[%s11 + $0x3c] sm:$0xf]
      %v1933 = vld [vmem:[%s11 + $0x40] sm:$0xf]
      %v1934 = vld [vmem:[%s11 + $0x44] sm:$0xf]
      %v1935 = vld [vmem:[%s11 + $0x48] sm:$0xf]
      %v1936 = vld [vmem:[%s11 + $0x4c] sm:$0xf]
      %v1937 = vld [vmem:[%s11 + $0x50] sm:$0xf]
      %v1938 = vld [vmem:[%s11 + $0x54] sm:$0xf]
      %v1939 = vld [vmem:[%s11 + $0x58] sm:$0xf]
      %v1940 = vld [vmem:[%s11 + $0x5c] sm:$0xf]
      %v1941 = vld [vmem:[%s11 + $0x60] sm:$0xf]
      %v1942 = vld [vmem:[%s11 + $0x64] sm:$0xf]
      %v1943 = vld [vmem:[%s11 + $0x68] sm:$0xf]
      %v1944 = vld [vmem:[%s11 + $0x6c] sm:$0xf]
      %v1945 = vld [vmem:[%s11 + $0x70] sm:$0xf]
      %v1946 = vld [vmem:[%s11 + $0x74] sm:$0xf]
      %v1947 = vld [vmem:[%s11 + $0x78] sm:$0xf]
      %v1948 = vld [vmem:[%s11 + $0x7c] sm:$0xf]
      %v1949 = vld [vmem:[%s11 + $0x80] sm:$0xf]
      %v1950 = vld [vmem:[%s11 + $0x84] sm:$0xf]
      %v1951 = vld [vmem:[%s11 + $0x88] sm:$0xf]
      %v1952 = vld [vmem:[%s11 + $0x8c] sm:$0xf]
      %v1953 = vld [vmem:[%s11 + $0x90] sm:$0xf]
      %v1954 = vld [vmem:[%s11 + $0x94] sm:$0xf]
      %v1955 = vld [vmem:[%s11 + $0x98] sm:$0xf]
      %v1956 = vld [vmem:[%s11 + $0x9c] sm:$0xf]
      %v1957 = vld [vmem:[%s11 + $0xa0] sm:$0xf]
      %v1958 = vld [vmem:[%s11 + $0xa4] sm:$0xf]
      %v1959 = vld [vmem:[%s11 + $0xa8] sm:$0xf]
      %v1960 = vld [vmem:[%s11 + $0xac] sm:$0xf]
      %v1961 = vld [vmem:[%s11 + $0xb0] sm:$0xf]
      %v1962 = vld [vmem:[%s11 + $0xb4] sm:$0xf]
      %v1963 = vld [vmem:[%s11 + $0xb8] sm:$0xf]
      %v1964 = vld [vmem:[%s11 + $0xbc] sm:$0xf]
      %v1965 = vld [vmem:[%s11 + $0xc0] sm:$0xf]
      %v1966 = vld [vmem:[%s11 + $0xc4] sm:$0xf]
      %v1967 = vld [vmem:[%s11 + $0xc8] sm:$0xf]
      %v1968 = vld [vmem:[%s11 + $0xcc] sm:$0xf]
      %v1969 = vld [vmem:[%s11 + $0xd0] sm:$0xf]
      %v1970 = vld [vmem:[%s11 + $0xd4] sm:$0xf]
      %v1971 = vld [vmem:[%s11 + $0xd8] sm:$0xf]
      %v1972 = vld [vmem:[%s11 + $0xdc] sm:$0xf]
      %v1973 = vld [vmem:[%s11 + $0xe0] sm:$0xf]
      %v1974 = vld [vmem:[%s11 + $0xe4] sm:$0xf]
      %v1975 = vld [vmem:[%s11 + $0xe8] sm:$0xf]
      %v1976 = vld [vmem:[%s11 + $0xec] sm:$0xf]
      %v1977 = vld [vmem:[%s11 + $0xf0] sm:$0xf]
      %v1978 = vld [vmem:[%s11 + $0xf4] sm:$0xf]
      %v1979 = vld [vmem:[%s11 + $0xf8] sm:$0xf]
      %v1980 = vld [vmem:[%s11 + $0xfc] sm:$0xf]
      %v1981 = vld [vmem:[%s11 + $0x100] sm:$0xf]
      %v1982 = vld [vmem:[%s11 + $0x104] sm:$0xf]
      %v1983 = vld [vmem:[%s11 + $0x108] sm:$0xf]
      %v1984 = vld [vmem:[%s11 + $0x10c] sm:$0xf]
      %v1985 = vld [vmem:[%s11 + $0x110] sm:$0xf]
      %v1986 = vld [vmem:[%s11 + $0x114] sm:$0xf]
      %v1987 = vld [vmem:[%s11 + $0x118] sm:$0xf]
      %v1988 = vld [vmem:[%s11 + $0x11c] sm:$0xf]
      %v2061 = vunpack.c.l.b16 %v1917
      %v2062 = vunpack.c.l.b16 %v1918
      %v2063 = vunpack.c.l.b16 %v1919
      %v2064 = vunpack.c.l.b16 %v1920
      %v2065 = vunpack.c.l.b16 %v1921
      %v2066 = vunpack.c.l.b16 %v1922
      %v2067 = vunpack.c.l.b16 %v1923
      %v2068 = vunpack.c.l.b16 %v1924
      %v2069 = vunpack.c.l.b16 %v1925
      %v2070 = vunpack.c.l.b16 %v1926
      %v2071 = vunpack.c.l.b16 %v1927
      %v2072 = vunpack.c.l.b16 %v1928
      %v2073 = vunpack.c.l.b16 %v1929
      %v2074 = vunpack.c.l.b16 %v1930
      %v2075 = vunpack.c.l.b16 %v1931
      %v2076 = vunpack.c.l.b16 %v1932
      %v2077 = vunpack.c.l.b16 %v1933
      %v2078 = vunpack.c.l.b16 %v1934
      %v2079 = vunpack.c.l.b16 %v1935
      %v2080 = vunpack.c.l.b16 %v1936
      %v2081 = vunpack.c.l.b16 %v1937
      %v2082 = vunpack.c.l.b16 %v1938
      %v2083 = vunpack.c.l.b16 %v1939
      %v2084 = vunpack.c.l.b16 %v1940
      %v2085 = vunpack.c.l.b16 %v1941
      %v2086 = vunpack.c.l.b16 %v1942
      %v2087 = vunpack.c.l.b16 %v1943
      %v2088 = vunpack.c.l.b16 %v1944
      %v2089 = vunpack.c.l.b16 %v1945
      %v2090 = vunpack.c.l.b16 %v1946
      %v2091 = vunpack.c.l.b16 %v1947
      %v2092 = vunpack.c.l.b16 %v1948
      %v2093 = vunpack.c.l.b16 %v1949
      %v2094 = vunpack.c.l.b16 %v1950
      %v2095 = vunpack.c.l.b16 %v1951
      %v2096 = vunpack.c.l.b16 %v1952
      %v2097 = vunpack.c.l.b16 %v1953
      %v2098 = vunpack.c.l.b16 %v1954
      %v2099 = vunpack.c.l.b16 %v1955
      %v2100 = vunpack.c.l.b16 %v1956
      %v2101 = vunpack.c.l.b16 %v1957
      %v2102 = vunpack.c.l.b16 %v1958
      %v2103 = vunpack.c.l.b16 %v1959
      %v2104 = vunpack.c.l.b16 %v1960
      %v2105 = vunpack.c.l.b16 %v1961
      %v2106 = vunpack.c.l.b16 %v1962
      %v2107 = vunpack.c.l.b16 %v1963
      %v2108 = vunpack.c.l.b16 %v1964
      %v2109 = vunpack.c.l.b16 %v1965
      %v2110 = vunpack.c.l.b16 %v1966
      %v2111 = vunpack.c.l.b16 %v1967
      %v2112 = vunpack.c.l.b16 %v1968
      %v2113 = vunpack.c.l.b16 %v1969
      %v2114 = vunpack.c.l.b16 %v1970
      %v2115 = vunpack.c.l.b16 %v1971
      %v2116 = vunpack.c.l.b16 %v1972
      %v2117 = vunpack.c.l.b16 %v1973
      %v2118 = vunpack.c.l.b16 %v1974
      %v2119 = vunpack.c.l.b16 %v1975
      %v2120 = vunpack.c.l.b16 %v1976
      %v2121 = vunpack.c.l.b16 %v1977
      %v2122 = vunpack.c.l.b16 %v1978
      %v2123 = vunpack.c.l.b16 %v1979
      %v2124 = vunpack.c.l.b16 %v1980
      %v2125 = vunpack.c.l.b16 %v1981
      %v2126 = vunpack.c.l.b16 %v1982
      %v2127 = vunpack.c.l.b16 %v1983
      %v2128 = vunpack.c.l.b16 %v1984
      %v2129 = vunpack.c.l.b16 %v1985
      %v2130 = vunpack.c.l.b16 %v1986
      %v2131 = vunpack.c.l.b16 %v1987
      %v2132 = vunpack.c.l.b16 %v1988
      %v2133 = vpack.c.b16 %v2062, %v2061
      %v2134 = vpack.c.b16 %v2064, %v2063
      %v2135 = vpack.c.b16 %v2066, %v2065
      %v2136 = vpack.c.b16 %v2068, %v2067
      %v2137 = vpack.c.b16 %v2070, %v2069
      %v2138 = vpack.c.b16 %v2072, %v2071
      %v2139 = vpack.c.b16 %v2074, %v2073
      %v2140 = vpack.c.b16 %v2076, %v2075
      %v2141 = vpack.c.b16 %v2078, %v2077
      %v2142 = vpack.c.b16 %v2080, %v2079
      %v2143 = vpack.c.b16 %v2082, %v2081
      %v2144 = vpack.c.b16 %v2084, %v2083
      %v2145 = vpack.c.b16 %v2086, %v2085
      %v2146 = vpack.c.b16 %v2088, %v2087
      %v2147 = vpack.c.b16 %v2090, %v2089
      %v2148 = vpack.c.b16 %v2092, %v2091
      %v2149 = vpack.c.b16 %v2094, %v2093
      %v2150 = vpack.c.b16 %v2096, %v2095
      %v2151 = vpack.c.b16 %v2098, %v2097
      %v2152 = vpack.c.b16 %v2100, %v2099
      %v2153 = vpack.c.b16 %v2102, %v2101
      %v2154 = vpack.c.b16 %v2104, %v2103
      %v2155 = vpack.c.b16 %v2106, %v2105
      %v2156 = vpack.c.b16 %v2108, %v2107
      %v2157 = vpack.c.b16 %v2110, %v2109
      %v2158 = vpack.c.b16 %v2112, %v2111
      %v2159 = vpack.c.b16 %v2114, %v2113
      %v2160 = vpack.c.b16 %v2116, %v2115
      %v2161 = vpack.c.b16 %v2118, %v2117
      %v2162 = vpack.c.b16 %v2120, %v2119
      %v2163 = vpack.c.b16 %v2122, %v2121
      %v2164 = vpack.c.b16 %v2124, %v2123
      %v2165 = vpack.c.b16 %v2126, %v2125
      %v2166 = vpack.c.b16 %v2128, %v2127
      %v2167 = vpack.c.b16 %v2130, %v2129
      %v2168 = vpack.c.b16 %v2132, %v2131
      %vm2169 = vcmask 523264
      %v2171 = vsel %vm2169, %v2133, 0
      %v2174 = vsel %vm2169, %v2134, 0
      %v2177 = vsel %vm2169, %v2135, 0
      %v2180 = vsel %vm2169, %v2136, 0
      %v2183 = vsel %vm2169, %v2137, 0
      %v2186 = vsel %vm2169, %v2138, 0
      %v2189 = vsel %vm2169, %v2139, 0
      %v2192 = vsel %vm2169, %v2140, 0
      %v2195 = vsel %vm2169, %v2141, 0
      %v2198 = vsel %vm2169, %v2142, 0
      %v2201 = vsel %vm2169, %v2143, 0
      %v2204 = vsel %vm2169, %v2144, 0
      %v2207 = vsel %vm2169, %v2145, 0
      %v2210 = vsel %vm2169, %v2146, 0
      %v2213 = vsel %vm2169, %v2147, 0
      %v2216 = vsel %vm2169, %v2148, 0
      %v2219 = vsel %vm2169, %v2149, 0
      %v2222 = vsel %vm2169, %v2150, 0
      %v2225 = vsel %vm2169, %v2151, 0
      %v2228 = vsel %vm2169, %v2152, 0
      %v2231 = vsel %vm2169, %v2153, 0
      %v2234 = vsel %vm2169, %v2154, 0
      %v2237 = vsel %vm2169, %v2155, 0
      %v2240 = vsel %vm2169, %v2156, 0
      %v2243 = vsel %vm2169, %v2157, 0
      %v2246 = vsel %vm2169, %v2158, 0
      %v2249 = vsel %vm2169, %v2159, 0
      %v2252 = vsel %vm2169, %v2160, 0
      %v2255 = vsel %vm2169, %v2161, 0
      %v2258 = vsel %vm2169, %v2162, 0
      %v2261 = vsel %vm2169, %v2163, 0
      %v2264 = vsel %vm2169, %v2164, 0
      %v2267 = vsel %vm2169, %v2165, 0
      %v2270 = vsel %vm2169, %v2166, 0
      %v2273 = vsel %vm2169, %v2167, 0
      %v2276 = vsel %vm2169, %v2168, 0
      %2278 = vmatprep.subr.bf16.mxu0 0
      %2279 = vmatpush1.bf16.msra.mxu0 %v1913
      %2280 = vmatprep.subr.bf16.mxu0 0
      %2281 = vmatpush1.bf16.msra.mxu0 %v1914
      %2282 = vmatprep.subr.bf16.mxu0 0
      %2283 = vmatpush1.bf16.msra.mxu0 %v1915
      %2284 = vmatprep.subr.bf16.mxu0 0
      %2285 = vmatpush1.bf16.msra.mxu0 %v1916
      %2286 = vmatprep.subr.bf16.mxu0 0
      %2287 = vmatpush1.bf16.msra.mxu0 0
      %2288 = vmatprep.subr.bf16.mxu0 0
      %2289 = vmatpush1.bf16.msra.mxu0 0
      %2290 = vmatprep.subr.bf16.mxu0 0
      %2291 = vmatpush1.bf16.msra.mxu0 0
      %2292 = vmatprep.subr.bf16.mxu0 0
      %2293 = vmatpush1.bf16.msra.mxu0 0
      %2294 = vmatprep.subr.bf16.mxu0 0
      %2295 = vmatpush1.bf16.msra.mxu0 0
      %2296 = vmatprep.subr.bf16.mxu0 0
      %2297 = vmatpush1.bf16.msra.mxu0 0
      %2298 = vmatprep.subr.bf16.mxu0 0
      %2299 = vmatpush1.bf16.msra.mxu0 0
      %2300 = vmatprep.subr.bf16.mxu0 0
      %2301 = vmatpush1.bf16.msra.mxu0 0
      %2302 = vmatprep.subr.bf16.mxu0 0
      %2303 = vmatpush1.bf16.msra.mxu0 0
      %2304 = vmatprep.subr.bf16.mxu0 0
      %2305 = vmatpush1.bf16.msra.mxu0 0
      %2306 = vmatprep.subr.bf16.mxu0 0
      %2307 = vmatpush1.bf16.msra.mxu0 0
      %2308 = vmatprep.subr.bf16.mxu0 0
      %2309 = vmatpush1.bf16.msra.mxu0 0
      %2310 = vmatprep.mubr.bf16.mxu0 0
      %2311 = vmatmul.mubr.bf16.gmra.mrb[0].mxu0 %v2171
      %v2312 = vpop.f32.mrb[0].mxu0
      %v2313 = vadd.f32 0.0, %v2312
      %v2314 = vpop.f32.mrb[0].mxu0
      %v2315 = vpop.f32.mrb[0].mxu0
      %v2316 = vadd.f32 0.0, %v2315
      %v2317 = vpop.f32.mrb[0].mxu0
      %2318 = vmatprep.mubr.bf16.mxu0 0
      %2319 = vmatmul.mubr.bf16.gmra.mrb[0].mxu0 %v2174
      %v2320 = vpop.f32.mrb[0].mxu0
      %v2321 = vadd.f32 0.0, %v2320
      %v2322 = vpop.f32.mrb[0].mxu0
      %v2323 = vpop.f32.mrb[0].mxu0
      %v2324 = vadd.f32 0.0, %v2323
      %v2325 = vpop.f32.mrb[0].mxu0
      %2326 = vmatprep.mubr.bf16.mxu0 0
      %2327 = vmatmul.mubr.bf16.gmra.mrb[0].mxu0 %v2177
      %v2328 = vpop.f32.mrb[0].mxu0
      %v2329 = vadd.f32 0.0, %v2328
      %v2330 = vpop.f32.mrb[0].mxu0
      %v2331 = vpop.f32.mrb[0].mxu0
      %v2332 = vadd.f32 0.0, %v2331
      %v2333 = vpop.f32.mrb[0].mxu0
      %2334 = vmatprep.mubr.bf16.mxu0 0
      %2335 = vmatmul.mubr.bf16.gmra.mrb[0].mxu0 %v2180
      %v2336 = vpop.f32.mrb[0].mxu0
      %v2337 = vadd.f32 0.0, %v2336
      %v2338 = vpop.f32.mrb[0].mxu0
      %v2339 = vpop.f32.mrb[0].mxu0
      %v2340 = vadd.f32 0.0, %v2339
      %v2341 = vpop.f32.mrb[0].mxu0
      %2342 = vmatprep.mubr.bf16.mxu0 0
      %2343 = vmatmul.mubr.bf16.gmra.mrb[0].mxu0 %v2183
      %v2344 = vpop.f32.mrb[0].mxu0
      %v2345 = vadd.f32 0.0, %v2344
      %v2346 = vpop.f32.mrb[0].mxu0
      %v2347 = vpop.f32.mrb[0].mxu0
      %v2348 = vadd.f32 0.0, %v2347
      %v2349 = vpop.f32.mrb[0].mxu0
      %2350 = vmatprep.mubr.bf16.mxu0 0
      %2351 = vmatmul.mubr.bf16.gmra.mrb[0].mxu0 %v2186
      %v2352 = vpop.f32.mrb[0].mxu0
      %v2353 = vadd.f32 0.0, %v2352
      %v2354 = vpop.f32.mrb[0].mxu0
      %v2355 = vpop.f32.mrb[0].mxu0
      %v2356 = vadd.f32 0.0, %v2355
      %v2357 = vpop.f32.mrb[0].mxu0
      %2358 = vmatprep.mubr.bf16.mxu0 0
      %2359 = vmatmul.mubr.bf16.gmra.mrb[0].mxu0 %v2189
      %v2360 = vpop.f32.mrb[0].mxu0
      %v2361 = vadd.f32 0.0, %v2360
      %v2362 = vpop.f32.mrb[0].mxu0
      %v2363 = vpop.f32.mrb[0].mxu0
      %v2364 = vadd.f32 0.0, %v2363
      %v2365 = vpop.f32.mrb[0].mxu0
      %2366 = vmatprep.mubr.bf16.mxu0 0
      %2367 = vmatmul.mubr.bf16.gmra.mrb[0].mxu0 %v2192
      %v2368 = vpop.f32.mrb[0].mxu0
      %v2369 = vadd.f32 0.0, %v2368
      %v2370 = vpop.f32.mrb[0].mxu0
      %v2371 = vpop.f32.mrb[0].mxu0
      %v2372 = vadd.f32 0.0, %v2371
      %v2373 = vpop.f32.mrb[0].mxu0
      %2374 = vmatprep.mubr.bf16.mxu0 0
      %2375 = vmatmul.mubr.bf16.gmra.mrb[0].mxu0 %v2195
      %v2376 = vpop.f32.mrb[0].mxu0
      %v2377 = vadd.f32 0.0, %v2376
      %v2378 = vpop.f32.mrb[0].mxu0
      %v2379 = vpop.f32.mrb[0].mxu0
      %v2380 = vadd.f32 0.0, %v2379
      %v2381 = vpop.f32.mrb[0].mxu0
      %2382 = vmatprep.mubr.bf16.mxu0 0
      %2383 = vmatmul.mubr.bf16.gmra.mrb[0].mxu0 %v2198
      %v2384 = vpop.f32.mrb[0].mxu0
      %v2385 = vadd.f32 0.0, %v2384
      %v2386 = vpop.f32.mrb[0].mxu0
      %v2387 = vpop.f32.mrb[0].mxu0
      %v2388 = vadd.f32 0.0, %v2387
      %v2389 = vpop.f32.mrb[0].mxu0
      %2390 = vmatprep.mubr.bf16.mxu0 0
      %2391 = vmatmul.mubr.bf16.gmra.mrb[0].mxu0 %v2201
      %v2392 = vpop.f32.mrb[0].mxu0
      %v2393 = vadd.f32 0.0, %v2392
      %v2394 = vpop.f32.mrb[0].mxu0
      %v2395 = vpop.f32.mrb[0].mxu0
      %v2396 = vadd.f32 0.0, %v2395
      %v2397 = vpop.f32.mrb[0].mxu0
      %2398 = vmatprep.mubr.bf16.mxu0 0
      %2399 = vmatmul.mubr.bf16.gmra.mrb[0].mxu0 %v2204
      %v2400 = vpop.f32.mrb[0].mxu0
      %v2401 = vadd.f32 0.0, %v2400
      %v2402 = vpop.f32.mrb[0].mxu0
      %v2403 = vpop.f32.mrb[0].mxu0
      %v2404 = vadd.f32 0.0, %v2403
      %v2405 = vpop.f32.mrb[0].mxu0
      %2406 = vmatprep.mubr.bf16.mxu0 0
      %2407 = vmatmul.mubr.bf16.gmra.mrb[0].mxu0 %v2207
      %v2408 = vpop.f32.mrb[0].mxu0
      %v2409 = vadd.f32 0.0, %v2408
      %v2410 = vpop.f32.mrb[0].mxu0
      %v2411 = vpop.f32.mrb[0].mxu0
      %v2412 = vadd.f32 0.0, %v2411
      %v2413 = vpop.f32.mrb[0].mxu0
      %2414 = vmatprep.mubr.bf16.mxu0 0
      %2415 = vmatmul.mubr.bf16.gmra.mrb[0].mxu0 %v2210
      %v2416 = vpop.f32.mrb[0].mxu0
      %v2417 = vadd.f32 0.0, %v2416
      %v2418 = vpop.f32.mrb[0].mxu0
      %v2419 = vpop.f32.mrb[0].mxu0
      %v2420 = vadd.f32 0.0, %v2419
      %v2421 = vpop.f32.mrb[0].mxu0
      %2422 = vmatprep.mubr.bf16.mxu0 0
      %2423 = vmatmul.mubr.bf16.gmra.mrb[0].mxu0 %v2213
      %v2424 = vpop.f32.mrb[0].mxu0
      %v2425 = vadd.f32 0.0, %v2424
      %v2426 = vpop.f32.mrb[0].mxu0
      %v2427 = vpop.f32.mrb[0].mxu0
      %v2428 = vadd.f32 0.0, %v2427
      %v2429 = vpop.f32.mrb[0].mxu0
      %2430 = vmatprep.mubr.bf16.mxu0 0
      %2431 = vmatmul.mubr.bf16.gmra.mrb[0].mxu0 %v2216
      %v2432 = vpop.f32.mrb[0].mxu0
      %v2433 = vadd.f32 0.0, %v2432
      %v2434 = vpop.f32.mrb[0].mxu0
      %v2435 = vpop.f32.mrb[0].mxu0
      %v2436 = vadd.f32 0.0, %v2435
      %v2437 = vpop.f32.mrb[0].mxu0
      %2438 = vmatprep.mubr.bf16.mxu0 0
      %2439 = vmatmul.mubr.bf16.gmra.mrb[0].mxu0 %v2219
      %v2440 = vpop.f32.mrb[0].mxu0
      %v2441 = vadd.f32 0.0, %v2440
      %v2442 = vpop.f32.mrb[0].mxu0
      %v2443 = vpop.f32.mrb[0].mxu0
      %v2444 = vadd.f32 0.0, %v2443
      %v2445 = vpop.f32.mrb[0].mxu0
      %2446 = vmatprep.mubr.bf16.mxu0 0
      %2447 = vmatmul.mubr.bf16.gmra.mrb[0].mxu0 %v2222
      %v2448 = vpop.f32.mrb[0].mxu0
      %v2449 = vadd.f32 0.0, %v2448
      %v2450 = vpop.f32.mrb[0].mxu0
      %v2451 = vpop.f32.mrb[0].mxu0
      %v2452 = vadd.f32 0.0, %v2451
      %v2453 = vpop.f32.mrb[0].mxu0
      %2454 = vmatprep.mubr.bf16.mxu0 0
      %2455 = vmatmul.mubr.bf16.gmra.mrb[0].mxu0 %v2225
      %v2456 = vpop.f32.mrb[0].mxu0
      %v2457 = vadd.f32 0.0, %v2456
      %v2458 = vpop.f32.mrb[0].mxu0
      %v2459 = vpop.f32.mrb[0].mxu0
      %v2460 = vadd.f32 0.0, %v2459
      %v2461 = vpop.f32.mrb[0].mxu0
      %2462 = vmatprep.mubr.bf16.mxu0 0
      %2463 = vmatmul.mubr.bf16.gmra.mrb[0].mxu0 %v2228
      %v2464 = vpop.f32.mrb[0].mxu0
      %v2465 = vadd.f32 0.0, %v2464
      %v2466 = vpop.f32.mrb[0].mxu0
      %v2467 = vpop.f32.mrb[0].mxu0
      %v2468 = vadd.f32 0.0, %v2467
      %v2469 = vpop.f32.mrb[0].mxu0
      %2470 = vmatprep.mubr.bf16.mxu0 0
      %2471 = vmatmul.mubr.bf16.gmra.mrb[0].mxu0 %v2231
      %v2472 = vpop.f32.mrb[0].mxu0
      %v2473 = vadd.f32 0.0, %v2472
      %v2474 = vpop.f32.mrb[0].mxu0
      %v2475 = vpop.f32.mrb[0].mxu0
      %v2476 = vadd.f32 0.0, %v2475
      %v2477 = vpop.f32.mrb[0].mxu0
      %2478 = vmatprep.mubr.bf16.mxu0 0
      %2479 = vmatmul.mubr.bf16.gmra.mrb[0].mxu0 %v2234
      %v2480 = vpop.f32.mrb[0].mxu0
      %v2481 = vadd.f32 0.0, %v2480
      %v2482 = vpop.f32.mrb[0].mxu0
      %v2483 = vpop.f32.mrb[0].mxu0
      %v2484 = vadd.f32 0.0, %v2483
      %v2485 = vpop.f32.mrb[0].mxu0
      %2486 = vmatprep.mubr.bf16.mxu0 0
      %2487 = vmatmul.mubr.bf16.gmra.mrb[0].mxu0 %v2237
      %v2488 = vpop.f32.mrb[0].mxu0
      %v2489 = vadd.f32 0.0, %v2488
      %v2490 = vpop.f32.mrb[0].mxu0
      %v2491 = vpop.f32.mrb[0].mxu0
      %v2492 = vadd.f32 0.0, %v2491
      %v2493 = vpop.f32.mrb[0].mxu0
      %2494 = vmatprep.mubr.bf16.mxu0 0
      %2495 = vmatmul.mubr.bf16.gmra.mrb[0].mxu0 %v2240
      %v2496 = vpop.f32.mrb[0].mxu0
      %v2497 = vadd.f32 0.0, %v2496
      %v2498 = vpop.f32.mrb[0].mxu0
      %v2499 = vpop.f32.mrb[0].mxu0
      %v2500 = vadd.f32 0.0, %v2499
      %v2501 = vpop.f32.mrb[0].mxu0
      %2502 = vmatprep.mubr.bf16.mxu0 0
      %2503 = vmatmul.mubr.bf16.gmra.mrb[0].mxu0 %v2243
      %v2504 = vpop.f32.mrb[0].mxu0
      %v2505 = vadd.f32 0.0, %v2504
      %v2506 = vpop.f32.mrb[0].mxu0
      %v2507 = vpop.f32.mrb[0].mxu0
      %v2508 = vadd.f32 0.0, %v2507
      %v2509 = vpop.f32.mrb[0].mxu0
      %2510 = vmatprep.mubr.bf16.mxu0 0
      %2511 = vmatmul.mubr.bf16.gmra.mrb[0].mxu0 %v2246
      %v2512 = vpop.f32.mrb[0].mxu0
      %v2513 = vadd.f32 0.0, %v2512
      %v2514 = vpop.f32.mrb[0].mxu0
      %v2515 = vpop.f32.mrb[0].mxu0
      %v2516 = vadd.f32 0.0, %v2515
      %v2517 = vpop.f32.mrb[0].mxu0
      %2518 = vmatprep.mubr.bf16.mxu0 0
      %2519 = vmatmul.mubr.bf16.gmra.mrb[0].mxu0 %v2249
      %v2520 = vpop.f32.mrb[0].mxu0
      %v2521 = vadd.f32 0.0, %v2520
      %v2522 = vpop.f32.mrb[0].mxu0
      %v2523 = vpop.f32.mrb[0].mxu0
      %v2524 = vadd.f32 0.0, %v2523
      %v2525 = vpop.f32.mrb[0].mxu0
      %2526 = vmatprep.mubr.bf16.mxu0 0
      %2527 = vmatmul.mubr.bf16.gmra.mrb[0].mxu0 %v2252
      %v2528 = vpop.f32.mrb[0].mxu0
      %v2529 = vadd.f32 0.0, %v2528
      %v2530 = vpop.f32.mrb[0].mxu0
      %v2531 = vpop.f32.mrb[0].mxu0
      %v2532 = vadd.f32 0.0, %v2531
      %v2533 = vpop.f32.mrb[0].mxu0
      %2534 = vmatprep.mubr.bf16.mxu0 0
      %2535 = vmatmul.mubr.bf16.gmra.mrb[0].mxu0 %v2255
      %v2536 = vpop.f32.mrb[0].mxu0
      %v2537 = vadd.f32 0.0, %v2536
      %v2538 = vpop.f32.mrb[0].mxu0
      %v2539 = vpop.f32.mrb[0].mxu0
      %v2540 = vadd.f32 0.0, %v2539
      %v2541 = vpop.f32.mrb[0].mxu0
      %2542 = vmatprep.mubr.bf16.mxu0 0
      %2543 = vmatmul.mubr.bf16.gmra.mrb[0].mxu0 %v2258
      %v2544 = vpop.f32.mrb[0].mxu0
      %v2545 = vadd.f32 0.0, %v2544
      %v2546 = vpop.f32.mrb[0].mxu0
      %v2547 = vpop.f32.mrb[0].mxu0
      %v2548 = vadd.f32 0.0, %v2547
      %v2549 = vpop.f32.mrb[0].mxu0
      %2550 = vmatprep.mubr.bf16.mxu0 0
      %2551 = vmatmul.mubr.bf16.gmra.mrb[0].mxu0 %v2261
      %v2552 = vpop.f32.mrb[0].mxu0
      %v2553 = vadd.f32 0.0, %v2552
      %v2554 = vpop.f32.mrb[0].mxu0
      %v2555 = vpop.f32.mrb[0].mxu0
      %v2556 = vadd.f32 0.0, %v2555
      %v2557 = vpop.f32.mrb[0].mxu0
      %2558 = vmatprep.mubr.bf16.mxu0 0
      %2559 = vmatmul.mubr.bf16.gmra.mrb[0].mxu0 %v2264
      %v2560 = vpop.f32.mrb[0].mxu0
      %v2561 = vadd.f32 0.0, %v2560
      %v2562 = vpop.f32.mrb[0].mxu0
      %v2563 = vpop.f32.mrb[0].mxu0
      %v2564 = vadd.f32 0.0, %v2563
      %v2565 = vpop.f32.mrb[0].mxu0
      %2566 = vmatprep.mubr.bf16.mxu0 0
      %2567 = vmatmul.mubr.bf16.gmra.mrb[0].mxu0 %v2267
      %v2568 = vpop.f32.mrb[0].mxu0
      %v2569 = vadd.f32 0.0, %v2568
      %v2570 = vpop.f32.mrb[0].mxu0
      %v2571 = vpop.f32.mrb[0].mxu0
      %v2572 = vadd.f32 0.0, %v2571
      %v2573 = vpop.f32.mrb[0].mxu0
      %2574 = vmatprep.mubr.bf16.mxu0 0
      %2575 = vmatmul.mubr.bf16.gmra.mrb[0].mxu0 %v2270
      %v2576 = vpop.f32.mrb[0].mxu0
      %v2577 = vadd.f32 0.0, %v2576
      %v2578 = vpop.f32.mrb[0].mxu0
      %v2579 = vpop.f32.mrb[0].mxu0
      %v2580 = vadd.f32 0.0, %v2579
      %v2581 = vpop.f32.mrb[0].mxu0
      %2582 = vmatprep.mubr.bf16.mxu0 0
      %2583 = vmatmul.mubr.bf16.gmra.mrb[0].mxu0 %v2273
      %v2584 = vpop.f32.mrb[0].mxu0
      %v2585 = vadd.f32 0.0, %v2584
      %v2586 = vpop.f32.mrb[0].mxu0
      %v2587 = vpop.f32.mrb[0].mxu0
      %v2588 = vadd.f32 0.0, %v2587
      %v2589 = vpop.f32.mrb[0].mxu0
      %2590 = vmatprep.mubr.bf16.mxu0 0
      %2591 = vmatmul.mubr.bf16.gmra.mrb[0].mxu0 %v2276
      %v2592 = vpop.f32.mrb[0].mxu0
      %v2593 = vadd.f32 0.0, %v2592
      %v2594 = vpop.f32.mrb[0].mxu0
      %v2595 = vpop.f32.mrb[0].mxu0
      %v2596 = vadd.f32 0.0, %v2595
      %v2597 = vpop.f32.mrb[0].mxu0
      %2598 = vdwg.mxu0
      %v2599 = vpack.c.bf16 %v2316, %v2313
      %v2600 = vpack.c.bf16 %v2324, %v2321
      %v2601 = vpack.c.bf16 %v2332, %v2329
      %v2602 = vpack.c.bf16 %v2340, %v2337
      %v2603 = vpack.c.bf16 %v2348, %v2345
      %v2604 = vpack.c.bf16 %v2356, %v2353
      %v2605 = vpack.c.bf16 %v2364, %v2361
      %v2606 = vpack.c.bf16 %v2372, %v2369
      %v2607 = vpack.c.bf16 %v2380, %v2377
      %v2608 = vpack.c.bf16 %v2388, %v2385
      %v2609 = vpack.c.bf16 %v2396, %v2393
      %v2610 = vpack.c.bf16 %v2404, %v2401
      %v2611 = vpack.c.bf16 %v2412, %v2409
      %v2612 = vpack.c.bf16 %v2420, %v2417
      %v2613 = vpack.c.bf16 %v2428, %v2425
      %v2614 = vpack.c.bf16 %v2436, %v2433
      %v2615 = vpack.c.bf16 %v2444, %v2441
      %v2616 = vpack.c.bf16 %v2452, %v2449
      %v2617 = vpack.c.bf16 %v2460, %v2457
      %v2618 = vpack.c.bf16 %v2468, %v2465
      %v2619 = vpack.c.bf16 %v2476, %v2473
      %v2620 = vpack.c.bf16 %v2484, %v2481
      %v2621 = vpack.c.bf16 %v2492, %v2489
      %v2622 = vpack.c.bf16 %v2500, %v2497
      %v2623 = vpack.c.bf16 %v2508, %v2505
      %v2624 = vpack.c.bf16 %v2516, %v2513
      %v2625 = vpack.c.bf16 %v2524, %v2521
      %v2626 = vpack.c.bf16 %v2532, %v2529
      %v2627 = vpack.c.bf16 %v2540, %v2537
      %v2628 = vpack.c.bf16 %v2548, %v2545
      %v2629 = vpack.c.bf16 %v2556, %v2553
      %v2630 = vpack.c.bf16 %v2564, %v2561
      %v2631 = vpack.c.bf16 %v2572, %v2569
      %v2632 = vpack.c.bf16 %v2580, %v2577
      %v2633 = vpack.c.bf16 %v2588, %v2585
      %v2634 = vpack.c.bf16 %v2596, %v2593
      %2639 = vrot.lane.b32.xlu0 %v2603, 64
      %v2640 = vpop.permute.xlu0 %2639
      %2641 = vrot.lane.b32.xlu0 %v2604, 64
      %v2642 = vpop.permute.xlu0 %2641
      %2643 = vrot.lane.b32.xlu0 %v2605, 64
      %v2644 = vpop.permute.xlu0 %2643
      %2645 = vrot.lane.b32.xlu0 %v2606, 64
      %v2646 = vpop.permute.xlu0 %2645
      %2651 = vrot.lane.b32.xlu0 %v2611, 64
      %v2652 = vpop.permute.xlu0 %2651
      %2653 = vrot.lane.b32.xlu0 %v2612, 64
      %v2654 = vpop.permute.xlu0 %2653
      %2655 = vrot.lane.b32.xlu0 %v2613, 64
      %v2656 = vpop.permute.xlu0 %2655
      %2657 = vrot.lane.b32.xlu0 %v2614, 64
      %v2658 = vpop.permute.xlu0 %2657
      %2663 = vrot.lane.b32.xlu0 %v2619, 64
      %v2664 = vpop.permute.xlu0 %2663
      %2665 = vrot.lane.b32.xlu0 %v2620, 64
      %v2666 = vpop.permute.xlu0 %2665
      %2667 = vrot.lane.b32.xlu0 %v2621, 64
      %v2668 = vpop.permute.xlu0 %2667
      %2669 = vrot.lane.b32.xlu0 %v2622, 64
      %v2670 = vpop.permute.xlu0 %2669
      %2675 = vrot.lane.b32.xlu0 %v2627, 64
      %v2676 = vpop.permute.xlu0 %2675
      %2677 = vrot.lane.b32.xlu0 %v2628, 64
      %v2678 = vpop.permute.xlu0 %2677
      %2679 = vrot.lane.b32.xlu0 %v2629, 64
      %v2680 = vpop.permute.xlu0 %2679
      %2681 = vrot.lane.b32.xlu0 %v2630, 64
      %v2682 = vpop.permute.xlu0 %2681
      %v2685 = vsel %vm2169, %v2599, %v2640
      %v2689 = vsel %vm2169, %v2600, %v2642
      %v2693 = vsel %vm2169, %v2601, %v2644
      %v2697 = vsel %vm2169, %v2602, %v2646
      %v2701 = vsel %vm2169, %v2607, %v2652
      %v2705 = vsel %vm2169, %v2608, %v2654
      %v2709 = vsel %vm2169, %v2609, %v2656
      %v2713 = vsel %vm2169, %v2610, %v2658
      %v2717 = vsel %vm2169, %v2615, %v2664
      %v2721 = vsel %vm2169, %v2616, %v2666
      %v2725 = vsel %vm2169, %v2617, %v2668
      %v2729 = vsel %vm2169, %v2618, %v2670
      %v2733 = vsel %vm2169, %v2623, %v2676
      %v2737 = vsel %vm2169, %v2624, %v2678
      %v2741 = vsel %vm2169, %v2625, %v2680
      %v2745 = vsel %vm2169, %v2626, %v2682
      %v2747 = vld [vmem:[%s13] sm:$0xf]
      %v2748 = vld [vmem:[%s13 + $0x4] sm:$0xf]
      %v2749 = vld [vmem:[%s13 + $0x8] sm:$0xf]
      %v2750 = vld [vmem:[%s13 + $0xc] sm:$0xf]
      %v2751 = vld [vmem:[%s13 + $0x10] sm:$0xf]
      %v2752 = vld [vmem:[%s13 + $0x14] sm:$0xf]
      %v2753 = vld [vmem:[%s13 + $0x18] sm:$0xf]
      %v2754 = vld [vmem:[%s13 + $0x1c] sm:$0xf]
      %v2755 = vld [vmem:[%s13 + $0x20] sm:$0xf]
      %v2756 = vld [vmem:[%s13 + $0x24] sm:$0xf]
      %v2757 = vld [vmem:[%s13 + $0x28] sm:$0xf]
      %v2758 = vld [vmem:[%s13 + $0x2c] sm:$0xf]
      %v2759 = vld [vmem:[%s13 + $0x30] sm:$0xf]
      %v2760 = vld [vmem:[%s13 + $0x34] sm:$0xf]
      %v2761 = vld [vmem:[%s13 + $0x38] sm:$0xf]
      %v2762 = vld [vmem:[%s13 + $0x3c] sm:$0xf]
      %v2763 = vld [vmem:[%s13 + $0x40] sm:$0xf]
      %v2764 = vld [vmem:[%s13 + $0x44] sm:$0xf]
      %v2765 = vld [vmem:[%s13 + $0x48] sm:$0xf]
      %v2766 = vld [vmem:[%s13 + $0x4c] sm:$0xf]
      %v2767 = vld [vmem:[%s13 + $0x50] sm:$0xf]
      %v2768 = vld [vmem:[%s13 + $0x54] sm:$0xf]
      %v2769 = vld [vmem:[%s13 + $0x58] sm:$0xf]
      %v2770 = vld [vmem:[%s13 + $0x5c] sm:$0xf]
      %v2771 = vld [vmem:[%s13 + $0x60] sm:$0xf]
      %v2772 = vld [vmem:[%s13 + $0x64] sm:$0xf]
      %v2773 = vld [vmem:[%s13 + $0x68] sm:$0xf]
      %v2774 = vld [vmem:[%s13 + $0x6c] sm:$0xf]
      %v2775 = vld [vmem:[%s13 + $0x70] sm:$0xf]
      %v2776 = vld [vmem:[%s13 + $0x74] sm:$0xf]
      %v2777 = vld [vmem:[%s13 + $0x78] sm:$0xf]
      %v2778 = vld [vmem:[%s13 + $0x7c] sm:$0xf]
      %v2779 = vld [vmem:[%s13 + $0x80] sm:$0xf]
      %v2780 = vld [vmem:[%s13 + $0x84] sm:$0xf]
      %v2781 = vld [vmem:[%s13 + $0x88] sm:$0xf]
      %v2782 = vld [vmem:[%s13 + $0x8c] sm:$0xf]
      %v2783 = vld [vmem:[%s13 + $0x90] sm:$0xf]
      %v2784 = vld [vmem:[%s13 + $0x94] sm:$0xf]
      %v2785 = vld [vmem:[%s13 + $0x98] sm:$0xf]
      %v2786 = vld [vmem:[%s13 + $0x9c] sm:$0xf]
      %v2787 = vld [vmem:[%s13 + $0xa0] sm:$0xf]
      %v2788 = vld [vmem:[%s13 + $0xa4] sm:$0xf]
      %v2789 = vld [vmem:[%s13 + $0xa8] sm:$0xf]
      %v2790 = vld [vmem:[%s13 + $0xac] sm:$0xf]
      %v2791 = vld [vmem:[%s13 + $0xb0] sm:$0xf]
      %v2792 = vld [vmem:[%s13 + $0xb4] sm:$0xf]
      %v2793 = vld [vmem:[%s13 + $0xb8] sm:$0xf]
      %v2794 = vld [vmem:[%s13 + $0xbc] sm:$0xf]
      %v2795 = vld [vmem:[%s13 + $0xc0] sm:$0xf]
      %v2796 = vld [vmem:[%s13 + $0xc4] sm:$0xf]
      %v2797 = vld [vmem:[%s13 + $0xc8] sm:$0xf]
      %v2798 = vld [vmem:[%s13 + $0xcc] sm:$0xf]
      %v2799 = vld [vmem:[%s13 + $0xd0] sm:$0xf]
      %v2800 = vld [vmem:[%s13 + $0xd4] sm:$0xf]
      %v2801 = vld [vmem:[%s13 + $0xd8] sm:$0xf]
      %v2802 = vld [vmem:[%s13 + $0xdc] sm:$0xf]
      %v2803 = vld [vmem:[%s13 + $0xe0] sm:$0xf]
      %v2804 = vld [vmem:[%s13 + $0xe4] sm:$0xf]
      %v2805 = vld [vmem:[%s13 + $0xe8] sm:$0xf]
      %v2806 = vld [vmem:[%s13 + $0xec] sm:$0xf]
      %v2807 = vld [vmem:[%s13 + $0xf0] sm:$0xf]
      %v2808 = vld [vmem:[%s13 + $0xf4] sm:$0xf]
      %v2809 = vld [vmem:[%s13 + $0xf8] sm:$0xf]
      %v2810 = vld [vmem:[%s13 + $0xfc] sm:$0xf]
      %v2811 = vld [vmem:[%s13 + $0x100] sm:$0xf]
      %v2812 = vld [vmem:[%s13 + $0x104] sm:$0xf]
      %v2813 = vld [vmem:[%s13 + $0x108] sm:$0xf]
      %v2814 = vld [vmem:[%s13 + $0x10c] sm:$0xf]
      %v2815 = vld [vmem:[%s13 + $0x110] sm:$0xf]
      %v2816 = vld [vmem:[%s13 + $0x114] sm:$0xf]
      %v2817 = vld [vmem:[%s13 + $0x118] sm:$0xf]
      %v2818 = vld [vmem:[%s13 + $0x11c] sm:$0xf]
      %v2891 = vunpack.c.l.b16 %v2747
      %v2892 = vunpack.c.l.b16 %v2748
      %v2893 = vunpack.c.l.b16 %v2749
      %v2894 = vunpack.c.l.b16 %v2750
      %v2895 = vunpack.c.l.b16 %v2751
      %v2896 = vunpack.c.l.b16 %v2752
      %v2897 = vunpack.c.l.b16 %v2753
      %v2898 = vunpack.c.l.b16 %v2754
      %v2899 = vunpack.c.l.b16 %v2755
      %v2900 = vunpack.c.l.b16 %v2756
      %v2901 = vunpack.c.l.b16 %v2757
      %v2902 = vunpack.c.l.b16 %v2758
      %v2903 = vunpack.c.l.b16 %v2759
      %v2904 = vunpack.c.l.b16 %v2760
      %v2905 = vunpack.c.l.b16 %v2761
      %v2906 = vunpack.c.l.b16 %v2762
      %v2907 = vunpack.c.l.b16 %v2763
      %v2908 = vunpack.c.l.b16 %v2764
      %v2909 = vunpack.c.l.b16 %v2765
      %v2910 = vunpack.c.l.b16 %v2766
      %v2911 = vunpack.c.l.b16 %v2767
      %v2912 = vunpack.c.l.b16 %v2768
      %v2913 = vunpack.c.l.b16 %v2769
      %v2914 = vunpack.c.l.b16 %v2770
      %v2915 = vunpack.c.l.b16 %v2771
      %v2916 = vunpack.c.l.b16 %v2772
      %v2917 = vunpack.c.l.b16 %v2773
      %v2918 = vunpack.c.l.b16 %v2774
      %v2919 = vunpack.c.l.b16 %v2775
      %v2920 = vunpack.c.l.b16 %v2776
      %v2921 = vunpack.c.l.b16 %v2777
      %v2922 = vunpack.c.l.b16 %v2778
      %v2923 = vunpack.c.l.b16 %v2779
      %v2924 = vunpack.c.l.b16 %v2780
      %v2925 = vunpack.c.l.b16 %v2781
      %v2926 = vunpack.c.l.b16 %v2782
      %v2927 = vunpack.c.l.b16 %v2783
      %v2928 = vunpack.c.l.b16 %v2784
      %v2929 = vunpack.c.l.b16 %v2785
      %v2930 = vunpack.c.l.b16 %v2786
      %v2931 = vunpack.c.l.b16 %v2787
      %v2932 = vunpack.c.l.b16 %v2788
      %v2933 = vunpack.c.l.b16 %v2789
      %v2934 = vunpack.c.l.b16 %v2790
      %v2935 = vunpack.c.l.b16 %v2791
      %v2936 = vunpack.c.l.b16 %v2792
      %v2937 = vunpack.c.l.b16 %v2793
      %v2938 = vunpack.c.l.b16 %v2794
      %v2939 = vunpack.c.l.b16 %v2795
      %v2940 = vunpack.c.l.b16 %v2796
      %v2941 = vunpack.c.l.b16 %v2797
      %v2942 = vunpack.c.l.b16 %v2798
      %v2943 = vunpack.c.l.b16 %v2799
      %v2944 = vunpack.c.l.b16 %v2800
      %v2945 = vunpack.c.l.b16 %v2801
      %v2946 = vunpack.c.l.b16 %v2802
      %v2947 = vunpack.c.l.b16 %v2803
      %v2948 = vunpack.c.l.b16 %v2804
      %v2949 = vunpack.c.l.b16 %v2805
      %v2950 = vunpack.c.l.b16 %v2806
      %v2951 = vunpack.c.l.b16 %v2807
      %v2952 = vunpack.c.l.b16 %v2808
      %v2953 = vunpack.c.l.b16 %v2809
      %v2954 = vunpack.c.l.b16 %v2810
      %v2955 = vunpack.c.l.b16 %v2811
      %v2956 = vunpack.c.l.b16 %v2812
      %v2957 = vunpack.c.l.b16 %v2813
      %v2958 = vunpack.c.l.b16 %v2814
      %v2959 = vunpack.c.l.b16 %v2815
      %v2960 = vunpack.c.l.b16 %v2816
      %v2961 = vunpack.c.l.b16 %v2817
      %v2962 = vunpack.c.l.b16 %v2818
      %v2963 = vpack.c.b16 %v2892, %v2891
      %v2964 = vpack.c.b16 %v2894, %v2893
      %v2965 = vpack.c.b16 %v2896, %v2895
      %v2966 = vpack.c.b16 %v2898, %v2897
      %v2967 = vpack.c.b16 %v2900, %v2899
      %v2968 = vpack.c.b16 %v2902, %v2901
      %v2969 = vpack.c.b16 %v2904, %v2903
      %v2970 = vpack.c.b16 %v2906, %v2905
      %v2971 = vpack.c.b16 %v2908, %v2907
      %v2972 = vpack.c.b16 %v2910, %v2909
      %v2973 = vpack.c.b16 %v2912, %v2911
      %v2974 = vpack.c.b16 %v2914, %v2913
      %v2975 = vpack.c.b16 %v2916, %v2915
      %v2976 = vpack.c.b16 %v2918, %v2917
      %v2977 = vpack.c.b16 %v2920, %v2919
      %v2978 = vpack.c.b16 %v2922, %v2921
      %v2979 = vpack.c.b16 %v2924, %v2923
      %v2980 = vpack.c.b16 %v2926, %v2925
      %v2981 = vpack.c.b16 %v2928, %v2927
      %v2982 = vpack.c.b16 %v2930, %v2929
      %v2983 = vpack.c.b16 %v2932, %v2931
      %v2984 = vpack.c.b16 %v2934, %v2933
      %v2985 = vpack.c.b16 %v2936, %v2935
      %v2986 = vpack.c.b16 %v2938, %v2937
      %v2987 = vpack.c.b16 %v2940, %v2939
      %v2988 = vpack.c.b16 %v2942, %v2941
      %v2989 = vpack.c.b16 %v2944, %v2943
      %v2990 = vpack.c.b16 %v2946, %v2945
      %v2991 = vpack.c.b16 %v2948, %v2947
      %v2992 = vpack.c.b16 %v2950, %v2949
      %v2993 = vpack.c.b16 %v2952, %v2951
      %v2994 = vpack.c.b16 %v2954, %v2953
      %v2995 = vpack.c.b16 %v2956, %v2955
      %v2996 = vpack.c.b16 %v2958, %v2957
      %v2997 = vpack.c.b16 %v2960, %v2959
      %v2998 = vpack.c.b16 %v2962, %v2961
      %v3036 = vsel %vm2169, %v2631, 0
      %v3039 = vsel %vm2169, %v2632, 0
      %v3042 = vsel %vm2169, %v2633, 0
      %v3045 = vsel %vm2169, %v2634, 0
      %3047 = vmatprep.subr.bf16.mxu0 0
      %3048 = vmatpush1.bf16.msra.mxu0 %v2963
      %3049 = vmatprep.subr.bf16.mxu0 0
      %3050 = vmatpush1.bf16.msra.mxu0 %v2964
      %3051 = vmatprep.subr.bf16.mxu0 0
      %3052 = vmatpush1.bf16.msra.mxu0 %v2965
      %3053 = vmatprep.subr.bf16.mxu0 0
      %3054 = vmatpush1.bf16.msra.mxu0 %v2966
      %3055 = vmatprep.subr.bf16.mxu0 0
      %3056 = vmatpush1.bf16.msra.mxu0 %v2967
      %3057 = vmatprep.subr.bf16.mxu0 0
      %3058 = vmatpush1.bf16.msra.mxu0 %v2968
      %3059 = vmatprep.subr.bf16.mxu0 0
      %3060 = vmatpush1.bf16.msra.mxu0 %v2969
      %3061 = vmatprep.subr.bf16.mxu0 0
      %3062 = vmatpush1.bf16.msra.mxu0 %v2970
      %3063 = vmatprep.subr.bf16.mxu0 0
      %3064 = vmatpush1.bf16.msra.mxu0 %v2971
      %3065 = vmatprep.subr.bf16.mxu0 0
      %3066 = vmatpush1.bf16.msra.mxu0 %v2972
      %3067 = vmatprep.subr.bf16.mxu0 0
      %3068 = vmatpush1.bf16.msra.mxu0 %v2973
      %3069 = vmatprep.subr.bf16.mxu0 0
      %3070 = vmatpush1.bf16.msra.mxu0 %v2974
      %3071 = vmatprep.subr.bf16.mxu0 0
      %3072 = vmatpush1.bf16.msra.mxu0 %v2975
      %3073 = vmatprep.subr.bf16.mxu0 0
      %3074 = vmatpush1.bf16.msra.mxu0 %v2976
      %3075 = vmatprep.subr.bf16.mxu0 0
      %3076 = vmatpush1.bf16.msra.mxu0 %v2977
      %3077 = vmatprep.subr.bf16.mxu0 0
      %3078 = vmatpush1.bf16.msra.mxu0 %v2978
      %3079 = vmatprep.mubr.bf16.mxu0 %v2701
      %3080 = vmatmul.mubr.bf16.gmra.mrb[0].mxu0 %v2685
      %v3081 = vpop.f32.mrb[0].mxu0
      %v3082 = vadd.f32 0.0, %v3081
      %v3083 = vpop.f32.mrb[0].mxu0
      %v3084 = vpop.f32.mrb[0].mxu0
      %v3085 = vadd.f32 0.0, %v3084
      %v3086 = vpop.f32.mrb[0].mxu0
      %3087 = vmatprep.mubr.bf16.mxu0 %v2705
      %3088 = vmatmul.mubr.bf16.gmra.mrb[0].mxu0 %v2689
      %v3089 = vpop.f32.mrb[0].mxu0
      %v3090 = vadd.f32 0.0, %v3089
      %v3091 = vpop.f32.mrb[0].mxu0
      %v3092 = vpop.f32.mrb[0].mxu0
      %v3093 = vadd.f32 0.0, %v3092
      %v3094 = vpop.f32.mrb[0].mxu0
      %3095 = vmatprep.mubr.bf16.mxu0 %v2709
      %3096 = vmatmul.mubr.bf16.gmra.mrb[0].mxu0 %v2693
      %v3097 = vpop.f32.mrb[0].mxu0
      %v3098 = vadd.f32 0.0, %v3097
      %v3099 = vpop.f32.mrb[0].mxu0
      %v3100 = vpop.f32.mrb[0].mxu0
      %v3101 = vadd.f32 0.0, %v3100
      %v3102 = vpop.f32.mrb[0].mxu0
      %3103 = vmatprep.mubr.bf16.mxu0 %v2713
      %3104 = vmatmul.mubr.bf16.gmra.mrb[0].mxu0 %v2697
      %v3105 = vpop.f32.mrb[0].mxu0
      %v3106 = vadd.f32 0.0, %v3105
      %v3107 = vpop.f32.mrb[0].mxu0
      %v3108 = vpop.f32.mrb[0].mxu0
      %v3109 = vadd.f32 0.0, %v3108
      %v3110 = vpop.f32.mrb[0].mxu0
      %3111 = vdwg.mxu0
      %3112 = vmatprep.subr.bf16.mxu0 0
      %3113 = vmatpush1.bf16.msra.mxu0 %v2979
      %3114 = vmatprep.subr.bf16.mxu0 0
      %3115 = vmatpush1.bf16.msra.mxu0 %v2980
      %3116 = vmatprep.subr.bf16.mxu0 0
      %3117 = vmatpush1.bf16.msra.mxu0 %v2981
      %3118 = vmatprep.subr.bf16.mxu0 0
      %3119 = vmatpush1.bf16.msra.mxu0 %v2982
      %3120 = vmatprep.subr.bf16.mxu0 0
      %3121 = vmatpush1.bf16.msra.mxu0 %v2983
      %3122 = vmatprep.subr.bf16.mxu0 0
      %3123 = vmatpush1.bf16.msra.mxu0 %v2984
      %3124 = vmatprep.subr.bf16.mxu0 0
      %3125 = vmatpush1.bf16.msra.mxu0 %v2985
      %3126 = vmatprep.subr.bf16.mxu0 0
      %3127 = vmatpush1.bf16.msra.mxu0 %v2986
      %3128 = vmatprep.subr.bf16.mxu0 0
      %3129 = vmatpush1.bf16.msra.mxu0 %v2987
      %3130 = vmatprep.subr.bf16.mxu0 0
      %3131 = vmatpush1.bf16.msra.mxu0 %v2988
      %3132 = vmatprep.subr.bf16.mxu0 0
      %3133 = vmatpush1.bf16.msra.mxu0 %v2989
      %3134 = vmatprep.subr.bf16.mxu0 0
      %3135 = vmatpush1.bf16.msra.mxu0 %v2990
      %3136 = vmatprep.subr.bf16.mxu0 0
      %3137 = vmatpush1.bf16.msra.mxu0 %v2991
      %3138 = vmatprep.subr.bf16.mxu0 0
      %3139 = vmatpush1.bf16.msra.mxu0 %v2992
      %3140 = vmatprep.subr.bf16.mxu0 0
      %3141 = vmatpush1.bf16.msra.mxu0 %v2993
      %3142 = vmatprep.subr.bf16.mxu0 0
      %3143 = vmatpush1.bf16.msra.mxu0 %v2994
      %3144 = vmatprep.mubr.bf16.mxu0 %v2733
      %3145 = vmatmul.mubr.bf16.gmra.mrb[0].mxu0 %v2717
      %v3146 = vpop.f32.mrb[0].mxu0
      %v3147 = vadd.f32 %v3082, %v3146
      %v3148 = vpop.f32.mrb[0].mxu0
      %v3149 = vpop.f32.mrb[0].mxu0
      %v3150 = vadd.f32 %v3085, %v3149
      %v3151 = vpop.f32.mrb[0].mxu0
      %3152 = vmatprep.mubr.bf16.mxu0 %v2737
      %3153 = vmatmul.mubr.bf16.gmra.mrb[0].mxu0 %v2721
      %v3154 = vpop.f32.mrb[0].mxu0
      %v3155 = vadd.f32 %v3090, %v3154
      %v3156 = vpop.f32.mrb[0].mxu0
      %v3157 = vpop.f32.mrb[0].mxu0
      %v3158 = vadd.f32 %v3093, %v3157
      %v3159 = vpop.f32.mrb[0].mxu0
      %3160 = vmatprep.mubr.bf16.mxu0 %v2741
      %3161 = vmatmul.mubr.bf16.gmra.mrb[0].mxu0 %v2725
      %v3162 = vpop.f32.mrb[0].mxu0
      %v3163 = vadd.f32 %v3098, %v3162
      %v3164 = vpop.f32.mrb[0].mxu0
      %v3165 = vpop.f32.mrb[0].mxu0
      %v3166 = vadd.f32 %v3101, %v3165
      %v3167 = vpop.f32.mrb[0].mxu0
      %3168 = vmatprep.mubr.bf16.mxu0 %v2745
      %3169 = vmatmul.mubr.bf16.gmra.mrb[0].mxu0 %v2729
      %v3170 = vpop.f32.mrb[0].mxu0
      %v3171 = vadd.f32 %v3106, %v3170
      %v3172 = vpop.f32.mrb[0].mxu0
      %v3173 = vpop.f32.mrb[0].mxu0
      %v3174 = vadd.f32 %v3109, %v3173
      %v3175 = vpop.f32.mrb[0].mxu0
      %3176 = vdwg.mxu0
      %3177 = vmatprep.subr.bf16.mxu0 0
      %3178 = vmatpush1.bf16.msra.mxu0 %v2995
      %3179 = vmatprep.subr.bf16.mxu0 0
      %3180 = vmatpush1.bf16.msra.mxu0 %v2996
      %3181 = vmatprep.subr.bf16.mxu0 0
      %3182 = vmatpush1.bf16.msra.mxu0 %v2997
      %3183 = vmatprep.subr.bf16.mxu0 0
      %3184 = vmatpush1.bf16.msra.mxu0 %v2998
      %3185 = vmatprep.subr.bf16.mxu0 0
      %3186 = vmatpush1.bf16.msra.mxu0 0
      %3187 = vmatprep.subr.bf16.mxu0 0
      %3188 = vmatpush1.bf16.msra.mxu0 0
      %3189 = vmatprep.subr.bf16.mxu0 0
      %3190 = vmatpush1.bf16.msra.mxu0 0
      %3191 = vmatprep.subr.bf16.mxu0 0
      %3192 = vmatpush1.bf16.msra.mxu0 0
      %3193 = vmatprep.subr.bf16.mxu0 0
      %3194 = vmatpush1.bf16.msra.mxu0 0
      %3195 = vmatprep.subr.bf16.mxu0 0
      %3196 = vmatpush1.bf16.msra.mxu0 0
      %3197 = vmatprep.subr.bf16.mxu0 0
      %3198 = vmatpush1.bf16.msra.mxu0 0
      %3199 = vmatprep.subr.bf16.mxu0 0
      %3200 = vmatpush1.bf16.msra.mxu0 0
      %3201 = vmatprep.subr.bf16.mxu0 0
      %3202 = vmatpush1.bf16.msra.mxu0 0
      %3203 = vmatprep.subr.bf16.mxu0 0
      %3204 = vmatpush1.bf16.msra.mxu0 0
      %3205 = vmatprep.subr.bf16.mxu0 0
      %3206 = vmatpush1.bf16.msra.mxu0 0
      %3207 = vmatprep.subr.bf16.mxu0 0
      %3208 = vmatpush1.bf16.msra.mxu0 0
      %3209 = vmatprep.mubr.bf16.mxu0 0
      %3210 = vmatmul.mubr.bf16.gmra.mrb[0].mxu0 %v3036
      %v3211 = vpop.f32.mrb[0].mxu0
      %v3212 = vadd.f32 %v3147, %v3211
      %v3213 = vpop.f32.mrb[0].mxu0
      %v3214 = vpop.f32.mrb[0].mxu0
      %v3215 = vadd.f32 %v3150, %v3214
      %v3216 = vpop.f32.mrb[0].mxu0
      %3217 = vmatprep.mubr.bf16.mxu0 0
      %3218 = vmatmul.mubr.bf16.gmra.mrb[0].mxu0 %v3039
      %v3219 = vpop.f32.mrb[0].mxu0
      %v3220 = vadd.f32 %v3155, %v3219
      %v3221 = vpop.f32.mrb[0].mxu0
      %v3222 = vpop.f32.mrb[0].mxu0
      %v3223 = vadd.f32 %v3158, %v3222
      %v3224 = vpop.f32.mrb[0].mxu0
      %3225 = vmatprep.mubr.bf16.mxu0 0
      %3226 = vmatmul.mubr.bf16.gmra.mrb[0].mxu0 %v3042
      %v3227 = vpop.f32.mrb[0].mxu0
      %v3228 = vadd.f32 %v3163, %v3227
      %v3229 = vpop.f32.mrb[0].mxu0
      %v3230 = vpop.f32.mrb[0].mxu0
      %v3231 = vadd.f32 %v3166, %v3230
      %v3232 = vpop.f32.mrb[0].mxu0
      %3233 = vmatprep.mubr.bf16.mxu0 0
      %3234 = vmatmul.mubr.bf16.gmra.mrb[0].mxu0 %v3045
      %v3235 = vpop.f32.mrb[0].mxu0
      %v3236 = vadd.f32 %v3171, %v3235
      %v3237 = vpop.f32.mrb[0].mxu0
      %v3238 = vpop.f32.mrb[0].mxu0
      %v3239 = vadd.f32 %v3174, %v3238
      %v3240 = vpop.f32.mrb[0].mxu0
      %3241 = vdwg.mxu0
      %v3242 = vld [vmem:[%s15] sm:$0x1]
      %v3244 = vlaneseq
      %v3245 = vshrl.u32 %v3244, 7
      %v3246 = vsub.s32 0, %v3245
      %v3247 = vrot.slane %v3242, %v3246
      %v3249 = vmul.f32 %v3212, %v3247
      %v3250 = vmul.f32 %v3215, %v3247
      %v3251 = vmul.f32 %v3220, %v3247
      %v3252 = vmul.f32 %v3223, %v3247
      %v3253 = vmul.f32 %v3228, %v3247
      %v3254 = vmul.f32 %v3231, %v3247
      %v3255 = vmul.f32 %v3236, %v3247
      %v3256 = vmul.f32 %v3239, %v3247
      %v3257 = vld [vmem:[%s17] sm:$0x1]
      %v3259 = vlaneseq
      %v3260 = vshrl.u32 %v3259, 7
      %v3261 = vsub.s32 0, %v3260
      %v3262 = vrot.slane %v3257, %v3261
      %v3264 = vadd.f32 %v3249, %v3262
      %v3265 = vadd.f32 %v3250, %v3262
      %v3266 = vadd.f32 %v3251, %v3262
      %v3267 = vadd.f32 %v3252, %v3262
      %v3268 = vadd.f32 %v3253, %v3262
      %v3269 = vadd.f32 %v3254, %v3262
      %v3270 = vadd.f32 %v3255, %v3262
      %v3271 = vadd.f32 %v3256, %v3262
      %v3272 = vmax.f32 %v3264, 0.0
      %v3273 = vmax.f32 %v3265, 0.0
      %v3274 = vmax.f32 %v3266, 0.0
      %v3275 = vmax.f32 %v3267, 0.0
      %v3276 = vmax.f32 %v3268, 0.0
      %v3277 = vmax.f32 %v3269, 0.0
      %v3278 = vmax.f32 %v3270, 0.0
      %v3279 = vmax.f32 %v3271, 0.0
      %v3280 = vld [vmem:[%s19] sm:$0xf]
      %v3281 = vld [vmem:[%s19 + $0x4] sm:$0xf]
      %v3282 = vld [vmem:[%s19 + $0x8] sm:$0xf]
      %v3283 = vld [vmem:[%s19 + $0xc] sm:$0xf]
      %v3284 = vld [vmem:[%s19 + $0x10] sm:$0xf]
      %v3285 = vld [vmem:[%s19 + $0x14] sm:$0xf]
      %v3286 = vld [vmem:[%s19 + $0x18] sm:$0xf]
      %v3287 = vld [vmem:[%s19 + $0x1c] sm:$0xf]
      %v3288 = vpack.c.bf16 %v3273, %v3272
      %v3289 = vpack.c.bf16 %v3275, %v3274
      %v3290 = vpack.c.bf16 %v3277, %v3276
      %v3291 = vpack.c.bf16 %v3279, %v3278
      %v3300 = vunpack.c.l.b16 %v3280
      %v3301 = vunpack.c.l.b16 %v3281
      %v3302 = vunpack.c.l.b16 %v3282
      %v3303 = vunpack.c.l.b16 %v3283
      %v3304 = vunpack.c.l.b16 %v3284
      %v3305 = vunpack.c.l.b16 %v3285
      %v3306 = vunpack.c.l.b16 %v3286
      %v3307 = vunpack.c.l.b16 %v3287
      %v3308 = vpack.c.b16 %v3301, %v3300
      %v3309 = vpack.c.b16 %v3303, %v3302
      %v3310 = vpack.c.b16 %v3305, %v3304
      %v3311 = vpack.c.b16 %v3307, %v3306
      %v3313 = vsel %vm2169, %v3308, 0
      %v3316 = vsel %vm2169, %v3309, 0
      %v3319 = vsel %vm2169, %v3310, 0
      %v3322 = vsel %vm2169, %v3311, 0
      %3324 = vmatprep.subr.bf16.mxu0 0
      %3325 = vmatpush1.bf16.msra.mxu0 %v3288
      %3326 = vmatprep.subr.bf16.mxu0 0
      %3327 = vmatpush1.bf16.msra.mxu0 %v3289
      %3328 = vmatprep.subr.bf16.mxu0 0
      %3329 = vmatpush1.bf16.msra.mxu0 %v3290
      %3330 = vmatprep.subr.bf16.mxu0 0
      %3331 = vmatpush1.bf16.msra.mxu0 %v3291
      %3332 = vmatprep.subr.bf16.mxu0 0
      %3333 = vmatpush1.bf16.msra.mxu0 0
      %3334 = vmatprep.subr.bf16.mxu0 0
      %3335 = vmatpush1.bf16.msra.mxu0 0
      %3336 = vmatprep.subr.bf16.mxu0 0
      %3337 = vmatpush1.bf16.msra.mxu0 0
      %3338 = vmatprep.subr.bf16.mxu0 0
      %3339 = vmatpush1.bf16.msra.mxu0 0
      %3340 = vmatprep.subr.bf16.mxu0 0
      %3341 = vmatpush1.bf16.msra.mxu0 0
      %3342 = vmatprep.subr.bf16.mxu0 0
      %3343 = vmatpush1.bf16.msra.mxu0 0
      %3344 = vmatprep.subr.bf16.mxu0 0
      %3345 = vmatpush1.bf16.msra.mxu0 0
      %3346 = vmatprep.subr.bf16.mxu0 0
      %3347 = vmatpush1.bf16.msra.mxu0 0
      %3348 = vmatprep.subr.bf16.mxu0 0
      %3349 = vmatpush1.bf16.msra.mxu0 0
      %3350 = vmatprep.subr.bf16.mxu0 0
      %3351 = vmatpush1.bf16.msra.mxu0 0
      %3352 = vmatprep.subr.bf16.mxu0 0
      %3353 = vmatpush1.bf16.msra.mxu0 0
      %3354 = vmatprep.subr.bf16.mxu0 0
      %3355 = vmatpush1.bf16.msra.mxu0 0
      %3356 = vmatprep.mubr.bf16.mxu0 0
      %3357 = vmatmul.mubr.bf16.gmra.mrb[0].mxu0 %v3313
      %v3358 = vpop.f32.mrb[0].mxu0
      %v3359 = vadd.f32 0.0, %v3358
      %v3360 = vpop.f32.mrb[0].mxu0
      %v3361 = vpop.f32.mrb[0].mxu0
      %v3362 = vadd.f32 0.0, %v3361
      %v3363 = vpop.f32.mrb[0].mxu0
      %3364 = vmatprep.mubr.bf16.mxu0 0
      %3365 = vmatmul.mubr.bf16.gmra.mrb[0].mxu0 %v3316
      %v3366 = vpop.f32.mrb[0].mxu0
      %v3367 = vadd.f32 0.0, %v3366
      %v3368 = vpop.f32.mrb[0].mxu0
      %v3369 = vpop.f32.mrb[0].mxu0
      %v3370 = vadd.f32 0.0, %v3369
      %v3371 = vpop.f32.mrb[0].mxu0
      %3372 = vmatprep.mubr.bf16.mxu0 0
      %3373 = vmatmul.mubr.bf16.gmra.mrb[0].mxu0 %v3319
      %v3374 = vpop.f32.mrb[0].mxu0
      %v3375 = vadd.f32 0.0, %v3374
      %v3376 = vpop.f32.mrb[0].mxu0
      %v3377 = vpop.f32.mrb[0].mxu0
      %v3378 = vadd.f32 0.0, %v3377
      %v3379 = vpop.f32.mrb[0].mxu0
      %3380 = vmatprep.mubr.bf16.mxu0 0
      %3381 = vmatmul.mubr.bf16.gmra.mrb[0].mxu0 %v3322
      %v3382 = vpop.f32.mrb[0].mxu0
      %v3383 = vadd.f32 0.0, %v3382
      %v3384 = vpop.f32.mrb[0].mxu0
      %v3385 = vpop.f32.mrb[0].mxu0
      %v3386 = vadd.f32 0.0, %v3385
      %v3387 = vpop.f32.mrb[0].mxu0
      %3388 = vdwg.mxu0
      %v3389 = vmax.f32 %v3359, %v3367
      %v3390 = vmax.f32 %v3362, %v3370
      %v3391 = vmax.f32 %v3375, %v3383
      %v3392 = vmax.f32 %v3378, %v3386
      %v3393 = vmax.f32 %v3389, %v3391
      %v3394 = vmax.f32 %v3390, %v3392
      %v3395 = vpack.c.bf16 %v3394, %v3393
      %v3396 = vld [vmem:[%s21] sm:$0xf]
      %v3397 = vld [vmem:[%s21 + $0x4] sm:$0xf]
      %v3398 = vld [vmem:[%s21 + $0x8] sm:$0xf]
      %v3399 = vld [vmem:[%s21 + $0xc] sm:$0xf]
      %v3400 = vld [vmem:[%s21 + $0x10] sm:$0xf]
      %v3401 = vld [vmem:[%s21 + $0x14] sm:$0xf]
      %v3402 = vld [vmem:[%s21 + $0x18] sm:$0xf]
      %v3403 = vld [vmem:[%s21 + $0x1c] sm:$0xf]
      %v3404 = vld [vmem:[%s21 + $0x20] sm:$0xf]
      %v3405 = vld [vmem:[%s21 + $0x24] sm:$0xf]
      %v3406 = vld [vmem:[%s21 + $0x28] sm:$0xf]
      %v3407 = vld [vmem:[%s21 + $0x2c] sm:$0xf]
      %v3408 = vld [vmem:[%s21 + $0x30] sm:$0xf]
      %v3409 = vld [vmem:[%s21 + $0x34] sm:$0xf]
      %v3410 = vld [vmem:[%s21 + $0x38] sm:$0xf]
      %v3411 = vld [vmem:[%s21 + $0x3c] sm:$0xf]
      %v3412 = vld [vmem:[%s21 + $0x40] sm:$0xf]
      %v3413 = vld [vmem:[%s21 + $0x44] sm:$0xf]
      %v3432 = vunpack.c.l.b16 %v3396
      %v3433 = vunpack.c.l.b16 %v3397
      %v3434 = vunpack.c.l.b16 %v3398
      %v3435 = vunpack.c.l.b16 %v3399
      %v3436 = vunpack.c.l.b16 %v3400
      %v3437 = vunpack.c.l.b16 %v3401
      %v3438 = vunpack.c.l.b16 %v3402
      %v3439 = vunpack.c.l.b16 %v3403
      %v3440 = vunpack.c.l.b16 %v3404
      %v3441 = vunpack.c.l.b16 %v3405
      %v3442 = vunpack.c.l.b16 %v3406
      %v3443 = vunpack.c.l.b16 %v3407
      %v3444 = vunpack.c.l.b16 %v3408
      %v3445 = vunpack.c.l.b16 %v3409
      %v3446 = vunpack.c.l.b16 %v3410
      %v3447 = vunpack.c.l.b16 %v3411
      %v3448 = vunpack.c.l.b16 %v3412
      %v3449 = vunpack.c.l.b16 %v3413
      %v3450 = vpack.c.b16 %v3433, %v3432
      %v3451 = vpack.c.b16 %v3435, %v3434
      %v3452 = vpack.c.b16 %v3437, %v3436
      %v3453 = vpack.c.b16 %v3439, %v3438
      %v3454 = vpack.c.b16 %v3441, %v3440
      %v3455 = vpack.c.b16 %v3443, %v3442
      %v3456 = vpack.c.b16 %v3445, %v3444
      %v3457 = vpack.c.b16 %v3447, %v3446
      %v3458 = vpack.c.b16 %v3449, %v3448
      %vm3459 = vcmask 130048
      %v3461 = vsel %vm3459, %v3450, 0
      %v3464 = vsel %vm3459, %v3451, 0
      %v3467 = vsel %vm3459, %v3452, 0
      %v3470 = vsel %vm3459, %v3453, 0
      %v3473 = vsel %vm3459, %v3454, 0
      %v3476 = vsel %vm3459, %v3455, 0
      %v3479 = vsel %vm3459, %v3456, 0
      %v3482 = vsel %vm3459, %v3457, 0
      %v3485 = vsel %vm3459, %v3458, 0
      %3487 = vmatprep.subr.bf16.mxu0 0
      %3488 = vmatpush1.bf16.msra.mxu0 %v3395
      %3489 = vmatprep.subr.bf16.mxu0 0
      %3490 = vmatpush1.bf16.msra.mxu0 0
      %3491 = vmatprep.subr.bf16.mxu0 0
      %3492 = vmatpush1.bf16.msra.mxu0 0
      %3493 = vmatprep.subr.bf16.mxu0 0
      %3494 = vmatpush1.bf16.msra.mxu0 0
      %3495 = vmatprep.subr.bf16.mxu0 0
      %3496 = vmatpush1.bf16.msra.mxu0 0
      %3497 = vmatprep.subr.bf16.mxu0 0
      %3498 = vmatpush1.bf16.msra.mxu0 0
      %3499 = vmatprep.subr.bf16.mxu0 0
      %3500 = vmatpush1.bf16.msra.mxu0 0
      %3501 = vmatprep.subr.bf16.mxu0 0
      %3502 = vmatpush1.bf16.msra.mxu0 0
      %3503 = vmatprep.subr.bf16.mxu0 0
      %3504 = vmatpush1.bf16.msra.mxu0 0
      %3505 = vmatprep.subr.bf16.mxu0 0
      %3506 = vmatpush1.bf16.msra.mxu0 0
      %3507 = vmatprep.subr.bf16.mxu0 0
      %3508 = vmatpush1.bf16.msra.mxu0 0
      %3509 = vmatprep.subr.bf16.mxu0 0
      %3510 = vmatpush1.bf16.msra.mxu0 0
      %3511 = vmatprep.subr.bf16.mxu0 0
      %3512 = vmatpush1.bf16.msra.mxu0 0
      %3513 = vmatprep.subr.bf16.mxu0 0
      %3514 = vmatpush1.bf16.msra.mxu0 0
      %3515 = vmatprep.subr.bf16.mxu0 0
      %3516 = vmatpush1.bf16.msra.mxu0 0
      %3517 = vmatprep.subr.bf16.mxu0 0
      %3518 = vmatpush1.bf16.msra.mxu0 0
      %3519 = vmatprep.mubr.bf16.mxu0 0
      %3520 = vmatmul.mubr.bf16.gmra.mrb[0].mxu0 %v3461
      %v3521 = vpop.f32.mrb[0].mxu0
      %v3522 = vadd.f32 0.0, %v3521
      %v3523 = vpop.f32.mrb[0].mxu0
      %v3524 = vpop.f32.mrb[0].mxu0
      %v3525 = vadd.f32 0.0, %v3524
      %v3526 = vpop.f32.mrb[0].mxu0
      %3527 = vmatprep.mubr.bf16.mxu0 0
      %3528 = vmatmul.mubr.bf16.gmra.mrb[0].mxu0 %v3464
      %v3529 = vpop.f32.mrb[0].mxu0
      %v3530 = vadd.f32 0.0, %v3529
      %v3531 = vpop.f32.mrb[0].mxu0
      %v3532 = vpop.f32.mrb[0].mxu0
      %v3533 = vadd.f32 0.0, %v3532
      %v3534 = vpop.f32.mrb[0].mxu0
      %3535 = vmatprep.mubr.bf16.mxu0 0
      %3536 = vmatmul.mubr.bf16.gmra.mrb[0].mxu0 %v3467
      %v3537 = vpop.f32.mrb[0].mxu0
      %v3538 = vadd.f32 0.0, %v3537
      %v3539 = vpop.f32.mrb[0].mxu0
      %v3540 = vpop.f32.mrb[0].mxu0
      %v3541 = vadd.f32 0.0, %v3540
      %v3542 = vpop.f32.mrb[0].mxu0
      %3543 = vmatprep.mubr.bf16.mxu0 0
      %3544 = vmatmul.mubr.bf16.gmra.mrb[0].mxu0 %v3470
      %v3545 = vpop.f32.mrb[0].mxu0
      %v3546 = vadd.f32 0.0, %v3545
      %v3547 = vpop.f32.mrb[0].mxu0
      %v3548 = vpop.f32.mrb[0].mxu0
      %v3549 = vadd.f32 0.0, %v3548
      %v3550 = vpop.f32.mrb[0].mxu0
      %3551 = vmatprep.mubr.bf16.mxu0 0
      %3552 = vmatmul.mubr.bf16.gmra.mrb[0].mxu0 %v3473
      %v3553 = vpop.f32.mrb[0].mxu0
      %v3554 = vadd.f32 0.0, %v3553
      %v3555 = vpop.f32.mrb[0].mxu0
      %v3556 = vpop.f32.mrb[0].mxu0
      %v3557 = vadd.f32 0.0, %v3556
      %v3558 = vpop.f32.mrb[0].mxu0
      %3559 = vmatprep.mubr.bf16.mxu0 0
      %3560 = vmatmul.mubr.bf16.gmra.mrb[0].mxu0 %v3476
      %v3561 = vpop.f32.mrb[0].mxu0
      %v3562 = vadd.f32 0.0, %v3561
      %v3563 = vpop.f32.mrb[0].mxu0
      %v3564 = vpop.f32.mrb[0].mxu0
      %v3565 = vadd.f32 0.0, %v3564
      %v3566 = vpop.f32.mrb[0].mxu0
      %3567 = vmatprep.mubr.bf16.mxu0 0
      %3568 = vmatmul.mubr.bf16.gmra.mrb[0].mxu0 %v3479
      %v3569 = vpop.f32.mrb[0].mxu0
      %v3570 = vadd.f32 0.0, %v3569
      %v3571 = vpop.f32.mrb[0].mxu0
      %v3572 = vpop.f32.mrb[0].mxu0
      %v3573 = vadd.f32 0.0, %v3572
      %v3574 = vpop.f32.mrb[0].mxu0
      %3575 = vmatprep.mubr.bf16.mxu0 0
      %3576 = vmatmul.mubr.bf16.gmra.mrb[0].mxu0 %v3482
      %v3577 = vpop.f32.mrb[0].mxu0
      %v3578 = vadd.f32 0.0, %v3577
      %v3579 = vpop.f32.mrb[0].mxu0
      %v3580 = vpop.f32.mrb[0].mxu0
      %v3581 = vadd.f32 0.0, %v3580
      %v3582 = vpop.f32.mrb[0].mxu0
      %3583 = vmatprep.mubr.bf16.mxu0 0
      %3584 = vmatmul.mubr.bf16.gmra.mrb[0].mxu0 %v3485
      %v3585 = vpop.f32.mrb[0].mxu0
      %v3586 = vadd.f32 0.0, %v3585
      %v3587 = vpop.f32.mrb[0].mxu0
      %v3588 = vpop.f32.mrb[0].mxu0
      %v3589 = vadd.f32 0.0, %v3588
      %v3590 = vpop.f32.mrb[0].mxu0
      %3591 = vdwg.mxu0
      %v3592 = vpack.c.bf16 %v3525, %v3522
      %v3593 = vpack.c.bf16 %v3533, %v3530
      %v3594 = vpack.c.bf16 %v3541, %v3538
      %v3595 = vpack.c.bf16 %v3549, %v3546
      %v3596 = vpack.c.bf16 %v3557, %v3554
      %v3597 = vpack.c.bf16 %v3565, %v3562
      %v3598 = vpack.c.bf16 %v3573, %v3570
      %v3599 = vpack.c.bf16 %v3581, %v3578
      %v3600 = vpack.c.bf16 %v3589, %v3586
      %v3601 = vld [vmem:[%s23] sm:$0xff]
      %v3602 = vld [vmem:[%s23 + $0x8] sm:$0xff]
      %v3603 = vld [vmem:[%s23 + $0x10] sm:$0xff]
      %v3604 = vld [vmem:[%s23 + $0x18] sm:$0xff]
      %v3605 = vld [vmem:[%s23 + $0x20] sm:$0xff]
      %v3606 = vld [vmem:[%s23 + $0x28] sm:$0xff]
      %v3607 = vld [vmem:[%s23 + $0x30] sm:$0xff]
      %v3608 = vld [vmem:[%s23 + $0x38] sm:$0xff]
      %v3609 = vld [vmem:[%s23 + $0x40] sm:$0xff]
      %v3610 = vld [vmem:[%s23 + $0x48] sm:$0xff]
      %v3611 = vld [vmem:[%s23 + $0x50] sm:$0xff]
      %v3612 = vld [vmem:[%s23 + $0x58] sm:$0xff]
      %v3613 = vld [vmem:[%s23 + $0x60] sm:$0xff]
      %v3614 = vld [vmem:[%s23 + $0x68] sm:$0xff]
      %v3615 = vld [vmem:[%s23 + $0x70] sm:$0xff]
      %v3616 = vld [vmem:[%s23 + $0x78] sm:$0xff]
      %v3617 = vld [vmem:[%s23 + $0x80] sm:$0xff]
      %v3618 = vld [vmem:[%s23 + $0x88] sm:$0xff]
      %v3619 = vld [vmem:[%s23 + $0x90] sm:$0xff]
      %v3620 = vld [vmem:[%s23 + $0x98] sm:$0xff]
      %v3621 = vld [vmem:[%s23 + $0xa0] sm:$0xff]
      %v3622 = vld [vmem:[%s23 + $0xa8] sm:$0xff]
      %v3623 = vld [vmem:[%s23 + $0xb0] sm:$0xff]
      %v3624 = vld [vmem:[%s23 + $0xb8] sm:$0xff]
      %v3625 = vld [vmem:[%s23 + $0xc0] sm:$0xff]
      %v3626 = vld [vmem:[%s23 + $0xc8] sm:$0xff]
      %v3627 = vld [vmem:[%s23 + $0xd0] sm:$0xff]
      %v3628 = vld [vmem:[%s23 + $0xd8] sm:$0xff]
      %v3629 = vld [vmem:[%s23 + $0xe0] sm:$0xff]
      %v3630 = vld [vmem:[%s23 + $0xe8] sm:$0xff]
      %v3631 = vld [vmem:[%s23 + $0xf0] sm:$0xff]
      %v3632 = vld [vmem:[%s23 + $0xf8] sm:$0xff]
      %v3633 = vld [vmem:[%s23 + $0x100] sm:$0xff]
      %v3634 = vld [vmem:[%s23 + $0x108] sm:$0xff]
      %v3635 = vld [vmem:[%s23 + $0x110] sm:$0xff]
      %v3636 = vld [vmem:[%s23 + $0x118] sm:$0xff]
      %v3637 = vld [vmem:[%s23 + $0x120] sm:$0xff]
      %v3638 = vld [vmem:[%s23 + $0x128] sm:$0xff]
      %v3639 = vld [vmem:[%s23 + $0x130] sm:$0xff]
      %v3640 = vld [vmem:[%s23 + $0x138] sm:$0xff]
      %v3641 = vld [vmem:[%s23 + $0x140] sm:$0xff]
      %v3642 = vld [vmem:[%s23 + $0x148] sm:$0xff]
      %v3643 = vld [vmem:[%s23 + $0x150] sm:$0xff]
      %v3644 = vld [vmem:[%s23 + $0x158] sm:$0xff]
      %v3645 = vld [vmem:[%s23 + $0x160] sm:$0xff]
      %v3646 = vld [vmem:[%s23 + $0x168] sm:$0xff]
      %v3647 = vld [vmem:[%s23 + $0x170] sm:$0xff]
      %v3648 = vld [vmem:[%s23 + $0x178] sm:$0xff]
      %v3649 = vld [vmem:[%s23 + $0x180] sm:$0xff]
      %v3650 = vld [vmem:[%s23 + $0x188] sm:$0xff]
      %v3651 = vld [vmem:[%s23 + $0x190] sm:$0xff]
      %v3652 = vld [vmem:[%s23 + $0x198] sm:$0xff]
      %v3653 = vld [vmem:[%s23 + $0x1a0] sm:$0xff]
      %v3654 = vld [vmem:[%s23 + $0x1a8] sm:$0xff]
      %v3655 = vld [vmem:[%s23 + $0x1b0] sm:$0xff]
      %v3656 = vld [vmem:[%s23 + $0x1b8] sm:$0xff]
      %v3657 = vld [vmem:[%s23 + $0x1c0] sm:$0xff]
      %v3658 = vld [vmem:[%s23 + $0x1c8] sm:$0xff]
      %v3659 = vld [vmem:[%s23 + $0x1d0] sm:$0xff]
      %v3660 = vld [vmem:[%s23 + $0x1d8] sm:$0xff]
      %v3661 = vld [vmem:[%s23 + $0x1e0] sm:$0xff]
      %v3662 = vld [vmem:[%s23 + $0x1e8] sm:$0xff]
      %v3663 = vld [vmem:[%s23 + $0x1f0] sm:$0xff]
      %v3664 = vld [vmem:[%s23 + $0x1f8] sm:$0xff]
      %v3665 = vld [vmem:[%s23 + $0x200] sm:$0xff]
      %v3666 = vld [vmem:[%s23 + $0x208] sm:$0xff]
      %v3667 = vld [vmem:[%s23 + $0x210] sm:$0xff]
      %v3668 = vld [vmem:[%s23 + $0x218] sm:$0xff]
      %v3669 = vld [vmem:[%s23 + $0x220] sm:$0xff]
      %v3670 = vld [vmem:[%s23 + $0x228] sm:$0xff]
      %v3671 = vld [vmem:[%s23 + $0x230] sm:$0xff]
      %v3672 = vld [vmem:[%s23 + $0x238] sm:$0xff]
      %v3673 = vld [vmem:[%s23 + $0x240] sm:$0xff]
      %v3674 = vld [vmem:[%s23 + $0x248] sm:$0xff]
      %v3675 = vld [vmem:[%s23 + $0x250] sm:$0xff]
      %v3676 = vld [vmem:[%s23 + $0x258] sm:$0xff]
      %v3677 = vld [vmem:[%s23 + $0x260] sm:$0xff]
      %v3678 = vld [vmem:[%s23 + $0x268] sm:$0xff]
      %v3679 = vld [vmem:[%s23 + $0x270] sm:$0xff]
      %v3680 = vld [vmem:[%s23 + $0x278] sm:$0xff]
      %v3681 = vld [vmem:[%s23 + $0x280] sm:$0xff]
      %v3682 = vld [vmem:[%s23 + $0x288] sm:$0xff]
      %v3683 = vld [vmem:[%s23 + $0x290] sm:$0xff]
      %v3684 = vld [vmem:[%s23 + $0x298] sm:$0xff]
      %v3685 = vld [vmem:[%s23 + $0x2a0] sm:$0xff]
      %v3686 = vld [vmem:[%s23 + $0x2a8] sm:$0xff]
      %v3687 = vld [vmem:[%s23 + $0x2b0] sm:$0xff]
      %v3688 = vld [vmem:[%s23 + $0x2b8] sm:$0xff]
      %v3689 = vld [vmem:[%s23 + $0x2c0] sm:$0xff]
      %v3690 = vld [vmem:[%s23 + $0x2c8] sm:$0xff]
      %v3691 = vld [vmem:[%s23 + $0x2d0] sm:$0xff]
      %v3692 = vld [vmem:[%s23 + $0x2d8] sm:$0xff]
      %v3693 = vld [vmem:[%s23 + $0x2e0] sm:$0xff]
      %v3694 = vld [vmem:[%s23 + $0x2e8] sm:$0xff]
      %v3695 = vld [vmem:[%s23 + $0x2f0] sm:$0xff]
      %v3696 = vld [vmem:[%s23 + $0x2f8] sm:$0xff]
      %v3697 = vld [vmem:[%s23 + $0x300] sm:$0xff]
      %v3698 = vld [vmem:[%s23 + $0x308] sm:$0xff]
      %v3699 = vld [vmem:[%s23 + $0x310] sm:$0xff]
      %v3700 = vld [vmem:[%s23 + $0x318] sm:$0xff]
      %v3701 = vld [vmem:[%s23 + $0x320] sm:$0xff]
      %v3702 = vld [vmem:[%s23 + $0x328] sm:$0xff]
      %v3703 = vld [vmem:[%s23 + $0x330] sm:$0xff]
      %v3704 = vld [vmem:[%s23 + $0x338] sm:$0xff]
      %v3705 = vld [vmem:[%s23 + $0x340] sm:$0xff]
      %v3706 = vld [vmem:[%s23 + $0x348] sm:$0xff]
      %v3707 = vld [vmem:[%s23 + $0x350] sm:$0xff]
      %v3708 = vld [vmem:[%s23 + $0x358] sm:$0xff]
      %v3709 = vld [vmem:[%s23 + $0x360] sm:$0xff]
      %v3710 = vld [vmem:[%s23 + $0x368] sm:$0xff]
      %v3711 = vld [vmem:[%s23 + $0x370] sm:$0xff]
      %v3712 = vld [vmem:[%s23 + $0x378] sm:$0xff]
      %v3713 = vld [vmem:[%s23 + $0x380] sm:$0xff]
      %v3714 = vld [vmem:[%s23 + $0x388] sm:$0xff]
      %v3715 = vld [vmem:[%s23 + $0x390] sm:$0xff]
      %v3716 = vld [vmem:[%s23 + $0x398] sm:$0xff]
      %v3717 = vld [vmem:[%s23 + $0x3a0] sm:$0xff]
      %v3718 = vld [vmem:[%s23 + $0x3a8] sm:$0xff]
      %v3719 = vld [vmem:[%s23 + $0x3b0] sm:$0xff]
      %v3720 = vld [vmem:[%s23 + $0x3b8] sm:$0xff]
      %v3721 = vld [vmem:[%s23 + $0x3c0] sm:$0xff]
      %v3722 = vld [vmem:[%s23 + $0x3c8] sm:$0xff]
      %v3723 = vld [vmem:[%s23 + $0x3d0] sm:$0xff]
      %v3724 = vld [vmem:[%s23 + $0x3d8] sm:$0xff]
      %v3725 = vld [vmem:[%s23 + $0x3e0] sm:$0xff]
      %v3726 = vld [vmem:[%s23 + $0x3e8] sm:$0xff]
      %v3727 = vld [vmem:[%s23 + $0x3f0] sm:$0xff]
      %v3728 = vld [vmem:[%s23 + $0x3f8] sm:$0xff]
      %v3729 = vld [vmem:[%s23 + $0x400] sm:$0xff]
      %v3730 = vld [vmem:[%s23 + $0x408] sm:$0xff]
      %v3731 = vld [vmem:[%s23 + $0x410] sm:$0xff]
      %v3732 = vld [vmem:[%s23 + $0x418] sm:$0xff]
      %v3733 = vld [vmem:[%s23 + $0x420] sm:$0xff]
      %v3734 = vld [vmem:[%s23 + $0x428] sm:$0xff]
      %v3735 = vld [vmem:[%s23 + $0x430] sm:$0xff]
      %v3736 = vld [vmem:[%s23 + $0x438] sm:$0xff]
      %v3737 = vld [vmem:[%s23 + $0x440] sm:$0xff]
      %v3738 = vld [vmem:[%s23 + $0x448] sm:$0xff]
      %v3739 = vld [vmem:[%s23 + $0x450] sm:$0xff]
      %v3740 = vld [vmem:[%s23 + $0x458] sm:$0xff]
      %v3741 = vld [vmem:[%s23 + $0x460] sm:$0xff]
      %v3742 = vld [vmem:[%s23 + $0x468] sm:$0xff]
      %v3743 = vld [vmem:[%s23 + $0x470] sm:$0xff]
      %v3744 = vld [vmem:[%s23 + $0x478] sm:$0xff]
      %v3889 = vunpack.c.l.b16 %v3601
      %v3890 = vunpack.c.h.b16 %v3601
      %v3891 = vunpack.c.l.b16 %v3602
      %v3892 = vunpack.c.h.b16 %v3602
      %v3893 = vunpack.c.l.b16 %v3603
      %v3894 = vunpack.c.h.b16 %v3603
      %v3895 = vunpack.c.l.b16 %v3604
      %v3896 = vunpack.c.h.b16 %v3604
      %v3897 = vunpack.c.l.b16 %v3605
      %v3898 = vunpack.c.h.b16 %v3605
      %v3899 = vunpack.c.l.b16 %v3606
      %v3900 = vunpack.c.h.b16 %v3606
      %v3901 = vunpack.c.l.b16 %v3607
      %v3902 = vunpack.c.h.b16 %v3607
      %v3903 = vunpack.c.l.b16 %v3608
      %v3904 = vunpack.c.h.b16 %v3608
      %v3905 = vunpack.c.l.b16 %v3609
      %v3906 = vunpack.c.h.b16 %v3609
      %v3907 = vunpack.c.l.b16 %v3610
      %v3908 = vunpack.c.h.b16 %v3610
      %v3909 = vunpack.c.l.b16 %v3611
      %v3910 = vunpack.c.h.b16 %v3611
      %v3911 = vunpack.c.l.b16 %v3612
      %v3912 = vunpack.c.h.b16 %v3612
      %v3913 = vunpack.c.l.b16 %v3613
      %v3914 = vunpack.c.h.b16 %v3613
      %v3915 = vunpack.c.l.b16 %v3614
      %v3916 = vunpack.c.h.b16 %v3614
      %v3917 = vunpack.c.l.b16 %v3615
      %v3918 = vunpack.c.h.b16 %v3615
      %v3919 = vunpack.c.l.b16 %v3616
      %v3920 = vunpack.c.h.b16 %v3616
      %v3921 = vunpack.c.l.b16 %v3617
      %v3922 = vunpack.c.h.b16 %v3617
      %v3923 = vunpack.c.l.b16 %v3618
      %v3924 = vunpack.c.h.b16 %v3618
      %v3925 = vunpack.c.l.b16 %v3619
      %v3926 = vunpack.c.h.b16 %v3619
      %v3927 = vunpack.c.l.b16 %v3620
      %v3928 = vunpack.c.h.b16 %v3620
      %v3929 = vunpack.c.l.b16 %v3621
      %v3930 = vunpack.c.h.b16 %v3621
      %v3931 = vunpack.c.l.b16 %v3622
      %v3932 = vunpack.c.h.b16 %v3622
      %v3933 = vunpack.c.l.b16 %v3623
      %v3934 = vunpack.c.h.b16 %v3623
      %v3935 = vunpack.c.l.b16 %v3624
      %v3936 = vunpack.c.h.b16 %v3624
      %v3937 = vunpack.c.l.b16 %v3625
      %v3938 = vunpack.c.h.b16 %v3625
      %v3939 = vunpack.c.l.b16 %v3626
      %v3940 = vunpack.c.h.b16 %v3626
      %v3941 = vunpack.c.l.b16 %v3627
      %v3942 = vunpack.c.h.b16 %v3627
      %v3943 = vunpack.c.l.b16 %v3628
      %v3944 = vunpack.c.h.b16 %v3628
      %v3945 = vunpack.c.l.b16 %v3629
      %v3946 = vunpack.c.h.b16 %v3629
      %v3947 = vunpack.c.l.b16 %v3630
      %v3948 = vunpack.c.h.b16 %v3630
      %v3949 = vunpack.c.l.b16 %v3631
      %v3950 = vunpack.c.h.b16 %v3631
      %v3951 = vunpack.c.l.b16 %v3632
      %v3952 = vunpack.c.h.b16 %v3632
      %v3953 = vunpack.c.l.b16 %v3633
      %v3954 = vunpack.c.h.b16 %v3633
      %v3955 = vunpack.c.l.b16 %v3634
      %v3956 = vunpack.c.h.b16 %v3634
      %v3957 = vunpack.c.l.b16 %v3635
      %v3958 = vunpack.c.h.b16 %v3635
      %v3959 = vunpack.c.l.b16 %v3636
      %v3960 = vunpack.c.h.b16 %v3636
      %v3961 = vunpack.c.l.b16 %v3637
      %v3962 = vunpack.c.h.b16 %v3637
      %v3963 = vunpack.c.l.b16 %v3638
      %v3964 = vunpack.c.h.b16 %v3638
      %v3965 = vunpack.c.l.b16 %v3639
      %v3966 = vunpack.c.h.b16 %v3639
      %v3967 = vunpack.c.l.b16 %v3640
      %v3968 = vunpack.c.h.b16 %v3640
      %v3969 = vunpack.c.l.b16 %v3641
      %v3970 = vunpack.c.h.b16 %v3641
      %v3971 = vunpack.c.l.b16 %v3642
      %v3972 = vunpack.c.h.b16 %v3642
      %v3973 = vunpack.c.l.b16 %v3643
      %v3974 = vunpack.c.h.b16 %v3643
      %v3975 = vunpack.c.l.b16 %v3644
      %v3976 = vunpack.c.h.b16 %v3644
      %v3977 = vunpack.c.l.b16 %v3645
      %v3978 = vunpack.c.h.b16 %v3645
      %v3979 = vunpack.c.l.b16 %v3646
      %v3980 = vunpack.c.h.b16 %v3646
      %v3981 = vunpack.c.l.b16 %v3647
      %v3982 = vunpack.c.h.b16 %v3647
      %v3983 = vunpack.c.l.b16 %v3648
      %v3984 = vunpack.c.h.b16 %v3648
      %v3985 = vunpack.c.l.b16 %v3649
      %v3986 = vunpack.c.h.b16 %v3649
      %v3987 = vunpack.c.l.b16 %v3650
      %v3988 = vunpack.c.h.b16 %v3650
      %v3989 = vunpack.c.l.b16 %v3651
      %v3990 = vunpack.c.h.b16 %v3651
      %v3991 = vunpack.c.l.b16 %v3652
      %v3992 = vunpack.c.h.b16 %v3652
      %v3993 = vunpack.c.l.b16 %v3653
      %v3994 = vunpack.c.h.b16 %v3653
      %v3995 = vunpack.c.l.b16 %v3654
      %v3996 = vunpack.c.h.b16 %v3654
      %v3997 = vunpack.c.l.b16 %v3655
      %v3998 = vunpack.c.h.b16 %v3655
      %v3999 = vunpack.c.l.b16 %v3656
      %v4000 = vunpack.c.h.b16 %v3656
      %v4001 = vunpack.c.l.b16 %v3657
      %v4002 = vunpack.c.h.b16 %v3657
      %v4003 = vunpack.c.l.b16 %v3658
      %v4004 = vunpack.c.h.b16 %v3658
      %v4005 = vunpack.c.l.b16 %v3659
      %v4006 = vunpack.c.h.b16 %v3659
      %v4007 = vunpack.c.l.b16 %v3660
      %v4008 = vunpack.c.h.b16 %v3660
      %v4009 = vunpack.c.l.b16 %v3661
      %v4010 = vunpack.c.h.b16 %v3661
      %v4011 = vunpack.c.l.b16 %v3662
      %v4012 = vunpack.c.h.b16 %v3662
      %v4013 = vunpack.c.l.b16 %v3663
      %v4014 = vunpack.c.h.b16 %v3663
      %v4015 = vunpack.c.l.b16 %v3664
      %v4016 = vunpack.c.h.b16 %v3664
      %v4017 = vunpack.c.l.b16 %v3665
      %v4018 = vunpack.c.h.b16 %v3665
      %v4019 = vunpack.c.l.b16 %v3666
      %v4020 = vunpack.c.h.b16 %v3666
      %v4021 = vunpack.c.l.b16 %v3667
      %v4022 = vunpack.c.h.b16 %v3667
      %v4023 = vunpack.c.l.b16 %v3668
      %v4024 = vunpack.c.h.b16 %v3668
      %v4025 = vunpack.c.l.b16 %v3669
      %v4026 = vunpack.c.h.b16 %v3669
      %v4027 = vunpack.c.l.b16 %v3670
      %v4028 = vunpack.c.h.b16 %v3670
      %v4029 = vunpack.c.l.b16 %v3671
      %v4030 = vunpack.c.h.b16 %v3671
      %v4031 = vunpack.c.l.b16 %v3672
      %v4032 = vunpack.c.h.b16 %v3672
      %v4033 = vunpack.c.l.b16 %v3673
      %v4034 = vunpack.c.h.b16 %v3673
      %v4035 = vunpack.c.l.b16 %v3674
      %v4036 = vunpack.c.h.b16 %v3674
      %v4037 = vunpack.c.l.b16 %v3675
      %v4038 = vunpack.c.h.b16 %v3675
      %v4039 = vunpack.c.l.b16 %v3676
      %v4040 = vunpack.c.h.b16 %v3676
      %v4041 = vunpack.c.l.b16 %v3677
      %v4042 = vunpack.c.h.b16 %v3677
      %v4043 = vunpack.c.l.b16 %v3678
      %v4044 = vunpack.c.h.b16 %v3678
      %v4045 = vunpack.c.l.b16 %v3679
      %v4046 = vunpack.c.h.b16 %v3679
      %v4047 = vunpack.c.l.b16 %v3680
      %v4048 = vunpack.c.h.b16 %v3680
      %v4049 = vunpack.c.l.b16 %v3681
      %v4050 = vunpack.c.h.b16 %v3681
      %v4051 = vunpack.c.l.b16 %v3682
      %v4052 = vunpack.c.h.b16 %v3682
      %v4053 = vunpack.c.l.b16 %v3683
      %v4054 = vunpack.c.h.b16 %v3683
      %v4055 = vunpack.c.l.b16 %v3684
      %v4056 = vunpack.c.h.b16 %v3684
      %v4057 = vunpack.c.l.b16 %v3685
      %v4058 = vunpack.c.h.b16 %v3685
      %v4059 = vunpack.c.l.b16 %v3686
      %v4060 = vunpack.c.h.b16 %v3686
      %v4061 = vunpack.c.l.b16 %v3687
      %v4062 = vunpack.c.h.b16 %v3687
      %v4063 = vunpack.c.l.b16 %v3688
      %v4064 = vunpack.c.h.b16 %v3688
      %v4065 = vunpack.c.l.b16 %v3689
      %v4066 = vunpack.c.h.b16 %v3689
      %v4067 = vunpack.c.l.b16 %v3690
      %v4068 = vunpack.c.h.b16 %v3690
      %v4069 = vunpack.c.l.b16 %v3691
      %v4070 = vunpack.c.h.b16 %v3691
      %v4071 = vunpack.c.l.b16 %v3692
      %v4072 = vunpack.c.h.b16 %v3692
      %v4073 = vunpack.c.l.b16 %v3693
      %v4074 = vunpack.c.h.b16 %v3693
      %v4075 = vunpack.c.l.b16 %v3694
      %v4076 = vunpack.c.h.b16 %v3694
      %v4077 = vunpack.c.l.b16 %v3695
      %v4078 = vunpack.c.h.b16 %v3695
      %v4079 = vunpack.c.l.b16 %v3696
      %v4080 = vunpack.c.h.b16 %v3696
      %v4081 = vunpack.c.l.b16 %v3697
      %v4082 = vunpack.c.h.b16 %v3697
      %v4083 = vunpack.c.l.b16 %v3698
      %v4084 = vunpack.c.h.b16 %v3698
      %v4085 = vunpack.c.l.b16 %v3699
      %v4086 = vunpack.c.h.b16 %v3699
      %v4087 = vunpack.c.l.b16 %v3700
      %v4088 = vunpack.c.h.b16 %v3700
      %v4089 = vunpack.c.l.b16 %v3701
      %v4090 = vunpack.c.h.b16 %v3701
      %v4091 = vunpack.c.l.b16 %v3702
      %v4092 = vunpack.c.h.b16 %v3702
      %v4093 = vunpack.c.l.b16 %v3703
      %v4094 = vunpack.c.h.b16 %v3703
      %v4095 = vunpack.c.l.b16 %v3704
      %v4096 = vunpack.c.h.b16 %v3704
      %v4097 = vunpack.c.l.b16 %v3705
      %v4098 = vunpack.c.h.b16 %v3705
      %v4099 = vunpack.c.l.b16 %v3706
      %v4100 = vunpack.c.h.b16 %v3706
      %v4101 = vunpack.c.l.b16 %v3707
      %v4102 = vunpack.c.h.b16 %v3707
      %v4103 = vunpack.c.l.b16 %v3708
      %v4104 = vunpack.c.h.b16 %v3708
      %v4105 = vunpack.c.l.b16 %v3709
      %v4106 = vunpack.c.h.b16 %v3709
      %v4107 = vunpack.c.l.b16 %v3710
      %v4108 = vunpack.c.h.b16 %v3710
      %v4109 = vunpack.c.l.b16 %v3711
      %v4110 = vunpack.c.h.b16 %v3711
      %v4111 = vunpack.c.l.b16 %v3712
      %v4112 = vunpack.c.h.b16 %v3712
      %v4113 = vunpack.c.l.b16 %v3713
      %v4114 = vunpack.c.h.b16 %v3713
      %v4115 = vunpack.c.l.b16 %v3714
      %v4116 = vunpack.c.h.b16 %v3714
      %v4117 = vunpack.c.l.b16 %v3715
      %v4118 = vunpack.c.h.b16 %v3715
      %v4119 = vunpack.c.l.b16 %v3716
      %v4120 = vunpack.c.h.b16 %v3716
      %v4121 = vunpack.c.l.b16 %v3717
      %v4122 = vunpack.c.h.b16 %v3717
      %v4123 = vunpack.c.l.b16 %v3718
      %v4124 = vunpack.c.h.b16 %v3718
      %v4125 = vunpack.c.l.b16 %v3719
      %v4126 = vunpack.c.h.b16 %v3719
      %v4127 = vunpack.c.l.b16 %v3720
      %v4128 = vunpack.c.h.b16 %v3720
      %v4129 = vunpack.c.l.b16 %v3721
      %v4130 = vunpack.c.h.b16 %v3721
      %v4131 = vunpack.c.l.b16 %v3722
      %v4132 = vunpack.c.h.b16 %v3722
      %v4133 = vunpack.c.l.b16 %v3723
      %v4134 = vunpack.c.h.b16 %v3723
      %v4135 = vunpack.c.l.b16 %v3724
      %v4136 = vunpack.c.h.b16 %v3724
      %v4137 = vunpack.c.l.b16 %v3725
      %v4138 = vunpack.c.h.b16 %v3725
      %v4139 = vunpack.c.l.b16 %v3726
      %v4140 = vunpack.c.h.b16 %v3726
      %v4141 = vunpack.c.l.b16 %v3727
      %v4142 = vunpack.c.h.b16 %v3727
      %v4143 = vunpack.c.l.b16 %v3728
      %v4144 = vunpack.c.h.b16 %v3728
      %v4145 = vunpack.c.l.b16 %v3729
      %v4146 = vunpack.c.h.b16 %v3729
      %v4147 = vunpack.c.l.b16 %v3730
      %v4148 = vunpack.c.h.b16 %v3730
      %v4149 = vunpack.c.l.b16 %v3731
      %v4150 = vunpack.c.h.b16 %v3731
      %v4151 = vunpack.c.l.b16 %v3732
      %v4152 = vunpack.c.h.b16 %v3732
      %v4153 = vunpack.c.l.b16 %v3733
      %v4154 = vunpack.c.h.b16 %v3733
      %v4155 = vunpack.c.l.b16 %v3734
      %v4156 = vunpack.c.h.b16 %v3734
      %v4157 = vunpack.c.l.b16 %v3735
      %v4158 = vunpack.c.h.b16 %v3735
      %v4159 = vunpack.c.l.b16 %v3736
      %v4160 = vunpack.c.h.b16 %v3736
      %v4161 = vunpack.c.l.b16 %v3737
      %v4162 = vunpack.c.h.b16 %v3737
      %v4163 = vunpack.c.l.b16 %v3738
      %v4164 = vunpack.c.h.b16 %v3738
      %v4165 = vunpack.c.l.b16 %v3739
      %v4166 = vunpack.c.h.b16 %v3739
      %v4167 = vunpack.c.l.b16 %v3740
      %v4168 = vunpack.c.h.b16 %v3740
      %v4169 = vunpack.c.l.b16 %v3741
      %v4170 = vunpack.c.h.b16 %v3741
      %v4171 = vunpack.c.l.b16 %v3742
      %v4172 = vunpack.c.h.b16 %v3742
      %v4173 = vunpack.c.l.b16 %v3743
      %v4174 = vunpack.c.h.b16 %v3743
      %v4175 = vunpack.c.l.b16 %v3744
      %v4176 = vunpack.c.h.b16 %v3744
      %v4177 = vpack.c.b16 %v3891, %v3889
      %v4178 = vpack.c.b16 %v3892, %v3890
      %v4179 = vpack.c.b16 %v3895, %v3893
      %v4180 = vpack.c.b16 %v3896, %v3894
      %v4181 = vpack.c.b16 %v3899, %v3897
      %v4182 = vpack.c.b16 %v3900, %v3898
      %v4183 = vpack.c.b16 %v3903, %v3901
      %v4184 = vpack.c.b16 %v3904, %v3902
      %v4185 = vpack.c.b16 %v3907, %v3905
      %v4186 = vpack.c.b16 %v3908, %v3906
      %v4187 = vpack.c.b16 %v3911, %v3909
      %v4188 = vpack.c.b16 %v3912, %v3910
      %v4189 = vpack.c.b16 %v3915, %v3913
      %v4190 = vpack.c.b16 %v3916, %v3914
      %v4191 = vpack.c.b16 %v3919, %v3917
      %v4192 = vpack.c.b16 %v3920, %v3918
      %v4193 = vpack.c.b16 %v3923, %v3921
      %v4194 = vpack.c.b16 %v3924, %v3922
      %v4195 = vpack.c.b16 %v3927, %v3925
      %v4196 = vpack.c.b16 %v3928, %v3926
      %v4197 = vpack.c.b16 %v3931, %v3929
      %v4198 = vpack.c.b16 %v3932, %v3930
      %v4199 = vpack.c.b16 %v3935, %v3933
      %v4200 = vpack.c.b16 %v3936, %v3934
      %v4201 = vpack.c.b16 %v3939, %v3937
      %v4202 = vpack.c.b16 %v3940, %v3938
      %v4203 = vpack.c.b16 %v3943, %v3941
      %v4204 = vpack.c.b16 %v3944, %v3942
      %v4205 = vpack.c.b16 %v3947, %v3945
      %v4206 = vpack.c.b16 %v3948, %v3946
      %v4207 = vpack.c.b16 %v3951, %v3949
      %v4208 = vpack.c.b16 %v3952, %v3950
      %v4209 = vpack.c.b16 %v3955, %v3953
      %v4210 = vpack.c.b16 %v3956, %v3954
      %v4211 = vpack.c.b16 %v3959, %v3957
      %v4212 = vpack.c.b16 %v3960, %v3958
      %v4213 = vpack.c.b16 %v3963, %v3961
      %v4214 = vpack.c.b16 %v3964, %v3962
      %v4215 = vpack.c.b16 %v3967, %v3965
      %v4216 = vpack.c.b16 %v3968, %v3966
      %v4217 = vpack.c.b16 %v3971, %v3969
      %v4218 = vpack.c.b16 %v3972, %v3970
      %v4219 = vpack.c.b16 %v3975, %v3973
      %v4220 = vpack.c.b16 %v3976, %v3974
      %v4221 = vpack.c.b16 %v3979, %v3977
      %v4222 = vpack.c.b16 %v3980, %v3978
      %v4223 = vpack.c.b16 %v3983, %v3981
      %v4224 = vpack.c.b16 %v3984, %v3982
      %v4225 = vpack.c.b16 %v3987, %v3985
      %v4226 = vpack.c.b16 %v3988, %v3986
      %v4227 = vpack.c.b16 %v3991, %v3989
      %v4228 = vpack.c.b16 %v3992, %v3990
      %v4229 = vpack.c.b16 %v3995, %v3993
      %v4230 = vpack.c.b16 %v3996, %v3994
      %v4231 = vpack.c.b16 %v3999, %v3997
      %v4232 = vpack.c.b16 %v4000, %v3998
      %v4233 = vpack.c.b16 %v4003, %v4001
      %v4234 = vpack.c.b16 %v4004, %v4002
      %v4235 = vpack.c.b16 %v4007, %v4005
      %v4236 = vpack.c.b16 %v4008, %v4006
      %v4237 = vpack.c.b16 %v4011, %v4009
      %v4238 = vpack.c.b16 %v4012, %v4010
      %v4239 = vpack.c.b16 %v4015, %v4013
      %v4240 = vpack.c.b16 %v4016, %v4014
      %v4241 = vpack.c.b16 %v4019, %v4017
      %v4242 = vpack.c.b16 %v4020, %v4018
      %v4243 = vpack.c.b16 %v4023, %v4021
      %v4244 = vpack.c.b16 %v4024, %v4022
      %v4245 = vpack.c.b16 %v4027, %v4025
      %v4246 = vpack.c.b16 %v4028, %v4026
      %v4247 = vpack.c.b16 %v4031, %v4029
      %v4248 = vpack.c.b16 %v4032, %v4030
      %v4249 = vpack.c.b16 %v4035, %v4033
      %v4250 = vpack.c.b16 %v4036, %v4034
      %v4251 = vpack.c.b16 %v4039, %v4037
      %v4252 = vpack.c.b16 %v4040, %v4038
      %v4253 = vpack.c.b16 %v4043, %v4041
      %v4254 = vpack.c.b16 %v4044, %v4042
      %v4255 = vpack.c.b16 %v4047, %v4045
      %v4256 = vpack.c.b16 %v4048, %v4046
      %v4257 = vpack.c.b16 %v4051, %v4049
      %v4258 = vpack.c.b16 %v4052, %v4050
      %v4259 = vpack.c.b16 %v4055, %v4053
      %v4260 = vpack.c.b16 %v4056, %v4054
      %v4261 = vpack.c.b16 %v4059, %v4057
      %v4262 = vpack.c.b16 %v4060, %v4058
      %v4263 = vpack.c.b16 %v4063, %v4061
      %v4264 = vpack.c.b16 %v4064, %v4062
      %v4265 = vpack.c.b16 %v4067, %v4065
      %v4266 = vpack.c.b16 %v4068, %v4066
      %v4267 = vpack.c.b16 %v4071, %v4069
      %v4268 = vpack.c.b16 %v4072, %v4070
      %v4269 = vpack.c.b16 %v4075, %v4073
      %v4270 = vpack.c.b16 %v4076, %v4074
      %v4271 = vpack.c.b16 %v4079, %v4077
      %v4272 = vpack.c.b16 %v4080, %v4078
      %v4273 = vpack.c.b16 %v4083, %v4081
      %v4274 = vpack.c.b16 %v4084, %v4082
      %v4275 = vpack.c.b16 %v4087, %v4085
      %v4276 = vpack.c.b16 %v4088, %v4086
      %v4277 = vpack.c.b16 %v4091, %v4089
      %v4278 = vpack.c.b16 %v4092, %v4090
      %v4279 = vpack.c.b16 %v4095, %v4093
      %v4280 = vpack.c.b16 %v4096, %v4094
      %v4281 = vpack.c.b16 %v4099, %v4097
      %v4282 = vpack.c.b16 %v4100, %v4098
      %v4283 = vpack.c.b16 %v4103, %v4101
      %v4284 = vpack.c.b16 %v4104, %v4102
      %v4285 = vpack.c.b16 %v4107, %v4105
      %v4286 = vpack.c.b16 %v4108, %v4106
      %v4287 = vpack.c.b16 %v4111, %v4109
      %v4288 = vpack.c.b16 %v4112, %v4110
      %v4289 = vpack.c.b16 %v4115, %v4113
      %v4290 = vpack.c.b16 %v4116, %v4114
      %v4291 = vpack.c.b16 %v4119, %v4117
      %v4292 = vpack.c.b16 %v4120, %v4118
      %v4293 = vpack.c.b16 %v4123, %v4121
      %v4294 = vpack.c.b16 %v4124, %v4122
      %v4295 = vpack.c.b16 %v4127, %v4125
      %v4296 = vpack.c.b16 %v4128, %v4126
      %v4297 = vpack.c.b16 %v4131, %v4129
      %v4298 = vpack.c.b16 %v4132, %v4130
      %v4299 = vpack.c.b16 %v4135, %v4133
      %v4300 = vpack.c.b16 %v4136, %v4134
      %v4301 = vpack.c.b16 %v4139, %v4137
      %v4302 = vpack.c.b16 %v4140, %v4138
      %v4303 = vpack.c.b16 %v4143, %v4141
      %v4304 = vpack.c.b16 %v4144, %v4142
      %v4305 = vpack.c.b16 %v4147, %v4145
      %v4306 = vpack.c.b16 %v4148, %v4146
      %v4307 = vpack.c.b16 %v4151, %v4149
      %v4308 = vpack.c.b16 %v4152, %v4150
      %v4309 = vpack.c.b16 %v4155, %v4153
      %v4310 = vpack.c.b16 %v4156, %v4154
      %v4311 = vpack.c.b16 %v4159, %v4157
      %v4312 = vpack.c.b16 %v4160, %v4158
      %v4313 = vpack.c.b16 %v4163, %v4161
      %v4314 = vpack.c.b16 %v4164, %v4162
      %v4315 = vpack.c.b16 %v4167, %v4165
      %v4316 = vpack.c.b16 %v4168, %v4166
      %v4317 = vpack.c.b16 %v4171, %v4169
      %v4318 = vpack.c.b16 %v4172, %v4170
      %v4319 = vpack.c.b16 %v4175, %v4173
      %v4320 = vpack.c.b16 %v4176, %v4174
      %4465 = vmatprep.subr.bf16.mxu0 %v4178
      %4466 = vmatpush1.bf16.msra.mxu0 %v4177
      %4467 = vmatprep.subr.bf16.mxu0 %v4180
      %4468 = vmatpush1.bf16.msra.mxu0 %v4179
      %4469 = vmatprep.subr.bf16.mxu0 %v4182
      %4470 = vmatpush1.bf16.msra.mxu0 %v4181
      %4471 = vmatprep.subr.bf16.mxu0 %v4184
      %4472 = vmatpush1.bf16.msra.mxu0 %v4183
      %4473 = vmatprep.subr.bf16.mxu0 %v4186
      %4474 = vmatpush1.bf16.msra.mxu0 %v4185
      %4475 = vmatprep.subr.bf16.mxu0 %v4188
      %4476 = vmatpush1.bf16.msra.mxu0 %v4187
      %4477 = vmatprep.subr.bf16.mxu0 %v4190
      %4478 = vmatpush1.bf16.msra.mxu0 %v4189
      %4479 = vmatprep.subr.bf16.mxu0 %v4192
      %4480 = vmatpush1.bf16.msra.mxu0 %v4191
      %4481 = vmatprep.subr.bf16.mxu0 %v4194
      %4482 = vmatpush1.bf16.msra.mxu0 %v4193
      %4483 = vmatprep.subr.bf16.mxu0 %v4196
      %4484 = vmatpush1.bf16.msra.mxu0 %v4195
      %4485 = vmatprep.subr.bf16.mxu0 %v4198
      %4486 = vmatpush1.bf16.msra.mxu0 %v4197
      %4487 = vmatprep.subr.bf16.mxu0 %v4200
      %4488 = vmatpush1.bf16.msra.mxu0 %v4199
      %4489 = vmatprep.subr.bf16.mxu0 %v4202
      %4490 = vmatpush1.bf16.msra.mxu0 %v4201
      %4491 = vmatprep.subr.bf16.mxu0 %v4204
      %4492 = vmatpush1.bf16.msra.mxu0 %v4203
      %4493 = vmatprep.subr.bf16.mxu0 %v4206
      %4494 = vmatpush1.bf16.msra.mxu0 %v4205
      %4495 = vmatprep.subr.bf16.mxu0 %v4208
      %4496 = vmatpush1.bf16.msra.mxu0 %v4207
      %4497 = vmatprep.mubr.bf16.mxu0 %v3593
      %4498 = vmatmul.mubr.bf16.gmra.mrb[0].mxu0 %v3592
      %v4499 = vpop.f32.mrb[0].mxu0
      %v4500 = vadd.f32 0.0, %v4499
      %v4501 = vpop.f32.mrb[0].mxu0
      %v4502 = vadd.f32 0.0, %v4501
      %v4503 = vpop.f32.mrb[0].mxu0
      %v4504 = vadd.f32 0.0, %v4503
      %v4505 = vpop.f32.mrb[0].mxu0
      %v4506 = vadd.f32 0.0, %v4505
      %4507 = vdwg.mxu0
      %4508 = vmatprep.subr.bf16.mxu0 %v4210
      %4509 = vmatpush1.bf16.msra.mxu0 %v4209
      %4510 = vmatprep.subr.bf16.mxu0 %v4212
      %4511 = vmatpush1.bf16.msra.mxu0 %v4211
      %4512 = vmatprep.subr.bf16.mxu0 %v4214
      %4513 = vmatpush1.bf16.msra.mxu0 %v4213
      %4514 = vmatprep.subr.bf16.mxu0 %v4216
      %4515 = vmatpush1.bf16.msra.mxu0 %v4215
      %4516 = vmatprep.subr.bf16.mxu0 %v4218
      %4517 = vmatpush1.bf16.msra.mxu0 %v4217
      %4518 = vmatprep.subr.bf16.mxu0 %v4220
      %4519 = vmatpush1.bf16.msra.mxu0 %v4219
      %4520 = vmatprep.subr.bf16.mxu0 %v4222
      %4521 = vmatpush1.bf16.msra.mxu0 %v4221
      %4522 = vmatprep.subr.bf16.mxu0 %v4224
      %4523 = vmatpush1.bf16.msra.mxu0 %v4223
      %4524 = vmatprep.subr.bf16.mxu0 %v4226
      %4525 = vmatpush1.bf16.msra.mxu0 %v4225
      %4526 = vmatprep.subr.bf16.mxu0 %v4228
      %4527 = vmatpush1.bf16.msra.mxu0 %v4227
      %4528 = vmatprep.subr.bf16.mxu0 %v4230
      %4529 = vmatpush1.bf16.msra.mxu0 %v4229
      %4530 = vmatprep.subr.bf16.mxu0 %v4232
      %4531 = vmatpush1.bf16.msra.mxu0 %v4231
      %4532 = vmatprep.subr.bf16.mxu0 %v4234
      %4533 = vmatpush1.bf16.msra.mxu0 %v4233
      %4534 = vmatprep.subr.bf16.mxu0 %v4236
      %4535 = vmatpush1.bf16.msra.mxu0 %v4235
      %4536 = vmatprep.subr.bf16.mxu0 %v4238
      %4537 = vmatpush1.bf16.msra.mxu0 %v4237
      %4538 = vmatprep.subr.bf16.mxu0 %v4240
      %4539 = vmatpush1.bf16.msra.mxu0 %v4239
      %4540 = vmatprep.mubr.bf16.mxu0 %v3595
      %4541 = vmatmul.mubr.bf16.gmra.mrb[0].mxu0 %v3594
      %v4542 = vpop.f32.mrb[0].mxu0
      %v4543 = vadd.f32 %v4500, %v4542
      %v4544 = vpop.f32.mrb[0].mxu0
      %v4545 = vadd.f32 %v4502, %v4544
      %v4546 = vpop.f32.mrb[0].mxu0
      %v4547 = vadd.f32 %v4504, %v4546
      %v4548 = vpop.f32.mrb[0].mxu0
      %v4549 = vadd.f32 %v4506, %v4548
      %4550 = vdwg.mxu0
      %4551 = vmatprep.subr.bf16.mxu0 %v4242
      %4552 = vmatpush1.bf16.msra.mxu0 %v4241
      %4553 = vmatprep.subr.bf16.mxu0 %v4244
      %4554 = vmatpush1.bf16.msra.mxu0 %v4243
      %4555 = vmatprep.subr.bf16.mxu0 %v4246
      %4556 = vmatpush1.bf16.msra.mxu0 %v4245
      %4557 = vmatprep.subr.bf16.mxu0 %v4248
      %4558 = vmatpush1.bf16.msra.mxu0 %v4247
      %4559 = vmatprep.subr.bf16.mxu0 %v4250
      %4560 = vmatpush1.bf16.msra.mxu0 %v4249
      %4561 = vmatprep.subr.bf16.mxu0 %v4252
      %4562 = vmatpush1.bf16.msra.mxu0 %v4251
      %4563 = vmatprep.subr.bf16.mxu0 %v4254
      %4564 = vmatpush1.bf16.msra.mxu0 %v4253
      %4565 = vmatprep.subr.bf16.mxu0 %v4256
      %4566 = vmatpush1.bf16.msra.mxu0 %v4255
      %4567 = vmatprep.subr.bf16.mxu0 %v4258
      %4568 = vmatpush1.bf16.msra.mxu0 %v4257
      %4569 = vmatprep.subr.bf16.mxu0 %v4260
      %4570 = vmatpush1.bf16.msra.mxu0 %v4259
      %4571 = vmatprep.subr.bf16.mxu0 %v4262
      %4572 = vmatpush1.bf16.msra.mxu0 %v4261
      %4573 = vmatprep.subr.bf16.mxu0 %v4264
      %4574 = vmatpush1.bf16.msra.mxu0 %v4263
      %4575 = vmatprep.subr.bf16.mxu0 %v4266
      %4576 = vmatpush1.bf16.msra.mxu0 %v4265
      %4577 = vmatprep.subr.bf16.mxu0 %v4268
      %4578 = vmatpush1.bf16.msra.mxu0 %v4267
      %4579 = vmatprep.subr.bf16.mxu0 %v4270
      %4580 = vmatpush1.bf16.msra.mxu0 %v4269
      %4581 = vmatprep.subr.bf16.mxu0 %v4272
      %4582 = vmatpush1.bf16.msra.mxu0 %v4271
      %4583 = vmatprep.mubr.bf16.mxu0 %v3597
      %4584 = vmatmul.mubr.bf16.gmra.mrb[0].mxu0 %v3596
      %v4585 = vpop.f32.mrb[0].mxu0
      %v4586 = vadd.f32 %v4543, %v4585
      %v4587 = vpop.f32.mrb[0].mxu0
      %v4588 = vadd.f32 %v4545, %v4587
      %v4589 = vpop.f32.mrb[0].mxu0
      %v4590 = vadd.f32 %v4547, %v4589
      %v4591 = vpop.f32.mrb[0].mxu0
      %v4592 = vadd.f32 %v4549, %v4591
      %4593 = vdwg.mxu0
      %4594 = vmatprep.subr.bf16.mxu0 %v4274
      %4595 = vmatpush1.bf16.msra.mxu0 %v4273
      %4596 = vmatprep.subr.bf16.mxu0 %v4276
      %4597 = vmatpush1.bf16.msra.mxu0 %v4275
      %4598 = vmatprep.subr.bf16.mxu0 %v4278
      %4599 = vmatpush1.bf16.msra.mxu0 %v4277
      %4600 = vmatprep.subr.bf16.mxu0 %v4280
      %4601 = vmatpush1.bf16.msra.mxu0 %v4279
      %4602 = vmatprep.subr.bf16.mxu0 %v4282
      %4603 = vmatpush1.bf16.msra.mxu0 %v4281
      %4604 = vmatprep.subr.bf16.mxu0 %v4284
      %4605 = vmatpush1.bf16.msra.mxu0 %v4283
      %4606 = vmatprep.subr.bf16.mxu0 %v4286
      %4607 = vmatpush1.bf16.msra.mxu0 %v4285
      %4608 = vmatprep.subr.bf16.mxu0 %v4288
      %4609 = vmatpush1.bf16.msra.mxu0 %v4287
      %4610 = vmatprep.subr.bf16.mxu0 %v4290
      %4611 = vmatpush1.bf16.msra.mxu0 %v4289
      %4612 = vmatprep.subr.bf16.mxu0 %v4292
      %4613 = vmatpush1.bf16.msra.mxu0 %v4291
      %4614 = vmatprep.subr.bf16.mxu0 %v4294
      %4615 = vmatpush1.bf16.msra.mxu0 %v4293
      %4616 = vmatprep.subr.bf16.mxu0 %v4296
      %4617 = vmatpush1.bf16.msra.mxu0 %v4295
      %4618 = vmatprep.subr.bf16.mxu0 %v4298
      %4619 = vmatpush1.bf16.msra.mxu0 %v4297
      %4620 = vmatprep.subr.bf16.mxu0 %v4300
      %4621 = vmatpush1.bf16.msra.mxu0 %v4299
      %4622 = vmatprep.subr.bf16.mxu0 %v4302
      %4623 = vmatpush1.bf16.msra.mxu0 %v4301
      %4624 = vmatprep.subr.bf16.mxu0 %v4304
      %4625 = vmatpush1.bf16.msra.mxu0 %v4303
      %4626 = vmatprep.mubr.bf16.mxu0 %v3599
      %4627 = vmatmul.mubr.bf16.gmra.mrb[0].mxu0 %v3598
      %v4628 = vpop.f32.mrb[0].mxu0
      %v4629 = vadd.f32 %v4586, %v4628
      %v4630 = vpop.f32.mrb[0].mxu0
      %v4631 = vadd.f32 %v4588, %v4630
      %v4632 = vpop.f32.mrb[0].mxu0
      %v4633 = vadd.f32 %v4590, %v4632
      %v4634 = vpop.f32.mrb[0].mxu0
      %v4635 = vadd.f32 %v4592, %v4634
      %4636 = vdwg.mxu0
      %4637 = vmatprep.subr.bf16.mxu0 %v4306
      %4638 = vmatpush1.bf16.msra.mxu0 %v4305
      %4639 = vmatprep.subr.bf16.mxu0 %v4308
      %4640 = vmatpush1.bf16.msra.mxu0 %v4307
      %4641 = vmatprep.subr.bf16.mxu0 %v4310
      %4642 = vmatpush1.bf16.msra.mxu0 %v4309
      %4643 = vmatprep.subr.bf16.mxu0 %v4312
      %4644 = vmatpush1.bf16.msra.mxu0 %v4311
      %4645 = vmatprep.subr.bf16.mxu0 %v4314
      %4646 = vmatpush1.bf16.msra.mxu0 %v4313
      %4647 = vmatprep.subr.bf16.mxu0 %v4316
      %4648 = vmatpush1.bf16.msra.mxu0 %v4315
      %4649 = vmatprep.subr.bf16.mxu0 %v4318
      %4650 = vmatpush1.bf16.msra.mxu0 %v4317
      %4651 = vmatprep.subr.bf16.mxu0 %v4320
      %4652 = vmatpush1.bf16.msra.mxu0 %v4319
      %4653 = vmatprep.subr.bf16.mxu0 0
      %4654 = vmatpush1.bf16.msra.mxu0 0
      %4655 = vmatprep.subr.bf16.mxu0 0
      %4656 = vmatpush1.bf16.msra.mxu0 0
      %4657 = vmatprep.subr.bf16.mxu0 0
      %4658 = vmatpush1.bf16.msra.mxu0 0
      %4659 = vmatprep.subr.bf16.mxu0 0
      %4660 = vmatpush1.bf16.msra.mxu0 0
      %4661 = vmatprep.subr.bf16.mxu0 0
      %4662 = vmatpush1.bf16.msra.mxu0 0
      %4663 = vmatprep.subr.bf16.mxu0 0
      %4664 = vmatpush1.bf16.msra.mxu0 0
      %4665 = vmatprep.subr.bf16.mxu0 0
      %4666 = vmatpush1.bf16.msra.mxu0 0
      %4667 = vmatprep.subr.bf16.mxu0 0
      %4668 = vmatpush1.bf16.msra.mxu0 0
      %4669 = vmatprep.mubr.bf16.mxu0 0
      %4670 = vmatmul.mubr.bf16.gmra.mrb[0].mxu0 %v3600
      %v4671 = vpop.f32.mrb[0].mxu0
      %v4672 = vadd.f32 %v4629, %v4671
      %v4673 = vpop.f32.mrb[0].mxu0
      %v4674 = vadd.f32 %v4631, %v4673
      %v4675 = vpop.f32.mrb[0].mxu0
      %v4676 = vadd.f32 %v4633, %v4675
      %v4677 = vpop.f32.mrb[0].mxu0
      %v4678 = vadd.f32 %v4635, %v4677
      %4679 = vdwg.mxu0
      %v4680 = vld [vmem:[%s25] sm:$0x3]
      %v4682 = vlaneseq
      %v4683 = vshrl.u32 %v4682, 7
      %v4684 = vsub.s32 0, %v4683
      %v4685 = vrot.slane %v4680, %v4684
      %v4686 = vlaneseq
      %v4687 = vshrl.u32 %v4686, 7
      %v4688 = vsub.s32 1, %v4687
      %v4689 = vrot.slane %v4680, %v4688
      %v4692 = vmul.f32 %v4672, %v4685
      %v4693 = vmul.f32 %v4674, %v4689
      %v4694 = vmul.f32 %v4676, %v4685
      %v4695 = vmul.f32 %v4678, %v4689
      %v4696 = vld [vmem:[%s27] sm:$0x3]
      %v4698 = vlaneseq
      %v4699 = vshrl.u32 %v4698, 7
      %v4700 = vsub.s32 0, %v4699
      %v4701 = vrot.slane %v4696, %v4700
      %v4702 = vlaneseq
      %v4703 = vshrl.u32 %v4702, 7
      %v4704 = vsub.s32 1, %v4703
      %v4705 = vrot.slane %v4696, %v4704
      %v4708 = vadd.f32 %v4692, %v4701
      %v4709 = vadd.f32 %v4693, %v4705
      %v4710 = vadd.f32 %v4694, %v4701
      %v4711 = vadd.f32 %v4695, %v4705
      %v4712 = vmax.f32 %v4708, 0.0
      %v4713 = vmax.f32 %v4709, 0.0
      %v4714 = vmax.f32 %v4710, 0.0
      %v4715 = vmax.f32 %v4711, 0.0
      %v4716 = vpack.c.bf16 %v4714, %v4712
      %v4717 = vpack.c.bf16 %v4715, %v4713
      %4718 = vmatprep.subr.bf16.mxu0 %v4717
      %4719 = vmatpush1.bf16.msra.mxu0 %v4716
      %4720 = vmatprep.subr.bf16.mxu0 0
      %4721 = vmatpush1.bf16.msra.mxu0 0
      %4722 = vmatprep.subr.bf16.mxu0 0
      %4723 = vmatpush1.bf16.msra.mxu0 0
      %4724 = vmatprep.subr.bf16.mxu0 0
      %4725 = vmatpush1.bf16.msra.mxu0 0
      %4726 = vmatprep.subr.bf16.mxu0 0
      %4727 = vmatpush1.bf16.msra.mxu0 0
      %4728 = vmatprep.subr.bf16.mxu0 0
      %4729 = vmatpush1.bf16.msra.mxu0 0
      %4730 = vmatprep.subr.bf16.mxu0 0
      %4731 = vmatpush1.bf16.msra.mxu0 0
      %4732 = vmatprep.subr.bf16.mxu0 0
      %4733 = vmatpush1.bf16.msra.mxu0 0
      %4734 = vmatprep.subr.bf16.mxu0 0
      %4735 = vmatpush1.bf16.msra.mxu0 0
      %4736 = vmatprep.subr.bf16.mxu0 0
      %4737 = vmatpush1.bf16.msra.mxu0 0
      %4738 = vmatprep.subr.bf16.mxu0 0
      %4739 = vmatpush1.bf16.msra.mxu0 0
      %4740 = vmatprep.subr.bf16.mxu0 0
      %4741 = vmatpush1.bf16.msra.mxu0 0
      %4742 = vmatprep.subr.bf16.mxu0 0
      %4743 = vmatpush1.bf16.msra.mxu0 0
      %4744 = vmatprep.subr.bf16.mxu0 0
      %4745 = vmatpush1.bf16.msra.mxu0 0
      %4746 = vmatprep.subr.bf16.mxu0 0
      %4747 = vmatpush1.bf16.msra.mxu0 0
      %4748 = vmatprep.subr.bf16.mxu0 0
      %4749 = vmatpush1.bf16.msra.mxu0 0
      %4750 = vmatprep.mubr.bf16.mxu0 0
      %4751 = vmatmul.mubr.bf16.gmra.mrb[0].mxu0 %v3461
      %v4752 = vpop.f32.mrb[0].mxu0
      %v4753 = vadd.f32 0.0, %v4752
      %v4754 = vpop.f32.mrb[0].mxu0
      %v4755 = vadd.f32 0.0, %v4754
      %v4756 = vpop.f32.mrb[0].mxu0
      %v4757 = vadd.f32 0.0, %v4756
      %v4758 = vpop.f32.mrb[0].mxu0
      %v4759 = vadd.f32 0.0, %v4758
      %4760 = vmatprep.mubr.bf16.mxu0 0
      %4761 = vmatmul.mubr.bf16.gmra.mrb[0].mxu0 %v3464
      %v4762 = vpop.f32.mrb[0].mxu0
      %v4763 = vadd.f32 0.0, %v4762
      %v4764 = vpop.f32.mrb[0].mxu0
      %v4765 = vadd.f32 0.0, %v4764
      %v4766 = vpop.f32.mrb[0].mxu0
      %v4767 = vadd.f32 0.0, %v4766
      %v4768 = vpop.f32.mrb[0].mxu0
      %v4769 = vadd.f32 0.0, %v4768
      %4770 = vmatprep.mubr.bf16.mxu0 0
      %4771 = vmatmul.mubr.bf16.gmra.mrb[0].mxu0 %v3467
      %v4772 = vpop.f32.mrb[0].mxu0
      %v4773 = vadd.f32 0.0, %v4772
      %v4774 = vpop.f32.mrb[0].mxu0
      %v4775 = vadd.f32 0.0, %v4774
      %v4776 = vpop.f32.mrb[0].mxu0
      %v4777 = vadd.f32 0.0, %v4776
      %v4778 = vpop.f32.mrb[0].mxu0
      %v4779 = vadd.f32 0.0, %v4778
      %4780 = vmatprep.mubr.bf16.mxu0 0
      %4781 = vmatmul.mubr.bf16.gmra.mrb[0].mxu0 %v3470
      %v4782 = vpop.f32.mrb[0].mxu0
      %v4783 = vadd.f32 0.0, %v4782
      %v4784 = vpop.f32.mrb[0].mxu0
      %v4785 = vadd.f32 0.0, %v4784
      %v4786 = vpop.f32.mrb[0].mxu0
      %v4787 = vadd.f32 0.0, %v4786
      %v4788 = vpop.f32.mrb[0].mxu0
      %v4789 = vadd.f32 0.0, %v4788
      %4790 = vmatprep.mubr.bf16.mxu0 0
      %4791 = vmatmul.mubr.bf16.gmra.mrb[0].mxu0 %v3473
      %v4792 = vpop.f32.mrb[0].mxu0
      %v4793 = vadd.f32 0.0, %v4792
      %v4794 = vpop.f32.mrb[0].mxu0
      %v4795 = vadd.f32 0.0, %v4794
      %v4796 = vpop.f32.mrb[0].mxu0
      %v4797 = vadd.f32 0.0, %v4796
      %v4798 = vpop.f32.mrb[0].mxu0
      %v4799 = vadd.f32 0.0, %v4798
      %4800 = vmatprep.mubr.bf16.mxu0 0
      %4801 = vmatmul.mubr.bf16.gmra.mrb[0].mxu0 %v3476
      %v4802 = vpop.f32.mrb[0].mxu0
      %v4803 = vadd.f32 0.0, %v4802
      %v4804 = vpop.f32.mrb[0].mxu0
      %v4805 = vadd.f32 0.0, %v4804
      %v4806 = vpop.f32.mrb[0].mxu0
      %v4807 = vadd.f32 0.0, %v4806
      %v4808 = vpop.f32.mrb[0].mxu0
      %v4809 = vadd.f32 0.0, %v4808
      %4810 = vmatprep.mubr.bf16.mxu0 0
      %4811 = vmatmul.mubr.bf16.gmra.mrb[0].mxu0 %v3479
      %v4812 = vpop.f32.mrb[0].mxu0
      %v4813 = vadd.f32 0.0, %v4812
      %v4814 = vpop.f32.mrb[0].mxu0
      %v4815 = vadd.f32 0.0, %v4814
      %v4816 = vpop.f32.mrb[0].mxu0
      %v4817 = vadd.f32 0.0, %v4816
      %v4818 = vpop.f32.mrb[0].mxu0
      %v4819 = vadd.f32 0.0, %v4818
      %4820 = vmatprep.mubr.bf16.mxu0 0
      %4821 = vmatmul.mubr.bf16.gmra.mrb[0].mxu0 %v3482
      %v4822 = vpop.f32.mrb[0].mxu0
      %v4823 = vadd.f32 0.0, %v4822
      %v4824 = vpop.f32.mrb[0].mxu0
      %v4825 = vadd.f32 0.0, %v4824
      %v4826 = vpop.f32.mrb[0].mxu0
      %v4827 = vadd.f32 0.0, %v4826
      %v4828 = vpop.f32.mrb[0].mxu0
      %v4829 = vadd.f32 0.0, %v4828
      %4830 = vmatprep.mubr.bf16.mxu0 0
      %4831 = vmatmul.mubr.bf16.gmra.mrb[0].mxu0 %v3485
      %v4832 = vpop.f32.mrb[0].mxu0
      %v4833 = vadd.f32 0.0, %v4832
      %v4834 = vpop.f32.mrb[0].mxu0
      %v4835 = vadd.f32 0.0, %v4834
      %v4836 = vpop.f32.mrb[0].mxu0
      %v4837 = vadd.f32 0.0, %v4836
      %v4838 = vpop.f32.mrb[0].mxu0
      %v4839 = vadd.f32 0.0, %v4838
      %4840 = vdwg.mxu0
      %v4841 = vpack.c.bf16 %v4757, %v4753
      %v4842 = vpack.c.bf16 %v4759, %v4755
      %v4843 = vpack.c.bf16 %v4767, %v4763
      %v4844 = vpack.c.bf16 %v4769, %v4765
      %v4845 = vpack.c.bf16 %v4777, %v4773
      %v4846 = vpack.c.bf16 %v4779, %v4775
      %v4847 = vpack.c.bf16 %v4787, %v4783
      %v4848 = vpack.c.bf16 %v4789, %v4785
      %v4849 = vpack.c.bf16 %v4797, %v4793
      %v4850 = vpack.c.bf16 %v4799, %v4795
      %v4851 = vpack.c.bf16 %v4807, %v4803
      %v4852 = vpack.c.bf16 %v4809, %v4805
      %v4853 = vpack.c.bf16 %v4817, %v4813
      %v4854 = vpack.c.bf16 %v4819, %v4815
      %v4855 = vpack.c.bf16 %v4827, %v4823
      %v4856 = vpack.c.bf16 %v4829, %v4825
      %v4857 = vpack.c.bf16 %v4837, %v4833
      %v4858 = vpack.c.bf16 %v4839, %v4835
      %v4859 = vld [vmem:[%s29] sm:$0xff]
      %v4860 = vld [vmem:[%s29 + $0x8] sm:$0xff]
      %v4861 = vld [vmem:[%s29 + $0x10] sm:$0xff]
      %v4862 = vld [vmem:[%s29 + $0x18] sm:$0xff]
      %v4863 = vld [vmem:[%s29 + $0x20] sm:$0xff]
      %v4864 = vld [vmem:[%s29 + $0x28] sm:$0xff]
      %v4865 = vld [vmem:[%s29 + $0x30] sm:$0xff]
      %v4866 = vld [vmem:[%s29 + $0x38] sm:$0xff]
      %v4867 = vld [vmem:[%s29 + $0x40] sm:$0xff]
      %v4868 = vld [vmem:[%s29 + $0x48] sm:$0xff]
      %v4869 = vld [vmem:[%s29 + $0x50] sm:$0xff]
      %v4870 = vld [vmem:[%s29 + $0x58] sm:$0xff]
      %v4871 = vld [vmem:[%s29 + $0x60] sm:$0xff]
      %v4872 = vld [vmem:[%s29 + $0x68] sm:$0xff]
      %v4873 = vld [vmem:[%s29 + $0x70] sm:$0xff]
      %v4874 = vld [vmem:[%s29 + $0x78] sm:$0xff]
      %v4875 = vld [vmem:[%s29 + $0x80] sm:$0xff]
      %v4876 = vld [vmem:[%s29 + $0x88] sm:$0xff]
      %v4877 = vld [vmem:[%s29 + $0x90] sm:$0xff]
      %v4878 = vld [vmem:[%s29 + $0x98] sm:$0xff]
      %v4879 = vld [vmem:[%s29 + $0xa0] sm:$0xff]
      %v4880 = vld [vmem:[%s29 + $0xa8] sm:$0xff]
      %v4881 = vld [vmem:[%s29 + $0xb0] sm:$0xff]
      %v4882 = vld [vmem:[%s29 + $0xb8] sm:$0xff]
      %v4883 = vld [vmem:[%s29 + $0xc0] sm:$0xff]
      %v4884 = vld [vmem:[%s29 + $0xc8] sm:$0xff]
      %v4885 = vld [vmem:[%s29 + $0xd0] sm:$0xff]
      %v4886 = vld [vmem:[%s29 + $0xd8] sm:$0xff]
      %v4887 = vld [vmem:[%s29 + $0xe0] sm:$0xff]
      %v4888 = vld [vmem:[%s29 + $0xe8] sm:$0xff]
      %v4889 = vld [vmem:[%s29 + $0xf0] sm:$0xff]
      %v4890 = vld [vmem:[%s29 + $0xf8] sm:$0xff]
      %v4891 = vld [vmem:[%s29 + $0x100] sm:$0xff]
      %v4892 = vld [vmem:[%s29 + $0x108] sm:$0xff]
      %v4893 = vld [vmem:[%s29 + $0x110] sm:$0xff]
      %v4894 = vld [vmem:[%s29 + $0x118] sm:$0xff]
      %v4895 = vld [vmem:[%s29 + $0x120] sm:$0xff]
      %v4896 = vld [vmem:[%s29 + $0x128] sm:$0xff]
      %v4897 = vld [vmem:[%s29 + $0x130] sm:$0xff]
      %v4898 = vld [vmem:[%s29 + $0x138] sm:$0xff]
      %v4899 = vld [vmem:[%s29 + $0x140] sm:$0xff]
      %v4900 = vld [vmem:[%s29 + $0x148] sm:$0xff]
      %v4901 = vld [vmem:[%s29 + $0x150] sm:$0xff]
      %v4902 = vld [vmem:[%s29 + $0x158] sm:$0xff]
      %v4903 = vld [vmem:[%s29 + $0x160] sm:$0xff]
      %v4904 = vld [vmem:[%s29 + $0x168] sm:$0xff]
      %v4905 = vld [vmem:[%s29 + $0x170] sm:$0xff]
      %v4906 = vld [vmem:[%s29 + $0x178] sm:$0xff]
      %v4907 = vld [vmem:[%s29 + $0x180] sm:$0xff]
      %v4908 = vld [vmem:[%s29 + $0x188] sm:$0xff]
      %v4909 = vld [vmem:[%s29 + $0x190] sm:$0xff]
      %v4910 = vld [vmem:[%s29 + $0x198] sm:$0xff]
      %v4911 = vld [vmem:[%s29 + $0x1a0] sm:$0xff]
      %v4912 = vld [vmem:[%s29 + $0x1a8] sm:$0xff]
      %v4913 = vld [vmem:[%s29 + $0x1b0] sm:$0xff]
      %v4914 = vld [vmem:[%s29 + $0x1b8] sm:$0xff]
      %v4915 = vld [vmem:[%s29 + $0x1c0] sm:$0xff]
      %v4916 = vld [vmem:[%s29 + $0x1c8] sm:$0xff]
      %v4917 = vld [vmem:[%s29 + $0x1d0] sm:$0xff]
      %v4918 = vld [vmem:[%s29 + $0x1d8] sm:$0xff]
      %v4919 = vld [vmem:[%s29 + $0x1e0] sm:$0xff]
      %v4920 = vld [vmem:[%s29 + $0x1e8] sm:$0xff]
      %v4921 = vld [vmem:[%s29 + $0x1f0] sm:$0xff]
      %v4922 = vld [vmem:[%s29 + $0x1f8] sm:$0xff]
      %v4923 = vld [vmem:[%s29 + $0x200] sm:$0xff]
      %v4924 = vld [vmem:[%s29 + $0x208] sm:$0xff]
      %v4925 = vld [vmem:[%s29 + $0x210] sm:$0xff]
      %v4926 = vld [vmem:[%s29 + $0x218] sm:$0xff]
      %v4927 = vld [vmem:[%s29 + $0x220] sm:$0xff]
      %v4928 = vld [vmem:[%s29 + $0x228] sm:$0xff]
      %v4929 = vld [vmem:[%s29 + $0x230] sm:$0xff]
      %v4930 = vld [vmem:[%s29 + $0x238] sm:$0xff]
      %v4931 = vld [vmem:[%s29 + $0x240] sm:$0xff]
      %v4932 = vld [vmem:[%s29 + $0x248] sm:$0xff]
      %v4933 = vld [vmem:[%s29 + $0x250] sm:$0xff]
      %v4934 = vld [vmem:[%s29 + $0x258] sm:$0xff]
      %v4935 = vld [vmem:[%s29 + $0x260] sm:$0xff]
      %v4936 = vld [vmem:[%s29 + $0x268] sm:$0xff]
      %v4937 = vld [vmem:[%s29 + $0x270] sm:$0xff]
      %v4938 = vld [vmem:[%s29 + $0x278] sm:$0xff]
      %v4939 = vld [vmem:[%s29 + $0x280] sm:$0xff]
      %v4940 = vld [vmem:[%s29 + $0x288] sm:$0xff]
      %v4941 = vld [vmem:[%s29 + $0x290] sm:$0xff]
      %v4942 = vld [vmem:[%s29 + $0x298] sm:$0xff]
      %v4943 = vld [vmem:[%s29 + $0x2a0] sm:$0xff]
      %v4944 = vld [vmem:[%s29 + $0x2a8] sm:$0xff]
      %v4945 = vld [vmem:[%s29 + $0x2b0] sm:$0xff]
      %v4946 = vld [vmem:[%s29 + $0x2b8] sm:$0xff]
      %v4947 = vld [vmem:[%s29 + $0x2c0] sm:$0xff]
      %v4948 = vld [vmem:[%s29 + $0x2c8] sm:$0xff]
      %v4949 = vld [vmem:[%s29 + $0x2d0] sm:$0xff]
      %v4950 = vld [vmem:[%s29 + $0x2d8] sm:$0xff]
      %v4951 = vld [vmem:[%s29 + $0x2e0] sm:$0xff]
      %v4952 = vld [vmem:[%s29 + $0x2e8] sm:$0xff]
      %v4953 = vld [vmem:[%s29 + $0x2f0] sm:$0xff]
      %v4954 = vld [vmem:[%s29 + $0x2f8] sm:$0xff]
      %v4955 = vld [vmem:[%s29 + $0x300] sm:$0xff]
      %v4956 = vld [vmem:[%s29 + $0x308] sm:$0xff]
      %v4957 = vld [vmem:[%s29 + $0x310] sm:$0xff]
      %v4958 = vld [vmem:[%s29 + $0x318] sm:$0xff]
      %v4959 = vld [vmem:[%s29 + $0x320] sm:$0xff]
      %v4960 = vld [vmem:[%s29 + $0x328] sm:$0xff]
      %v4961 = vld [vmem:[%s29 + $0x330] sm:$0xff]
      %v4962 = vld [vmem:[%s29 + $0x338] sm:$0xff]
      %v4963 = vld [vmem:[%s29 + $0x340] sm:$0xff]
      %v4964 = vld [vmem:[%s29 + $0x348] sm:$0xff]
      %v4965 = vld [vmem:[%s29 + $0x350] sm:$0xff]
      %v4966 = vld [vmem:[%s29 + $0x358] sm:$0xff]
      %v4967 = vld [vmem:[%s29 + $0x360] sm:$0xff]
      %v4968 = vld [vmem:[%s29 + $0x368] sm:$0xff]
      %v4969 = vld [vmem:[%s29 + $0x370] sm:$0xff]
      %v4970 = vld [vmem:[%s29 + $0x378] sm:$0xff]
      %v4971 = vld [vmem:[%s29 + $0x380] sm:$0xff]
      %v4972 = vld [vmem:[%s29 + $0x388] sm:$0xff]
      %v4973 = vld [vmem:[%s29 + $0x390] sm:$0xff]
      %v4974 = vld [vmem:[%s29 + $0x398] sm:$0xff]
      %v4975 = vld [vmem:[%s29 + $0x3a0] sm:$0xff]
      %v4976 = vld [vmem:[%s29 + $0x3a8] sm:$0xff]
      %v4977 = vld [vmem:[%s29 + $0x3b0] sm:$0xff]
      %v4978 = vld [vmem:[%s29 + $0x3b8] sm:$0xff]
      %v4979 = vld [vmem:[%s29 + $0x3c0] sm:$0xff]
      %v4980 = vld [vmem:[%s29 + $0x3c8] sm:$0xff]
      %v4981 = vld [vmem:[%s29 + $0x3d0] sm:$0xff]
      %v4982 = vld [vmem:[%s29 + $0x3d8] sm:$0xff]
      %v4983 = vld [vmem:[%s29 + $0x3e0] sm:$0xff]
      %v4984 = vld [vmem:[%s29 + $0x3e8] sm:$0xff]
      %v4985 = vld [vmem:[%s29 + $0x3f0] sm:$0xff]
      %v4986 = vld [vmem:[%s29 + $0x3f8] sm:$0xff]
      %v4987 = vld [vmem:[%s29 + $0x400] sm:$0xff]
      %v4988 = vld [vmem:[%s29 + $0x408] sm:$0xff]
      %v4989 = vld [vmem:[%s29 + $0x410] sm:$0xff]
      %v4990 = vld [vmem:[%s29 + $0x418] sm:$0xff]
      %v4991 = vld [vmem:[%s29 + $0x420] sm:$0xff]
      %v4992 = vld [vmem:[%s29 + $0x428] sm:$0xff]
      %v4993 = vld [vmem:[%s29 + $0x430] sm:$0xff]
      %v4994 = vld [vmem:[%s29 + $0x438] sm:$0xff]
      %v4995 = vld [vmem:[%s29 + $0x440] sm:$0xff]
      %v4996 = vld [vmem:[%s29 + $0x448] sm:$0xff]
      %v4997 = vld [vmem:[%s29 + $0x450] sm:$0xff]
      %v4998 = vld [vmem:[%s29 + $0x458] sm:$0xff]
      %v4999 = vld [vmem:[%s29 + $0x460] sm:$0xff]
      %v5000 = vld [vmem:[%s29 + $0x468] sm:$0xff]
      %v5001 = vld [vmem:[%s29 + $0x470] sm:$0xff]
      %v5002 = vld [vmem:[%s29 + $0x478] sm:$0xff]
      %v5003 = vld [vmem:[%s29 + $0x480] sm:$0xff]
      %v5004 = vld [vmem:[%s29 + $0x488] sm:$0xff]
      %v5005 = vld [vmem:[%s29 + $0x490] sm:$0xff]
      %v5006 = vld [vmem:[%s29 + $0x498] sm:$0xff]
      %v5007 = vld [vmem:[%s29 + $0x4a0] sm:$0xff]
      %v5008 = vld [vmem:[%s29 + $0x4a8] sm:$0xff]
      %v5009 = vld [vmem:[%s29 + $0x4b0] sm:$0xff]
      %v5010 = vld [vmem:[%s29 + $0x4b8] sm:$0xff]
      %v5011 = vld [vmem:[%s29 + $0x4c0] sm:$0xff]
      %v5012 = vld [vmem:[%s29 + $0x4c8] sm:$0xff]
      %v5013 = vld [vmem:[%s29 + $0x4d0] sm:$0xff]
      %v5014 = vld [vmem:[%s29 + $0x4d8] sm:$0xff]
      %v5015 = vld [vmem:[%s29 + $0x4e0] sm:$0xff]
      %v5016 = vld [vmem:[%s29 + $0x4e8] sm:$0xff]
      %v5017 = vld [vmem:[%s29 + $0x4f0] sm:$0xff]
      %v5018 = vld [vmem:[%s29 + $0x4f8] sm:$0xff]
      %v5019 = vld [vmem:[%s29 + $0x500] sm:$0xff]
      %v5020 = vld [vmem:[%s29 + $0x508] sm:$0xff]
      %v5021 = vld [vmem:[%s29 + $0x510] sm:$0xff]
      %v5022 = vld [vmem:[%s29 + $0x518] sm:$0xff]
      %v5023 = vld [vmem:[%s29 + $0x520] sm:$0xff]
      %v5024 = vld [vmem:[%s29 + $0x528] sm:$0xff]
      %v5025 = vld [vmem:[%s29 + $0x530] sm:$0xff]
      %v5026 = vld [vmem:[%s29 + $0x538] sm:$0xff]
      %v5027 = vld [vmem:[%s29 + $0x540] sm:$0xff]
      %v5028 = vld [vmem:[%s29 + $0x548] sm:$0xff]
      %v5029 = vld [vmem:[%s29 + $0x550] sm:$0xff]
      %v5030 = vld [vmem:[%s29 + $0x558] sm:$0xff]
      %v5031 = vld [vmem:[%s29 + $0x560] sm:$0xff]
      %v5032 = vld [vmem:[%s29 + $0x568] sm:$0xff]
      %v5033 = vld [vmem:[%s29 + $0x570] sm:$0xff]
      %v5034 = vld [vmem:[%s29 + $0x578] sm:$0xff]
      %v5035 = vld [vmem:[%s29 + $0x580] sm:$0xff]
      %v5036 = vld [vmem:[%s29 + $0x588] sm:$0xff]
      %v5037 = vld [vmem:[%s29 + $0x590] sm:$0xff]
      %v5038 = vld [vmem:[%s29 + $0x598] sm:$0xff]
      %v5039 = vld [vmem:[%s29 + $0x5a0] sm:$0xff]
      %v5040 = vld [vmem:[%s29 + $0x5a8] sm:$0xff]
      %v5041 = vld [vmem:[%s29 + $0x5b0] sm:$0xff]
      %v5042 = vld [vmem:[%s29 + $0x5b8] sm:$0xff]
      %v5043 = vld [vmem:[%s29 + $0x5c0] sm:$0xff]
      %v5044 = vld [vmem:[%s29 + $0x5c8] sm:$0xff]
      %v5045 = vld [vmem:[%s29 + $0x5d0] sm:$0xff]
      %v5046 = vld [vmem:[%s29 + $0x5d8] sm:$0xff]
      %v5047 = vld [vmem:[%s29 + $0x5e0] sm:$0xff]
      %v5048 = vld [vmem:[%s29 + $0x5e8] sm:$0xff]
      %v5049 = vld [vmem:[%s29 + $0x5f0] sm:$0xff]
      %v5050 = vld [vmem:[%s29 + $0x5f8] sm:$0xff]
      %v5051 = vld [vmem:[%s29 + $0x600] sm:$0xff]
      %v5052 = vld [vmem:[%s29 + $0x608] sm:$0xff]
      %v5053 = vld [vmem:[%s29 + $0x610] sm:$0xff]
      %v5054 = vld [vmem:[%s29 + $0x618] sm:$0xff]
      %v5055 = vld [vmem:[%s29 + $0x620] sm:$0xff]
      %v5056 = vld [vmem:[%s29 + $0x628] sm:$0xff]
      %v5057 = vld [vmem:[%s29 + $0x630] sm:$0xff]
      %v5058 = vld [vmem:[%s29 + $0x638] sm:$0xff]
      %v5059 = vld [vmem:[%s29 + $0x640] sm:$0xff]
      %v5060 = vld [vmem:[%s29 + $0x648] sm:$0xff]
      %v5061 = vld [vmem:[%s29 + $0x650] sm:$0xff]
      %v5062 = vld [vmem:[%s29 + $0x658] sm:$0xff]
      %v5063 = vld [vmem:[%s29 + $0x660] sm:$0xff]
      %v5064 = vld [vmem:[%s29 + $0x668] sm:$0xff]
      %v5065 = vld [vmem:[%s29 + $0x670] sm:$0xff]
      %v5066 = vld [vmem:[%s29 + $0x678] sm:$0xff]
      %v5067 = vld [vmem:[%s29 + $0x680] sm:$0xff]
      %v5068 = vld [vmem:[%s29 + $0x688] sm:$0xff]
      %v5069 = vld [vmem:[%s29 + $0x690] sm:$0xff]
      %v5070 = vld [vmem:[%s29 + $0x698] sm:$0xff]
      %v5071 = vld [vmem:[%s29 + $0x6a0] sm:$0xff]
      %v5072 = vld [vmem:[%s29 + $0x6a8] sm:$0xff]
      %v5073 = vld [vmem:[%s29 + $0x6b0] sm:$0xff]
      %v5074 = vld [vmem:[%s29 + $0x6b8] sm:$0xff]
      %v5075 = vld [vmem:[%s29 + $0x6c0] sm:$0xff]
      %v5076 = vld [vmem:[%s29 + $0x6c8] sm:$0xff]
      %v5077 = vld [vmem:[%s29 + $0x6d0] sm:$0xff]
      %v5078 = vld [vmem:[%s29 + $0x6d8] sm:$0xff]
      %v5079 = vld [vmem:[%s29 + $0x6e0] sm:$0xff]
      %v5080 = vld [vmem:[%s29 + $0x6e8] sm:$0xff]
      %v5081 = vld [vmem:[%s29 + $0x6f0] sm:$0xff]
      %v5082 = vld [vmem:[%s29 + $0x6f8] sm:$0xff]
      %v5083 = vld [vmem:[%s29 + $0x700] sm:$0xff]
      %v5084 = vld [vmem:[%s29 + $0x708] sm:$0xff]
      %v5085 = vld [vmem:[%s29 + $0x710] sm:$0xff]
      %v5086 = vld [vmem:[%s29 + $0x718] sm:$0xff]
      %v5087 = vld [vmem:[%s29 + $0x720] sm:$0xff]
      %v5088 = vld [vmem:[%s29 + $0x728] sm:$0xff]
      %v5089 = vld [vmem:[%s29 + $0x730] sm:$0xff]
      %v5090 = vld [vmem:[%s29 + $0x738] sm:$0xff]
      %v5091 = vld [vmem:[%s29 + $0x740] sm:$0xff]
      %v5092 = vld [vmem:[%s29 + $0x748] sm:$0xff]
      %v5093 = vld [vmem:[%s29 + $0x750] sm:$0xff]
      %v5094 = vld [vmem:[%s29 + $0x758] sm:$0xff]
      %v5095 = vld [vmem:[%s29 + $0x760] sm:$0xff]
      %v5096 = vld [vmem:[%s29 + $0x768] sm:$0xff]
      %v5097 = vld [vmem:[%s29 + $0x770] sm:$0xff]
      %v5098 = vld [vmem:[%s29 + $0x778] sm:$0xff]
      %v5099 = vld [vmem:[%s29 + $0x780] sm:$0xff]
      %v5100 = vld [vmem:[%s29 + $0x788] sm:$0xff]
      %v5101 = vld [vmem:[%s29 + $0x790] sm:$0xff]
      %v5102 = vld [vmem:[%s29 + $0x798] sm:$0xff]
      %v5103 = vld [vmem:[%s29 + $0x7a0] sm:$0xff]
      %v5104 = vld [vmem:[%s29 + $0x7a8] sm:$0xff]
      %v5105 = vld [vmem:[%s29 + $0x7b0] sm:$0xff]
      %v5106 = vld [vmem:[%s29 + $0x7b8] sm:$0xff]
      %v5107 = vld [vmem:[%s29 + $0x7c0] sm:$0xff]
      %v5108 = vld [vmem:[%s29 + $0x7c8] sm:$0xff]
      %v5109 = vld [vmem:[%s29 + $0x7d0] sm:$0xff]
      %v5110 = vld [vmem:[%s29 + $0x7d8] sm:$0xff]
      %v5111 = vld [vmem:[%s29 + $0x7e0] sm:$0xff]
      %v5112 = vld [vmem:[%s29 + $0x7e8] sm:$0xff]
      %v5113 = vld [vmem:[%s29 + $0x7f0] sm:$0xff]
      %v5114 = vld [vmem:[%s29 + $0x7f8] sm:$0xff]
      %v5115 = vld [vmem:[%s29 + $0x800] sm:$0xff]
      %v5116 = vld [vmem:[%s29 + $0x808] sm:$0xff]
      %v5117 = vld [vmem:[%s29 + $0x810] sm:$0xff]
      %v5118 = vld [vmem:[%s29 + $0x818] sm:$0xff]
      %v5119 = vld [vmem:[%s29 + $0x820] sm:$0xff]
      %v5120 = vld [vmem:[%s29 + $0x828] sm:$0xff]
      %v5121 = vld [vmem:[%s29 + $0x830] sm:$0xff]
      %v5122 = vld [vmem:[%s29 + $0x838] sm:$0xff]
      %v5123 = vld [vmem:[%s29 + $0x840] sm:$0xff]
      %v5124 = vld [vmem:[%s29 + $0x848] sm:$0xff]
      %v5125 = vld [vmem:[%s29 + $0x850] sm:$0xff]
      %v5126 = vld [vmem:[%s29 + $0x858] sm:$0xff]
      %v5127 = vld [vmem:[%s29 + $0x860] sm:$0xff]
      %v5128 = vld [vmem:[%s29 + $0x868] sm:$0xff]
      %v5129 = vld [vmem:[%s29 + $0x870] sm:$0xff]
      %v5130 = vld [vmem:[%s29 + $0x878] sm:$0xff]
      %v5131 = vld [vmem:[%s29 + $0x880] sm:$0xff]
      %v5132 = vld [vmem:[%s29 + $0x888] sm:$0xff]
      %v5133 = vld [vmem:[%s29 + $0x890] sm:$0xff]
      %v5134 = vld [vmem:[%s29 + $0x898] sm:$0xff]
      %v5135 = vld [vmem:[%s29 + $0x8a0] sm:$0xff]
      %v5136 = vld [vmem:[%s29 + $0x8a8] sm:$0xff]
      %v5137 = vld [vmem:[%s29 + $0x8b0] sm:$0xff]
      %v5138 = vld [vmem:[%s29 + $0x8b8] sm:$0xff]
      %v5139 = vld [vmem:[%s29 + $0x8c0] sm:$0xff]
      %v5140 = vld [vmem:[%s29 + $0x8c8] sm:$0xff]
      %v5141 = vld [vmem:[%s29 + $0x8d0] sm:$0xff]
      %v5142 = vld [vmem:[%s29 + $0x8d8] sm:$0xff]
      %v5143 = vld [vmem:[%s29 + $0x8e0] sm:$0xff]
      %v5144 = vld [vmem:[%s29 + $0x8e8] sm:$0xff]
      %v5145 = vld [vmem:[%s29 + $0x8f0] sm:$0xff]
      %v5146 = vld [vmem:[%s29 + $0x8f8] sm:$0xff]
      %v5435 = vunpack.c.l.b16 %v4859
      %v5436 = vunpack.c.h.b16 %v4859
      %v5437 = vunpack.c.l.b16 %v4860
      %v5438 = vunpack.c.h.b16 %v4860
      %v5439 = vunpack.c.l.b16 %v4861
      %v5440 = vunpack.c.h.b16 %v4861
      %v5441 = vunpack.c.l.b16 %v4862
      %v5442 = vunpack.c.h.b16 %v4862
      %v5443 = vunpack.c.l.b16 %v4863
      %v5444 = vunpack.c.h.b16 %v4863
      %v5445 = vunpack.c.l.b16 %v4864
      %v5446 = vunpack.c.h.b16 %v4864
      %v5447 = vunpack.c.l.b16 %v4865
      %v5448 = vunpack.c.h.b16 %v4865
      %v5449 = vunpack.c.l.b16 %v4866
      %v5450 = vunpack.c.h.b16 %v4866
      %v5451 = vunpack.c.l.b16 %v4867
      %v5452 = vunpack.c.h.b16 %v4867
      %v5453 = vunpack.c.l.b16 %v4868
      %v5454 = vunpack.c.h.b16 %v4868
      %v5455 = vunpack.c.l.b16 %v4869
      %v5456 = vunpack.c.h.b16 %v4869
      %v5457 = vunpack.c.l.b16 %v4870
      %v5458 = vunpack.c.h.b16 %v4870
      %v5459 = vunpack.c.l.b16 %v4871
      %v5460 = vunpack.c.h.b16 %v4871
      %v5461 = vunpack.c.l.b16 %v4872
      %v5462 = vunpack.c.h.b16 %v4872
      %v5463 = vunpack.c.l.b16 %v4873
      %v5464 = vunpack.c.h.b16 %v4873
      %v5465 = vunpack.c.l.b16 %v4874
      %v5466 = vunpack.c.h.b16 %v4874
      %v5467 = vunpack.c.l.b16 %v4875
      %v5468 = vunpack.c.h.b16 %v4875
      %v5469 = vunpack.c.l.b16 %v4876
      %v5470 = vunpack.c.h.b16 %v4876
      %v5471 = vunpack.c.l.b16 %v4877
      %v5472 = vunpack.c.h.b16 %v4877
      %v5473 = vunpack.c.l.b16 %v4878
      %v5474 = vunpack.c.h.b16 %v4878
      %v5475 = vunpack.c.l.b16 %v4879
      %v5476 = vunpack.c.h.b16 %v4879
      %v5477 = vunpack.c.l.b16 %v4880
      %v5478 = vunpack.c.h.b16 %v4880
      %v5479 = vunpack.c.l.b16 %v4881
      %v5480 = vunpack.c.h.b16 %v4881
      %v5481 = vunpack.c.l.b16 %v4882
      %v5482 = vunpack.c.h.b16 %v4882
      %v5483 = vunpack.c.l.b16 %v4883
      %v5484 = vunpack.c.h.b16 %v4883
      %v5485 = vunpack.c.l.b16 %v4884
      %v5486 = vunpack.c.h.b16 %v4884
      %v5487 = vunpack.c.l.b16 %v4885
      %v5488 = vunpack.c.h.b16 %v4885
      %v5489 = vunpack.c.l.b16 %v4886
      %v5490 = vunpack.c.h.b16 %v4886
      %v5491 = vunpack.c.l.b16 %v4887
      %v5492 = vunpack.c.h.b16 %v4887
      %v5493 = vunpack.c.l.b16 %v4888
      %v5494 = vunpack.c.h.b16 %v4888
      %v5495 = vunpack.c.l.b16 %v4889
      %v5496 = vunpack.c.h.b16 %v4889
      %v5497 = vunpack.c.l.b16 %v4890
      %v5498 = vunpack.c.h.b16 %v4890
      %v5499 = vunpack.c.l.b16 %v4891
      %v5500 = vunpack.c.h.b16 %v4891
      %v5501 = vunpack.c.l.b16 %v4892
      %v5502 = vunpack.c.h.b16 %v4892
      %v5503 = vunpack.c.l.b16 %v4893
      %v5504 = vunpack.c.h.b16 %v4893
      %v5505 = vunpack.c.l.b16 %v4894
      %v5506 = vunpack.c.h.b16 %v4894
      %v5507 = vunpack.c.l.b16 %v4895
      %v5508 = vunpack.c.h.b16 %v4895
      %v5509 = vunpack.c.l.b16 %v4896
      %v5510 = vunpack.c.h.b16 %v4896
      %v5511 = vunpack.c.l.b16 %v4897
      %v5512 = vunpack.c.h.b16 %v4897
      %v5513 = vunpack.c.l.b16 %v4898
      %v5514 = vunpack.c.h.b16 %v4898
      %v5515 = vunpack.c.l.b16 %v4899
      %v5516 = vunpack.c.h.b16 %v4899
      %v5517 = vunpack.c.l.b16 %v4900
      %v5518 = vunpack.c.h.b16 %v4900
      %v5519 = vunpack.c.l.b16 %v4901
      %v5520 = vunpack.c.h.b16 %v4901
      %v5521 = vunpack.c.l.b16 %v4902
      %v5522 = vunpack.c.h.b16 %v4902
      %v5523 = vunpack.c.l.b16 %v4903
      %v5524 = vunpack.c.h.b16 %v4903
      %v5525 = vunpack.c.l.b16 %v4904
      %v5526 = vunpack.c.h.b16 %v4904
      %v5527 = vunpack.c.l.b16 %v4905
      %v5528 = vunpack.c.h.b16 %v4905
      %v5529 = vunpack.c.l.b16 %v4906
      %v5530 = vunpack.c.h.b16 %v4906
      %v5531 = vunpack.c.l.b16 %v4907
      %v5532 = vunpack.c.h.b16 %v4907
      %v5533 = vunpack.c.l.b16 %v4908
      %v5534 = vunpack.c.h.b16 %v4908
      %v5535 = vunpack.c.l.b16 %v4909
      %v5536 = vunpack.c.h.b16 %v4909
      %v5537 = vunpack.c.l.b16 %v4910
      %v5538 = vunpack.c.h.b16 %v4910
      %v5539 = vunpack.c.l.b16 %v4911
      %v5540 = vunpack.c.h.b16 %v4911
      %v5541 = vunpack.c.l.b16 %v4912
      %v5542 = vunpack.c.h.b16 %v4912
      %v5543 = vunpack.c.l.b16 %v4913
      %v5544 = vunpack.c.h.b16 %v4913
      %v5545 = vunpack.c.l.b16 %v4914
      %v5546 = vunpack.c.h.b16 %v4914
      %v5547 = vunpack.c.l.b16 %v4915
      %v5548 = vunpack.c.h.b16 %v4915
      %v5549 = vunpack.c.l.b16 %v4916
      %v5550 = vunpack.c.h.b16 %v4916
      %v5551 = vunpack.c.l.b16 %v4917
      %v5552 = vunpack.c.h.b16 %v4917
      %v5553 = vunpack.c.l.b16 %v4918
      %v5554 = vunpack.c.h.b16 %v4918
      %v5555 = vunpack.c.l.b16 %v4919
      %v5556 = vunpack.c.h.b16 %v4919
      %v5557 = vunpack.c.l.b16 %v4920
      %v5558 = vunpack.c.h.b16 %v4920
      %v5559 = vunpack.c.l.b16 %v4921
      %v5560 = vunpack.c.h.b16 %v4921
      %v5561 = vunpack.c.l.b16 %v4922
      %v5562 = vunpack.c.h.b16 %v4922
      %v5563 = vunpack.c.l.b16 %v4923
      %v5564 = vunpack.c.h.b16 %v4923
      %v5565 = vunpack.c.l.b16 %v4924
      %v5566 = vunpack.c.h.b16 %v4924
      %v5567 = vunpack.c.l.b16 %v4925
      %v5568 = vunpack.c.h.b16 %v4925
      %v5569 = vunpack.c.l.b16 %v4926
      %v5570 = vunpack.c.h.b16 %v4926
      %v5571 = vunpack.c.l.b16 %v4927
      %v5572 = vunpack.c.h.b16 %v4927
      %v5573 = vunpack.c.l.b16 %v4928
      %v5574 = vunpack.c.h.b16 %v4928
      %v5575 = vunpack.c.l.b16 %v4929
      %v5576 = vunpack.c.h.b16 %v4929
      %v5577 = vunpack.c.l.b16 %v4930
      %v5578 = vunpack.c.h.b16 %v4930
      %v5579 = vunpack.c.l.b16 %v4931
      %v5580 = vunpack.c.h.b16 %v4931
      %v5581 = vunpack.c.l.b16 %v4932
      %v5582 = vunpack.c.h.b16 %v4932
      %v5583 = vunpack.c.l.b16 %v4933
      %v5584 = vunpack.c.h.b16 %v4933
      %v5585 = vunpack.c.l.b16 %v4934
      %v5586 = vunpack.c.h.b16 %v4934
      %v5587 = vunpack.c.l.b16 %v4935
      %v5588 = vunpack.c.h.b16 %v4935
      %v5589 = vunpack.c.l.b16 %v4936
      %v5590 = vunpack.c.h.b16 %v4936
      %v5591 = vunpack.c.l.b16 %v4937
      %v5592 = vunpack.c.h.b16 %v4937
      %v5593 = vunpack.c.l.b16 %v4938
      %v5594 = vunpack.c.h.b16 %v4938
      %v5595 = vunpack.c.l.b16 %v4939
      %v5596 = vunpack.c.h.b16 %v4939
      %v5597 = vunpack.c.l.b16 %v4940
      %v5598 = vunpack.c.h.b16 %v4940
      %v5599 = vunpack.c.l.b16 %v4941
      %v5600 = vunpack.c.h.b16 %v4941
      %v5601 = vunpack.c.l.b16 %v4942
      %v5602 = vunpack.c.h.b16 %v4942
      %v5603 = vunpack.c.l.b16 %v4943
      %v5604 = vunpack.c.h.b16 %v4943
      %v5605 = vunpack.c.l.b16 %v4944
      %v5606 = vunpack.c.h.b16 %v4944
      %v5607 = vunpack.c.l.b16 %v4945
      %v5608 = vunpack.c.h.b16 %v4945
      %v5609 = vunpack.c.l.b16 %v4946
      %v5610 = vunpack.c.h.b16 %v4946
      %v5611 = vunpack.c.l.b16 %v4947
      %v5612 = vunpack.c.h.b16 %v4947
      %v5613 = vunpack.c.l.b16 %v4948
      %v5614 = vunpack.c.h.b16 %v4948
      %v5615 = vunpack.c.l.b16 %v4949
      %v5616 = vunpack.c.h.b16 %v4949
      %v5617 = vunpack.c.l.b16 %v4950
      %v5618 = vunpack.c.h.b16 %v4950
      %v5619 = vunpack.c.l.b16 %v4951
      %v5620 = vunpack.c.h.b16 %v4951
      %v5621 = vunpack.c.l.b16 %v4952
      %v5622 = vunpack.c.h.b16 %v4952
      %v5623 = vunpack.c.l.b16 %v4953
      %v5624 = vunpack.c.h.b16 %v4953
      %v5625 = vunpack.c.l.b16 %v4954
      %v5626 = vunpack.c.h.b16 %v4954
      %v5627 = vunpack.c.l.b16 %v4955
      %v5628 = vunpack.c.h.b16 %v4955
      %v5629 = vunpack.c.l.b16 %v4956
      %v5630 = vunpack.c.h.b16 %v4956
      %v5631 = vunpack.c.l.b16 %v4957
      %v5632 = vunpack.c.h.b16 %v4957
      %v5633 = vunpack.c.l.b16 %v4958
      %v5634 = vunpack.c.h.b16 %v4958
      %v5635 = vunpack.c.l.b16 %v4959
      %v5636 = vunpack.c.h.b16 %v4959
      %v5637 = vunpack.c.l.b16 %v4960
      %v5638 = vunpack.c.h.b16 %v4960
      %v5639 = vunpack.c.l.b16 %v4961
      %v5640 = vunpack.c.h.b16 %v4961
      %v5641 = vunpack.c.l.b16 %v4962
      %v5642 = vunpack.c.h.b16 %v4962
      %v5643 = vunpack.c.l.b16 %v4963
      %v5644 = vunpack.c.h.b16 %v4963
      %v5645 = vunpack.c.l.b16 %v4964
      %v5646 = vunpack.c.h.b16 %v4964
      %v5647 = vunpack.c.l.b16 %v4965
      %v5648 = vunpack.c.h.b16 %v4965
      %v5649 = vunpack.c.l.b16 %v4966
      %v5650 = vunpack.c.h.b16 %v4966
      %v5651 = vunpack.c.l.b16 %v4967
      %v5652 = vunpack.c.h.b16 %v4967
      %v5653 = vunpack.c.l.b16 %v4968
      %v5654 = vunpack.c.h.b16 %v4968
      %v5655 = vunpack.c.l.b16 %v4969
      %v5656 = vunpack.c.h.b16 %v4969
      %v5657 = vunpack.c.l.b16 %v4970
      %v5658 = vunpack.c.h.b16 %v4970
      %v5659 = vunpack.c.l.b16 %v4971
      %v5660 = vunpack.c.h.b16 %v4971
      %v5661 = vunpack.c.l.b16 %v4972
      %v5662 = vunpack.c.h.b16 %v4972
      %v5663 = vunpack.c.l.b16 %v4973
      %v5664 = vunpack.c.h.b16 %v4973
      %v5665 = vunpack.c.l.b16 %v4974
      %v5666 = vunpack.c.h.b16 %v4974
      %v5667 = vunpack.c.l.b16 %v4975
      %v5668 = vunpack.c.h.b16 %v4975
      %v5669 = vunpack.c.l.b16 %v4976
      %v5670 = vunpack.c.h.b16 %v4976
      %v5671 = vunpack.c.l.b16 %v4977
      %v5672 = vunpack.c.h.b16 %v4977
      %v5673 = vunpack.c.l.b16 %v4978
      %v5674 = vunpack.c.h.b16 %v4978
      %v5675 = vunpack.c.l.b16 %v4979
      %v5676 = vunpack.c.h.b16 %v4979
      %v5677 = vunpack.c.l.b16 %v4980
      %v5678 = vunpack.c.h.b16 %v4980
      %v5679 = vunpack.c.l.b16 %v4981
      %v5680 = vunpack.c.h.b16 %v4981
      %v5681 = vunpack.c.l.b16 %v4982
      %v5682 = vunpack.c.h.b16 %v4982
      %v5683 = vunpack.c.l.b16 %v4983
      %v5684 = vunpack.c.h.b16 %v4983
      %v5685 = vunpack.c.l.b16 %v4984
      %v5686 = vunpack.c.h.b16 %v4984
      %v5687 = vunpack.c.l.b16 %v4985
      %v5688 = vunpack.c.h.b16 %v4985
      %v5689 = vunpack.c.l.b16 %v4986
      %v5690 = vunpack.c.h.b16 %v4986
      %v5691 = vunpack.c.l.b16 %v4987
      %v5692 = vunpack.c.h.b16 %v4987
      %v5693 = vunpack.c.l.b16 %v4988
      %v5694 = vunpack.c.h.b16 %v4988
      %v5695 = vunpack.c.l.b16 %v4989
      %v5696 = vunpack.c.h.b16 %v4989
      %v5697 = vunpack.c.l.b16 %v4990
      %v5698 = vunpack.c.h.b16 %v4990
      %v5699 = vunpack.c.l.b16 %v4991
      %v5700 = vunpack.c.h.b16 %v4991
      %v5701 = vunpack.c.l.b16 %v4992
      %v5702 = vunpack.c.h.b16 %v4992
      %v5703 = vunpack.c.l.b16 %v4993
      %v5704 = vunpack.c.h.b16 %v4993
      %v5705 = vunpack.c.l.b16 %v4994
      %v5706 = vunpack.c.h.b16 %v4994
      %v5707 = vunpack.c.l.b16 %v4995
      %v5708 = vunpack.c.h.b16 %v4995
      %v5709 = vunpack.c.l.b16 %v4996
      %v5710 = vunpack.c.h.b16 %v4996
      %v5711 = vunpack.c.l.b16 %v4997
      %v5712 = vunpack.c.h.b16 %v4997
      %v5713 = vunpack.c.l.b16 %v4998
      %v5714 = vunpack.c.h.b16 %v4998
      %v5715 = vunpack.c.l.b16 %v4999
      %v5716 = vunpack.c.h.b16 %v4999
      %v5717 = vunpack.c.l.b16 %v5000
      %v5718 = vunpack.c.h.b16 %v5000
      %v5719 = vunpack.c.l.b16 %v5001
      %v5720 = vunpack.c.h.b16 %v5001
      %v5721 = vunpack.c.l.b16 %v5002
      %v5722 = vunpack.c.h.b16 %v5002
      %v5723 = vunpack.c.l.b16 %v5003
      %v5724 = vunpack.c.h.b16 %v5003
      %v5725 = vunpack.c.l.b16 %v5004
      %v5726 = vunpack.c.h.b16 %v5004
      %v5727 = vunpack.c.l.b16 %v5005
      %v5728 = vunpack.c.h.b16 %v5005
      %v5729 = vunpack.c.l.b16 %v5006
      %v5730 = vunpack.c.h.b16 %v5006
      %v5731 = vunpack.c.l.b16 %v5007
      %v5732 = vunpack.c.h.b16 %v5007
      %v5733 = vunpack.c.l.b16 %v5008
      %v5734 = vunpack.c.h.b16 %v5008
      %v5735 = vunpack.c.l.b16 %v5009
      %v5736 = vunpack.c.h.b16 %v5009
      %v5737 = vunpack.c.l.b16 %v5010
      %v5738 = vunpack.c.h.b16 %v5010
      %v5739 = vunpack.c.l.b16 %v5011
      %v5740 = vunpack.c.h.b16 %v5011
      %v5741 = vunpack.c.l.b16 %v5012
      %v5742 = vunpack.c.h.b16 %v5012
      %v5743 = vunpack.c.l.b16 %v5013
      %v5744 = vunpack.c.h.b16 %v5013
      %v5745 = vunpack.c.l.b16 %v5014
      %v5746 = vunpack.c.h.b16 %v5014
      %v5747 = vunpack.c.l.b16 %v5015
      %v5748 = vunpack.c.h.b16 %v5015
      %v5749 = vunpack.c.l.b16 %v5016
      %v5750 = vunpack.c.h.b16 %v5016
      %v5751 = vunpack.c.l.b16 %v5017
      %v5752 = vunpack.c.h.b16 %v5017
      %v5753 = vunpack.c.l.b16 %v5018
      %v5754 = vunpack.c.h.b16 %v5018
      %v5755 = vunpack.c.l.b16 %v5019
      %v5756 = vunpack.c.h.b16 %v5019
      %v5757 = vunpack.c.l.b16 %v5020
      %v5758 = vunpack.c.h.b16 %v5020
      %v5759 = vunpack.c.l.b16 %v5021
      %v5760 = vunpack.c.h.b16 %v5021
      %v5761 = vunpack.c.l.b16 %v5022
      %v5762 = vunpack.c.h.b16 %v5022
      %v5763 = vunpack.c.l.b16 %v5023
      %v5764 = vunpack.c.h.b16 %v5023
      %v5765 = vunpack.c.l.b16 %v5024
      %v5766 = vunpack.c.h.b16 %v5024
      %v5767 = vunpack.c.l.b16 %v5025
      %v5768 = vunpack.c.h.b16 %v5025
      %v5769 = vunpack.c.l.b16 %v5026
      %v5770 = vunpack.c.h.b16 %v5026
      %v5771 = vunpack.c.l.b16 %v5027
      %v5772 = vunpack.c.h.b16 %v5027
      %v5773 = vunpack.c.l.b16 %v5028
      %v5774 = vunpack.c.h.b16 %v5028
      %v5775 = vunpack.c.l.b16 %v5029
      %v5776 = vunpack.c.h.b16 %v5029
      %v5777 = vunpack.c.l.b16 %v5030
      %v5778 = vunpack.c.h.b16 %v5030
      %v5779 = vunpack.c.l.b16 %v5031
      %v5780 = vunpack.c.h.b16 %v5031
      %v5781 = vunpack.c.l.b16 %v5032
      %v5782 = vunpack.c.h.b16 %v5032
      %v5783 = vunpack.c.l.b16 %v5033
      %v5784 = vunpack.c.h.b16 %v5033
      %v5785 = vunpack.c.l.b16 %v5034
      %v5786 = vunpack.c.h.b16 %v5034
      %v5787 = vunpack.c.l.b16 %v5035
      %v5788 = vunpack.c.h.b16 %v5035
      %v5789 = vunpack.c.l.b16 %v5036
      %v5790 = vunpack.c.h.b16 %v5036
      %v5791 = vunpack.c.l.b16 %v5037
      %v5792 = vunpack.c.h.b16 %v5037
      %v5793 = vunpack.c.l.b16 %v5038
      %v5794 = vunpack.c.h.b16 %v5038
      %v5795 = vunpack.c.l.b16 %v5039
      %v5796 = vunpack.c.h.b16 %v5039
      %v5797 = vunpack.c.l.b16 %v5040
      %v5798 = vunpack.c.h.b16 %v5040
      %v5799 = vunpack.c.l.b16 %v5041
      %v5800 = vunpack.c.h.b16 %v5041
      %v5801 = vunpack.c.l.b16 %v5042
      %v5802 = vunpack.c.h.b16 %v5042
      %v5803 = vunpack.c.l.b16 %v5043
      %v5804 = vunpack.c.h.b16 %v5043
      %v5805 = vunpack.c.l.b16 %v5044
      %v5806 = vunpack.c.h.b16 %v5044
      %v5807 = vunpack.c.l.b16 %v5045
      %v5808 = vunpack.c.h.b16 %v5045
      %v5809 = vunpack.c.l.b16 %v5046
      %v5810 = vunpack.c.h.b16 %v5046
      %v5811 = vunpack.c.l.b16 %v5047
      %v5812 = vunpack.c.h.b16 %v5047
      %v5813 = vunpack.c.l.b16 %v5048
      %v5814 = vunpack.c.h.b16 %v5048
      %v5815 = vunpack.c.l.b16 %v5049
      %v5816 = vunpack.c.h.b16 %v5049
      %v5817 = vunpack.c.l.b16 %v5050
      %v5818 = vunpack.c.h.b16 %v5050
      %v5819 = vunpack.c.l.b16 %v5051
      %v5820 = vunpack.c.h.b16 %v5051
      %v5821 = vunpack.c.l.b16 %v5052
      %v5822 = vunpack.c.h.b16 %v5052
      %v5823 = vunpack.c.l.b16 %v5053
      %v5824 = vunpack.c.h.b16 %v5053
      %v5825 = vunpack.c.l.b16 %v5054
      %v5826 = vunpack.c.h.b16 %v5054
      %v5827 = vunpack.c.l.b16 %v5055
      %v5828 = vunpack.c.h.b16 %v5055
      %v5829 = vunpack.c.l.b16 %v5056
      %v5830 = vunpack.c.h.b16 %v5056
      %v5831 = vunpack.c.l.b16 %v5057
      %v5832 = vunpack.c.h.b16 %v5057
      %v5833 = vunpack.c.l.b16 %v5058
      %v5834 = vunpack.c.h.b16 %v5058
      %v5835 = vunpack.c.l.b16 %v5059
      %v5836 = vunpack.c.h.b16 %v5059
      %v5837 = vunpack.c.l.b16 %v5060
      %v5838 = vunpack.c.h.b16 %v5060
      %v5839 = vunpack.c.l.b16 %v5061
      %v5840 = vunpack.c.h.b16 %v5061
      %v5841 = vunpack.c.l.b16 %v5062
      %v5842 = vunpack.c.h.b16 %v5062
      %v5843 = vunpack.c.l.b16 %v5063
      %v5844 = vunpack.c.h.b16 %v5063
      %v5845 = vunpack.c.l.b16 %v5064
      %v5846 = vunpack.c.h.b16 %v5064
      %v5847 = vunpack.c.l.b16 %v5065
      %v5848 = vunpack.c.h.b16 %v5065
      %v5849 = vunpack.c.l.b16 %v5066
      %v5850 = vunpack.c.h.b16 %v5066
      %v5851 = vunpack.c.l.b16 %v5067
      %v5852 = vunpack.c.h.b16 %v5067
      %v5853 = vunpack.c.l.b16 %v5068
      %v5854 = vunpack.c.h.b16 %v5068
      %v5855 = vunpack.c.l.b16 %v5069
      %v5856 = vunpack.c.h.b16 %v5069
      %v5857 = vunpack.c.l.b16 %v5070
      %v5858 = vunpack.c.h.b16 %v5070
      %v5859 = vunpack.c.l.b16 %v5071
      %v5860 = vunpack.c.h.b16 %v5071
      %v5861 = vunpack.c.l.b16 %v5072
      %v5862 = vunpack.c.h.b16 %v5072
      %v5863 = vunpack.c.l.b16 %v5073
      %v5864 = vunpack.c.h.b16 %v5073
      %v5865 = vunpack.c.l.b16 %v5074
      %v5866 = vunpack.c.h.b16 %v5074
      %v5867 = vunpack.c.l.b16 %v5075
      %v5868 = vunpack.c.h.b16 %v5075
      %v5869 = vunpack.c.l.b16 %v5076
      %v5870 = vunpack.c.h.b16 %v5076
      %v5871 = vunpack.c.l.b16 %v5077
      %v5872 = vunpack.c.h.b16 %v5077
      %v5873 = vunpack.c.l.b16 %v5078
      %v5874 = vunpack.c.h.b16 %v5078
      %v5875 = vunpack.c.l.b16 %v5079
      %v5876 = vunpack.c.h.b16 %v5079
      %v5877 = vunpack.c.l.b16 %v5080
      %v5878 = vunpack.c.h.b16 %v5080
      %v5879 = vunpack.c.l.b16 %v5081
      %v5880 = vunpack.c.h.b16 %v5081
      %v5881 = vunpack.c.l.b16 %v5082
      %v5882 = vunpack.c.h.b16 %v5082
      %v5883 = vunpack.c.l.b16 %v5083
      %v5884 = vunpack.c.h.b16 %v5083
      %v5885 = vunpack.c.l.b16 %v5084
      %v5886 = vunpack.c.h.b16 %v5084
      %v5887 = vunpack.c.l.b16 %v5085
      %v5888 = vunpack.c.h.b16 %v5085
      %v5889 = vunpack.c.l.b16 %v5086
      %v5890 = vunpack.c.h.b16 %v5086
      %v5891 = vunpack.c.l.b16 %v5087
      %v5892 = vunpack.c.h.b16 %v5087
      %v5893 = vunpack.c.l.b16 %v5088
      %v5894 = vunpack.c.h.b16 %v5088
      %v5895 = vunpack.c.l.b16 %v5089
      %v5896 = vunpack.c.h.b16 %v5089
      %v5897 = vunpack.c.l.b16 %v5090
      %v5898 = vunpack.c.h.b16 %v5090
      %v5899 = vunpack.c.l.b16 %v5091
      %v5900 = vunpack.c.h.b16 %v5091
      %v5901 = vunpack.c.l.b16 %v5092
      %v5902 = vunpack.c.h.b16 %v5092
      %v5903 = vunpack.c.l.b16 %v5093
      %v5904 = vunpack.c.h.b16 %v5093
      %v5905 = vunpack.c.l.b16 %v5094
      %v5906 = vunpack.c.h.b16 %v5094
      %v5907 = vunpack.c.l.b16 %v5095
      %v5908 = vunpack.c.h.b16 %v5095
      %v5909 = vunpack.c.l.b16 %v5096
      %v5910 = vunpack.c.h.b16 %v5096
      %v5911 = vunpack.c.l.b16 %v5097
      %v5912 = vunpack.c.h.b16 %v5097
      %v5913 = vunpack.c.l.b16 %v5098
      %v5914 = vunpack.c.h.b16 %v5098
      %v5915 = vunpack.c.l.b16 %v5099
      %v5916 = vunpack.c.h.b16 %v5099
      %v5917 = vunpack.c.l.b16 %v5100
      %v5918 = vunpack.c.h.b16 %v5100
      %v5919 = vunpack.c.l.b16 %v5101
      %v5920 = vunpack.c.h.b16 %v5101
      %v5921 = vunpack.c.l.b16 %v5102
      %v5922 = vunpack.c.h.b16 %v5102
      %v5923 = vunpack.c.l.b16 %v5103
      %v5924 = vunpack.c.h.b16 %v5103
      %v5925 = vunpack.c.l.b16 %v5104
      %v5926 = vunpack.c.h.b16 %v5104
      %v5927 = vunpack.c.l.b16 %v5105
      %v5928 = vunpack.c.h.b16 %v5105
      %v5929 = vunpack.c.l.b16 %v5106
      %v5930 = vunpack.c.h.b16 %v5106
      %v5931 = vunpack.c.l.b16 %v5107
      %v5932 = vunpack.c.h.b16 %v5107
      %v5933 = vunpack.c.l.b16 %v5108
      %v5934 = vunpack.c.h.b16 %v5108
      %v5935 = vunpack.c.l.b16 %v5109
      %v5936 = vunpack.c.h.b16 %v5109
      %v5937 = vunpack.c.l.b16 %v5110
      %v5938 = vunpack.c.h.b16 %v5110
      %v5939 = vunpack.c.l.b16 %v5111
      %v5940 = vunpack.c.h.b16 %v5111
      %v5941 = vunpack.c.l.b16 %v5112
      %v5942 = vunpack.c.h.b16 %v5112
      %v5943 = vunpack.c.l.b16 %v5113
      %v5944 = vunpack.c.h.b16 %v5113
      %v5945 = vunpack.c.l.b16 %v5114
      %v5946 = vunpack.c.h.b16 %v5114
      %v5947 = vunpack.c.l.b16 %v5115
      %v5948 = vunpack.c.h.b16 %v5115
      %v5949 = vunpack.c.l.b16 %v5116
      %v5950 = vunpack.c.h.b16 %v5116
      %v5951 = vunpack.c.l.b16 %v5117
      %v5952 = vunpack.c.h.b16 %v5117
      %v5953 = vunpack.c.l.b16 %v5118
      %v5954 = vunpack.c.h.b16 %v5118
      %v5955 = vunpack.c.l.b16 %v5119
      %v5956 = vunpack.c.h.b16 %v5119
      %v5957 = vunpack.c.l.b16 %v5120
      %v5958 = vunpack.c.h.b16 %v5120
      %v5959 = vunpack.c.l.b16 %v5121
      %v5960 = vunpack.c.h.b16 %v5121
      %v5961 = vunpack.c.l.b16 %v5122
      %v5962 = vunpack.c.h.b16 %v5122
      %v5963 = vunpack.c.l.b16 %v5123
      %v5964 = vunpack.c.h.b16 %v5123
      %v5965 = vunpack.c.l.b16 %v5124
      %v5966 = vunpack.c.h.b16 %v5124
      %v5967 = vunpack.c.l.b16 %v5125
      %v5968 = vunpack.c.h.b16 %v5125
      %v5969 = vunpack.c.l.b16 %v5126
      %v5970 = vunpack.c.h.b16 %v5126
      %v5971 = vunpack.c.l.b16 %v5127
      %v5972 = vunpack.c.h.b16 %v5127
      %v5973 = vunpack.c.l.b16 %v5128
      %v5974 = vunpack.c.h.b16 %v5128
      %v5975 = vunpack.c.l.b16 %v5129
      %v5976 = vunpack.c.h.b16 %v5129
      %v5977 = vunpack.c.l.b16 %v5130
      %v5978 = vunpack.c.h.b16 %v5130
      %v5979 = vunpack.c.l.b16 %v5131
      %v5980 = vunpack.c.h.b16 %v5131
      %v5981 = vunpack.c.l.b16 %v5132
      %v5982 = vunpack.c.h.b16 %v5132
      %v5983 = vunpack.c.l.b16 %v5133
      %v5984 = vunpack.c.h.b16 %v5133
      %v5985 = vunpack.c.l.b16 %v5134
      %v5986 = vunpack.c.h.b16 %v5134
      %v5987 = vunpack.c.l.b16 %v5135
      %v5988 = vunpack.c.h.b16 %v5135
      %v5989 = vunpack.c.l.b16 %v5136
      %v5990 = vunpack.c.h.b16 %v5136
      %v5991 = vunpack.c.l.b16 %v5137
      %v5992 = vunpack.c.h.b16 %v5137
      %v5993 = vunpack.c.l.b16 %v5138
      %v5994 = vunpack.c.h.b16 %v5138
      %v5995 = vunpack.c.l.b16 %v5139
      %v5996 = vunpack.c.h.b16 %v5139
      %v5997 = vunpack.c.l.b16 %v5140
      %v5998 = vunpack.c.h.b16 %v5140
      %v5999 = vunpack.c.l.b16 %v5141
      %v6000 = vunpack.c.h.b16 %v5141
      %v6001 = vunpack.c.l.b16 %v5142
      %v6002 = vunpack.c.h.b16 %v5142
      %v6003 = vunpack.c.l.b16 %v5143
      %v6004 = vunpack.c.h.b16 %v5143
      %v6005 = vunpack.c.l.b16 %v5144
      %v6006 = vunpack.c.h.b16 %v5144
      %v6007 = vunpack.c.l.b16 %v5145
      %v6008 = vunpack.c.h.b16 %v5145
      %v6009 = vunpack.c.l.b16 %v5146
      %v6010 = vunpack.c.h.b16 %v5146
      %v6011 = vpack.c.b16 %v5437, %v5435
      %v6012 = vpack.c.b16 %v5438, %v5436
      %v6013 = vpack.c.b16 %v5441, %v5439
      %v6014 = vpack.c.b16 %v5442, %v5440
      %v6015 = vpack.c.b16 %v5445, %v5443
      %v6016 = vpack.c.b16 %v5446, %v5444
      %v6017 = vpack.c.b16 %v5449, %v5447
      %v6018 = vpack.c.b16 %v5450, %v5448
      %v6019 = vpack.c.b16 %v5453, %v5451
      %v6020 = vpack.c.b16 %v5454, %v5452
      %v6021 = vpack.c.b16 %v5457, %v5455
      %v6022 = vpack.c.b16 %v5458, %v5456
      %v6023 = vpack.c.b16 %v5461, %v5459
      %v6024 = vpack.c.b16 %v5462, %v5460
      %v6025 = vpack.c.b16 %v5465, %v5463
      %v6026 = vpack.c.b16 %v5466, %v5464
      %v6027 = vpack.c.b16 %v5469, %v5467
      %v6028 = vpack.c.b16 %v5470, %v5468
      %v6029 = vpack.c.b16 %v5473, %v5471
      %v6030 = vpack.c.b16 %v5474, %v5472
      %v6031 = vpack.c.b16 %v5477, %v5475
      %v6032 = vpack.c.b16 %v5478, %v5476
      %v6033 = vpack.c.b16 %v5481, %v5479
      %v6034 = vpack.c.b16 %v5482, %v5480
      %v6035 = vpack.c.b16 %v5485, %v5483
      %v6036 = vpack.c.b16 %v5486, %v5484
      %v6037 = vpack.c.b16 %v5489, %v5487
      %v6038 = vpack.c.b16 %v5490, %v5488
      %v6039 = vpack.c.b16 %v5493, %v5491
      %v6040 = vpack.c.b16 %v5494, %v5492
      %v6041 = vpack.c.b16 %v5497, %v5495
      %v6042 = vpack.c.b16 %v5498, %v5496
      %v6043 = vpack.c.b16 %v5501, %v5499
      %v6044 = vpack.c.b16 %v5502, %v5500
      %v6045 = vpack.c.b16 %v5505, %v5503
      %v6046 = vpack.c.b16 %v5506, %v5504
      %v6047 = vpack.c.b16 %v5509, %v5507
      %v6048 = vpack.c.b16 %v5510, %v5508
      %v6049 = vpack.c.b16 %v5513, %v5511
      %v6050 = vpack.c.b16 %v5514, %v5512
      %v6051 = vpack.c.b16 %v5517, %v5515
      %v6052 = vpack.c.b16 %v5518, %v5516
      %v6053 = vpack.c.b16 %v5521, %v5519
      %v6054 = vpack.c.b16 %v5522, %v5520
      %v6055 = vpack.c.b16 %v5525, %v5523
      %v6056 = vpack.c.b16 %v5526, %v5524
      %v6057 = vpack.c.b16 %v5529, %v5527
      %v6058 = vpack.c.b16 %v5530, %v5528
      %v6059 = vpack.c.b16 %v5533, %v5531
      %v6060 = vpack.c.b16 %v5534, %v5532
      %v6061 = vpack.c.b16 %v5537, %v5535
      %v6062 = vpack.c.b16 %v5538, %v5536
      %v6063 = vpack.c.b16 %v5541, %v5539
      %v6064 = vpack.c.b16 %v5542, %v5540
      %v6065 = vpack.c.b16 %v5545, %v5543
      %v6066 = vpack.c.b16 %v5546, %v5544
      %v6067 = vpack.c.b16 %v5549, %v5547
      %v6068 = vpack.c.b16 %v5550, %v5548
      %v6069 = vpack.c.b16 %v5553, %v5551
      %v6070 = vpack.c.b16 %v5554, %v5552
      %v6071 = vpack.c.b16 %v5557, %v5555
      %v6072 = vpack.c.b16 %v5558, %v5556
      %v6073 = vpack.c.b16 %v5561, %v5559
      %v6074 = vpack.c.b16 %v5562, %v5560
      %v6075 = vpack.c.b16 %v5565, %v5563
      %v6076 = vpack.c.b16 %v5566, %v5564
      %v6077 = vpack.c.b16 %v5569, %v5567
      %v6078 = vpack.c.b16 %v5570, %v5568
      %v6079 = vpack.c.b16 %v5573, %v5571
      %v6080 = vpack.c.b16 %v5574, %v5572
      %v6081 = vpack.c.b16 %v5577, %v5575
      %v6082 = vpack.c.b16 %v5578, %v5576
      %v6083 = vpack.c.b16 %v5581, %v5579
      %v6084 = vpack.c.b16 %v5582, %v5580
      %v6085 = vpack.c.b16 %v5585, %v5583
      %v6086 = vpack.c.b16 %v5586, %v5584
      %v6087 = vpack.c.b16 %v5589, %v5587
      %v6088 = vpack.c.b16 %v5590, %v5588
      %v6089 = vpack.c.b16 %v5593, %v5591
      %v6090 = vpack.c.b16 %v5594, %v5592
      %v6091 = vpack.c.b16 %v5597, %v5595
      %v6092 = vpack.c.b16 %v5598, %v5596
      %v6093 = vpack.c.b16 %v5601, %v5599
      %v6094 = vpack.c.b16 %v5602, %v5600
      %v6095 = vpack.c.b16 %v5605, %v5603
      %v6096 = vpack.c.b16 %v5606, %v5604
      %v6097 = vpack.c.b16 %v5609, %v5607
      %v6098 = vpack.c.b16 %v5610, %v5608
      %v6099 = vpack.c.b16 %v5613, %v5611
      %v6100 = vpack.c.b16 %v5614, %v5612
      %v6101 = vpack.c.b16 %v5617, %v5615
      %v6102 = vpack.c.b16 %v5618, %v5616
      %v6103 = vpack.c.b16 %v5621, %v5619
      %v6104 = vpack.c.b16 %v5622, %v5620
      %v6105 = vpack.c.b16 %v5625, %v5623
      %v6106 = vpack.c.b16 %v5626, %v5624
      %v6107 = vpack.c.b16 %v5629, %v5627
      %v6108 = vpack.c.b16 %v5630, %v5628
      %v6109 = vpack.c.b16 %v5633, %v5631
      %v6110 = vpack.c.b16 %v5634, %v5632
      %v6111 = vpack.c.b16 %v5637, %v5635
      %v6112 = vpack.c.b16 %v5638, %v5636
      %v6113 = vpack.c.b16 %v5641, %v5639
      %v6114 = vpack.c.b16 %v5642, %v5640
      %v6115 = vpack.c.b16 %v5645, %v5643
      %v6116 = vpack.c.b16 %v5646, %v5644
      %v6117 = vpack.c.b16 %v5649, %v5647
      %v6118 = vpack.c.b16 %v5650, %v5648
      %v6119 = vpack.c.b16 %v5653, %v5651
      %v6120 = vpack.c.b16 %v5654, %v5652
      %v6121 = vpack.c.b16 %v5657, %v5655
      %v6122 = vpack.c.b16 %v5658, %v5656
      %v6123 = vpack.c.b16 %v5661, %v5659
      %v6124 = vpack.c.b16 %v5662, %v5660
      %v6125 = vpack.c.b16 %v5665, %v5663
      %v6126 = vpack.c.b16 %v5666, %v5664
      %v6127 = vpack.c.b16 %v5669, %v5667
      %v6128 = vpack.c.b16 %v5670, %v5668
      %v6129 = vpack.c.b16 %v5673, %v5671
      %v6130 = vpack.c.b16 %v5674, %v5672
      %v6131 = vpack.c.b16 %v5677, %v5675
      %v6132 = vpack.c.b16 %v5678, %v5676
      %v6133 = vpack.c.b16 %v5681, %v5679
      %v6134 = vpack.c.b16 %v5682, %v5680
      %v6135 = vpack.c.b16 %v5685, %v5683
      %v6136 = vpack.c.b16 %v5686, %v5684
      %v6137 = vpack.c.b16 %v5689, %v5687
      %v6138 = vpack.c.b16 %v5690, %v5688
      %v6139 = vpack.c.b16 %v5693, %v5691
      %v6140 = vpack.c.b16 %v5694, %v5692
      %v6141 = vpack.c.b16 %v5697, %v5695
      %v6142 = vpack.c.b16 %v5698, %v5696
      %v6143 = vpack.c.b16 %v5701, %v5699
      %v6144 = vpack.c.b16 %v5702, %v5700
      %v6145 = vpack.c.b16 %v5705, %v5703
      %v6146 = vpack.c.b16 %v5706, %v5704
      %v6147 = vpack.c.b16 %v5709, %v5707
      %v6148 = vpack.c.b16 %v5710, %v5708
      %v6149 = vpack.c.b16 %v5713, %v5711
      %v6150 = vpack.c.b16 %v5714, %v5712
      %v6151 = vpack.c.b16 %v5717, %v5715
      %v6152 = vpack.c.b16 %v5718, %v5716
      %v6153 = vpack.c.b16 %v5721, %v5719
      %v6154 = vpack.c.b16 %v5722, %v5720
      %v6155 = vpack.c.b16 %v5725, %v5723
      %v6156 = vpack.c.b16 %v5726, %v5724
      %v6157 = vpack.c.b16 %v5729, %v5727
      %v6158 = vpack.c.b16 %v5730, %v5728
      %v6159 = vpack.c.b16 %v5733, %v5731
      %v6160 = vpack.c.b16 %v5734, %v5732
      %v6161 = vpack.c.b16 %v5737, %v5735
      %v6162 = vpack.c.b16 %v5738, %v5736
      %v6163 = vpack.c.b16 %v5741, %v5739
      %v6164 = vpack.c.b16 %v5742, %v5740
      %v6165 = vpack.c.b16 %v5745, %v5743
      %v6166 = vpack.c.b16 %v5746, %v5744
      %v6167 = vpack.c.b16 %v5749, %v5747
      %v6168 = vpack.c.b16 %v5750, %v5748
      %v6169 = vpack.c.b16 %v5753, %v5751
      %v6170 = vpack.c.b16 %v5754, %v5752
      %v6171 = vpack.c.b16 %v5757, %v5755
      %v6172 = vpack.c.b16 %v5758, %v5756
      %v6173 = vpack.c.b16 %v5761, %v5759
      %v6174 = vpack.c.b16 %v5762, %v5760
      %v6175 = vpack.c.b16 %v5765, %v5763
      %v6176 = vpack.c.b16 %v5766, %v5764
      %v6177 = vpack.c.b16 %v5769, %v5767
      %v6178 = vpack.c.b16 %v5770, %v5768
      %v6179 = vpack.c.b16 %v5773, %v5771
      %v6180 = vpack.c.b16 %v5774, %v5772
      %v6181 = vpack.c.b16 %v5777, %v5775
      %v6182 = vpack.c.b16 %v5778, %v5776
      %v6183 = vpack.c.b16 %v5781, %v5779
      %v6184 = vpack.c.b16 %v5782, %v5780
      %v6185 = vpack.c.b16 %v5785, %v5783
      %v6186 = vpack.c.b16 %v5786, %v5784
      %v6187 = vpack.c.b16 %v5789, %v5787
      %v6188 = vpack.c.b16 %v5790, %v5788
      %v6189 = vpack.c.b16 %v5793, %v5791
      %v6190 = vpack.c.b16 %v5794, %v5792
      %v6191 = vpack.c.b16 %v5797, %v5795
      %v6192 = vpack.c.b16 %v5798, %v5796
      %v6193 = vpack.c.b16 %v5801, %v5799
      %v6194 = vpack.c.b16 %v5802, %v5800
      %v6195 = vpack.c.b16 %v5805, %v5803
      %v6196 = vpack.c.b16 %v5806, %v5804
      %v6197 = vpack.c.b16 %v5809, %v5807
      %v6198 = vpack.c.b16 %v5810, %v5808
      %v6199 = vpack.c.b16 %v5813, %v5811
      %v6200 = vpack.c.b16 %v5814, %v5812
      %v6201 = vpack.c.b16 %v5817, %v5815
      %v6202 = vpack.c.b16 %v5818, %v5816
      %v6203 = vpack.c.b16 %v5821, %v5819
      %v6204 = vpack.c.b16 %v5822, %v5820
      %v6205 = vpack.c.b16 %v5825, %v5823
      %v6206 = vpack.c.b16 %v5826, %v5824
      %v6207 = vpack.c.b16 %v5829, %v5827
      %v6208 = vpack.c.b16 %v5830, %v5828
      %v6209 = vpack.c.b16 %v5833, %v5831
      %v6210 = vpack.c.b16 %v5834, %v5832
      %v6211 = vpack.c.b16 %v5837, %v5835
      %v6212 = vpack.c.b16 %v5838, %v5836
      %v6213 = vpack.c.b16 %v5841, %v5839
      %v6214 = vpack.c.b16 %v5842, %v5840
      %v6215 = vpack.c.b16 %v5845, %v5843
      %v6216 = vpack.c.b16 %v5846, %v5844
      %v6217 = vpack.c.b16 %v5849, %v5847
      %v6218 = vpack.c.b16 %v5850, %v5848
      %v6219 = vpack.c.b16 %v5853, %v5851
      %v6220 = vpack.c.b16 %v5854, %v5852
      %v6221 = vpack.c.b16 %v5857, %v5855
      %v6222 = vpack.c.b16 %v5858, %v5856
      %v6223 = vpack.c.b16 %v5861, %v5859
      %v6224 = vpack.c.b16 %v5862, %v5860
      %v6225 = vpack.c.b16 %v5865, %v5863
      %v6226 = vpack.c.b16 %v5866, %v5864
      %v6227 = vpack.c.b16 %v5869, %v5867
      %v6228 = vpack.c.b16 %v5870, %v5868
      %v6229 = vpack.c.b16 %v5873, %v5871
      %v6230 = vpack.c.b16 %v5874, %v5872
      %v6231 = vpack.c.b16 %v5877, %v5875
      %v6232 = vpack.c.b16 %v5878, %v5876
      %v6233 = vpack.c.b16 %v5881, %v5879
      %v6234 = vpack.c.b16 %v5882, %v5880
      %v6235 = vpack.c.b16 %v5885, %v5883
      %v6236 = vpack.c.b16 %v5886, %v5884
      %v6237 = vpack.c.b16 %v5889, %v5887
      %v6238 = vpack.c.b16 %v5890, %v5888
      %v6239 = vpack.c.b16 %v5893, %v5891
      %v6240 = vpack.c.b16 %v5894, %v5892
      %v6241 = vpack.c.b16 %v5897, %v5895
      %v6242 = vpack.c.b16 %v5898, %v5896
      %v6243 = vpack.c.b16 %v5901, %v5899
      %v6244 = vpack.c.b16 %v5902, %v5900
      %v6245 = vpack.c.b16 %v5905, %v5903
      %v6246 = vpack.c.b16 %v5906, %v5904
      %v6247 = vpack.c.b16 %v5909, %v5907
      %v6248 = vpack.c.b16 %v5910, %v5908
      %v6249 = vpack.c.b16 %v5913, %v5911
      %v6250 = vpack.c.b16 %v5914, %v5912
      %v6251 = vpack.c.b16 %v5917, %v5915
      %v6252 = vpack.c.b16 %v5918, %v5916
      %v6253 = vpack.c.b16 %v5921, %v5919
      %v6254 = vpack.c.b16 %v5922, %v5920
      %v6255 = vpack.c.b16 %v5925, %v5923
      %v6256 = vpack.c.b16 %v5926, %v5924
      %v6257 = vpack.c.b16 %v5929, %v5927
      %v6258 = vpack.c.b16 %v5930, %v5928
      %v6259 = vpack.c.b16 %v5933, %v5931
      %v6260 = vpack.c.b16 %v5934, %v5932
      %v6261 = vpack.c.b16 %v5937, %v5935
      %v6262 = vpack.c.b16 %v5938, %v5936
      %v6263 = vpack.c.b16 %v5941, %v5939
      %v6264 = vpack.c.b16 %v5942, %v5940
      %v6265 = vpack.c.b16 %v5945, %v5943
      %v6266 = vpack.c.b16 %v5946, %v5944
      %v6267 = vpack.c.b16 %v5949, %v5947
      %v6268 = vpack.c.b16 %v5950, %v5948
      %v6269 = vpack.c.b16 %v5953, %v5951
      %v6270 = vpack.c.b16 %v5954, %v5952
      %v6271 = vpack.c.b16 %v5957, %v5955
      %v6272 = vpack.c.b16 %v5958, %v5956
      %v6273 = vpack.c.b16 %v5961, %v5959
      %v6274 = vpack.c.b16 %v5962, %v5960
      %v6275 = vpack.c.b16 %v5965, %v5963
      %v6276 = vpack.c.b16 %v5966, %v5964
      %v6277 = vpack.c.b16 %v5969, %v5967
      %v6278 = vpack.c.b16 %v5970, %v5968
      %v6279 = vpack.c.b16 %v5973, %v5971
      %v6280 = vpack.c.b16 %v5974, %v5972
      %v6281 = vpack.c.b16 %v5977, %v5975
      %v6282 = vpack.c.b16 %v5978, %v5976
      %v6283 = vpack.c.b16 %v5981, %v5979
      %v6284 = vpack.c.b16 %v5982, %v5980
      %v6285 = vpack.c.b16 %v5985, %v5983
      %v6286 = vpack.c.b16 %v5986, %v5984
      %v6287 = vpack.c.b16 %v5989, %v5987
      %v6288 = vpack.c.b16 %v5990, %v5988
      %v6289 = vpack.c.b16 %v5993, %v5991
      %v6290 = vpack.c.b16 %v5994, %v5992
      %v6291 = vpack.c.b16 %v5997, %v5995
      %v6292 = vpack.c.b16 %v5998, %v5996
      %v6293 = vpack.c.b16 %v6001, %v5999
      %v6294 = vpack.c.b16 %v6002, %v6000
      %v6295 = vpack.c.b16 %v6005, %v6003
      %v6296 = vpack.c.b16 %v6006, %v6004
      %v6297 = vpack.c.b16 %v6009, %v6007
      %v6298 = vpack.c.b16 %v6010, %v6008
      %6587 = vmatprep.subr.bf16.mxu0 %v6012
      %6588 = vmatpush1.bf16.msra.mxu0 %v6011
      %6589 = vmatprep.subr.bf16.mxu0 %v6014
      %6590 = vmatpush1.bf16.msra.mxu0 %v6013
      %6591 = vmatprep.subr.bf16.mxu0 %v6016
      %6592 = vmatpush1.bf16.msra.mxu0 %v6015
      %6593 = vmatprep.subr.bf16.mxu0 %v6018
      %6594 = vmatpush1.bf16.msra.mxu0 %v6017
      %6595 = vmatprep.subr.bf16.mxu0 %v6020
      %6596 = vmatpush1.bf16.msra.mxu0 %v6019
      %6597 = vmatprep.subr.bf16.mxu0 %v6022
      %6598 = vmatpush1.bf16.msra.mxu0 %v6021
      %6599 = vmatprep.subr.bf16.mxu0 %v6024
      %6600 = vmatpush1.bf16.msra.mxu0 %v6023
      %6601 = vmatprep.subr.bf16.mxu0 %v6026
      %6602 = vmatpush1.bf16.msra.mxu0 %v6025
      %6603 = vmatprep.subr.bf16.mxu0 %v6028
      %6604 = vmatpush1.bf16.msra.mxu0 %v6027
      %6605 = vmatprep.subr.bf16.mxu0 %v6030
      %6606 = vmatpush1.bf16.msra.mxu0 %v6029
      %6607 = vmatprep.subr.bf16.mxu0 %v6032
      %6608 = vmatpush1.bf16.msra.mxu0 %v6031
      %6609 = vmatprep.subr.bf16.mxu0 %v6034
      %6610 = vmatpush1.bf16.msra.mxu0 %v6033
      %6611 = vmatprep.subr.bf16.mxu0 %v6036
      %6612 = vmatpush1.bf16.msra.mxu0 %v6035
      %6613 = vmatprep.subr.bf16.mxu0 %v6038
      %6614 = vmatpush1.bf16.msra.mxu0 %v6037
      %6615 = vmatprep.subr.bf16.mxu0 %v6040
      %6616 = vmatpush1.bf16.msra.mxu0 %v6039
      %6617 = vmatprep.subr.bf16.mxu0 %v6042
      %6618 = vmatpush1.bf16.msra.mxu0 %v6041
      %6619 = vmatprep.mubr.bf16.mxu0 %v4842
      %6620 = vmatmul.mubr.bf16.gmra.mrb[0].mxu0 %v4841
      %v6621 = vpop.f32.mrb[0].mxu0
      %v6622 = vadd.f32 0.0, %v6621
      %v6623 = vpop.f32.mrb[0].mxu0
      %v6624 = vadd.f32 0.0, %v6623
      %v6625 = vpop.f32.mrb[0].mxu0
      %v6626 = vadd.f32 0.0, %v6625
      %v6627 = vpop.f32.mrb[0].mxu0
      %v6628 = vadd.f32 0.0, %v6627
      %6629 = vdwg.mxu0
      %6630 = vmatprep.subr.bf16.mxu0 %v6044
      %6631 = vmatpush1.bf16.msra.mxu0 %v6043
      %6632 = vmatprep.subr.bf16.mxu0 %v6046
      %6633 = vmatpush1.bf16.msra.mxu0 %v6045
      %6634 = vmatprep.subr.bf16.mxu0 %v6048
      %6635 = vmatpush1.bf16.msra.mxu0 %v6047
      %6636 = vmatprep.subr.bf16.mxu0 %v6050
      %6637 = vmatpush1.bf16.msra.mxu0 %v6049
      %6638 = vmatprep.subr.bf16.mxu0 %v6052
      %6639 = vmatpush1.bf16.msra.mxu0 %v6051
      %6640 = vmatprep.subr.bf16.mxu0 %v6054
      %6641 = vmatpush1.bf16.msra.mxu0 %v6053
      %6642 = vmatprep.subr.bf16.mxu0 %v6056
      %6643 = vmatpush1.bf16.msra.mxu0 %v6055
      %6644 = vmatprep.subr.bf16.mxu0 %v6058
      %6645 = vmatpush1.bf16.msra.mxu0 %v6057
      %6646 = vmatprep.subr.bf16.mxu0 %v6060
      %6647 = vmatpush1.bf16.msra.mxu0 %v6059
      %6648 = vmatprep.subr.bf16.mxu0 %v6062
      %6649 = vmatpush1.bf16.msra.mxu0 %v6061
      %6650 = vmatprep.subr.bf16.mxu0 %v6064
      %6651 = vmatpush1.bf16.msra.mxu0 %v6063
      %6652 = vmatprep.subr.bf16.mxu0 %v6066
      %6653 = vmatpush1.bf16.msra.mxu0 %v6065
      %6654 = vmatprep.subr.bf16.mxu0 %v6068
      %6655 = vmatpush1.bf16.msra.mxu0 %v6067
      %6656 = vmatprep.subr.bf16.mxu0 %v6070
      %6657 = vmatpush1.bf16.msra.mxu0 %v6069
      %6658 = vmatprep.subr.bf16.mxu0 %v6072
      %6659 = vmatpush1.bf16.msra.mxu0 %v6071
      %6660 = vmatprep.subr.bf16.mxu0 %v6074
      %6661 = vmatpush1.bf16.msra.mxu0 %v6073
      %6662 = vmatprep.mubr.bf16.mxu0 %v4844
      %6663 = vmatmul.mubr.bf16.gmra.mrb[0].mxu0 %v4843
      %v6664 = vpop.f32.mrb[0].mxu0
      %v6665 = vadd.f32 %v6622, %v6664
      %v6666 = vpop.f32.mrb[0].mxu0
      %v6667 = vadd.f32 %v6624, %v6666
      %v6668 = vpop.f32.mrb[0].mxu0
      %v6669 = vadd.f32 %v6626, %v6668
      %v6670 = vpop.f32.mrb[0].mxu0
      %v6671 = vadd.f32 %v6628, %v6670
      %6672 = vdwg.mxu0
      %6673 = vmatprep.subr.bf16.mxu0 %v6076
      %6674 = vmatpush1.bf16.msra.mxu0 %v6075
      %6675 = vmatprep.subr.bf16.mxu0 %v6078
      %6676 = vmatpush1.bf16.msra.mxu0 %v6077
      %6677 = vmatprep.subr.bf16.mxu0 %v6080
      %6678 = vmatpush1.bf16.msra.mxu0 %v6079
      %6679 = vmatprep.subr.bf16.mxu0 %v6082
      %6680 = vmatpush1.bf16.msra.mxu0 %v6081
      %6681 = vmatprep.subr.bf16.mxu0 %v6084
      %6682 = vmatpush1.bf16.msra.mxu0 %v6083
      %6683 = vmatprep.subr.bf16.mxu0 %v6086
      %6684 = vmatpush1.bf16.msra.mxu0 %v6085
      %6685 = vmatprep.subr.bf16.mxu0 %v6088
      %6686 = vmatpush1.bf16.msra.mxu0 %v6087
      %6687 = vmatprep.subr.bf16.mxu0 %v6090
      %6688 = vmatpush1.bf16.msra.mxu0 %v6089
      %6689 = vmatprep.subr.bf16.mxu0 %v6092
      %6690 = vmatpush1.bf16.msra.mxu0 %v6091
      %6691 = vmatprep.subr.bf16.mxu0 %v6094
      %6692 = vmatpush1.bf16.msra.mxu0 %v6093
      %6693 = vmatprep.subr.bf16.mxu0 %v6096
      %6694 = vmatpush1.bf16.msra.mxu0 %v6095
      %6695 = vmatprep.subr.bf16.mxu0 %v6098
      %6696 = vmatpush1.bf16.msra.mxu0 %v6097
      %6697 = vmatprep.subr.bf16.mxu0 %v6100
      %6698 = vmatpush1.bf16.msra.mxu0 %v6099
      %6699 = vmatprep.subr.bf16.mxu0 %v6102
      %6700 = vmatpush1.bf16.msra.mxu0 %v6101
      %6701 = vmatprep.subr.bf16.mxu0 %v6104
      %6702 = vmatpush1.bf16.msra.mxu0 %v6103
      %6703 = vmatprep.subr.bf16.mxu0 %v6106
      %6704 = vmatpush1.bf16.msra.mxu0 %v6105
      %6705 = vmatprep.mubr.bf16.mxu0 %v4846
      %6706 = vmatmul.mubr.bf16.gmra.mrb[0].mxu0 %v4845
      %v6707 = vpop.f32.mrb[0].mxu0
      %v6708 = vadd.f32 %v6665, %v6707
      %v6709 = vpop.f32.mrb[0].mxu0
      %v6710 = vadd.f32 %v6667, %v6709
      %v6711 = vpop.f32.mrb[0].mxu0
      %v6712 = vadd.f32 %v6669, %v6711
      %v6713 = vpop.f32.mrb[0].mxu0
      %v6714 = vadd.f32 %v6671, %v6713
      %6715 = vdwg.mxu0
      %6716 = vmatprep.subr.bf16.mxu0 %v6108
      %6717 = vmatpush1.bf16.msra.mxu0 %v6107
      %6718 = vmatprep.subr.bf16.mxu0 %v6110
      %6719 = vmatpush1.bf16.msra.mxu0 %v6109
      %6720 = vmatprep.subr.bf16.mxu0 %v6112
      %6721 = vmatpush1.bf16.msra.mxu0 %v6111
      %6722 = vmatprep.subr.bf16.mxu0 %v6114
      %6723 = vmatpush1.bf16.msra.mxu0 %v6113
      %6724 = vmatprep.subr.bf16.mxu0 %v6116
      %6725 = vmatpush1.bf16.msra.mxu0 %v6115
      %6726 = vmatprep.subr.bf16.mxu0 %v6118
      %6727 = vmatpush1.bf16.msra.mxu0 %v6117
      %6728 = vmatprep.subr.bf16.mxu0 %v6120
      %6729 = vmatpush1.bf16.msra.mxu0 %v6119
      %6730 = vmatprep.subr.bf16.mxu0 %v6122
      %6731 = vmatpush1.bf16.msra.mxu0 %v6121
      %6732 = vmatprep.subr.bf16.mxu0 %v6124
      %6733 = vmatpush1.bf16.msra.mxu0 %v6123
      %6734 = vmatprep.subr.bf16.mxu0 %v6126
      %6735 = vmatpush1.bf16.msra.mxu0 %v6125
      %6736 = vmatprep.subr.bf16.mxu0 %v6128
      %6737 = vmatpush1.bf16.msra.mxu0 %v6127
      %6738 = vmatprep.subr.bf16.mxu0 %v6130
      %6739 = vmatpush1.bf16.msra.mxu0 %v6129
      %6740 = vmatprep.subr.bf16.mxu0 %v6132
      %6741 = vmatpush1.bf16.msra.mxu0 %v6131
      %6742 = vmatprep.subr.bf16.mxu0 %v6134
      %6743 = vmatpush1.bf16.msra.mxu0 %v6133
      %6744 = vmatprep.subr.bf16.mxu0 %v6136
      %6745 = vmatpush1.bf16.msra.mxu0 %v6135
      %6746 = vmatprep.subr.bf16.mxu0 %v6138
      %6747 = vmatpush1.bf16.msra.mxu0 %v6137
      %6748 = vmatprep.mubr.bf16.mxu0 %v4848
      %6749 = vmatmul.mubr.bf16.gmra.mrb[0].mxu0 %v4847
      %v6750 = vpop.f32.mrb[0].mxu0
      %v6751 = vadd.f32 %v6708, %v6750
      %v6752 = vpop.f32.mrb[0].mxu0
      %v6753 = vadd.f32 %v6710, %v6752
      %v6754 = vpop.f32.mrb[0].mxu0
      %v6755 = vadd.f32 %v6712, %v6754
      %v6756 = vpop.f32.mrb[0].mxu0
      %v6757 = vadd.f32 %v6714, %v6756
      %6758 = vdwg.mxu0
      %6759 = vmatprep.subr.bf16.mxu0 %v6140
      %6760 = vmatpush1.bf16.msra.mxu0 %v6139
      %6761 = vmatprep.subr.bf16.mxu0 %v6142
      %6762 = vmatpush1.bf16.msra.mxu0 %v6141
      %6763 = vmatprep.subr.bf16.mxu0 %v6144
      %6764 = vmatpush1.bf16.msra.mxu0 %v6143
      %6765 = vmatprep.subr.bf16.mxu0 %v6146
      %6766 = vmatpush1.bf16.msra.mxu0 %v6145
      %6767 = vmatprep.subr.bf16.mxu0 %v6148
      %6768 = vmatpush1.bf16.msra.mxu0 %v6147
      %6769 = vmatprep.subr.bf16.mxu0 %v6150
      %6770 = vmatpush1.bf16.msra.mxu0 %v6149
      %6771 = vmatprep.subr.bf16.mxu0 %v6152
      %6772 = vmatpush1.bf16.msra.mxu0 %v6151
      %6773 = vmatprep.subr.bf16.mxu0 %v6154
      %6774 = vmatpush1.bf16.msra.mxu0 %v6153
      %6775 = vmatprep.subr.bf16.mxu0 %v6156
      %6776 = vmatpush1.bf16.msra.mxu0 %v6155
      %6777 = vmatprep.subr.bf16.mxu0 %v6158
      %6778 = vmatpush1.bf16.msra.mxu0 %v6157
      %6779 = vmatprep.subr.bf16.mxu0 %v6160
      %6780 = vmatpush1.bf16.msra.mxu0 %v6159
      %6781 = vmatprep.subr.bf16.mxu0 %v6162
      %6782 = vmatpush1.bf16.msra.mxu0 %v6161
      %6783 = vmatprep.subr.bf16.mxu0 %v6164
      %6784 = vmatpush1.bf16.msra.mxu0 %v6163
      %6785 = vmatprep.subr.bf16.mxu0 %v6166
      %6786 = vmatpush1.bf16.msra.mxu0 %v6165
      %6787 = vmatprep.subr.bf16.mxu0 %v6168
      %6788 = vmatpush1.bf16.msra.mxu0 %v6167
      %6789 = vmatprep.subr.bf16.mxu0 %v6170
      %6790 = vmatpush1.bf16.msra.mxu0 %v6169
      %6791 = vmatprep.mubr.bf16.mxu0 %v4850
      %6792 = vmatmul.mubr.bf16.gmra.mrb[0].mxu0 %v4849
      %v6793 = vpop.f32.mrb[0].mxu0
      %v6794 = vadd.f32 %v6751, %v6793
      %v6795 = vpop.f32.mrb[0].mxu0
      %v6796 = vadd.f32 %v6753, %v6795
      %v6797 = vpop.f32.mrb[0].mxu0
      %v6798 = vadd.f32 %v6755, %v6797
      %v6799 = vpop.f32.mrb[0].mxu0
      %v6800 = vadd.f32 %v6757, %v6799
      %6801 = vdwg.mxu0
      %6802 = vmatprep.subr.bf16.mxu0 %v6172
      %6803 = vmatpush1.bf16.msra.mxu0 %v6171
      %6804 = vmatprep.subr.bf16.mxu0 %v6174
      %6805 = vmatpush1.bf16.msra.mxu0 %v6173
      %6806 = vmatprep.subr.bf16.mxu0 %v6176
      %6807 = vmatpush1.bf16.msra.mxu0 %v6175
      %6808 = vmatprep.subr.bf16.mxu0 %v6178
      %6809 = vmatpush1.bf16.msra.mxu0 %v6177
      %6810 = vmatprep.subr.bf16.mxu0 %v6180
      %6811 = vmatpush1.bf16.msra.mxu0 %v6179
      %6812 = vmatprep.subr.bf16.mxu0 %v6182
      %6813 = vmatpush1.bf16.msra.mxu0 %v6181
      %6814 = vmatprep.subr.bf16.mxu0 %v6184
      %6815 = vmatpush1.bf16.msra.mxu0 %v6183
      %6816 = vmatprep.subr.bf16.mxu0 %v6186
      %6817 = vmatpush1.bf16.msra.mxu0 %v6185
      %6818 = vmatprep.subr.bf16.mxu0 %v6188
      %6819 = vmatpush1.bf16.msra.mxu0 %v6187
      %6820 = vmatprep.subr.bf16.mxu0 %v6190
      %6821 = vmatpush1.bf16.msra.mxu0 %v6189
      %6822 = vmatprep.subr.bf16.mxu0 %v6192
      %6823 = vmatpush1.bf16.msra.mxu0 %v6191
      %6824 = vmatprep.subr.bf16.mxu0 %v6194
      %6825 = vmatpush1.bf16.msra.mxu0 %v6193
      %6826 = vmatprep.subr.bf16.mxu0 %v6196
      %6827 = vmatpush1.bf16.msra.mxu0 %v6195
      %6828 = vmatprep.subr.bf16.mxu0 %v6198
      %6829 = vmatpush1.bf16.msra.mxu0 %v6197
      %6830 = vmatprep.subr.bf16.mxu0 %v6200
      %6831 = vmatpush1.bf16.msra.mxu0 %v6199
      %6832 = vmatprep.subr.bf16.mxu0 %v6202
      %6833 = vmatpush1.bf16.msra.mxu0 %v6201
      %6834 = vmatprep.mubr.bf16.mxu0 %v4852
      %6835 = vmatmul.mubr.bf16.gmra.mrb[0].mxu0 %v4851
      %v6836 = vpop.f32.mrb[0].mxu0
      %v6837 = vadd.f32 %v6794, %v6836
      %v6838 = vpop.f32.mrb[0].mxu0
      %v6839 = vadd.f32 %v6796, %v6838
      %v6840 = vpop.f32.mrb[0].mxu0
      %v6841 = vadd.f32 %v6798, %v6840
      %v6842 = vpop.f32.mrb[0].mxu0
      %v6843 = vadd.f32 %v6800, %v6842
      %6844 = vdwg.mxu0
      %6845 = vmatprep.subr.bf16.mxu0 %v6204
      %6846 = vmatpush1.bf16.msra.mxu0 %v6203
      %6847 = vmatprep.subr.bf16.mxu0 %v6206
      %6848 = vmatpush1.bf16.msra.mxu0 %v6205
      %6849 = vmatprep.subr.bf16.mxu0 %v6208
      %6850 = vmatpush1.bf16.msra.mxu0 %v6207
      %6851 = vmatprep.subr.bf16.mxu0 %v6210
      %6852 = vmatpush1.bf16.msra.mxu0 %v6209
      %6853 = vmatprep.subr.bf16.mxu0 %v6212
      %6854 = vmatpush1.bf16.msra.mxu0 %v6211
      %6855 = vmatprep.subr.bf16.mxu0 %v6214
      %6856 = vmatpush1.bf16.msra.mxu0 %v6213
      %6857 = vmatprep.subr.bf16.mxu0 %v6216
      %6858 = vmatpush1.bf16.msra.mxu0 %v6215
      %6859 = vmatprep.subr.bf16.mxu0 %v6218
      %6860 = vmatpush1.bf16.msra.mxu0 %v6217
      %6861 = vmatprep.subr.bf16.mxu0 %v6220
      %6862 = vmatpush1.bf16.msra.mxu0 %v6219
      %6863 = vmatprep.subr.bf16.mxu0 %v6222
      %6864 = vmatpush1.bf16.msra.mxu0 %v6221
      %6865 = vmatprep.subr.bf16.mxu0 %v6224
      %6866 = vmatpush1.bf16.msra.mxu0 %v6223
      %6867 = vmatprep.subr.bf16.mxu0 %v6226
      %6868 = vmatpush1.bf16.msra.mxu0 %v6225
      %6869 = vmatprep.subr.bf16.mxu0 %v6228
      %6870 = vmatpush1.bf16.msra.mxu0 %v6227
      %6871 = vmatprep.subr.bf16.mxu0 %v6230
      %6872 = vmatpush1.bf16.msra.mxu0 %v6229
      %6873 = vmatprep.subr.bf16.mxu0 %v6232
      %6874 = vmatpush1.bf16.msra.mxu0 %v6231
      %6875 = vmatprep.subr.bf16.mxu0 %v6234
      %6876 = vmatpush1.bf16.msra.mxu0 %v6233
      %6877 = vmatprep.mubr.bf16.mxu0 %v4854
      %6878 = vmatmul.mubr.bf16.gmra.mrb[0].mxu0 %v4853
      %v6879 = vpop.f32.mrb[0].mxu0
      %v6880 = vadd.f32 %v6837, %v6879
      %v6881 = vpop.f32.mrb[0].mxu0
      %v6882 = vadd.f32 %v6839, %v6881
      %v6883 = vpop.f32.mrb[0].mxu0
      %v6884 = vadd.f32 %v6841, %v6883
      %v6885 = vpop.f32.mrb[0].mxu0
      %v6886 = vadd.f32 %v6843, %v6885
      %6887 = vdwg.mxu0
      %6888 = vmatprep.subr.bf16.mxu0 %v6236
      %6889 = vmatpush1.bf16.msra.mxu0 %v6235
      %6890 = vmatprep.subr.bf16.mxu0 %v6238
      %6891 = vmatpush1.bf16.msra.mxu0 %v6237
      %6892 = vmatprep.subr.bf16.mxu0 %v6240
      %6893 = vmatpush1.bf16.msra.mxu0 %v6239
      %6894 = vmatprep.subr.bf16.mxu0 %v6242
      %6895 = vmatpush1.bf16.msra.mxu0 %v6241
      %6896 = vmatprep.subr.bf16.mxu0 %v6244
      %6897 = vmatpush1.bf16.msra.mxu0 %v6243
      %6898 = vmatprep.subr.bf16.mxu0 %v6246
      %6899 = vmatpush1.bf16.msra.mxu0 %v6245
      %6900 = vmatprep.subr.bf16.mxu0 %v6248
      %6901 = vmatpush1.bf16.msra.mxu0 %v6247
      %6902 = vmatprep.subr.bf16.mxu0 %v6250
      %6903 = vmatpush1.bf16.msra.mxu0 %v6249
      %6904 = vmatprep.subr.bf16.mxu0 %v6252
      %6905 = vmatpush1.bf16.msra.mxu0 %v6251
      %6906 = vmatprep.subr.bf16.mxu0 %v6254
      %6907 = vmatpush1.bf16.msra.mxu0 %v6253
      %6908 = vmatprep.subr.bf16.mxu0 %v6256
      %6909 = vmatpush1.bf16.msra.mxu0 %v6255
      %6910 = vmatprep.subr.bf16.mxu0 %v6258
      %6911 = vmatpush1.bf16.msra.mxu0 %v6257
      %6912 = vmatprep.subr.bf16.mxu0 %v6260
      %6913 = vmatpush1.bf16.msra.mxu0 %v6259
      %6914 = vmatprep.subr.bf16.mxu0 %v6262
      %6915 = vmatpush1.bf16.msra.mxu0 %v6261
      %6916 = vmatprep.subr.bf16.mxu0 %v6264
      %6917 = vmatpush1.bf16.msra.mxu0 %v6263
      %6918 = vmatprep.subr.bf16.mxu0 %v6266
      %6919 = vmatpush1.bf16.msra.mxu0 %v6265
      %6920 = vmatprep.mubr.bf16.mxu0 %v4856
      %6921 = vmatmul.mubr.bf16.gmra.mrb[0].mxu0 %v4855
      %v6922 = vpop.f32.mrb[0].mxu0
      %v6923 = vadd.f32 %v6880, %v6922
      %v6924 = vpop.f32.mrb[0].mxu0
      %v6925 = vadd.f32 %v6882, %v6924
      %v6926 = vpop.f32.mrb[0].mxu0
      %v6927 = vadd.f32 %v6884, %v6926
      %v6928 = vpop.f32.mrb[0].mxu0
      %v6929 = vadd.f32 %v6886, %v6928
      %6930 = vdwg.mxu0
      %6931 = vmatprep.subr.bf16.mxu0 %v6268
      %6932 = vmatpush1.bf16.msra.mxu0 %v6267
      %6933 = vmatprep.subr.bf16.mxu0 %v6270
      %6934 = vmatpush1.bf16.msra.mxu0 %v6269
      %6935 = vmatprep.subr.bf16.mxu0 %v6272
      %6936 = vmatpush1.bf16.msra.mxu0 %v6271
      %6937 = vmatprep.subr.bf16.mxu0 %v6274
      %6938 = vmatpush1.bf16.msra.mxu0 %v6273
      %6939 = vmatprep.subr.bf16.mxu0 %v6276
      %6940 = vmatpush1.bf16.msra.mxu0 %v6275
      %6941 = vmatprep.subr.bf16.mxu0 %v6278
      %6942 = vmatpush1.bf16.msra.mxu0 %v6277
      %6943 = vmatprep.subr.bf16.mxu0 %v6280
      %6944 = vmatpush1.bf16.msra.mxu0 %v6279
      %6945 = vmatprep.subr.bf16.mxu0 %v6282
      %6946 = vmatpush1.bf16.msra.mxu0 %v6281
      %6947 = vmatprep.subr.bf16.mxu0 %v6284
      %6948 = vmatpush1.bf16.msra.mxu0 %v6283
      %6949 = vmatprep.subr.bf16.mxu0 %v6286
      %6950 = vmatpush1.bf16.msra.mxu0 %v6285
      %6951 = vmatprep.subr.bf16.mxu0 %v6288
      %6952 = vmatpush1.bf16.msra.mxu0 %v6287
      %6953 = vmatprep.subr.bf16.mxu0 %v6290
      %6954 = vmatpush1.bf16.msra.mxu0 %v6289
      %6955 = vmatprep.subr.bf16.mxu0 %v6292
      %6956 = vmatpush1.bf16.msra.mxu0 %v6291
      %6957 = vmatprep.subr.bf16.mxu0 %v6294
      %6958 = vmatpush1.bf16.msra.mxu0 %v6293
      %6959 = vmatprep.subr.bf16.mxu0 %v6296
      %6960 = vmatpush1.bf16.msra.mxu0 %v6295
      %6961 = vmatprep.subr.bf16.mxu0 %v6298
      %6962 = vmatpush1.bf16.msra.mxu0 %v6297
      %6963 = vmatprep.mubr.bf16.mxu0 %v4858
      %6964 = vmatmul.mubr.bf16.gmra.mrb[0].mxu0 %v4857
      %v6965 = vpop.f32.mrb[0].mxu0
      %v6966 = vadd.f32 %v6923, %v6965
      %v6967 = vpop.f32.mrb[0].mxu0
      %v6968 = vadd.f32 %v6925, %v6967
      %v6969 = vpop.f32.mrb[0].mxu0
      %v6970 = vadd.f32 %v6927, %v6969
      %v6971 = vpop.f32.mrb[0].mxu0
      %v6972 = vadd.f32 %v6929, %v6971
      %6973 = vdwg.mxu0
      %v6974 = vld [vmem:[%s31] sm:$0x3]
      %v6976 = vlaneseq
      %v6977 = vshrl.u32 %v6976, 7
      %v6978 = vsub.s32 0, %v6977
      %v6979 = vrot.slane %v6974, %v6978
      %v6980 = vlaneseq
      %v6981 = vshrl.u32 %v6980, 7
      %v6982 = vsub.s32 1, %v6981
      %v6983 = vrot.slane %v6974, %v6982
      %v6986 = vmul.f32 %v6966, %v6979
      %v6987 = vmul.f32 %v6968, %v6983
      %v6988 = vmul.f32 %v6970, %v6979
      %v6989 = vmul.f32 %v6972, %v6983
      %v6990 = vld [vmem:[%s33] sm:$0x3]
      %v6992 = vlaneseq
      %v6993 = vshrl.u32 %v6992, 7
      %v6994 = vsub.s32 0, %v6993
      %v6995 = vrot.slane %v6990, %v6994
      %v6996 = vlaneseq
      %v6997 = vshrl.u32 %v6996, 7
      %v6998 = vsub.s32 1, %v6997
      %v6999 = vrot.slane %v6990, %v6998
      %v7002 = vadd.f32 %v6986, %v6995
      %v7003 = vadd.f32 %v6987, %v6999
      %v7004 = vadd.f32 %v6988, %v6995
      %v7005 = vadd.f32 %v6989, %v6999
      %v7006 = vmax.f32 %v7002, 0.0
      %v7007 = vmax.f32 %v7003, 0.0
      %v7008 = vmax.f32 %v7004, 0.0
      %v7009 = vmax.f32 %v7005, 0.0
      %v7010 = vld [vmem:[%s35] sm:$0xf]
      %v7011 = vld [vmem:[%s35 + $0x4] sm:$0xf]
      %v7012 = vpack.c.bf16 %v7008, %v7006
      %v7013 = vpack.c.bf16 %v7009, %v7007
      %v7016 = vunpack.c.l.b16 %v7010
      %v7017 = vunpack.c.l.b16 %v7011
      %v7018 = vpack.c.b16 %v7017, %v7016
      %v7020 = vsel %vm3459, %v7018, 0
      %7022 = vmatprep.subr.bf16.mxu0 %v7013
      %7023 = vmatpush1.bf16.msra.mxu0 %v7012
      %7024 = vmatprep.subr.bf16.mxu0 0
      %7025 = vmatpush1.bf16.msra.mxu0 0
      %7026 = vmatprep.subr.bf16.mxu0 0
      %7027 = vmatpush1.bf16.msra.mxu0 0
      %7028 = vmatprep.subr.bf16.mxu0 0
      %7029 = vmatpush1.bf16.msra.mxu0 0
      %7030 = vmatprep.subr.bf16.mxu0 0
      %7031 = vmatpush1.bf16.msra.mxu0 0
      %7032 = vmatprep.subr.bf16.mxu0 0
      %7033 = vmatpush1.bf16.msra.mxu0 0
      %7034 = vmatprep.subr.bf16.mxu0 0
      %7035 = vmatpush1.bf16.msra.mxu0 0
      %7036 = vmatprep.subr.bf16.mxu0 0
      %7037 = vmatpush1.bf16.msra.mxu0 0
      %7038 = vmatprep.subr.bf16.mxu0 0
      %7039 = vmatpush1.bf16.msra.mxu0 0
      %7040 = vmatprep.subr.bf16.mxu0 0
      %7041 = vmatpush1.bf16.msra.mxu0 0
      %7042 = vmatprep.subr.bf16.mxu0 0
      %7043 = vmatpush1.bf16.msra.mxu0 0
      %7044 = vmatprep.subr.bf16.mxu0 0
      %7045 = vmatpush1.bf16.msra.mxu0 0
      %7046 = vmatprep.subr.bf16.mxu0 0
      %7047 = vmatpush1.bf16.msra.mxu0 0
      %7048 = vmatprep.subr.bf16.mxu0 0
      %7049 = vmatpush1.bf16.msra.mxu0 0
      %7050 = vmatprep.subr.bf16.mxu0 0
      %7051 = vmatpush1.bf16.msra.mxu0 0
      %7052 = vmatprep.subr.bf16.mxu0 0
      %7053 = vmatpush1.bf16.msra.mxu0 0
      %7054 = vmatprep.mubr.bf16.mxu0 0
      %7055 = vmatmul.mubr.bf16.gmra.mrb[0].mxu0 %v7020
      %v7056 = vpop.f32.mrb[0].mxu0
      %v7057 = vadd.f32 0.0, %v7056
      %v7058 = vpop.f32.mrb[0].mxu0
      %v7059 = vadd.f32 0.0, %v7058
      %v7060 = vpop.f32.mrb[0].mxu0
      %v7061 = vadd.f32 0.0, %v7060
      %v7062 = vpop.f32.mrb[0].mxu0
      %v7063 = vadd.f32 0.0, %v7062
      %7064 = vdwg.mxu0
      %v7067 = vrot.slane %v7057, 4
      %v7068 = vrot.slane %v7059, 4
      %v7071 = vmax.f32 %v7057, %v7067
      %v7072 = vmax.f32 %v7059, %v7068
      %v7075 = vrot.slane %v7061, 4
      %v7076 = vrot.slane %v7063, 4
      %v7079 = vmax.f32 %v7061, %v7075
      %v7080 = vmax.f32 %v7063, %v7076
      %v7081 = vmax.f32 %v7071, %v7079
      %v7082 = vmax.f32 %v7072, %v7080
      %v7083 = vpack.c.bf16 %v7081, %v7081
      %v7084 = vpack.c.bf16 %v7082, %v7082
      %v7085 = vld [vmem:[%s37] sm:$0xf]
      %v7086 = vld [vmem:[%s37 + $0x4] sm:$0xf]
      %v7089 = vunpack.c.l.b16 %v7085
      %v7090 = vunpack.c.l.b16 %v7086
      %v7091 = vpack.c.b16 %v7090, %v7089
      %vm7092 = vcmask 31744
      %v7094 = vsel %vm7092, %v7091, 0
      %vm7096 = vcmask 1041408
      %v7098 = vsel %vm7096, %v7083, 0
      %v7101 = vsel %vm7096, %v7084, 0
      %7103 = vmatprep.subr.bf16.mxu0 %v7101
      %7104 = vmatpush1.bf16.msra.mxu0 %v7098
      %7105 = vmatprep.subr.bf16.mxu0 0
      %7106 = vmatpush1.bf16.msra.mxu0 0
      %7107 = vmatprep.subr.bf16.mxu0 0
      %7108 = vmatpush1.bf16.msra.mxu0 0
      %7109 = vmatprep.subr.bf16.mxu0 0
      %7110 = vmatpush1.bf16.msra.mxu0 0
      %7111 = vmatprep.subr.bf16.mxu0 0
      %7112 = vmatpush1.bf16.msra.mxu0 0
      %7113 = vmatprep.subr.bf16.mxu0 0
      %7114 = vmatpush1.bf16.msra.mxu0 0
      %7115 = vmatprep.subr.bf16.mxu0 0
      %7116 = vmatpush1.bf16.msra.mxu0 0
      %7117 = vmatprep.subr.bf16.mxu0 0
      %7118 = vmatpush1.bf16.msra.mxu0 0
      %7119 = vmatprep.subr.bf16.mxu0 0
      %7120 = vmatpush1.bf16.msra.mxu0 0
      %7121 = vmatprep.subr.bf16.mxu0 0
      %7122 = vmatpush1.bf16.msra.mxu0 0
      %7123 = vmatprep.subr.bf16.mxu0 0
      %7124 = vmatpush1.bf16.msra.mxu0 0
      %7125 = vmatprep.subr.bf16.mxu0 0
      %7126 = vmatpush1.bf16.msra.mxu0 0
      %7127 = vmatprep.subr.bf16.mxu0 0
      %7128 = vmatpush1.bf16.msra.mxu0 0
      %7129 = vmatprep.subr.bf16.mxu0 0
      %7130 = vmatpush1.bf16.msra.mxu0 0
      %7131 = vmatprep.subr.bf16.mxu0 0
      %7132 = vmatpush1.bf16.msra.mxu0 0
      %7133 = vmatprep.subr.bf16.mxu0 0
      %7134 = vmatpush1.bf16.msra.mxu0 0
      %7135 = vmatprep.mubr.bf16.mxu0 0
      %7136 = vmatmul.mubr.bf16.gmra.mrb[0].mxu0 %v7094
      %v7137 = vpop.f32.mrb[0].mxu0
      %v7138 = vadd.f32 0.0, %v7137
      %v7139 = vpop.f32.mrb[0].mxu0
      %v7140 = vadd.f32 0.0, %v7139
      %v7141 = vpop.f32.mrb[0].mxu0
      %v7142 = vadd.f32 0.0, %v7141
      %v7143 = vpop.f32.mrb[0].mxu0
      %v7144 = vadd.f32 0.0, %v7143
      %7145 = vdwg.mxu0
      %v7146 = vpack.c.bf16 %v7142, %v7138
      %v7147 = vpack.c.bf16 %v7144, %v7140
      %v7150 = vrot.slane %v7146, 2
      %v7151 = vrot.slane %v7147, 2
      %v7154 = vrot.slane %v7146, 4
      %v7155 = vrot.slane %v7147, 4
      %v7158 = vrot.slane %v7146, 6
      %v7159 = vrot.slane %v7147, 6
      %v7162 = vld [vmem:[%s39] sm:$0xff]
      %v7163 = vld [vmem:[%s39 + $0x8] sm:$0xff]
      %v7164 = vld [vmem:[%s39 + $0x10] sm:$0xff]
      %v7165 = vld [vmem:[%s39 + $0x18] sm:$0xff]
      %v7166 = vld [vmem:[%s39 + $0x20] sm:$0xff]
      %v7167 = vld [vmem:[%s39 + $0x28] sm:$0xff]
      %v7168 = vld [vmem:[%s39 + $0x30] sm:$0xff]
      %v7169 = vld [vmem:[%s39 + $0x38] sm:$0xff]
      %v7170 = vld [vmem:[%s39 + $0x40] sm:$0xff]
      %v7171 = vld [vmem:[%s39 + $0x48] sm:$0xff]
      %v7172 = vld [vmem:[%s39 + $0x50] sm:$0xff]
      %v7173 = vld [vmem:[%s39 + $0x58] sm:$0xff]
      %v7174 = vld [vmem:[%s39 + $0x60] sm:$0xff]
      %v7175 = vld [vmem:[%s39 + $0x68] sm:$0xff]
      %v7176 = vld [vmem:[%s39 + $0x70] sm:$0xff]
      %v7177 = vld [vmem:[%s39 + $0x78] sm:$0xff]
      %v7178 = vld [vmem:[%s39 + $0x80] sm:$0xff]
      %v7179 = vld [vmem:[%s39 + $0x88] sm:$0xff]
      %v7180 = vld [vmem:[%s39 + $0x90] sm:$0xff]
      %v7181 = vld [vmem:[%s39 + $0x98] sm:$0xff]
      %v7182 = vld [vmem:[%s39 + $0xa0] sm:$0xff]
      %v7183 = vld [vmem:[%s39 + $0xa8] sm:$0xff]
      %v7184 = vld [vmem:[%s39 + $0xb0] sm:$0xff]
      %v7185 = vld [vmem:[%s39 + $0xb8] sm:$0xff]
      %v7186 = vld [vmem:[%s39 + $0xc0] sm:$0xff]
      %v7187 = vld [vmem:[%s39 + $0xc8] sm:$0xff]
      %v7188 = vld [vmem:[%s39 + $0xd0] sm:$0xff]
      %v7189 = vld [vmem:[%s39 + $0xd8] sm:$0xff]
      %v7190 = vld [vmem:[%s39 + $0xe0] sm:$0xff]
      %v7191 = vld [vmem:[%s39 + $0xe8] sm:$0xff]
      %v7192 = vld [vmem:[%s39 + $0xf0] sm:$0xff]
      %v7193 = vld [vmem:[%s39 + $0xf8] sm:$0xff]
      %v7194 = vld [vmem:[%s39 + $0x100] sm:$0xff]
      %v7195 = vld [vmem:[%s39 + $0x108] sm:$0xff]
      %v7196 = vld [vmem:[%s39 + $0x110] sm:$0xff]
      %v7197 = vld [vmem:[%s39 + $0x118] sm:$0xff]
      %v7198 = vld [vmem:[%s39 + $0x120] sm:$0xff]
      %v7199 = vld [vmem:[%s39 + $0x128] sm:$0xff]
      %v7200 = vld [vmem:[%s39 + $0x130] sm:$0xff]
      %v7201 = vld [vmem:[%s39 + $0x138] sm:$0xff]
      %v7202 = vld [vmem:[%s39 + $0x140] sm:$0xff]
      %v7203 = vld [vmem:[%s39 + $0x148] sm:$0xff]
      %v7204 = vld [vmem:[%s39 + $0x150] sm:$0xff]
      %v7205 = vld [vmem:[%s39 + $0x158] sm:$0xff]
      %v7206 = vld [vmem:[%s39 + $0x160] sm:$0xff]
      %v7207 = vld [vmem:[%s39 + $0x168] sm:$0xff]
      %v7208 = vld [vmem:[%s39 + $0x170] sm:$0xff]
      %v7209 = vld [vmem:[%s39 + $0x178] sm:$0xff]
      %v7210 = vld [vmem:[%s39 + $0x180] sm:$0xff]
      %v7211 = vld [vmem:[%s39 + $0x188] sm:$0xff]
      %v7212 = vld [vmem:[%s39 + $0x190] sm:$0xff]
      %v7213 = vld [vmem:[%s39 + $0x198] sm:$0xff]
      %v7214 = vld [vmem:[%s39 + $0x1a0] sm:$0xff]
      %v7215 = vld [vmem:[%s39 + $0x1a8] sm:$0xff]
      %v7216 = vld [vmem:[%s39 + $0x1b0] sm:$0xff]
      %v7217 = vld [vmem:[%s39 + $0x1b8] sm:$0xff]
      %v7218 = vld [vmem:[%s39 + $0x1c0] sm:$0xff]
      %v7219 = vld [vmem:[%s39 + $0x1c8] sm:$0xff]
      %v7220 = vld [vmem:[%s39 + $0x1d0] sm:$0xff]
      %v7221 = vld [vmem:[%s39 + $0x1d8] sm:$0xff]
      %v7222 = vld [vmem:[%s39 + $0x1e0] sm:$0xff]
      %v7223 = vld [vmem:[%s39 + $0x1e8] sm:$0xff]
      %v7224 = vld [vmem:[%s39 + $0x1f0] sm:$0xff]
      %v7225 = vld [vmem:[%s39 + $0x1f8] sm:$0xff]
      %v7226 = vld [vmem:[%s39 + $0x200] sm:$0xff]
      %v7227 = vld [vmem:[%s39 + $0x208] sm:$0xff]
      %v7228 = vld [vmem:[%s39 + $0x210] sm:$0xff]
      %v7229 = vld [vmem:[%s39 + $0x218] sm:$0xff]
      %v7230 = vld [vmem:[%s39 + $0x220] sm:$0xff]
      %v7231 = vld [vmem:[%s39 + $0x228] sm:$0xff]
      %v7232 = vld [vmem:[%s39 + $0x230] sm:$0xff]
      %v7233 = vld [vmem:[%s39 + $0x238] sm:$0xff]
      %v7234 = vld [vmem:[%s39 + $0x240] sm:$0xff]
      %v7235 = vld [vmem:[%s39 + $0x248] sm:$0xff]
      %v7236 = vld [vmem:[%s39 + $0x250] sm:$0xff]
      %v7237 = vld [vmem:[%s39 + $0x258] sm:$0xff]
      %v7238 = vld [vmem:[%s39 + $0x260] sm:$0xff]
      %v7239 = vld [vmem:[%s39 + $0x268] sm:$0xff]
      %v7240 = vld [vmem:[%s39 + $0x270] sm:$0xff]
      %v7241 = vld [vmem:[%s39 + $0x278] sm:$0xff]
      %v7242 = vld [vmem:[%s39 + $0x280] sm:$0xff]
      %v7243 = vld [vmem:[%s39 + $0x288] sm:$0xff]
      %v7244 = vld [vmem:[%s39 + $0x290] sm:$0xff]
      %v7245 = vld [vmem:[%s39 + $0x298] sm:$0xff]
      %v7246 = vld [vmem:[%s39 + $0x2a0] sm:$0xff]
      %v7247 = vld [vmem:[%s39 + $0x2a8] sm:$0xff]
      %v7248 = vld [vmem:[%s39 + $0x2b0] sm:$0xff]
      %v7249 = vld [vmem:[%s39 + $0x2b8] sm:$0xff]
      %v7250 = vld [vmem:[%s39 + $0x2c0] sm:$0xff]
      %v7251 = vld [vmem:[%s39 + $0x2c8] sm:$0xff]
      %v7252 = vld [vmem:[%s39 + $0x2d0] sm:$0xff]
      %v7253 = vld [vmem:[%s39 + $0x2d8] sm:$0xff]
      %v7254 = vld [vmem:[%s39 + $0x2e0] sm:$0xff]
      %v7255 = vld [vmem:[%s39 + $0x2e8] sm:$0xff]
      %v7256 = vld [vmem:[%s39 + $0x2f0] sm:$0xff]
      %v7257 = vld [vmem:[%s39 + $0x2f8] sm:$0xff]
      %v7258 = vld [vmem:[%s39 + $0x300] sm:$0xff]
      %v7259 = vld [vmem:[%s39 + $0x308] sm:$0xff]
      %v7260 = vld [vmem:[%s39 + $0x310] sm:$0xff]
      %v7261 = vld [vmem:[%s39 + $0x318] sm:$0xff]
      %v7262 = vld [vmem:[%s39 + $0x320] sm:$0xff]
      %v7263 = vld [vmem:[%s39 + $0x328] sm:$0xff]
      %v7264 = vld [vmem:[%s39 + $0x330] sm:$0xff]
      %v7265 = vld [vmem:[%s39 + $0x338] sm:$0xff]
      %v7266 = vld [vmem:[%s39 + $0x340] sm:$0xff]
      %v7267 = vld [vmem:[%s39 + $0x348] sm:$0xff]
      %v7268 = vld [vmem:[%s39 + $0x350] sm:$0xff]
      %v7269 = vld [vmem:[%s39 + $0x358] sm:$0xff]
      %v7270 = vld [vmem:[%s39 + $0x360] sm:$0xff]
      %v7271 = vld [vmem:[%s39 + $0x368] sm:$0xff]
      %v7272 = vld [vmem:[%s39 + $0x370] sm:$0xff]
      %v7273 = vld [vmem:[%s39 + $0x378] sm:$0xff]
      %v7274 = vld [vmem:[%s39 + $0x380] sm:$0xff]
      %v7275 = vld [vmem:[%s39 + $0x388] sm:$0xff]
      %v7276 = vld [vmem:[%s39 + $0x390] sm:$0xff]
      %v7277 = vld [vmem:[%s39 + $0x398] sm:$0xff]
      %v7278 = vld [vmem:[%s39 + $0x3a0] sm:$0xff]
      %v7279 = vld [vmem:[%s39 + $0x3a8] sm:$0xff]
      %v7280 = vld [vmem:[%s39 + $0x3b0] sm:$0xff]
      %v7281 = vld [vmem:[%s39 + $0x3b8] sm:$0xff]
      %v7282 = vld [vmem:[%s39 + $0x3c0] sm:$0xff]
      %v7283 = vld [vmem:[%s39 + $0x3c8] sm:$0xff]
      %v7284 = vld [vmem:[%s39 + $0x3d0] sm:$0xff]
      %v7285 = vld [vmem:[%s39 + $0x3d8] sm:$0xff]
      %v7286 = vld [vmem:[%s39 + $0x3e0] sm:$0xff]
      %v7287 = vld [vmem:[%s39 + $0x3e8] sm:$0xff]
      %v7288 = vld [vmem:[%s39 + $0x3f0] sm:$0xff]
      %v7289 = vld [vmem:[%s39 + $0x3f8] sm:$0xff]
      %v7290 = vld [vmem:[%s39 + $0x400] sm:$0xff]
      %v7291 = vld [vmem:[%s39 + $0x408] sm:$0xff]
      %v7292 = vld [vmem:[%s39 + $0x410] sm:$0xff]
      %v7293 = vld [vmem:[%s39 + $0x418] sm:$0xff]
      %v7294 = vld [vmem:[%s39 + $0x420] sm:$0xff]
      %v7295 = vld [vmem:[%s39 + $0x428] sm:$0xff]
      %v7296 = vld [vmem:[%s39 + $0x430] sm:$0xff]
      %v7297 = vld [vmem:[%s39 + $0x438] sm:$0xff]
      %v7298 = vld [vmem:[%s39 + $0x440] sm:$0xff]
      %v7299 = vld [vmem:[%s39 + $0x448] sm:$0xff]
      %v7300 = vld [vmem:[%s39 + $0x450] sm:$0xff]
      %v7301 = vld [vmem:[%s39 + $0x458] sm:$0xff]
      %v7302 = vld [vmem:[%s39 + $0x460] sm:$0xff]
      %v7303 = vld [vmem:[%s39 + $0x468] sm:$0xff]
      %v7304 = vld [vmem:[%s39 + $0x470] sm:$0xff]
      %v7305 = vld [vmem:[%s39 + $0x478] sm:$0xff]
      %v7306 = vld [vmem:[%s39 + $0x480] sm:$0xff]
      %v7307 = vld [vmem:[%s39 + $0x488] sm:$0xff]
      %v7308 = vld [vmem:[%s39 + $0x490] sm:$0xff]
      %v7309 = vld [vmem:[%s39 + $0x498] sm:$0xff]
      %v7310 = vld [vmem:[%s39 + $0x4a0] sm:$0xff]
      %v7311 = vld [vmem:[%s39 + $0x4a8] sm:$0xff]
      %v7312 = vld [vmem:[%s39 + $0x4b0] sm:$0xff]
      %v7313 = vld [vmem:[%s39 + $0x4b8] sm:$0xff]
      %v7314 = vld [vmem:[%s39 + $0x4c0] sm:$0xff]
      %v7315 = vld [vmem:[%s39 + $0x4c8] sm:$0xff]
      %v7316 = vld [vmem:[%s39 + $0x4d0] sm:$0xff]
      %v7317 = vld [vmem:[%s39 + $0x4d8] sm:$0xff]
      %v7318 = vld [vmem:[%s39 + $0x4e0] sm:$0xff]
      %v7319 = vld [vmem:[%s39 + $0x4e8] sm:$0xff]
      %v7320 = vld [vmem:[%s39 + $0x4f0] sm:$0xff]
      %v7321 = vld [vmem:[%s39 + $0x4f8] sm:$0xff]
      %v7322 = vld [vmem:[%s39 + $0x500] sm:$0xff]
      %v7323 = vld [vmem:[%s39 + $0x508] sm:$0xff]
      %v7324 = vld [vmem:[%s39 + $0x510] sm:$0xff]
      %v7325 = vld [vmem:[%s39 + $0x518] sm:$0xff]
      %v7326 = vld [vmem:[%s39 + $0x520] sm:$0xff]
      %v7327 = vld [vmem:[%s39 + $0x528] sm:$0xff]
      %v7328 = vld [vmem:[%s39 + $0x530] sm:$0xff]
      %v7329 = vld [vmem:[%s39 + $0x538] sm:$0xff]
      %v7330 = vld [vmem:[%s39 + $0x540] sm:$0xff]
      %v7331 = vld [vmem:[%s39 + $0x548] sm:$0xff]
      %v7332 = vld [vmem:[%s39 + $0x550] sm:$0xff]
      %v7333 = vld [vmem:[%s39 + $0x558] sm:$0xff]
      %v7334 = vld [vmem:[%s39 + $0x560] sm:$0xff]
      %v7335 = vld [vmem:[%s39 + $0x568] sm:$0xff]
      %v7336 = vld [vmem:[%s39 + $0x570] sm:$0xff]
      %v7337 = vld [vmem:[%s39 + $0x578] sm:$0xff]
      %v7338 = vld [vmem:[%s39 + $0x580] sm:$0xff]
      %v7339 = vld [vmem:[%s39 + $0x588] sm:$0xff]
      %v7340 = vld [vmem:[%s39 + $0x590] sm:$0xff]
      %v7341 = vld [vmem:[%s39 + $0x598] sm:$0xff]
      %v7342 = vld [vmem:[%s39 + $0x5a0] sm:$0xff]
      %v7343 = vld [vmem:[%s39 + $0x5a8] sm:$0xff]
      %v7344 = vld [vmem:[%s39 + $0x5b0] sm:$0xff]
      %v7345 = vld [vmem:[%s39 + $0x5b8] sm:$0xff]
      %v7346 = vld [vmem:[%s39 + $0x5c0] sm:$0xff]
      %v7347 = vld [vmem:[%s39 + $0x5c8] sm:$0xff]
      %v7348 = vld [vmem:[%s39 + $0x5d0] sm:$0xff]
      %v7349 = vld [vmem:[%s39 + $0x5d8] sm:$0xff]
      %v7350 = vld [vmem:[%s39 + $0x5e0] sm:$0xff]
      %v7351 = vld [vmem:[%s39 + $0x5e8] sm:$0xff]
      %v7352 = vld [vmem:[%s39 + $0x5f0] sm:$0xff]
      %v7353 = vld [vmem:[%s39 + $0x5f8] sm:$0xff]
      %v7354 = vld [vmem:[%s39 + $0x600] sm:$0xff]
      %v7355 = vld [vmem:[%s39 + $0x608] sm:$0xff]
      %v7356 = vld [vmem:[%s39 + $0x610] sm:$0xff]
      %v7357 = vld [vmem:[%s39 + $0x618] sm:$0xff]
      %v7358 = vld [vmem:[%s39 + $0x620] sm:$0xff]
      %v7359 = vld [vmem:[%s39 + $0x628] sm:$0xff]
      %v7360 = vld [vmem:[%s39 + $0x630] sm:$0xff]
      %v7361 = vld [vmem:[%s39 + $0x638] sm:$0xff]
      %v7362 = vld [vmem:[%s39 + $0x640] sm:$0xff]
      %v7363 = vld [vmem:[%s39 + $0x648] sm:$0xff]
      %v7364 = vld [vmem:[%s39 + $0x650] sm:$0xff]
      %v7365 = vld [vmem:[%s39 + $0x658] sm:$0xff]
      %v7366 = vld [vmem:[%s39 + $0x660] sm:$0xff]
      %v7367 = vld [vmem:[%s39 + $0x668] sm:$0xff]
      %v7368 = vld [vmem:[%s39 + $0x670] sm:$0xff]
      %v7369 = vld [vmem:[%s39 + $0x678] sm:$0xff]
      %v7370 = vld [vmem:[%s39 + $0x680] sm:$0xff]
      %v7371 = vld [vmem:[%s39 + $0x688] sm:$0xff]
      %v7372 = vld [vmem:[%s39 + $0x690] sm:$0xff]
      %v7373 = vld [vmem:[%s39 + $0x698] sm:$0xff]
      %v7374 = vld [vmem:[%s39 + $0x6a0] sm:$0xff]
      %v7375 = vld [vmem:[%s39 + $0x6a8] sm:$0xff]
      %v7376 = vld [vmem:[%s39 + $0x6b0] sm:$0xff]
      %v7377 = vld [vmem:[%s39 + $0x6b8] sm:$0xff]
      %v7378 = vld [vmem:[%s39 + $0x6c0] sm:$0xff]
      %v7379 = vld [vmem:[%s39 + $0x6c8] sm:$0xff]
      %v7380 = vld [vmem:[%s39 + $0x6d0] sm:$0xff]
      %v7381 = vld [vmem:[%s39 + $0x6d8] sm:$0xff]
      %v7382 = vld [vmem:[%s39 + $0x6e0] sm:$0xff]
      %v7383 = vld [vmem:[%s39 + $0x6e8] sm:$0xff]
      %v7384 = vld [vmem:[%s39 + $0x6f0] sm:$0xff]
      %v7385 = vld [vmem:[%s39 + $0x6f8] sm:$0xff]
      %v7386 = vld [vmem:[%s39 + $0x700] sm:$0xff]
      %v7387 = vld [vmem:[%s39 + $0x708] sm:$0xff]
      %v7388 = vld [vmem:[%s39 + $0x710] sm:$0xff]
      %v7389 = vld [vmem:[%s39 + $0x718] sm:$0xff]
      %v7390 = vld [vmem:[%s39 + $0x720] sm:$0xff]
      %v7391 = vld [vmem:[%s39 + $0x728] sm:$0xff]
      %v7392 = vld [vmem:[%s39 + $0x730] sm:$0xff]
      %v7393 = vld [vmem:[%s39 + $0x738] sm:$0xff]
      %v7394 = vld [vmem:[%s39 + $0x740] sm:$0xff]
      %v7395 = vld [vmem:[%s39 + $0x748] sm:$0xff]
      %v7396 = vld [vmem:[%s39 + $0x750] sm:$0xff]
      %v7397 = vld [vmem:[%s39 + $0x758] sm:$0xff]
      %v7398 = vld [vmem:[%s39 + $0x760] sm:$0xff]
      %v7399 = vld [vmem:[%s39 + $0x768] sm:$0xff]
      %v7400 = vld [vmem:[%s39 + $0x770] sm:$0xff]
      %v7401 = vld [vmem:[%s39 + $0x778] sm:$0xff]
      %v7402 = vld [vmem:[%s39 + $0x780] sm:$0xff]
      %v7403 = vld [vmem:[%s39 + $0x788] sm:$0xff]
      %v7404 = vld [vmem:[%s39 + $0x790] sm:$0xff]
      %v7405 = vld [vmem:[%s39 + $0x798] sm:$0xff]
      %v7406 = vld [vmem:[%s39 + $0x7a0] sm:$0xff]
      %v7407 = vld [vmem:[%s39 + $0x7a8] sm:$0xff]
      %v7408 = vld [vmem:[%s39 + $0x7b0] sm:$0xff]
      %v7409 = vld [vmem:[%s39 + $0x7b8] sm:$0xff]
      %v7410 = vld [vmem:[%s39 + $0x7c0] sm:$0xff]
      %v7411 = vld [vmem:[%s39 + $0x7c8] sm:$0xff]
      %v7412 = vld [vmem:[%s39 + $0x7d0] sm:$0xff]
      %v7413 = vld [vmem:[%s39 + $0x7d8] sm:$0xff]
      %v7414 = vld [vmem:[%s39 + $0x7e0] sm:$0xff]
      %v7415 = vld [vmem:[%s39 + $0x7e8] sm:$0xff]
      %v7416 = vld [vmem:[%s39 + $0x7f0] sm:$0xff]
      %v7417 = vld [vmem:[%s39 + $0x7f8] sm:$0xff]
      %v7674 = vunpack.c.l.b16 %v7162
      %v7675 = vunpack.c.h.b16 %v7162
      %v7676 = vunpack.c.l.b16 %v7163
      %v7677 = vunpack.c.h.b16 %v7163
      %v7678 = vunpack.c.l.b16 %v7164
      %v7679 = vunpack.c.h.b16 %v7164
      %v7680 = vunpack.c.l.b16 %v7165
      %v7681 = vunpack.c.h.b16 %v7165
      %v7682 = vunpack.c.l.b16 %v7166
      %v7683 = vunpack.c.h.b16 %v7166
      %v7684 = vunpack.c.l.b16 %v7167
      %v7685 = vunpack.c.h.b16 %v7167
      %v7686 = vunpack.c.l.b16 %v7168
      %v7687 = vunpack.c.h.b16 %v7168
      %v7688 = vunpack.c.l.b16 %v7169
      %v7689 = vunpack.c.h.b16 %v7169
      %v7690 = vunpack.c.l.b16 %v7170
      %v7691 = vunpack.c.h.b16 %v7170
      %v7692 = vunpack.c.l.b16 %v7171
      %v7693 = vunpack.c.h.b16 %v7171
      %v7694 = vunpack.c.l.b16 %v7172
      %v7695 = vunpack.c.h.b16 %v7172
      %v7696 = vunpack.c.l.b16 %v7173
      %v7697 = vunpack.c.h.b16 %v7173
      %v7698 = vunpack.c.l.b16 %v7174
      %v7699 = vunpack.c.h.b16 %v7174
      %v7700 = vunpack.c.l.b16 %v7175
      %v7701 = vunpack.c.h.b16 %v7175
      %v7702 = vunpack.c.l.b16 %v7176
      %v7703 = vunpack.c.h.b16 %v7176
      %v7704 = vunpack.c.l.b16 %v7177
      %v7705 = vunpack.c.h.b16 %v7177
      %v7706 = vunpack.c.l.b16 %v7178
      %v7707 = vunpack.c.h.b16 %v7178
      %v7708 = vunpack.c.l.b16 %v7179
      %v7709 = vunpack.c.h.b16 %v7179
      %v7710 = vunpack.c.l.b16 %v7180
      %v7711 = vunpack.c.h.b16 %v7180
      %v7712 = vunpack.c.l.b16 %v7181
      %v7713 = vunpack.c.h.b16 %v7181
      %v7714 = vunpack.c.l.b16 %v7182
      %v7715 = vunpack.c.h.b16 %v7182
      %v7716 = vunpack.c.l.b16 %v7183
      %v7717 = vunpack.c.h.b16 %v7183
      %v7718 = vunpack.c.l.b16 %v7184
      %v7719 = vunpack.c.h.b16 %v7184
      %v7720 = vunpack.c.l.b16 %v7185
      %v7721 = vunpack.c.h.b16 %v7185
      %v7722 = vunpack.c.l.b16 %v7186
      %v7723 = vunpack.c.h.b16 %v7186
      %v7724 = vunpack.c.l.b16 %v7187
      %v7725 = vunpack.c.h.b16 %v7187
      %v7726 = vunpack.c.l.b16 %v7188
      %v7727 = vunpack.c.h.b16 %v7188
      %v7728 = vunpack.c.l.b16 %v7189
      %v7729 = vunpack.c.h.b16 %v7189
      %v7730 = vunpack.c.l.b16 %v7190
      %v7731 = vunpack.c.h.b16 %v7190
      %v7732 = vunpack.c.l.b16 %v7191
      %v7733 = vunpack.c.h.b16 %v7191
      %v7734 = vunpack.c.l.b16 %v7192
      %v7735 = vunpack.c.h.b16 %v7192
      %v7736 = vunpack.c.l.b16 %v7193
      %v7737 = vunpack.c.h.b16 %v7193
      %v7738 = vunpack.c.l.b16 %v7194
      %v7739 = vunpack.c.h.b16 %v7194
      %v7740 = vunpack.c.l.b16 %v7195
      %v7741 = vunpack.c.h.b16 %v7195
      %v7742 = vunpack.c.l.b16 %v7196
      %v7743 = vunpack.c.h.b16 %v7196
      %v7744 = vunpack.c.l.b16 %v7197
      %v7745 = vunpack.c.h.b16 %v7197
      %v7746 = vunpack.c.l.b16 %v7198
      %v7747 = vunpack.c.h.b16 %v7198
      %v7748 = vunpack.c.l.b16 %v7199
      %v7749 = vunpack.c.h.b16 %v7199
      %v7750 = vunpack.c.l.b16 %v7200
      %v7751 = vunpack.c.h.b16 %v7200
      %v7752 = vunpack.c.l.b16 %v7201
      %v7753 = vunpack.c.h.b16 %v7201
      %v7754 = vunpack.c.l.b16 %v7202
      %v7755 = vunpack.c.h.b16 %v7202
      %v7756 = vunpack.c.l.b16 %v7203
      %v7757 = vunpack.c.h.b16 %v7203
      %v7758 = vunpack.c.l.b16 %v7204
      %v7759 = vunpack.c.h.b16 %v7204
      %v7760 = vunpack.c.l.b16 %v7205
      %v7761 = vunpack.c.h.b16 %v7205
      %v7762 = vunpack.c.l.b16 %v7206
      %v7763 = vunpack.c.h.b16 %v7206
      %v7764 = vunpack.c.l.b16 %v7207
      %v7765 = vunpack.c.h.b16 %v7207
      %v7766 = vunpack.c.l.b16 %v7208
      %v7767 = vunpack.c.h.b16 %v7208
      %v7768 = vunpack.c.l.b16 %v7209
      %v7769 = vunpack.c.h.b16 %v7209
      %v7770 = vunpack.c.l.b16 %v7210
      %v7771 = vunpack.c.h.b16 %v7210
      %v7772 = vunpack.c.l.b16 %v7211
      %v7773 = vunpack.c.h.b16 %v7211
      %v7774 = vunpack.c.l.b16 %v7212
      %v7775 = vunpack.c.h.b16 %v7212
      %v7776 = vunpack.c.l.b16 %v7213
      %v7777 = vunpack.c.h.b16 %v7213
      %v7778 = vunpack.c.l.b16 %v7214
      %v7779 = vunpack.c.h.b16 %v7214
      %v7780 = vunpack.c.l.b16 %v7215
      %v7781 = vunpack.c.h.b16 %v7215
      %v7782 = vunpack.c.l.b16 %v7216
      %v7783 = vunpack.c.h.b16 %v7216
      %v7784 = vunpack.c.l.b16 %v7217
      %v7785 = vunpack.c.h.b16 %v7217
      %v7786 = vunpack.c.l.b16 %v7218
      %v7787 = vunpack.c.h.b16 %v7218
      %v7788 = vunpack.c.l.b16 %v7219
      %v7789 = vunpack.c.h.b16 %v7219
      %v7790 = vunpack.c.l.b16 %v7220
      %v7791 = vunpack.c.h.b16 %v7220
      %v7792 = vunpack.c.l.b16 %v7221
      %v7793 = vunpack.c.h.b16 %v7221
      %v7794 = vunpack.c.l.b16 %v7222
      %v7795 = vunpack.c.h.b16 %v7222
      %v7796 = vunpack.c.l.b16 %v7223
      %v7797 = vunpack.c.h.b16 %v7223
      %v7798 = vunpack.c.l.b16 %v7224
      %v7799 = vunpack.c.h.b16 %v7224
      %v7800 = vunpack.c.l.b16 %v7225
      %v7801 = vunpack.c.h.b16 %v7225
      %v7802 = vunpack.c.l.b16 %v7226
      %v7803 = vunpack.c.h.b16 %v7226
      %v7804 = vunpack.c.l.b16 %v7227
      %v7805 = vunpack.c.h.b16 %v7227
      %v7806 = vunpack.c.l.b16 %v7228
      %v7807 = vunpack.c.h.b16 %v7228
      %v7808 = vunpack.c.l.b16 %v7229
      %v7809 = vunpack.c.h.b16 %v7229
      %v7810 = vunpack.c.l.b16 %v7230
      %v7811 = vunpack.c.h.b16 %v7230
      %v7812 = vunpack.c.l.b16 %v7231
      %v7813 = vunpack.c.h.b16 %v7231
      %v7814 = vunpack.c.l.b16 %v7232
      %v7815 = vunpack.c.h.b16 %v7232
      %v7816 = vunpack.c.l.b16 %v7233
      %v7817 = vunpack.c.h.b16 %v7233
      %v7818 = vunpack.c.l.b16 %v7234
      %v7819 = vunpack.c.h.b16 %v7234
      %v7820 = vunpack.c.l.b16 %v7235
      %v7821 = vunpack.c.h.b16 %v7235
      %v7822 = vunpack.c.l.b16 %v7236
      %v7823 = vunpack.c.h.b16 %v7236
      %v7824 = vunpack.c.l.b16 %v7237
      %v7825 = vunpack.c.h.b16 %v7237
      %v7826 = vunpack.c.l.b16 %v7238
      %v7827 = vunpack.c.h.b16 %v7238
      %v7828 = vunpack.c.l.b16 %v7239
      %v7829 = vunpack.c.h.b16 %v7239
      %v7830 = vunpack.c.l.b16 %v7240
      %v7831 = vunpack.c.h.b16 %v7240
      %v7832 = vunpack.c.l.b16 %v7241
      %v7833 = vunpack.c.h.b16 %v7241
      %v7834 = vunpack.c.l.b16 %v7242
      %v7835 = vunpack.c.h.b16 %v7242
      %v7836 = vunpack.c.l.b16 %v7243
      %v7837 = vunpack.c.h.b16 %v7243
      %v7838 = vunpack.c.l.b16 %v7244
      %v7839 = vunpack.c.h.b16 %v7244
      %v7840 = vunpack.c.l.b16 %v7245
      %v7841 = vunpack.c.h.b16 %v7245
      %v7842 = vunpack.c.l.b16 %v7246
      %v7843 = vunpack.c.h.b16 %v7246
      %v7844 = vunpack.c.l.b16 %v7247
      %v7845 = vunpack.c.h.b16 %v7247
      %v7846 = vunpack.c.l.b16 %v7248
      %v7847 = vunpack.c.h.b16 %v7248
      %v7848 = vunpack.c.l.b16 %v7249
      %v7849 = vunpack.c.h.b16 %v7249
      %v7850 = vunpack.c.l.b16 %v7250
      %v7851 = vunpack.c.h.b16 %v7250
      %v7852 = vunpack.c.l.b16 %v7251
      %v7853 = vunpack.c.h.b16 %v7251
      %v7854 = vunpack.c.l.b16 %v7252
      %v7855 = vunpack.c.h.b16 %v7252
      %v7856 = vunpack.c.l.b16 %v7253
      %v7857 = vunpack.c.h.b16 %v7253
      %v7858 = vunpack.c.l.b16 %v7254
      %v7859 = vunpack.c.h.b16 %v7254
      %v7860 = vunpack.c.l.b16 %v7255
      %v7861 = vunpack.c.h.b16 %v7255
      %v7862 = vunpack.c.l.b16 %v7256
      %v7863 = vunpack.c.h.b16 %v7256
      %v7864 = vunpack.c.l.b16 %v7257
      %v7865 = vunpack.c.h.b16 %v7257
      %v7866 = vunpack.c.l.b16 %v7258
      %v7867 = vunpack.c.h.b16 %v7258
      %v7868 = vunpack.c.l.b16 %v7259
      %v7869 = vunpack.c.h.b16 %v7259
      %v7870 = vunpack.c.l.b16 %v7260
      %v7871 = vunpack.c.h.b16 %v7260
      %v7872 = vunpack.c.l.b16 %v7261
      %v7873 = vunpack.c.h.b16 %v7261
      %v7874 = vunpack.c.l.b16 %v7262
      %v7875 = vunpack.c.h.b16 %v7262
      %v7876 = vunpack.c.l.b16 %v7263
      %v7877 = vunpack.c.h.b16 %v7263
      %v7878 = vunpack.c.l.b16 %v7264
      %v7879 = vunpack.c.h.b16 %v7264
      %v7880 = vunpack.c.l.b16 %v7265
      %v7881 = vunpack.c.h.b16 %v7265
      %v7882 = vunpack.c.l.b16 %v7266
      %v7883 = vunpack.c.h.b16 %v7266
      %v7884 = vunpack.c.l.b16 %v7267
      %v7885 = vunpack.c.h.b16 %v7267
      %v7886 = vunpack.c.l.b16 %v7268
      %v7887 = vunpack.c.h.b16 %v7268
      %v7888 = vunpack.c.l.b16 %v7269
      %v7889 = vunpack.c.h.b16 %v7269
      %v7890 = vunpack.c.l.b16 %v7270
      %v7891 = vunpack.c.h.b16 %v7270
      %v7892 = vunpack.c.l.b16 %v7271
      %v7893 = vunpack.c.h.b16 %v7271
      %v7894 = vunpack.c.l.b16 %v7272
      %v7895 = vunpack.c.h.b16 %v7272
      %v7896 = vunpack.c.l.b16 %v7273
      %v7897 = vunpack.c.h.b16 %v7273
      %v7898 = vunpack.c.l.b16 %v7274
      %v7899 = vunpack.c.h.b16 %v7274
      %v7900 = vunpack.c.l.b16 %v7275
      %v7901 = vunpack.c.h.b16 %v7275
      %v7902 = vunpack.c.l.b16 %v7276
      %v7903 = vunpack.c.h.b16 %v7276
      %v7904 = vunpack.c.l.b16 %v7277
      %v7905 = vunpack.c.h.b16 %v7277
      %v7906 = vunpack.c.l.b16 %v7278
      %v7907 = vunpack.c.h.b16 %v7278
      %v7908 = vunpack.c.l.b16 %v7279
      %v7909 = vunpack.c.h.b16 %v7279
      %v7910 = vunpack.c.l.b16 %v7280
      %v7911 = vunpack.c.h.b16 %v7280
      %v7912 = vunpack.c.l.b16 %v7281
      %v7913 = vunpack.c.h.b16 %v7281
      %v7914 = vunpack.c.l.b16 %v7282
      %v7915 = vunpack.c.h.b16 %v7282
      %v7916 = vunpack.c.l.b16 %v7283
      %v7917 = vunpack.c.h.b16 %v7283
      %v7918 = vunpack.c.l.b16 %v7284
      %v7919 = vunpack.c.h.b16 %v7284
      %v7920 = vunpack.c.l.b16 %v7285
      %v7921 = vunpack.c.h.b16 %v7285
      %v7922 = vunpack.c.l.b16 %v7286
      %v7923 = vunpack.c.h.b16 %v7286
      %v7924 = vunpack.c.l.b16 %v7287
      %v7925 = vunpack.c.h.b16 %v7287
      %v7926 = vunpack.c.l.b16 %v7288
      %v7927 = vunpack.c.h.b16 %v7288
      %v7928 = vunpack.c.l.b16 %v7289
      %v7929 = vunpack.c.h.b16 %v7289
      %v7930 = vunpack.c.l.b16 %v7290
      %v7931 = vunpack.c.h.b16 %v7290
      %v7932 = vunpack.c.l.b16 %v7291
      %v7933 = vunpack.c.h.b16 %v7291
      %v7934 = vunpack.c.l.b16 %v7292
      %v7935 = vunpack.c.h.b16 %v7292
      %v7936 = vunpack.c.l.b16 %v7293
      %v7937 = vunpack.c.h.b16 %v7293
      %v7938 = vunpack.c.l.b16 %v7294
      %v7939 = vunpack.c.h.b16 %v7294
      %v7940 = vunpack.c.l.b16 %v7295
      %v7941 = vunpack.c.h.b16 %v7295
      %v7942 = vunpack.c.l.b16 %v7296
      %v7943 = vunpack.c.h.b16 %v7296
      %v7944 = vunpack.c.l.b16 %v7297
      %v7945 = vunpack.c.h.b16 %v7297
      %v7946 = vunpack.c.l.b16 %v7298
      %v7947 = vunpack.c.h.b16 %v7298
      %v7948 = vunpack.c.l.b16 %v7299
      %v7949 = vunpack.c.h.b16 %v7299
      %v7950 = vunpack.c.l.b16 %v7300
      %v7951 = vunpack.c.h.b16 %v7300
      %v7952 = vunpack.c.l.b16 %v7301
      %v7953 = vunpack.c.h.b16 %v7301
      %v7954 = vunpack.c.l.b16 %v7302
      %v7955 = vunpack.c.h.b16 %v7302
      %v7956 = vunpack.c.l.b16 %v7303
      %v7957 = vunpack.c.h.b16 %v7303
      %v7958 = vunpack.c.l.b16 %v7304
      %v7959 = vunpack.c.h.b16 %v7304
      %v7960 = vunpack.c.l.b16 %v7305
      %v7961 = vunpack.c.h.b16 %v7305
      %v7962 = vunpack.c.l.b16 %v7306
      %v7963 = vunpack.c.h.b16 %v7306
      %v7964 = vunpack.c.l.b16 %v7307
      %v7965 = vunpack.c.h.b16 %v7307
      %v7966 = vunpack.c.l.b16 %v7308
      %v7967 = vunpack.c.h.b16 %v7308
      %v7968 = vunpack.c.l.b16 %v7309
      %v7969 = vunpack.c.h.b16 %v7309
      %v7970 = vunpack.c.l.b16 %v7310
      %v7971 = vunpack.c.h.b16 %v7310
      %v7972 = vunpack.c.l.b16 %v7311
      %v7973 = vunpack.c.h.b16 %v7311
      %v7974 = vunpack.c.l.b16 %v7312
      %v7975 = vunpack.c.h.b16 %v7312
      %v7976 = vunpack.c.l.b16 %v7313
      %v7977 = vunpack.c.h.b16 %v7313
      %v7978 = vunpack.c.l.b16 %v7314
      %v7979 = vunpack.c.h.b16 %v7314
      %v7980 = vunpack.c.l.b16 %v7315
      %v7981 = vunpack.c.h.b16 %v7315
      %v7982 = vunpack.c.l.b16 %v7316
      %v7983 = vunpack.c.h.b16 %v7316
      %v7984 = vunpack.c.l.b16 %v7317
      %v7985 = vunpack.c.h.b16 %v7317
      %v7986 = vunpack.c.l.b16 %v7318
      %v7987 = vunpack.c.h.b16 %v7318
      %v7988 = vunpack.c.l.b16 %v7319
      %v7989 = vunpack.c.h.b16 %v7319
      %v7990 = vunpack.c.l.b16 %v7320
      %v7991 = vunpack.c.h.b16 %v7320
      %v7992 = vunpack.c.l.b16 %v7321
      %v7993 = vunpack.c.h.b16 %v7321
      %v7994 = vunpack.c.l.b16 %v7322
      %v7995 = vunpack.c.h.b16 %v7322
      %v7996 = vunpack.c.l.b16 %v7323
      %v7997 = vunpack.c.h.b16 %v7323
      %v7998 = vunpack.c.l.b16 %v7324
      %v7999 = vunpack.c.h.b16 %v7324
      %v8000 = vunpack.c.l.b16 %v7325
      %v8001 = vunpack.c.h.b16 %v7325
      %v8002 = vunpack.c.l.b16 %v7326
      %v8003 = vunpack.c.h.b16 %v7326
      %v8004 = vunpack.c.l.b16 %v7327
      %v8005 = vunpack.c.h.b16 %v7327
      %v8006 = vunpack.c.l.b16 %v7328
      %v8007 = vunpack.c.h.b16 %v7328
      %v8008 = vunpack.c.l.b16 %v7329
      %v8009 = vunpack.c.h.b16 %v7329
      %v8010 = vunpack.c.l.b16 %v7330
      %v8011 = vunpack.c.h.b16 %v7330
      %v8012 = vunpack.c.l.b16 %v7331
      %v8013 = vunpack.c.h.b16 %v7331
      %v8014 = vunpack.c.l.b16 %v7332
      %v8015 = vunpack.c.h.b16 %v7332
      %v8016 = vunpack.c.l.b16 %v7333
      %v8017 = vunpack.c.h.b16 %v7333
      %v8018 = vunpack.c.l.b16 %v7334
      %v8019 = vunpack.c.h.b16 %v7334
      %v8020 = vunpack.c.l.b16 %v7335
      %v8021 = vunpack.c.h.b16 %v7335
      %v8022 = vunpack.c.l.b16 %v7336
      %v8023 = vunpack.c.h.b16 %v7336
      %v8024 = vunpack.c.l.b16 %v7337
      %v8025 = vunpack.c.h.b16 %v7337
      %v8026 = vunpack.c.l.b16 %v7338
      %v8027 = vunpack.c.h.b16 %v7338
      %v8028 = vunpack.c.l.b16 %v7339
      %v8029 = vunpack.c.h.b16 %v7339
      %v8030 = vunpack.c.l.b16 %v7340
      %v8031 = vunpack.c.h.b16 %v7340
      %v8032 = vunpack.c.l.b16 %v7341
      %v8033 = vunpack.c.h.b16 %v7341
      %v8034 = vunpack.c.l.b16 %v7342
      %v8035 = vunpack.c.h.b16 %v7342
      %v8036 = vunpack.c.l.b16 %v7343
      %v8037 = vunpack.c.h.b16 %v7343
      %v8038 = vunpack.c.l.b16 %v7344
      %v8039 = vunpack.c.h.b16 %v7344
      %v8040 = vunpack.c.l.b16 %v7345
      %v8041 = vunpack.c.h.b16 %v7345
      %v8042 = vunpack.c.l.b16 %v7346
      %v8043 = vunpack.c.h.b16 %v7346
      %v8044 = vunpack.c.l.b16 %v7347
      %v8045 = vunpack.c.h.b16 %v7347
      %v8046 = vunpack.c.l.b16 %v7348
      %v8047 = vunpack.c.h.b16 %v7348
      %v8048 = vunpack.c.l.b16 %v7349
      %v8049 = vunpack.c.h.b16 %v7349
      %v8050 = vunpack.c.l.b16 %v7350
      %v8051 = vunpack.c.h.b16 %v7350
      %v8052 = vunpack.c.l.b16 %v7351
      %v8053 = vunpack.c.h.b16 %v7351
      %v8054 = vunpack.c.l.b16 %v7352
      %v8055 = vunpack.c.h.b16 %v7352
      %v8056 = vunpack.c.l.b16 %v7353
      %v8057 = vunpack.c.h.b16 %v7353
      %v8058 = vunpack.c.l.b16 %v7354
      %v8059 = vunpack.c.h.b16 %v7354
      %v8060 = vunpack.c.l.b16 %v7355
      %v8061 = vunpack.c.h.b16 %v7355
      %v8062 = vunpack.c.l.b16 %v7356
      %v8063 = vunpack.c.h.b16 %v7356
      %v8064 = vunpack.c.l.b16 %v7357
      %v8065 = vunpack.c.h.b16 %v7357
      %v8066 = vunpack.c.l.b16 %v7358
      %v8067 = vunpack.c.h.b16 %v7358
      %v8068 = vunpack.c.l.b16 %v7359
      %v8069 = vunpack.c.h.b16 %v7359
      %v8070 = vunpack.c.l.b16 %v7360
      %v8071 = vunpack.c.h.b16 %v7360
      %v8072 = vunpack.c.l.b16 %v7361
      %v8073 = vunpack.c.h.b16 %v7361
      %v8074 = vunpack.c.l.b16 %v7362
      %v8075 = vunpack.c.h.b16 %v7362
      %v8076 = vunpack.c.l.b16 %v7363
      %v8077 = vunpack.c.h.b16 %v7363
      %v8078 = vunpack.c.l.b16 %v7364
      %v8079 = vunpack.c.h.b16 %v7364
      %v8080 = vunpack.c.l.b16 %v7365
      %v8081 = vunpack.c.h.b16 %v7365
      %v8082 = vunpack.c.l.b16 %v7366
      %v8083 = vunpack.c.h.b16 %v7366
      %v8084 = vunpack.c.l.b16 %v7367
      %v8085 = vunpack.c.h.b16 %v7367
      %v8086 = vunpack.c.l.b16 %v7368
      %v8087 = vunpack.c.h.b16 %v7368
      %v8088 = vunpack.c.l.b16 %v7369
      %v8089 = vunpack.c.h.b16 %v7369
      %v8090 = vunpack.c.l.b16 %v7370
      %v8091 = vunpack.c.h.b16 %v7370
      %v8092 = vunpack.c.l.b16 %v7371
      %v8093 = vunpack.c.h.b16 %v7371
      %v8094 = vunpack.c.l.b16 %v7372
      %v8095 = vunpack.c.h.b16 %v7372
      %v8096 = vunpack.c.l.b16 %v7373
      %v8097 = vunpack.c.h.b16 %v7373
      %v8098 = vunpack.c.l.b16 %v7374
      %v8099 = vunpack.c.h.b16 %v7374
      %v8100 = vunpack.c.l.b16 %v7375
      %v8101 = vunpack.c.h.b16 %v7375
      %v8102 = vunpack.c.l.b16 %v7376
      %v8103 = vunpack.c.h.b16 %v7376
      %v8104 = vunpack.c.l.b16 %v7377
      %v8105 = vunpack.c.h.b16 %v7377
      %v8106 = vunpack.c.l.b16 %v7378
      %v8107 = vunpack.c.h.b16 %v7378
      %v8108 = vunpack.c.l.b16 %v7379
      %v8109 = vunpack.c.h.b16 %v7379
      %v8110 = vunpack.c.l.b16 %v7380
      %v8111 = vunpack.c.h.b16 %v7380
      %v8112 = vunpack.c.l.b16 %v7381
      %v8113 = vunpack.c.h.b16 %v7381
      %v8114 = vunpack.c.l.b16 %v7382
      %v8115 = vunpack.c.h.b16 %v7382
      %v8116 = vunpack.c.l.b16 %v7383
      %v8117 = vunpack.c.h.b16 %v7383
      %v8118 = vunpack.c.l.b16 %v7384
      %v8119 = vunpack.c.h.b16 %v7384
      %v8120 = vunpack.c.l.b16 %v7385
      %v8121 = vunpack.c.h.b16 %v7385
      %v8122 = vunpack.c.l.b16 %v7386
      %v8123 = vunpack.c.h.b16 %v7386
      %v8124 = vunpack.c.l.b16 %v7387
      %v8125 = vunpack.c.h.b16 %v7387
      %v8126 = vunpack.c.l.b16 %v7388
      %v8127 = vunpack.c.h.b16 %v7388
      %v8128 = vunpack.c.l.b16 %v7389
      %v8129 = vunpack.c.h.b16 %v7389
      %v8130 = vunpack.c.l.b16 %v7390
      %v8131 = vunpack.c.h.b16 %v7390
      %v8132 = vunpack.c.l.b16 %v7391
      %v8133 = vunpack.c.h.b16 %v7391
      %v8134 = vunpack.c.l.b16 %v7392
      %v8135 = vunpack.c.h.b16 %v7392
      %v8136 = vunpack.c.l.b16 %v7393
      %v8137 = vunpack.c.h.b16 %v7393
      %v8138 = vunpack.c.l.b16 %v7394
      %v8139 = vunpack.c.h.b16 %v7394
      %v8140 = vunpack.c.l.b16 %v7395
      %v8141 = vunpack.c.h.b16 %v7395
      %v8142 = vunpack.c.l.b16 %v7396
      %v8143 = vunpack.c.h.b16 %v7396
      %v8144 = vunpack.c.l.b16 %v7397
      %v8145 = vunpack.c.h.b16 %v7397
      %v8146 = vunpack.c.l.b16 %v7398
      %v8147 = vunpack.c.h.b16 %v7398
      %v8148 = vunpack.c.l.b16 %v7399
      %v8149 = vunpack.c.h.b16 %v7399
      %v8150 = vunpack.c.l.b16 %v7400
      %v8151 = vunpack.c.h.b16 %v7400
      %v8152 = vunpack.c.l.b16 %v7401
      %v8153 = vunpack.c.h.b16 %v7401
      %v8154 = vunpack.c.l.b16 %v7402
      %v8155 = vunpack.c.h.b16 %v7402
      %v8156 = vunpack.c.l.b16 %v7403
      %v8157 = vunpack.c.h.b16 %v7403
      %v8158 = vunpack.c.l.b16 %v7404
      %v8159 = vunpack.c.h.b16 %v7404
      %v8160 = vunpack.c.l.b16 %v7405
      %v8161 = vunpack.c.h.b16 %v7405
      %v8162 = vunpack.c.l.b16 %v7406
      %v8163 = vunpack.c.h.b16 %v7406
      %v8164 = vunpack.c.l.b16 %v7407
      %v8165 = vunpack.c.h.b16 %v7407
      %v8166 = vunpack.c.l.b16 %v7408
      %v8167 = vunpack.c.h.b16 %v7408
      %v8168 = vunpack.c.l.b16 %v7409
      %v8169 = vunpack.c.h.b16 %v7409
      %v8170 = vunpack.c.l.b16 %v7410
      %v8171 = vunpack.c.h.b16 %v7410
      %v8172 = vunpack.c.l.b16 %v7411
      %v8173 = vunpack.c.h.b16 %v7411
      %v8174 = vunpack.c.l.b16 %v7412
      %v8175 = vunpack.c.h.b16 %v7412
      %v8176 = vunpack.c.l.b16 %v7413
      %v8177 = vunpack.c.h.b16 %v7413
      %v8178 = vunpack.c.l.b16 %v7414
      %v8179 = vunpack.c.h.b16 %v7414
      %v8180 = vunpack.c.l.b16 %v7415
      %v8181 = vunpack.c.h.b16 %v7415
      %v8182 = vunpack.c.l.b16 %v7416
      %v8183 = vunpack.c.h.b16 %v7416
      %v8184 = vunpack.c.l.b16 %v7417
      %v8185 = vunpack.c.h.b16 %v7417
      %v8186 = vpack.c.b16 %v7678, %v7674
      %v8187 = vpack.c.b16 %v7679, %v7675
      %v8188 = vpack.c.b16 %v7680, %v7676
      %v8189 = vpack.c.b16 %v7681, %v7677
      %v8190 = vpack.c.b16 %v7686, %v7682
      %v8191 = vpack.c.b16 %v7687, %v7683
      %v8192 = vpack.c.b16 %v7688, %v7684
      %v8193 = vpack.c.b16 %v7689, %v7685
      %v8194 = vpack.c.b16 %v7694, %v7690
      %v8195 = vpack.c.b16 %v7695, %v7691
      %v8196 = vpack.c.b16 %v7696, %v7692
      %v8197 = vpack.c.b16 %v7697, %v7693
      %v8198 = vpack.c.b16 %v7702, %v7698
      %v8199 = vpack.c.b16 %v7703, %v7699
      %v8200 = vpack.c.b16 %v7704, %v7700
      %v8201 = vpack.c.b16 %v7705, %v7701
      %v8202 = vpack.c.b16 %v7710, %v7706
      %v8203 = vpack.c.b16 %v7711, %v7707
      %v8204 = vpack.c.b16 %v7712, %v7708
      %v8205 = vpack.c.b16 %v7713, %v7709
      %v8206 = vpack.c.b16 %v7718, %v7714
      %v8207 = vpack.c.b16 %v7719, %v7715
      %v8208 = vpack.c.b16 %v7720, %v7716
      %v8209 = vpack.c.b16 %v7721, %v7717
      %v8210 = vpack.c.b16 %v7726, %v7722
      %v8211 = vpack.c.b16 %v7727, %v7723
      %v8212 = vpack.c.b16 %v7728, %v7724
      %v8213 = vpack.c.b16 %v7729, %v7725
      %v8214 = vpack.c.b16 %v7734, %v7730
      %v8215 = vpack.c.b16 %v7735, %v7731
      %v8216 = vpack.c.b16 %v7736, %v7732
      %v8217 = vpack.c.b16 %v7737, %v7733
      %v8218 = vpack.c.b16 %v7742, %v7738
      %v8219 = vpack.c.b16 %v7743, %v7739
      %v8220 = vpack.c.b16 %v7744, %v7740
      %v8221 = vpack.c.b16 %v7745, %v7741
      %v8222 = vpack.c.b16 %v7750, %v7746
      %v8223 = vpack.c.b16 %v7751, %v7747
      %v8224 = vpack.c.b16 %v7752, %v7748
      %v8225 = vpack.c.b16 %v7753, %v7749
      %v8226 = vpack.c.b16 %v7758, %v7754
      %v8227 = vpack.c.b16 %v7759, %v7755
      %v8228 = vpack.c.b16 %v7760, %v7756
      %v8229 = vpack.c.b16 %v7761, %v7757
      %v8230 = vpack.c.b16 %v7766, %v7762
      %v8231 = vpack.c.b16 %v7767, %v7763
      %v8232 = vpack.c.b16 %v7768, %v7764
      %v8233 = vpack.c.b16 %v7769, %v7765
      %v8234 = vpack.c.b16 %v7774, %v7770
      %v8235 = vpack.c.b16 %v7775, %v7771
      %v8236 = vpack.c.b16 %v7776, %v7772
      %v8237 = vpack.c.b16 %v7777, %v7773
      %v8238 = vpack.c.b16 %v7782, %v7778
      %v8239 = vpack.c.b16 %v7783, %v7779
      %v8240 = vpack.c.b16 %v7784, %v7780
      %v8241 = vpack.c.b16 %v7785, %v7781
      %v8242 = vpack.c.b16 %v7790, %v7786
      %v8243 = vpack.c.b16 %v7791, %v7787
      %v8244 = vpack.c.b16 %v7792, %v7788
      %v8245 = vpack.c.b16 %v7793, %v7789
      %v8246 = vpack.c.b16 %v7798, %v7794
      %v8247 = vpack.c.b16 %v7799, %v7795
      %v8248 = vpack.c.b16 %v7800, %v7796
      %v8249 = vpack.c.b16 %v7801, %v7797
      %v8250 = vpack.c.b16 %v7806, %v7802
      %v8251 = vpack.c.b16 %v7807, %v7803
      %v8252 = vpack.c.b16 %v7808, %v7804
      %v8253 = vpack.c.b16 %v7809, %v7805
      %v8254 = vpack.c.b16 %v7814, %v7810
      %v8255 = vpack.c.b16 %v7815, %v7811
      %v8256 = vpack.c.b16 %v7816, %v7812
      %v8257 = vpack.c.b16 %v7817, %v7813
      %v8258 = vpack.c.b16 %v7822, %v7818
      %v8259 = vpack.c.b16 %v7823, %v7819
      %v8260 = vpack.c.b16 %v7824, %v7820
      %v8261 = vpack.c.b16 %v7825, %v7821
      %v8262 = vpack.c.b16 %v7830, %v7826
      %v8263 = vpack.c.b16 %v7831, %v7827
      %v8264 = vpack.c.b16 %v7832, %v7828
      %v8265 = vpack.c.b16 %v7833, %v7829
      %v8266 = vpack.c.b16 %v7838, %v7834
      %v8267 = vpack.c.b16 %v7839, %v7835
      %v8268 = vpack.c.b16 %v7840, %v7836
      %v8269 = vpack.c.b16 %v7841, %v7837
      %v8270 = vpack.c.b16 %v7846, %v7842
      %v8271 = vpack.c.b16 %v7847, %v7843
      %v8272 = vpack.c.b16 %v7848, %v7844
      %v8273 = vpack.c.b16 %v7849, %v7845
      %v8274 = vpack.c.b16 %v7854, %v7850
      %v8275 = vpack.c.b16 %v7855, %v7851
      %v8276 = vpack.c.b16 %v7856, %v7852
      %v8277 = vpack.c.b16 %v7857, %v7853
      %v8278 = vpack.c.b16 %v7862, %v7858
      %v8279 = vpack.c.b16 %v7863, %v7859
      %v8280 = vpack.c.b16 %v7864, %v7860
      %v8281 = vpack.c.b16 %v7865, %v7861
      %v8282 = vpack.c.b16 %v7870, %v7866
      %v8283 = vpack.c.b16 %v7871, %v7867
      %v8284 = vpack.c.b16 %v7872, %v7868
      %v8285 = vpack.c.b16 %v7873, %v7869
      %v8286 = vpack.c.b16 %v7878, %v7874
      %v8287 = vpack.c.b16 %v7879, %v7875
      %v8288 = vpack.c.b16 %v7880, %v7876
      %v8289 = vpack.c.b16 %v7881, %v7877
      %v8290 = vpack.c.b16 %v7886, %v7882
      %v8291 = vpack.c.b16 %v7887, %v7883
      %v8292 = vpack.c.b16 %v7888, %v7884
      %v8293 = vpack.c.b16 %v7889, %v7885
      %v8294 = vpack.c.b16 %v7894, %v7890
      %v8295 = vpack.c.b16 %v7895, %v7891
      %v8296 = vpack.c.b16 %v7896, %v7892
      %v8297 = vpack.c.b16 %v7897, %v7893
      %v8298 = vpack.c.b16 %v7902, %v7898
      %v8299 = vpack.c.b16 %v7903, %v7899
      %v8300 = vpack.c.b16 %v7904, %v7900
      %v8301 = vpack.c.b16 %v7905, %v7901
      %v8302 = vpack.c.b16 %v7910, %v7906
      %v8303 = vpack.c.b16 %v7911, %v7907
      %v8304 = vpack.c.b16 %v7912, %v7908
      %v8305 = vpack.c.b16 %v7913, %v7909
      %v8306 = vpack.c.b16 %v7918, %v7914
      %v8307 = vpack.c.b16 %v7919, %v7915
      %v8308 = vpack.c.b16 %v7920, %v7916
      %v8309 = vpack.c.b16 %v7921, %v7917
      %v8310 = vpack.c.b16 %v7926, %v7922
      %v8311 = vpack.c.b16 %v7927, %v7923
      %v8312 = vpack.c.b16 %v7928, %v7924
      %v8313 = vpack.c.b16 %v7929, %v7925
      %v8314 = vpack.c.b16 %v7934, %v7930
      %v8315 = vpack.c.b16 %v7935, %v7931
      %v8316 = vpack.c.b16 %v7936, %v7932
      %v8317 = vpack.c.b16 %v7937, %v7933
      %v8318 = vpack.c.b16 %v7942, %v7938
      %v8319 = vpack.c.b16 %v7943, %v7939
      %v8320 = vpack.c.b16 %v7944, %v7940
      %v8321 = vpack.c.b16 %v7945, %v7941
      %v8322 = vpack.c.b16 %v7950, %v7946
      %v8323 = vpack.c.b16 %v7951, %v7947
      %v8324 = vpack.c.b16 %v7952, %v7948
      %v8325 = vpack.c.b16 %v7953, %v7949
      %v8326 = vpack.c.b16 %v7958, %v7954
      %v8327 = vpack.c.b16 %v7959, %v7955
      %v8328 = vpack.c.b16 %v7960, %v7956
      %v8329 = vpack.c.b16 %v7961, %v7957
      %v8330 = vpack.c.b16 %v7966, %v7962
      %v8331 = vpack.c.b16 %v7967, %v7963
      %v8332 = vpack.c.b16 %v7968, %v7964
      %v8333 = vpack.c.b16 %v7969, %v7965
      %v8334 = vpack.c.b16 %v7974, %v7970
      %v8335 = vpack.c.b16 %v7975, %v7971
      %v8336 = vpack.c.b16 %v7976, %v7972
      %v8337 = vpack.c.b16 %v7977, %v7973
      %v8338 = vpack.c.b16 %v7982, %v7978
      %v8339 = vpack.c.b16 %v7983, %v7979
      %v8340 = vpack.c.b16 %v7984, %v7980
      %v8341 = vpack.c.b16 %v7985, %v7981
      %v8342 = vpack.c.b16 %v7990, %v7986
      %v8343 = vpack.c.b16 %v7991, %v7987
      %v8344 = vpack.c.b16 %v7992, %v7988
      %v8345 = vpack.c.b16 %v7993, %v7989
      %v8346 = vpack.c.b16 %v7998, %v7994
      %v8347 = vpack.c.b16 %v7999, %v7995
      %v8348 = vpack.c.b16 %v8000, %v7996
      %v8349 = vpack.c.b16 %v8001, %v7997
      %v8350 = vpack.c.b16 %v8006, %v8002
      %v8351 = vpack.c.b16 %v8007, %v8003
      %v8352 = vpack.c.b16 %v8008, %v8004
      %v8353 = vpack.c.b16 %v8009, %v8005
      %v8354 = vpack.c.b16 %v8014, %v8010
      %v8355 = vpack.c.b16 %v8015, %v8011
      %v8356 = vpack.c.b16 %v8016, %v8012
      %v8357 = vpack.c.b16 %v8017, %v8013
      %v8358 = vpack.c.b16 %v8022, %v8018
      %v8359 = vpack.c.b16 %v8023, %v8019
      %v8360 = vpack.c.b16 %v8024, %v8020
      %v8361 = vpack.c.b16 %v8025, %v8021
      %v8362 = vpack.c.b16 %v8030, %v8026
      %v8363 = vpack.c.b16 %v8031, %v8027
      %v8364 = vpack.c.b16 %v8032, %v8028
      %v8365 = vpack.c.b16 %v8033, %v8029
      %v8366 = vpack.c.b16 %v8038, %v8034
      %v8367 = vpack.c.b16 %v8039, %v8035
      %v8368 = vpack.c.b16 %v8040, %v8036
      %v8369 = vpack.c.b16 %v8041, %v8037
      %v8370 = vpack.c.b16 %v8046, %v8042
      %v8371 = vpack.c.b16 %v8047, %v8043
      %v8372 = vpack.c.b16 %v8048, %v8044
      %v8373 = vpack.c.b16 %v8049, %v8045
      %v8374 = vpack.c.b16 %v8054, %v8050
      %v8375 = vpack.c.b16 %v8055, %v8051
      %v8376 = vpack.c.b16 %v8056, %v8052
      %v8377 = vpack.c.b16 %v8057, %v8053
      %v8378 = vpack.c.b16 %v8062, %v8058
      %v8379 = vpack.c.b16 %v8063, %v8059
      %v8380 = vpack.c.b16 %v8064, %v8060
      %v8381 = vpack.c.b16 %v8065, %v8061
      %v8382 = vpack.c.b16 %v8070, %v8066
      %v8383 = vpack.c.b16 %v8071, %v8067
      %v8384 = vpack.c.b16 %v8072, %v8068
      %v8385 = vpack.c.b16 %v8073, %v8069
      %v8386 = vpack.c.b16 %v8078, %v8074
      %v8387 = vpack.c.b16 %v8079, %v8075
      %v8388 = vpack.c.b16 %v8080, %v8076
      %v8389 = vpack.c.b16 %v8081, %v8077
      %v8390 = vpack.c.b16 %v8086, %v8082
      %v8391 = vpack.c.b16 %v8087, %v8083
      %v8392 = vpack.c.b16 %v8088, %v8084
      %v8393 = vpack.c.b16 %v8089, %v8085
      %v8394 = vpack.c.b16 %v8094, %v8090
      %v8395 = vpack.c.b16 %v8095, %v8091
      %v8396 = vpack.c.b16 %v8096, %v8092
      %v8397 = vpack.c.b16 %v8097, %v8093
      %v8398 = vpack.c.b16 %v8102, %v8098
      %v8399 = vpack.c.b16 %v8103, %v8099
      %v8400 = vpack.c.b16 %v8104, %v8100
      %v8401 = vpack.c.b16 %v8105, %v8101
      %v8402 = vpack.c.b16 %v8110, %v8106
      %v8403 = vpack.c.b16 %v8111, %v8107
      %v8404 = vpack.c.b16 %v8112, %v8108
      %v8405 = vpack.c.b16 %v8113, %v8109
      %v8406 = vpack.c.b16 %v8118, %v8114
      %v8407 = vpack.c.b16 %v8119, %v8115
      %v8408 = vpack.c.b16 %v8120, %v8116
      %v8409 = vpack.c.b16 %v8121, %v8117
      %v8410 = vpack.c.b16 %v8126, %v8122
      %v8411 = vpack.c.b16 %v8127, %v8123
      %v8412 = vpack.c.b16 %v8128, %v8124
      %v8413 = vpack.c.b16 %v8129, %v8125
      %v8414 = vpack.c.b16 %v8134, %v8130
      %v8415 = vpack.c.b16 %v8135, %v8131
      %v8416 = vpack.c.b16 %v8136, %v8132
      %v8417 = vpack.c.b16 %v8137, %v8133
      %v8418 = vpack.c.b16 %v8142, %v8138
      %v8419 = vpack.c.b16 %v8143, %v8139
      %v8420 = vpack.c.b16 %v8144, %v8140
      %v8421 = vpack.c.b16 %v8145, %v8141
      %v8422 = vpack.c.b16 %v8150, %v8146
      %v8423 = vpack.c.b16 %v8151, %v8147
      %v8424 = vpack.c.b16 %v8152, %v8148
      %v8425 = vpack.c.b16 %v8153, %v8149
      %v8426 = vpack.c.b16 %v8158, %v8154
      %v8427 = vpack.c.b16 %v8159, %v8155
      %v8428 = vpack.c.b16 %v8160, %v8156
      %v8429 = vpack.c.b16 %v8161, %v8157
      %v8430 = vpack.c.b16 %v8166, %v8162
      %v8431 = vpack.c.b16 %v8167, %v8163
      %v8432 = vpack.c.b16 %v8168, %v8164
      %v8433 = vpack.c.b16 %v8169, %v8165
      %v8434 = vpack.c.b16 %v8174, %v8170
      %v8435 = vpack.c.b16 %v8175, %v8171
      %v8436 = vpack.c.b16 %v8176, %v8172
      %v8437 = vpack.c.b16 %v8177, %v8173
      %v8438 = vpack.c.b16 %v8182, %v8178
      %v8439 = vpack.c.b16 %v8183, %v8179
      %v8440 = vpack.c.b16 %v8184, %v8180
      %v8441 = vpack.c.b16 %v8185, %v8181
      %8698 = vmatprep.subr.bf16.mxu0 %v8187
      %8699 = vmatpush1.bf16.msra.mxu0 %v8186
      %8700 = vmatprep.subr.bf16.mxu0 %v8191
      %8701 = vmatpush1.bf16.msra.mxu0 %v8190
      %8702 = vmatprep.subr.bf16.mxu0 %v8195
      %8703 = vmatpush1.bf16.msra.mxu0 %v8194
      %8704 = vmatprep.subr.bf16.mxu0 %v8199
      %8705 = vmatpush1.bf16.msra.mxu0 %v8198
      %8706 = vmatprep.subr.bf16.mxu0 %v8203
      %8707 = vmatpush1.bf16.msra.mxu0 %v8202
      %8708 = vmatprep.subr.bf16.mxu0 %v8207
      %8709 = vmatpush1.bf16.msra.mxu0 %v8206
      %8710 = vmatprep.subr.bf16.mxu0 %v8211
      %8711 = vmatpush1.bf16.msra.mxu0 %v8210
      %8712 = vmatprep.subr.bf16.mxu0 %v8215
      %8713 = vmatpush1.bf16.msra.mxu0 %v8214
      %8714 = vmatprep.subr.bf16.mxu0 %v8219
      %8715 = vmatpush1.bf16.msra.mxu0 %v8218
      %8716 = vmatprep.subr.bf16.mxu0 %v8223
      %8717 = vmatpush1.bf16.msra.mxu0 %v8222
      %8718 = vmatprep.subr.bf16.mxu0 %v8227
      %8719 = vmatpush1.bf16.msra.mxu0 %v8226
      %8720 = vmatprep.subr.bf16.mxu0 %v8231
      %8721 = vmatpush1.bf16.msra.mxu0 %v8230
      %8722 = vmatprep.subr.bf16.mxu0 %v8235
      %8723 = vmatpush1.bf16.msra.mxu0 %v8234
      %8724 = vmatprep.subr.bf16.mxu0 %v8239
      %8725 = vmatpush1.bf16.msra.mxu0 %v8238
      %8726 = vmatprep.subr.bf16.mxu0 %v8243
      %8727 = vmatpush1.bf16.msra.mxu0 %v8242
      %8728 = vmatprep.subr.bf16.mxu0 %v8247
      %8729 = vmatpush1.bf16.msra.mxu0 %v8246
      %8730 = vmatprep.mubr.bf16.mxu0 %v7147
      %8731 = vmatmul.mubr.bf16.gmra.mrb[0].mxu0 %v7146
      %v8732 = vpop.f32.mrb[0].mxu0
      %v8733 = vadd.f32 0.0, %v8732
      %v8734 = vpop.f32.mrb[0].mxu0
      %v8735 = vadd.f32 0.0, %v8734
      %v8736 = vpop.f32.mrb[0].mxu0
      %v8737 = vpop.f32.mrb[0].mxu0
      %8738 = vdwg.mxu0
      %8739 = vmatprep.subr.bf16.mxu0 %v8251
      %8740 = vmatpush1.bf16.msra.mxu0 %v8250
      %8741 = vmatprep.subr.bf16.mxu0 %v8255
      %8742 = vmatpush1.bf16.msra.mxu0 %v8254
      %8743 = vmatprep.subr.bf16.mxu0 %v8259
      %8744 = vmatpush1.bf16.msra.mxu0 %v8258
      %8745 = vmatprep.subr.bf16.mxu0 %v8263
      %8746 = vmatpush1.bf16.msra.mxu0 %v8262
      %8747 = vmatprep.subr.bf16.mxu0 %v8267
      %8748 = vmatpush1.bf16.msra.mxu0 %v8266
      %8749 = vmatprep.subr.bf16.mxu0 %v8271
      %8750 = vmatpush1.bf16.msra.mxu0 %v8270
      %8751 = vmatprep.subr.bf16.mxu0 %v8275
      %8752 = vmatpush1.bf16.msra.mxu0 %v8274
      %8753 = vmatprep.subr.bf16.mxu0 %v8279
      %8754 = vmatpush1.bf16.msra.mxu0 %v8278
      %8755 = vmatprep.subr.bf16.mxu0 %v8283
      %8756 = vmatpush1.bf16.msra.mxu0 %v8282
      %8757 = vmatprep.subr.bf16.mxu0 %v8287
      %8758 = vmatpush1.bf16.msra.mxu0 %v8286
      %8759 = vmatprep.subr.bf16.mxu0 %v8291
      %8760 = vmatpush1.bf16.msra.mxu0 %v8290
      %8761 = vmatprep.subr.bf16.mxu0 %v8295
      %8762 = vmatpush1.bf16.msra.mxu0 %v8294
      %8763 = vmatprep.subr.bf16.mxu0 %v8299
      %8764 = vmatpush1.bf16.msra.mxu0 %v8298
      %8765 = vmatprep.subr.bf16.mxu0 %v8303
      %8766 = vmatpush1.bf16.msra.mxu0 %v8302
      %8767 = vmatprep.subr.bf16.mxu0 %v8307
      %8768 = vmatpush1.bf16.msra.mxu0 %v8306
      %8769 = vmatprep.subr.bf16.mxu0 %v8311
      %8770 = vmatpush1.bf16.msra.mxu0 %v8310
      %8771 = vmatprep.mubr.bf16.mxu0 %v7151
      %8772 = vmatmul.mubr.bf16.gmra.mrb[0].mxu0 %v7150
      %v8773 = vpop.f32.mrb[0].mxu0
      %v8774 = vadd.f32 %v8733, %v8773
      %v8775 = vpop.f32.mrb[0].mxu0
      %v8776 = vadd.f32 %v8735, %v8775
      %v8777 = vpop.f32.mrb[0].mxu0
      %v8778 = vpop.f32.mrb[0].mxu0
      %8779 = vdwg.mxu0
      %8780 = vmatprep.subr.bf16.mxu0 %v8315
      %8781 = vmatpush1.bf16.msra.mxu0 %v8314
      %8782 = vmatprep.subr.bf16.mxu0 %v8319
      %8783 = vmatpush1.bf16.msra.mxu0 %v8318
      %8784 = vmatprep.subr.bf16.mxu0 %v8323
      %8785 = vmatpush1.bf16.msra.mxu0 %v8322
      %8786 = vmatprep.subr.bf16.mxu0 %v8327
      %8787 = vmatpush1.bf16.msra.mxu0 %v8326
      %8788 = vmatprep.subr.bf16.mxu0 %v8331
      %8789 = vmatpush1.bf16.msra.mxu0 %v8330
      %8790 = vmatprep.subr.bf16.mxu0 %v8335
      %8791 = vmatpush1.bf16.msra.mxu0 %v8334
      %8792 = vmatprep.subr.bf16.mxu0 %v8339
      %8793 = vmatpush1.bf16.msra.mxu0 %v8338
      %8794 = vmatprep.subr.bf16.mxu0 %v8343
      %8795 = vmatpush1.bf16.msra.mxu0 %v8342
      %8796 = vmatprep.subr.bf16.mxu0 %v8347
      %8797 = vmatpush1.bf16.msra.mxu0 %v8346
      %8798 = vmatprep.subr.bf16.mxu0 %v8351
      %8799 = vmatpush1.bf16.msra.mxu0 %v8350
      %8800 = vmatprep.subr.bf16.mxu0 %v8355
      %8801 = vmatpush1.bf16.msra.mxu0 %v8354
      %8802 = vmatprep.subr.bf16.mxu0 %v8359
      %8803 = vmatpush1.bf16.msra.mxu0 %v8358
      %8804 = vmatprep.subr.bf16.mxu0 %v8363
      %8805 = vmatpush1.bf16.msra.mxu0 %v8362
      %8806 = vmatprep.subr.bf16.mxu0 %v8367
      %8807 = vmatpush1.bf16.msra.mxu0 %v8366
      %8808 = vmatprep.subr.bf16.mxu0 %v8371
      %8809 = vmatpush1.bf16.msra.mxu0 %v8370
      %8810 = vmatprep.subr.bf16.mxu0 %v8375
      %8811 = vmatpush1.bf16.msra.mxu0 %v8374
      %8812 = vmatprep.mubr.bf16.mxu0 %v7155
      %8813 = vmatmul.mubr.bf16.gmra.mrb[0].mxu0 %v7154
      %v8814 = vpop.f32.mrb[0].mxu0
      %v8815 = vadd.f32 %v8774, %v8814
      %v8816 = vpop.f32.mrb[0].mxu0
      %v8817 = vadd.f32 %v8776, %v8816
      %v8818 = vpop.f32.mrb[0].mxu0
      %v8819 = vpop.f32.mrb[0].mxu0
      %8820 = vdwg.mxu0
      %8821 = vmatprep.subr.bf16.mxu0 %v8379
      %8822 = vmatpush1.bf16.msra.mxu0 %v8378
      %8823 = vmatprep.subr.bf16.mxu0 %v8383
      %8824 = vmatpush1.bf16.msra.mxu0 %v8382
      %8825 = vmatprep.subr.bf16.mxu0 %v8387
      %8826 = vmatpush1.bf16.msra.mxu0 %v8386
      %8827 = vmatprep.subr.bf16.mxu0 %v8391
      %8828 = vmatpush1.bf16.msra.mxu0 %v8390
      %8829 = vmatprep.subr.bf16.mxu0 %v8395
      %8830 = vmatpush1.bf16.msra.mxu0 %v8394
      %8831 = vmatprep.subr.bf16.mxu0 %v8399
      %8832 = vmatpush1.bf16.msra.mxu0 %v8398
      %8833 = vmatprep.subr.bf16.mxu0 %v8403
      %8834 = vmatpush1.bf16.msra.mxu0 %v8402
      %8835 = vmatprep.subr.bf16.mxu0 %v8407
      %8836 = vmatpush1.bf16.msra.mxu0 %v8406
      %8837 = vmatprep.subr.bf16.mxu0 %v8411
      %8838 = vmatpush1.bf16.msra.mxu0 %v8410
      %8839 = vmatprep.subr.bf16.mxu0 %v8415
      %8840 = vmatpush1.bf16.msra.mxu0 %v8414
      %8841 = vmatprep.subr.bf16.mxu0 %v8419
      %8842 = vmatpush1.bf16.msra.mxu0 %v8418
      %8843 = vmatprep.subr.bf16.mxu0 %v8423
      %8844 = vmatpush1.bf16.msra.mxu0 %v8422
      %8845 = vmatprep.subr.bf16.mxu0 %v8427
      %8846 = vmatpush1.bf16.msra.mxu0 %v8426
      %8847 = vmatprep.subr.bf16.mxu0 %v8431
      %8848 = vmatpush1.bf16.msra.mxu0 %v8430
      %8849 = vmatprep.subr.bf16.mxu0 %v8435
      %8850 = vmatpush1.bf16.msra.mxu0 %v8434
      %8851 = vmatprep.subr.bf16.mxu0 %v8439
      %8852 = vmatpush1.bf16.msra.mxu0 %v8438
      %8853 = vmatprep.mubr.bf16.mxu0 %v7159
      %8854 = vmatmul.mubr.bf16.gmra.mrb[0].mxu0 %v7158
      %v8855 = vpop.f32.mrb[0].mxu0
      %v8856 = vadd.f32 %v8815, %v8855
      %v8857 = vpop.f32.mrb[0].mxu0
      %v8858 = vadd.f32 %v8817, %v8857
      %v8859 = vpop.f32.mrb[0].mxu0
      %v8860 = vpop.f32.mrb[0].mxu0
      %8861 = vdwg.mxu0
      %8862 = vmatprep.subr.bf16.mxu0 %v8189
      %8863 = vmatpush1.bf16.msra.mxu0 %v8188
      %8864 = vmatprep.subr.bf16.mxu0 %v8193
      %8865 = vmatpush1.bf16.msra.mxu0 %v8192
      %8866 = vmatprep.subr.bf16.mxu0 %v8197
      %8867 = vmatpush1.bf16.msra.mxu0 %v8196
      %8868 = vmatprep.subr.bf16.mxu0 %v8201
      %8869 = vmatpush1.bf16.msra.mxu0 %v8200
      %8870 = vmatprep.subr.bf16.mxu0 %v8205
      %8871 = vmatpush1.bf16.msra.mxu0 %v8204
      %8872 = vmatprep.subr.bf16.mxu0 %v8209
      %8873 = vmatpush1.bf16.msra.mxu0 %v8208
      %8874 = vmatprep.subr.bf16.mxu0 %v8213
      %8875 = vmatpush1.bf16.msra.mxu0 %v8212
      %8876 = vmatprep.subr.bf16.mxu0 %v8217
      %8877 = vmatpush1.bf16.msra.mxu0 %v8216
      %8878 = vmatprep.subr.bf16.mxu0 %v8221
      %8879 = vmatpush1.bf16.msra.mxu0 %v8220
      %8880 = vmatprep.subr.bf16.mxu0 %v8225
      %8881 = vmatpush1.bf16.msra.mxu0 %v8224
      %8882 = vmatprep.subr.bf16.mxu0 %v8229
      %8883 = vmatpush1.bf16.msra.mxu0 %v8228
      %8884 = vmatprep.subr.bf16.mxu0 %v8233
      %8885 = vmatpush1.bf16.msra.mxu0 %v8232
      %8886 = vmatprep.subr.bf16.mxu0 %v8237
      %8887 = vmatpush1.bf16.msra.mxu0 %v8236
      %8888 = vmatprep.subr.bf16.mxu0 %v8241
      %8889 = vmatpush1.bf16.msra.mxu0 %v8240
      %8890 = vmatprep.subr.bf16.mxu0 %v8245
      %8891 = vmatpush1.bf16.msra.mxu0 %v8244
      %8892 = vmatprep.subr.bf16.mxu0 %v8249
      %8893 = vmatpush1.bf16.msra.mxu0 %v8248
      %8894 = vmatprep.mubr.bf16.mxu0 %v7147
      %8895 = vmatmul.mubr.bf16.gmra.mrb[0].mxu0 %v7146
      %v8896 = vpop.f32.mrb[0].mxu0
      %v8897 = vadd.f32 0.0, %v8896
      %v8898 = vpop.f32.mrb[0].mxu0
      %v8899 = vadd.f32 0.0, %v8898
      %v8900 = vpop.f32.mrb[0].mxu0
      %v8901 = vpop.f32.mrb[0].mxu0
      %8902 = vdwg.mxu0
      %8903 = vmatprep.subr.bf16.mxu0 %v8253
      %8904 = vmatpush1.bf16.msra.mxu0 %v8252
      %8905 = vmatprep.subr.bf16.mxu0 %v8257
      %8906 = vmatpush1.bf16.msra.mxu0 %v8256
      %8907 = vmatprep.subr.bf16.mxu0 %v8261
      %8908 = vmatpush1.bf16.msra.mxu0 %v8260
      %8909 = vmatprep.subr.bf16.mxu0 %v8265
      %8910 = vmatpush1.bf16.msra.mxu0 %v8264
      %8911 = vmatprep.subr.bf16.mxu0 %v8269
      %8912 = vmatpush1.bf16.msra.mxu0 %v8268
      %8913 = vmatprep.subr.bf16.mxu0 %v8273
      %8914 = vmatpush1.bf16.msra.mxu0 %v8272
      %8915 = vmatprep.subr.bf16.mxu0 %v8277
      %8916 = vmatpush1.bf16.msra.mxu0 %v8276
      %8917 = vmatprep.subr.bf16.mxu0 %v8281
      %8918 = vmatpush1.bf16.msra.mxu0 %v8280
      %8919 = vmatprep.subr.bf16.mxu0 %v8285
      %8920 = vmatpush1.bf16.msra.mxu0 %v8284
      %8921 = vmatprep.subr.bf16.mxu0 %v8289
      %8922 = vmatpush1.bf16.msra.mxu0 %v8288
      %8923 = vmatprep.subr.bf16.mxu0 %v8293
      %8924 = vmatpush1.bf16.msra.mxu0 %v8292
      %8925 = vmatprep.subr.bf16.mxu0 %v8297
      %8926 = vmatpush1.bf16.msra.mxu0 %v8296
      %8927 = vmatprep.subr.bf16.mxu0 %v8301
      %8928 = vmatpush1.bf16.msra.mxu0 %v8300
      %8929 = vmatprep.subr.bf16.mxu0 %v8305
      %8930 = vmatpush1.bf16.msra.mxu0 %v8304
      %8931 = vmatprep.subr.bf16.mxu0 %v8309
      %8932 = vmatpush1.bf16.msra.mxu0 %v8308
      %8933 = vmatprep.subr.bf16.mxu0 %v8313
      %8934 = vmatpush1.bf16.msra.mxu0 %v8312
      %8935 = vmatprep.mubr.bf16.mxu0 %v7151
      %8936 = vmatmul.mubr.bf16.gmra.mrb[0].mxu0 %v7150
      %v8937 = vpop.f32.mrb[0].mxu0
      %v8938 = vadd.f32 %v8897, %v8937
      %v8939 = vpop.f32.mrb[0].mxu0
      %v8940 = vadd.f32 %v8899, %v8939
      %v8941 = vpop.f32.mrb[0].mxu0
      %v8942 = vpop.f32.mrb[0].mxu0
      %8943 = vdwg.mxu0
      %8944 = vmatprep.subr.bf16.mxu0 %v8317
      %8945 = vmatpush1.bf16.msra.mxu0 %v8316
      %8946 = vmatprep.subr.bf16.mxu0 %v8321
      %8947 = vmatpush1.bf16.msra.mxu0 %v8320
      %8948 = vmatprep.subr.bf16.mxu0 %v8325
      %8949 = vmatpush1.bf16.msra.mxu0 %v8324
      %8950 = vmatprep.subr.bf16.mxu0 %v8329
      %8951 = vmatpush1.bf16.msra.mxu0 %v8328
      %8952 = vmatprep.subr.bf16.mxu0 %v8333
      %8953 = vmatpush1.bf16.msra.mxu0 %v8332
      %8954 = vmatprep.subr.bf16.mxu0 %v8337
      %8955 = vmatpush1.bf16.msra.mxu0 %v8336
      %8956 = vmatprep.subr.bf16.mxu0 %v8341
      %8957 = vmatpush1.bf16.msra.mxu0 %v8340
      %8958 = vmatprep.subr.bf16.mxu0 %v8345
      %8959 = vmatpush1.bf16.msra.mxu0 %v8344
      %8960 = vmatprep.subr.bf16.mxu0 %v8349
      %8961 = vmatpush1.bf16.msra.mxu0 %v8348
      %8962 = vmatprep.subr.bf16.mxu0 %v8353
      %8963 = vmatpush1.bf16.msra.mxu0 %v8352
      %8964 = vmatprep.subr.bf16.mxu0 %v8357
      %8965 = vmatpush1.bf16.msra.mxu0 %v8356
      %8966 = vmatprep.subr.bf16.mxu0 %v8361
      %8967 = vmatpush1.bf16.msra.mxu0 %v8360
      %8968 = vmatprep.subr.bf16.mxu0 %v8365
      %8969 = vmatpush1.bf16.msra.mxu0 %v8364
      %8970 = vmatprep.subr.bf16.mxu0 %v8369
      %8971 = vmatpush1.bf16.msra.mxu0 %v8368
      %8972 = vmatprep.subr.bf16.mxu0 %v8373
      %8973 = vmatpush1.bf16.msra.mxu0 %v8372
      %8974 = vmatprep.subr.bf16.mxu0 %v8377
      %8975 = vmatpush1.bf16.msra.mxu0 %v8376
      %8976 = vmatprep.mubr.bf16.mxu0 %v7155
      %8977 = vmatmul.mubr.bf16.gmra.mrb[0].mxu0 %v7154
      %v8978 = vpop.f32.mrb[0].mxu0
      %v8979 = vadd.f32 %v8938, %v8978
      %v8980 = vpop.f32.mrb[0].mxu0
      %v8981 = vadd.f32 %v8940, %v8980
      %v8982 = vpop.f32.mrb[0].mxu0
      %v8983 = vpop.f32.mrb[0].mxu0
      %8984 = vdwg.mxu0
      %8985 = vmatprep.subr.bf16.mxu0 %v8381
      %8986 = vmatpush1.bf16.msra.mxu0 %v8380
      %8987 = vmatprep.subr.bf16.mxu0 %v8385
      %8988 = vmatpush1.bf16.msra.mxu0 %v8384
      %8989 = vmatprep.subr.bf16.mxu0 %v8389
      %8990 = vmatpush1.bf16.msra.mxu0 %v8388
      %8991 = vmatprep.subr.bf16.mxu0 %v8393
      %8992 = vmatpush1.bf16.msra.mxu0 %v8392
      %8993 = vmatprep.subr.bf16.mxu0 %v8397
      %8994 = vmatpush1.bf16.msra.mxu0 %v8396
      %8995 = vmatprep.subr.bf16.mxu0 %v8401
      %8996 = vmatpush1.bf16.msra.mxu0 %v8400
      %8997 = vmatprep.subr.bf16.mxu0 %v8405
      %8998 = vmatpush1.bf16.msra.mxu0 %v8404
      %8999 = vmatprep.subr.bf16.mxu0 %v8409
      %9000 = vmatpush1.bf16.msra.mxu0 %v8408
      %9001 = vmatprep.subr.bf16.mxu0 %v8413
      %9002 = vmatpush1.bf16.msra.mxu0 %v8412
      %9003 = vmatprep.subr.bf16.mxu0 %v8417
      %9004 = vmatpush1.bf16.msra.mxu0 %v8416
      %9005 = vmatprep.subr.bf16.mxu0 %v8421
      %9006 = vmatpush1.bf16.msra.mxu0 %v8420
      %9007 = vmatprep.subr.bf16.mxu0 %v8425
      %9008 = vmatpush1.bf16.msra.mxu0 %v8424
      %9009 = vmatprep.subr.bf16.mxu0 %v8429
      %9010 = vmatpush1.bf16.msra.mxu0 %v8428
      %9011 = vmatprep.subr.bf16.mxu0 %v8433
      %9012 = vmatpush1.bf16.msra.mxu0 %v8432
      %9013 = vmatprep.subr.bf16.mxu0 %v8437
      %9014 = vmatpush1.bf16.msra.mxu0 %v8436
      %9015 = vmatprep.subr.bf16.mxu0 %v8441
      %9016 = vmatpush1.bf16.msra.mxu0 %v8440
      %9017 = vmatprep.mubr.bf16.mxu0 %v7159
      %9018 = vmatmul.mubr.bf16.gmra.mrb[0].mxu0 %v7158
      %v9019 = vpop.f32.mrb[0].mxu0
      %v9020 = vadd.f32 %v8979, %v9019
      %v9021 = vpop.f32.mrb[0].mxu0
      %v9022 = vadd.f32 %v8981, %v9021
      %v9023 = vpop.f32.mrb[0].mxu0
      %v9024 = vpop.f32.mrb[0].mxu0
      %9025 = vdwg.mxu0
      %v9026 = vld [vmem:[%s41] sm:$0xf]
      %v9028 = vlaneseq
      %v9029 = vshrl.u32 %v9028, 7
      %v9030 = vsub.s32 0, %v9029
      %v9031 = vrot.slane %v9026, %v9030
      %v9032 = vlaneseq
      %v9033 = vshrl.u32 %v9032, 7
      %v9034 = vsub.s32 1, %v9033
      %v9035 = vrot.slane %v9026, %v9034
      %v9036 = vlaneseq
      %v9037 = vshrl.u32 %v9036, 7
      %v9038 = vsub.s32 2, %v9037
      %v9039 = vrot.slane %v9026, %v9038
      %v9040 = vlaneseq
      %v9041 = vshrl.u32 %v9040, 7
      %v9042 = vsub.s32 3, %v9041
      %v9043 = vrot.slane %v9026, %v9042
      %v9048 = vmul.f32 %v8856, %v9031
      %v9049 = vmul.f32 %v8858, %v9035
      %v9050 = vmul.f32 %v9020, %v9039
      %v9051 = vmul.f32 %v9022, %v9043
      %v9052 = vld [vmem:[%s43] sm:$0xf]
      %v9054 = vlaneseq
      %v9055 = vshrl.u32 %v9054, 7
      %v9056 = vsub.s32 0, %v9055
      %v9057 = vrot.slane %v9052, %v9056
      %v9058 = vlaneseq
      %v9059 = vshrl.u32 %v9058, 7
      %v9060 = vsub.s32 1, %v9059
      %v9061 = vrot.slane %v9052, %v9060
      %v9062 = vlaneseq
      %v9063 = vshrl.u32 %v9062, 7
      %v9064 = vsub.s32 2, %v9063
      %v9065 = vrot.slane %v9052, %v9064
      %v9066 = vlaneseq
      %v9067 = vshrl.u32 %v9066, 7
      %v9068 = vsub.s32 3, %v9067
      %v9069 = vrot.slane %v9052, %v9068
      %v9074 = vadd.f32 %v9048, %v9057
      %v9075 = vadd.f32 %v9049, %v9061
      %v9076 = vadd.f32 %v9050, %v9065
      %v9077 = vadd.f32 %v9051, %v9069
      %v9078 = vmax.f32 %v9074, 0.0
      %v9079 = vmax.f32 %v9075, 0.0
      %v9080 = vmax.f32 %v9076, 0.0
      %v9081 = vmax.f32 %v9077, 0.0
      %v9082 = vpack.c.bf16 %v9078, %v9078
      %v9083 = vpack.c.bf16 %v9079, %v9079
      %v9084 = vpack.c.bf16 %v9080, %v9080
      %v9085 = vpack.c.bf16 %v9081, %v9081
      %v9086 = vld [vmem:[%s45] sm:$0xf]
      %v9087 = vld [vmem:[%s45 + $0x4] sm:$0xf]
      %s9088 = scalar_lea.vmem %s45, 8
      %v9089 = vld [vmem:[%s9088] sm:$0xf]
      %v9090 = vld [vmem:[%s9088 + $0x4] sm:$0xf]
      %v9093 = vunpack.c.l.b16 %v9089
      %v9094 = vunpack.c.l.b16 %v9090
      %v9095 = vpack.c.b16 %v9094, %v9093
      %v9097 = vsel %vm7092, %v9095, 0
      %v9100 = vsel %vm7096, %v9083, 0
      %9102 = vmatprep.subr.bf16.mxu0 0
      %9103 = vmatpush1.bf16.msra.mxu0 %v9100
      %9104 = vmatprep.subr.bf16.mxu0 0
      %9105 = vmatpush1.bf16.msra.mxu0 0
      %9106 = vmatprep.subr.bf16.mxu0 0
      %9107 = vmatpush1.bf16.msra.mxu0 0
      %9108 = vmatprep.subr.bf16.mxu0 0
      %9109 = vmatpush1.bf16.msra.mxu0 0
      %9110 = vmatprep.subr.bf16.mxu0 0
      %9111 = vmatpush1.bf16.msra.mxu0 0
      %9112 = vmatprep.subr.bf16.mxu0 0
      %9113 = vmatpush1.bf16.msra.mxu0 0
      %9114 = vmatprep.subr.bf16.mxu0 0
      %9115 = vmatpush1.bf16.msra.mxu0 0
      %9116 = vmatprep.subr.bf16.mxu0 0
      %9117 = vmatpush1.bf16.msra.mxu0 0
      %9118 = vmatprep.subr.bf16.mxu0 0
      %9119 = vmatpush1.bf16.msra.mxu0 0
      %9120 = vmatprep.subr.bf16.mxu0 0
      %9121 = vmatpush1.bf16.msra.mxu0 0
      %9122 = vmatprep.subr.bf16.mxu0 0
      %9123 = vmatpush1.bf16.msra.mxu0 0
      %9124 = vmatprep.subr.bf16.mxu0 0
      %9125 = vmatpush1.bf16.msra.mxu0 0
      %9126 = vmatprep.subr.bf16.mxu0 0
      %9127 = vmatpush1.bf16.msra.mxu0 0
      %9128 = vmatprep.subr.bf16.mxu0 0
      %9129 = vmatpush1.bf16.msra.mxu0 0
      %9130 = vmatprep.subr.bf16.mxu0 0
      %9131 = vmatpush1.bf16.msra.mxu0 0
      %9132 = vmatprep.subr.bf16.mxu0 0
      %9133 = vmatpush1.bf16.msra.mxu0 0
      %9134 = vmatprep.mubr.bf16.mxu0 0
      %9135 = vmatmul.mubr.bf16.gmra.mrb[0].mxu0 %v9097
      %v9136 = vpop.f32.mrb[0].mxu0
      %v9137 = vadd.f32 0.0, %v9136
      %v9138 = vpop.f32.mrb[0].mxu0
      %v9139 = vpop.f32.mrb[0].mxu0
      %v9140 = vadd.f32 0.0, %v9139
      %v9141 = vpop.f32.mrb[0].mxu0
      %9142 = vdwg.mxu0
      %v9145 = vunpack.c.l.b16 %v9086
      %v9146 = vunpack.c.l.b16 %v9087
      %v9147 = vpack.c.b16 %v9146, %v9145
      %v9149 = vsel %vm7092, %v9147, 0
      %v9152 = vsel %vm7096, %v9082, 0
      %9154 = vmatprep.subr.bf16.mxu0 0
      %9155 = vmatpush1.bf16.msra.mxu0 %v9152
      %9156 = vmatprep.subr.bf16.mxu0 0
      %9157 = vmatpush1.bf16.msra.mxu0 0
      %9158 = vmatprep.subr.bf16.mxu0 0
      %9159 = vmatpush1.bf16.msra.mxu0 0
      %9160 = vmatprep.subr.bf16.mxu0 0
      %9161 = vmatpush1.bf16.msra.mxu0 0
      %9162 = vmatprep.subr.bf16.mxu0 0
      %9163 = vmatpush1.bf16.msra.mxu0 0
      %9164 = vmatprep.subr.bf16.mxu0 0
      %9165 = vmatpush1.bf16.msra.mxu0 0
      %9166 = vmatprep.subr.bf16.mxu0 0
      %9167 = vmatpush1.bf16.msra.mxu0 0
      %9168 = vmatprep.subr.bf16.mxu0 0
      %9169 = vmatpush1.bf16.msra.mxu0 0
      %9170 = vmatprep.subr.bf16.mxu0 0
      %9171 = vmatpush1.bf16.msra.mxu0 0
      %9172 = vmatprep.subr.bf16.mxu0 0
      %9173 = vmatpush1.bf16.msra.mxu0 0
      %9174 = vmatprep.subr.bf16.mxu0 0
      %9175 = vmatpush1.bf16.msra.mxu0 0
      %9176 = vmatprep.subr.bf16.mxu0 0
      %9177 = vmatpush1.bf16.msra.mxu0 0
      %9178 = vmatprep.subr.bf16.mxu0 0
      %9179 = vmatpush1.bf16.msra.mxu0 0
      %9180 = vmatprep.subr.bf16.mxu0 0
      %9181 = vmatpush1.bf16.msra.mxu0 0
      %9182 = vmatprep.subr.bf16.mxu0 0
      %9183 = vmatpush1.bf16.msra.mxu0 0
      %9184 = vmatprep.subr.bf16.mxu0 0
      %9185 = vmatpush1.bf16.msra.mxu0 0
      %9186 = vmatprep.mubr.bf16.mxu0 0
      %9187 = vmatmul.mubr.bf16.gmra.mrb[0].mxu0 %v9149
      %v9188 = vpop.f32.mrb[0].mxu0
      %v9189 = vadd.f32 %v9137, %v9188
      %v9190 = vpop.f32.mrb[0].mxu0
      %v9191 = vpop.f32.mrb[0].mxu0
      %v9192 = vadd.f32 %v9140, %v9191
      %v9193 = vpop.f32.mrb[0].mxu0
      %9194 = vdwg.mxu0
      %s9195 = scalar_lea.vmem %s45, 16
      %v9196 = vld [vmem:[%s9195] sm:$0xf]
      %v9197 = vld [vmem:[%s9195 + $0x4] sm:$0xf]
      %v9200 = vunpack.c.l.b16 %v9196
      %v9201 = vunpack.c.l.b16 %v9197
      %v9202 = vpack.c.b16 %v9201, %v9200
      %v9204 = vsel %vm7092, %v9202, 0
      %v9207 = vsel %vm7096, %v9084, 0
      %9209 = vmatprep.subr.bf16.mxu0 0
      %9210 = vmatpush1.bf16.msra.mxu0 %v9207
      %9211 = vmatprep.subr.bf16.mxu0 0
      %9212 = vmatpush1.bf16.msra.mxu0 0
      %9213 = vmatprep.subr.bf16.mxu0 0
      %9214 = vmatpush1.bf16.msra.mxu0 0
      %9215 = vmatprep.subr.bf16.mxu0 0
      %9216 = vmatpush1.bf16.msra.mxu0 0
      %9217 = vmatprep.subr.bf16.mxu0 0
      %9218 = vmatpush1.bf16.msra.mxu0 0
      %9219 = vmatprep.subr.bf16.mxu0 0
      %9220 = vmatpush1.bf16.msra.mxu0 0
      %9221 = vmatprep.subr.bf16.mxu0 0
      %9222 = vmatpush1.bf16.msra.mxu0 0
      %9223 = vmatprep.subr.bf16.mxu0 0
      %9224 = vmatpush1.bf16.msra.mxu0 0
      %9225 = vmatprep.subr.bf16.mxu0 0
      %9226 = vmatpush1.bf16.msra.mxu0 0
      %9227 = vmatprep.subr.bf16.mxu0 0
      %9228 = vmatpush1.bf16.msra.mxu0 0
      %9229 = vmatprep.subr.bf16.mxu0 0
      %9230 = vmatpush1.bf16.msra.mxu0 0
      %9231 = vmatprep.subr.bf16.mxu0 0
      %9232 = vmatpush1.bf16.msra.mxu0 0
      %9233 = vmatprep.subr.bf16.mxu0 0
      %9234 = vmatpush1.bf16.msra.mxu0 0
      %9235 = vmatprep.subr.bf16.mxu0 0
      %9236 = vmatpush1.bf16.msra.mxu0 0
      %9237 = vmatprep.subr.bf16.mxu0 0
      %9238 = vmatpush1.bf16.msra.mxu0 0
      %9239 = vmatprep.subr.bf16.mxu0 0
      %9240 = vmatpush1.bf16.msra.mxu0 0
      %9241 = vmatprep.mubr.bf16.mxu0 0
      %9242 = vmatmul.mubr.bf16.gmra.mrb[0].mxu0 %v9204
      %v9243 = vpop.f32.mrb[0].mxu0
      %v9244 = vadd.f32 0.0, %v9243
      %v9245 = vpop.f32.mrb[0].mxu0
      %v9246 = vpop.f32.mrb[0].mxu0
      %v9247 = vadd.f32 0.0, %v9246
      %v9248 = vpop.f32.mrb[0].mxu0
      %9249 = vdwg.mxu0
      %v9250 = vadd.f32 %v9189, %v9244
      %v9251 = vadd.f32 %v9192, %v9247
      %s9252 = scalar_lea.vmem %s45, 24
      %v9253 = vld [vmem:[%s9252] sm:$0xf]
      %v9254 = vld [vmem:[%s9252 + $0x4] sm:$0xf]
      %v9257 = vunpack.c.l.b16 %v9253
      %v9258 = vunpack.c.l.b16 %v9254
      %v9259 = vpack.c.b16 %v9258, %v9257
      %v9261 = vsel %vm7092, %v9259, 0
      %v9264 = vsel %vm7096, %v9085, 0
      %9266 = vmatprep.subr.bf16.mxu0 0
      %9267 = vmatpush1.bf16.msra.mxu0 %v9264
      %9268 = vmatprep.subr.bf16.mxu0 0
      %9269 = vmatpush1.bf16.msra.mxu0 0
      %9270 = vmatprep.subr.bf16.mxu0 0
      %9271 = vmatpush1.bf16.msra.mxu0 0
      %9272 = vmatprep.subr.bf16.mxu0 0
      %9273 = vmatpush1.bf16.msra.mxu0 0
      %9274 = vmatprep.subr.bf16.mxu0 0
      %9275 = vmatpush1.bf16.msra.mxu0 0
      %9276 = vmatprep.subr.bf16.mxu0 0
      %9277 = vmatpush1.bf16.msra.mxu0 0
      %9278 = vmatprep.subr.bf16.mxu0 0
      %9279 = vmatpush1.bf16.msra.mxu0 0
      %9280 = vmatprep.subr.bf16.mxu0 0
      %9281 = vmatpush1.bf16.msra.mxu0 0
      %9282 = vmatprep.subr.bf16.mxu0 0
      %9283 = vmatpush1.bf16.msra.mxu0 0
      %9284 = vmatprep.subr.bf16.mxu0 0
      %9285 = vmatpush1.bf16.msra.mxu0 0
      %9286 = vmatprep.subr.bf16.mxu0 0
      %9287 = vmatpush1.bf16.msra.mxu0 0
      %9288 = vmatprep.subr.bf16.mxu0 0
      %9289 = vmatpush1.bf16.msra.mxu0 0
      %9290 = vmatprep.subr.bf16.mxu0 0
      %9291 = vmatpush1.bf16.msra.mxu0 0
      %9292 = vmatprep.subr.bf16.mxu0 0
      %9293 = vmatpush1.bf16.msra.mxu0 0
      %9294 = vmatprep.subr.bf16.mxu0 0
      %9295 = vmatpush1.bf16.msra.mxu0 0
      %9296 = vmatprep.subr.bf16.mxu0 0
      %9297 = vmatpush1.bf16.msra.mxu0 0
      %9298 = vmatprep.mubr.bf16.mxu0 0
      %9299 = vmatmul.mubr.bf16.gmra.mrb[0].mxu0 %v9261
      %v9300 = vpop.f32.mrb[0].mxu0
      %v9301 = vadd.f32 0.0, %v9300
      %v9302 = vpop.f32.mrb[0].mxu0
      %v9303 = vpop.f32.mrb[0].mxu0
      %v9304 = vadd.f32 0.0, %v9303
      %v9305 = vpop.f32.mrb[0].mxu0
      %9306 = vdwg.mxu0
      %v9307 = vadd.f32 %v9250, %v9301
      %v9308 = vadd.f32 %v9251, %v9304
      %v9309 = vpack.c.bf16 %v9308, %v9307
      %v9310 = vld [vmem:[%s47] sm:$0xf]
      %v9311 = vld [vmem:[%s47 + $0x4] sm:$0xf]
      %v9312 = vld [vmem:[%s47 + $0x8] sm:$0xf]
      %v9313 = vld [vmem:[%s47 + $0xc] sm:$0xf]
      %v9314 = vld [vmem:[%s47 + $0x10] sm:$0xf]
      %v9315 = vld [vmem:[%s47 + $0x14] sm:$0xf]
      %v9316 = vld [vmem:[%s47 + $0x18] sm:$0xf]
      %v9317 = vld [vmem:[%s47 + $0x1c] sm:$0xf]
      %v9326 = vunpack.c.l.b16 %v9310
      %v9327 = vunpack.c.l.b16 %v9311
      %v9328 = vunpack.c.l.b16 %v9312
      %v9329 = vunpack.c.l.b16 %v9313
      %v9330 = vunpack.c.l.b16 %v9314
      %v9331 = vunpack.c.l.b16 %v9315
      %v9332 = vunpack.c.l.b16 %v9316
      %v9333 = vunpack.c.l.b16 %v9317
      %v9334 = vpack.c.b16 %v9327, %v9326
      %v9335 = vpack.c.b16 %v9329, %v9328
      %v9336 = vpack.c.b16 %v9331, %v9330
      %v9337 = vpack.c.b16 %v9333, %v9332
      %v9339 = vsel %vm3459, %v9334, 0
      %v9342 = vsel %vm3459, %v9335, 0
      %v9345 = vsel %vm3459, %v9336, 0
      %v9348 = vsel %vm3459, %v9337, 0
      %9350 = vmatprep.subr.bf16.mxu0 0
      %9351 = vmatpush1.bf16.msra.mxu0 %v9309
      %9352 = vmatprep.subr.bf16.mxu0 0
      %9353 = vmatpush1.bf16.msra.mxu0 0
      %9354 = vmatprep.subr.bf16.mxu0 0
      %9355 = vmatpush1.bf16.msra.mxu0 0
      %9356 = vmatprep.subr.bf16.mxu0 0
      %9357 = vmatpush1.bf16.msra.mxu0 0
      %9358 = vmatprep.subr.bf16.mxu0 0
      %9359 = vmatpush1.bf16.msra.mxu0 0
      %9360 = vmatprep.subr.bf16.mxu0 0
      %9361 = vmatpush1.bf16.msra.mxu0 0
      %9362 = vmatprep.subr.bf16.mxu0 0
      %9363 = vmatpush1.bf16.msra.mxu0 0
      %9364 = vmatprep.subr.bf16.mxu0 0
      %9365 = vmatpush1.bf16.msra.mxu0 0
      %9366 = vmatprep.subr.bf16.mxu0 0
      %9367 = vmatpush1.bf16.msra.mxu0 0
      %9368 = vmatprep.subr.bf16.mxu0 0
      %9369 = vmatpush1.bf16.msra.mxu0 0
      %9370 = vmatprep.subr.bf16.mxu0 0
      %9371 = vmatpush1.bf16.msra.mxu0 0
      %9372 = vmatprep.subr.bf16.mxu0 0
      %9373 = vmatpush1.bf16.msra.mxu0 0
      %9374 = vmatprep.subr.bf16.mxu0 0
      %9375 = vmatpush1.bf16.msra.mxu0 0
      %9376 = vmatprep.subr.bf16.mxu0 0
      %9377 = vmatpush1.bf16.msra.mxu0 0
      %9378 = vmatprep.subr.bf16.mxu0 0
      %9379 = vmatpush1.bf16.msra.mxu0 0
      %9380 = vmatprep.subr.bf16.mxu0 0
      %9381 = vmatpush1.bf16.msra.mxu0 0
      %9382 = vmatprep.mubr.bf16.mxu0 0
      %9383 = vmatmul.mubr.bf16.gmra.mrb[0].mxu0 %v9339
      %v9384 = vpop.f32.mrb[0].mxu0
      %v9385 = vadd.f32 0.0, %v9384
      %v9386 = vpop.f32.mrb[0].mxu0
      %v9387 = vpop.f32.mrb[0].mxu0
      %v9388 = vadd.f32 0.0, %v9387
      %v9389 = vpop.f32.mrb[0].mxu0
      %9390 = vmatprep.mubr.bf16.mxu0 0
      %9391 = vmatmul.mubr.bf16.gmra.mrb[0].mxu0 %v9342
      %v9392 = vpop.f32.mrb[0].mxu0
      %v9393 = vadd.f32 0.0, %v9392
      %v9394 = vpop.f32.mrb[0].mxu0
      %v9395 = vpop.f32.mrb[0].mxu0
      %v9396 = vadd.f32 0.0, %v9395
      %v9397 = vpop.f32.mrb[0].mxu0
      %9398 = vmatprep.mubr.bf16.mxu0 0
      %9399 = vmatmul.mubr.bf16.gmra.mrb[0].mxu0 %v9345
      %v9400 = vpop.f32.mrb[0].mxu0
      %v9401 = vadd.f32 0.0, %v9400
      %v9402 = vpop.f32.mrb[0].mxu0
      %v9403 = vpop.f32.mrb[0].mxu0
      %v9404 = vadd.f32 0.0, %v9403
      %v9405 = vpop.f32.mrb[0].mxu0
      %9406 = vmatprep.mubr.bf16.mxu0 0
      %9407 = vmatmul.mubr.bf16.gmra.mrb[0].mxu0 %v9348
      %v9408 = vpop.f32.mrb[0].mxu0
      %v9409 = vadd.f32 0.0, %v9408
      %v9410 = vpop.f32.mrb[0].mxu0
      %v9411 = vpop.f32.mrb[0].mxu0
      %v9412 = vadd.f32 0.0, %v9411
      %v9413 = vpop.f32.mrb[0].mxu0
      %9414 = vdwg.mxu0
      %v9415 = vpack.c.bf16 %v9388, %v9385
      %v9416 = vpack.c.bf16 %v9396, %v9393
      %v9417 = vpack.c.bf16 %v9404, %v9401
      %v9418 = vpack.c.bf16 %v9412, %v9409
      %v9419 = vld [vmem:[%s49] sm:$0xff]
      %v9420 = vld [vmem:[%s49 + $0x8] sm:$0xff]
      %v9421 = vld [vmem:[%s49 + $0x10] sm:$0xff]
      %v9422 = vld [vmem:[%s49 + $0x18] sm:$0xff]
      %v9423 = vld [vmem:[%s49 + $0x20] sm:$0xff]
      %v9424 = vld [vmem:[%s49 + $0x28] sm:$0xff]
      %v9425 = vld [vmem:[%s49 + $0x30] sm:$0xff]
      %v9426 = vld [vmem:[%s49 + $0x38] sm:$0xff]
      %v9427 = vld [vmem:[%s49 + $0x40] sm:$0xff]
      %v9428 = vld [vmem:[%s49 + $0x48] sm:$0xff]
      %v9429 = vld [vmem:[%s49 + $0x50] sm:$0xff]
      %v9430 = vld [vmem:[%s49 + $0x58] sm:$0xff]
      %v9431 = vld [vmem:[%s49 + $0x60] sm:$0xff]
      %v9432 = vld [vmem:[%s49 + $0x68] sm:$0xff]
      %v9433 = vld [vmem:[%s49 + $0x70] sm:$0xff]
      %v9434 = vld [vmem:[%s49 + $0x78] sm:$0xff]
      %v9435 = vld [vmem:[%s49 + $0x80] sm:$0xff]
      %v9436 = vld [vmem:[%s49 + $0x88] sm:$0xff]
      %v9437 = vld [vmem:[%s49 + $0x90] sm:$0xff]
      %v9438 = vld [vmem:[%s49 + $0x98] sm:$0xff]
      %v9439 = vld [vmem:[%s49 + $0xa0] sm:$0xff]
      %v9440 = vld [vmem:[%s49 + $0xa8] sm:$0xff]
      %v9441 = vld [vmem:[%s49 + $0xb0] sm:$0xff]
      %v9442 = vld [vmem:[%s49 + $0xb8] sm:$0xff]
      %v9443 = vld [vmem:[%s49 + $0xc0] sm:$0xff]
      %v9444 = vld [vmem:[%s49 + $0xc8] sm:$0xff]
      %v9445 = vld [vmem:[%s49 + $0xd0] sm:$0xff]
      %v9446 = vld [vmem:[%s49 + $0xd8] sm:$0xff]
      %v9447 = vld [vmem:[%s49 + $0xe0] sm:$0xff]
      %v9448 = vld [vmem:[%s49 + $0xe8] sm:$0xff]
      %v9449 = vld [vmem:[%s49 + $0xf0] sm:$0xff]
      %v9450 = vld [vmem:[%s49 + $0xf8] sm:$0xff]
      %v9451 = vld [vmem:[%s49 + $0x100] sm:$0xff]
      %v9452 = vld [vmem:[%s49 + $0x108] sm:$0xff]
      %v9453 = vld [vmem:[%s49 + $0x110] sm:$0xff]
      %v9454 = vld [vmem:[%s49 + $0x118] sm:$0xff]
      %v9455 = vld [vmem:[%s49 + $0x120] sm:$0xff]
      %v9456 = vld [vmem:[%s49 + $0x128] sm:$0xff]
      %v9457 = vld [vmem:[%s49 + $0x130] sm:$0xff]
      %v9458 = vld [vmem:[%s49 + $0x138] sm:$0xff]
      %v9459 = vld [vmem:[%s49 + $0x140] sm:$0xff]
      %v9460 = vld [vmem:[%s49 + $0x148] sm:$0xff]
      %v9461 = vld [vmem:[%s49 + $0x150] sm:$0xff]
      %v9462 = vld [vmem:[%s49 + $0x158] sm:$0xff]
      %v9463 = vld [vmem:[%s49 + $0x160] sm:$0xff]
      %v9464 = vld [vmem:[%s49 + $0x168] sm:$0xff]
      %v9465 = vld [vmem:[%s49 + $0x170] sm:$0xff]
      %v9466 = vld [vmem:[%s49 + $0x178] sm:$0xff]
      %v9467 = vld [vmem:[%s49 + $0x180] sm:$0xff]
      %v9468 = vld [vmem:[%s49 + $0x188] sm:$0xff]
      %v9469 = vld [vmem:[%s49 + $0x190] sm:$0xff]
      %v9470 = vld [vmem:[%s49 + $0x198] sm:$0xff]
      %v9471 = vld [vmem:[%s49 + $0x1a0] sm:$0xff]
      %v9472 = vld [vmem:[%s49 + $0x1a8] sm:$0xff]
      %v9473 = vld [vmem:[%s49 + $0x1b0] sm:$0xff]
      %v9474 = vld [vmem:[%s49 + $0x1b8] sm:$0xff]
      %v9475 = vld [vmem:[%s49 + $0x1c0] sm:$0xff]
      %v9476 = vld [vmem:[%s49 + $0x1c8] sm:$0xff]
      %v9477 = vld [vmem:[%s49 + $0x1d0] sm:$0xff]
      %v9478 = vld [vmem:[%s49 + $0x1d8] sm:$0xff]
      %v9479 = vld [vmem:[%s49 + $0x1e0] sm:$0xff]
      %v9480 = vld [vmem:[%s49 + $0x1e8] sm:$0xff]
      %v9481 = vld [vmem:[%s49 + $0x1f0] sm:$0xff]
      %v9482 = vld [vmem:[%s49 + $0x1f8] sm:$0xff]
      %v9547 = vunpack.c.l.b16 %v9419
      %v9548 = vunpack.c.h.b16 %v9419
      %v9549 = vunpack.c.l.b16 %v9420
      %v9550 = vunpack.c.h.b16 %v9420
      %v9551 = vunpack.c.l.b16 %v9421
      %v9552 = vunpack.c.h.b16 %v9421
      %v9553 = vunpack.c.l.b16 %v9422
      %v9554 = vunpack.c.h.b16 %v9422
      %v9555 = vunpack.c.l.b16 %v9423
      %v9556 = vunpack.c.h.b16 %v9423
      %v9557 = vunpack.c.l.b16 %v9424
      %v9558 = vunpack.c.h.b16 %v9424
      %v9559 = vunpack.c.l.b16 %v9425
      %v9560 = vunpack.c.h.b16 %v9425
      %v9561 = vunpack.c.l.b16 %v9426
      %v9562 = vunpack.c.h.b16 %v9426
      %v9563 = vunpack.c.l.b16 %v9427
      %v9564 = vunpack.c.h.b16 %v9427
      %v9565 = vunpack.c.l.b16 %v9428
      %v9566 = vunpack.c.h.b16 %v9428
      %v9567 = vunpack.c.l.b16 %v9429
      %v9568 = vunpack.c.h.b16 %v9429
      %v9569 = vunpack.c.l.b16 %v9430
      %v9570 = vunpack.c.h.b16 %v9430
      %v9571 = vunpack.c.l.b16 %v9431
      %v9572 = vunpack.c.h.b16 %v9431
      %v9573 = vunpack.c.l.b16 %v9432
      %v9574 = vunpack.c.h.b16 %v9432
      %v9575 = vunpack.c.l.b16 %v9433
      %v9576 = vunpack.c.h.b16 %v9433
      %v9577 = vunpack.c.l.b16 %v9434
      %v9578 = vunpack.c.h.b16 %v9434
      %v9579 = vunpack.c.l.b16 %v9435
      %v9580 = vunpack.c.h.b16 %v9435
      %v9581 = vunpack.c.l.b16 %v9436
      %v9582 = vunpack.c.h.b16 %v9436
      %v9583 = vunpack.c.l.b16 %v9437
      %v9584 = vunpack.c.h.b16 %v9437
      %v9585 = vunpack.c.l.b16 %v9438
      %v9586 = vunpack.c.h.b16 %v9438
      %v9587 = vunpack.c.l.b16 %v9439
      %v9588 = vunpack.c.h.b16 %v9439
      %v9589 = vunpack.c.l.b16 %v9440
      %v9590 = vunpack.c.h.b16 %v9440
      %v9591 = vunpack.c.l.b16 %v9441
      %v9592 = vunpack.c.h.b16 %v9441
      %v9593 = vunpack.c.l.b16 %v9442
      %v9594 = vunpack.c.h.b16 %v9442
      %v9595 = vunpack.c.l.b16 %v9443
      %v9596 = vunpack.c.h.b16 %v9443
      %v9597 = vunpack.c.l.b16 %v9444
      %v9598 = vunpack.c.h.b16 %v9444
      %v9599 = vunpack.c.l.b16 %v9445
      %v9600 = vunpack.c.h.b16 %v9445
      %v9601 = vunpack.c.l.b16 %v9446
      %v9602 = vunpack.c.h.b16 %v9446
      %v9603 = vunpack.c.l.b16 %v9447
      %v9604 = vunpack.c.h.b16 %v9447
      %v9605 = vunpack.c.l.b16 %v9448
      %v9606 = vunpack.c.h.b16 %v9448
      %v9607 = vunpack.c.l.b16 %v9449
      %v9608 = vunpack.c.h.b16 %v9449
      %v9609 = vunpack.c.l.b16 %v9450
      %v9610 = vunpack.c.h.b16 %v9450
      %v9611 = vunpack.c.l.b16 %v9451
      %v9612 = vunpack.c.h.b16 %v9451
      %v9613 = vunpack.c.l.b16 %v9452
      %v9614 = vunpack.c.h.b16 %v9452
      %v9615 = vunpack.c.l.b16 %v9453
      %v9616 = vunpack.c.h.b16 %v9453
      %v9617 = vunpack.c.l.b16 %v9454
      %v9618 = vunpack.c.h.b16 %v9454
      %v9619 = vunpack.c.l.b16 %v9455
      %v9620 = vunpack.c.h.b16 %v9455
      %v9621 = vunpack.c.l.b16 %v9456
      %v9622 = vunpack.c.h.b16 %v9456
      %v9623 = vunpack.c.l.b16 %v9457
      %v9624 = vunpack.c.h.b16 %v9457
      %v9625 = vunpack.c.l.b16 %v9458
      %v9626 = vunpack.c.h.b16 %v9458
      %v9627 = vunpack.c.l.b16 %v9459
      %v9628 = vunpack.c.h.b16 %v9459
      %v9629 = vunpack.c.l.b16 %v9460
      %v9630 = vunpack.c.h.b16 %v9460
      %v9631 = vunpack.c.l.b16 %v9461
      %v9632 = vunpack.c.h.b16 %v9461
      %v9633 = vunpack.c.l.b16 %v9462
      %v9634 = vunpack.c.h.b16 %v9462
      %v9635 = vunpack.c.l.b16 %v9463
      %v9636 = vunpack.c.h.b16 %v9463
      %v9637 = vunpack.c.l.b16 %v9464
      %v9638 = vunpack.c.h.b16 %v9464
      %v9639 = vunpack.c.l.b16 %v9465
      %v9640 = vunpack.c.h.b16 %v9465
      %v9641 = vunpack.c.l.b16 %v9466
      %v9642 = vunpack.c.h.b16 %v9466
      %v9643 = vunpack.c.l.b16 %v9467
      %v9644 = vunpack.c.h.b16 %v9467
      %v9645 = vunpack.c.l.b16 %v9468
      %v9646 = vunpack.c.h.b16 %v9468
      %v9647 = vunpack.c.l.b16 %v9469
      %v9648 = vunpack.c.h.b16 %v9469
      %v9649 = vunpack.c.l.b16 %v9470
      %v9650 = vunpack.c.h.b16 %v9470
      %v9651 = vunpack.c.l.b16 %v9471
      %v9652 = vunpack.c.h.b16 %v9471
      %v9653 = vunpack.c.l.b16 %v9472
      %v9654 = vunpack.c.h.b16 %v9472
      %v9655 = vunpack.c.l.b16 %v9473
      %v9656 = vunpack.c.h.b16 %v9473
      %v9657 = vunpack.c.l.b16 %v9474
      %v9658 = vunpack.c.h.b16 %v9474
      %v9659 = vunpack.c.l.b16 %v9475
      %v9660 = vunpack.c.h.b16 %v9475
      %v9661 = vunpack.c.l.b16 %v9476
      %v9662 = vunpack.c.h.b16 %v9476
      %v9663 = vunpack.c.l.b16 %v9477
      %v9664 = vunpack.c.h.b16 %v9477
      %v9665 = vunpack.c.l.b16 %v9478
      %v9666 = vunpack.c.h.b16 %v9478
      %v9667 = vunpack.c.l.b16 %v9479
      %v9668 = vunpack.c.h.b16 %v9479
      %v9669 = vunpack.c.l.b16 %v9480
      %v9670 = vunpack.c.h.b16 %v9480
      %v9671 = vunpack.c.l.b16 %v9481
      %v9672 = vunpack.c.h.b16 %v9481
      %v9673 = vunpack.c.l.b16 %v9482
      %v9674 = vunpack.c.h.b16 %v9482
      %v9675 = vpack.c.b16 %v9549, %v9547
      %v9676 = vpack.c.b16 %v9550, %v9548
      %v9677 = vpack.c.b16 %v9553, %v9551
      %v9678 = vpack.c.b16 %v9554, %v9552
      %v9679 = vpack.c.b16 %v9557, %v9555
      %v9680 = vpack.c.b16 %v9558, %v9556
      %v9681 = vpack.c.b16 %v9561, %v9559
      %v9682 = vpack.c.b16 %v9562, %v9560
      %v9683 = vpack.c.b16 %v9565, %v9563
      %v9684 = vpack.c.b16 %v9566, %v9564
      %v9685 = vpack.c.b16 %v9569, %v9567
      %v9686 = vpack.c.b16 %v9570, %v9568
      %v9687 = vpack.c.b16 %v9573, %v9571
      %v9688 = vpack.c.b16 %v9574, %v9572
      %v9689 = vpack.c.b16 %v9577, %v9575
      %v9690 = vpack.c.b16 %v9578, %v9576
      %v9691 = vpack.c.b16 %v9581, %v9579
      %v9692 = vpack.c.b16 %v9582, %v9580
      %v9693 = vpack.c.b16 %v9585, %v9583
      %v9694 = vpack.c.b16 %v9586, %v9584
      %v9695 = vpack.c.b16 %v9589, %v9587
      %v9696 = vpack.c.b16 %v9590, %v9588
      %v9697 = vpack.c.b16 %v9593, %v9591
      %v9698 = vpack.c.b16 %v9594, %v9592
      %v9699 = vpack.c.b16 %v9597, %v9595
      %v9700 = vpack.c.b16 %v9598, %v9596
      %v9701 = vpack.c.b16 %v9601, %v9599
      %v9702 = vpack.c.b16 %v9602, %v9600
      %v9703 = vpack.c.b16 %v9605, %v9603
      %v9704 = vpack.c.b16 %v9606, %v9604
      %v9705 = vpack.c.b16 %v9609, %v9607
      %v9706 = vpack.c.b16 %v9610, %v9608
      %v9707 = vpack.c.b16 %v9613, %v9611
      %v9708 = vpack.c.b16 %v9614, %v9612
      %v9709 = vpack.c.b16 %v9617, %v9615
      %v9710 = vpack.c.b16 %v9618, %v9616
      %v9711 = vpack.c.b16 %v9621, %v9619
      %v9712 = vpack.c.b16 %v9622, %v9620
      %v9713 = vpack.c.b16 %v9625, %v9623
      %v9714 = vpack.c.b16 %v9626, %v9624
      %v9715 = vpack.c.b16 %v9629, %v9627
      %v9716 = vpack.c.b16 %v9630, %v9628
      %v9717 = vpack.c.b16 %v9633, %v9631
      %v9718 = vpack.c.b16 %v9634, %v9632
      %v9719 = vpack.c.b16 %v9637, %v9635
      %v9720 = vpack.c.b16 %v9638, %v9636
      %v9721 = vpack.c.b16 %v9641, %v9639
      %v9722 = vpack.c.b16 %v9642, %v9640
      %v9723 = vpack.c.b16 %v9645, %v9643
      %v9724 = vpack.c.b16 %v9646, %v9644
      %v9725 = vpack.c.b16 %v9649, %v9647
      %v9726 = vpack.c.b16 %v9650, %v9648
      %v9727 = vpack.c.b16 %v9653, %v9651
      %v9728 = vpack.c.b16 %v9654, %v9652
      %v9729 = vpack.c.b16 %v9657, %v9655
      %v9730 = vpack.c.b16 %v9658, %v9656
      %v9731 = vpack.c.b16 %v9661, %v9659
      %v9732 = vpack.c.b16 %v9662, %v9660
      %v9733 = vpack.c.b16 %v9665, %v9663
      %v9734 = vpack.c.b16 %v9666, %v9664
      %v9735 = vpack.c.b16 %v9669, %v9667
      %v9736 = vpack.c.b16 %v9670, %v9668
      %v9737 = vpack.c.b16 %v9673, %v9671
      %v9738 = vpack.c.b16 %v9674, %v9672
      %9803 = vmatprep.subr.bf16.mxu0 %v9676
      %9804 = vmatpush1.bf16.msra.mxu0 %v9675
      %9805 = vmatprep.subr.bf16.mxu0 %v9678
      %9806 = vmatpush1.bf16.msra.mxu0 %v9677
      %9807 = vmatprep.subr.bf16.mxu0 %v9680
      %9808 = vmatpush1.bf16.msra.mxu0 %v9679
      %9809 = vmatprep.subr.bf16.mxu0 %v9682
      %9810 = vmatpush1.bf16.msra.mxu0 %v9681
      %9811 = vmatprep.subr.bf16.mxu0 %v9684
      %9812 = vmatpush1.bf16.msra.mxu0 %v9683
      %9813 = vmatprep.subr.bf16.mxu0 %v9686
      %9814 = vmatpush1.bf16.msra.mxu0 %v9685
      %9815 = vmatprep.subr.bf16.mxu0 %v9688
      %9816 = vmatpush1.bf16.msra.mxu0 %v9687
      %9817 = vmatprep.subr.bf16.mxu0 %v9690
      %9818 = vmatpush1.bf16.msra.mxu0 %v9689
      %9819 = vmatprep.subr.bf16.mxu0 %v9692
      %9820 = vmatpush1.bf16.msra.mxu0 %v9691
      %9821 = vmatprep.subr.bf16.mxu0 %v9694
      %9822 = vmatpush1.bf16.msra.mxu0 %v9693
      %9823 = vmatprep.subr.bf16.mxu0 %v9696
      %9824 = vmatpush1.bf16.msra.mxu0 %v9695
      %9825 = vmatprep.subr.bf16.mxu0 %v9698
      %9826 = vmatpush1.bf16.msra.mxu0 %v9697
      %9827 = vmatprep.subr.bf16.mxu0 %v9700
      %9828 = vmatpush1.bf16.msra.mxu0 %v9699
      %9829 = vmatprep.subr.bf16.mxu0 %v9702
      %9830 = vmatpush1.bf16.msra.mxu0 %v9701
      %9831 = vmatprep.subr.bf16.mxu0 %v9704
      %9832 = vmatpush1.bf16.msra.mxu0 %v9703
      %9833 = vmatprep.subr.bf16.mxu0 %v9706
      %9834 = vmatpush1.bf16.msra.mxu0 %v9705
      %9835 = vmatprep.mubr.bf16.mxu0 %v9416
      %9836 = vmatmul.mubr.bf16.gmra.mrb[0].mxu0 %v9415
      %v9837 = vpop.f32.mrb[0].mxu0
      %v9838 = vadd.f32 0.0, %v9837
      %v9839 = vpop.f32.mrb[0].mxu0
      %v9840 = vadd.f32 0.0, %v9839
      %v9841 = vpop.f32.mrb[0].mxu0
      %v9842 = vadd.f32 0.0, %v9841
      %v9843 = vpop.f32.mrb[0].mxu0
      %v9844 = vadd.f32 0.0, %v9843
      %9845 = vdwg.mxu0
      %9846 = vmatprep.subr.bf16.mxu0 %v9708
      %9847 = vmatpush1.bf16.msra.mxu0 %v9707
      %9848 = vmatprep.subr.bf16.mxu0 %v9710
      %9849 = vmatpush1.bf16.msra.mxu0 %v9709
      %9850 = vmatprep.subr.bf16.mxu0 %v9712
      %9851 = vmatpush1.bf16.msra.mxu0 %v9711
      %9852 = vmatprep.subr.bf16.mxu0 %v9714
      %9853 = vmatpush1.bf16.msra.mxu0 %v9713
      %9854 = vmatprep.subr.bf16.mxu0 %v9716
      %9855 = vmatpush1.bf16.msra.mxu0 %v9715
      %9856 = vmatprep.subr.bf16.mxu0 %v9718
      %9857 = vmatpush1.bf16.msra.mxu0 %v9717
      %9858 = vmatprep.subr.bf16.mxu0 %v9720
      %9859 = vmatpush1.bf16.msra.mxu0 %v9719
      %9860 = vmatprep.subr.bf16.mxu0 %v9722
      %9861 = vmatpush1.bf16.msra.mxu0 %v9721
      %9862 = vmatprep.subr.bf16.mxu0 %v9724
      %9863 = vmatpush1.bf16.msra.mxu0 %v9723
      %9864 = vmatprep.subr.bf16.mxu0 %v9726
      %9865 = vmatpush1.bf16.msra.mxu0 %v9725
      %9866 = vmatprep.subr.bf16.mxu0 %v9728
      %9867 = vmatpush1.bf16.msra.mxu0 %v9727
      %9868 = vmatprep.subr.bf16.mxu0 %v9730
      %9869 = vmatpush1.bf16.msra.mxu0 %v9729
      %9870 = vmatprep.subr.bf16.mxu0 %v9732
      %9871 = vmatpush1.bf16.msra.mxu0 %v9731
      %9872 = vmatprep.subr.bf16.mxu0 %v9734
      %9873 = vmatpush1.bf16.msra.mxu0 %v9733
      %9874 = vmatprep.subr.bf16.mxu0 %v9736
      %9875 = vmatpush1.bf16.msra.mxu0 %v9735
      %9876 = vmatprep.subr.bf16.mxu0 %v9738
      %9877 = vmatpush1.bf16.msra.mxu0 %v9737
      %9878 = vmatprep.mubr.bf16.mxu0 %v9418
      %9879 = vmatmul.mubr.bf16.gmra.mrb[0].mxu0 %v9417
      %v9880 = vpop.f32.mrb[0].mxu0
      %v9881 = vadd.f32 %v9838, %v9880
      %v9882 = vpop.f32.mrb[0].mxu0
      %v9883 = vadd.f32 %v9840, %v9882
      %v9884 = vpop.f32.mrb[0].mxu0
      %v9885 = vadd.f32 %v9842, %v9884
      %v9886 = vpop.f32.mrb[0].mxu0
      %v9887 = vadd.f32 %v9844, %v9886
      %9888 = vdwg.mxu0
      %v9889 = vld [vmem:[%s51] sm:$0x3]
      %v9891 = vlaneseq
      %v9892 = vshrl.u32 %v9891, 7
      %v9893 = vsub.s32 0, %v9892
      %v9894 = vrot.slane %v9889, %v9893
      %v9895 = vlaneseq
      %v9896 = vshrl.u32 %v9895, 7
      %v9897 = vsub.s32 1, %v9896
      %v9898 = vrot.slane %v9889, %v9897
      %v9901 = vmul.f32 %v9881, %v9894
      %v9902 = vmul.f32 %v9883, %v9898
      %v9903 = vmul.f32 %v9885, %v9894
      %v9904 = vmul.f32 %v9887, %v9898
      %v9905 = vld [vmem:[%s53] sm:$0x3]
      %v9907 = vlaneseq
      %v9908 = vshrl.u32 %v9907, 7
      %v9909 = vsub.s32 0, %v9908
      %v9910 = vrot.slane %v9905, %v9909
      %v9911 = vlaneseq
      %v9912 = vshrl.u32 %v9911, 7
      %v9913 = vsub.s32 1, %v9912
      %v9914 = vrot.slane %v9905, %v9913
      %v9917 = vadd.f32 %v9901, %v9910
      %v9918 = vadd.f32 %v9902, %v9914
      %v9919 = vadd.f32 %v9903, %v9910
      %v9920 = vadd.f32 %v9904, %v9914
      %v9921 = vmax.f32 %v9917, 0.0
      %v9922 = vmax.f32 %v9918, 0.0
      %v9923 = vmax.f32 %v9919, 0.0
      %v9924 = vmax.f32 %v9920, 0.0
      %v9925 = vpack.c.bf16 %v9923, %v9921
      %v9926 = vpack.c.bf16 %v9924, %v9922
      %v9927 = vld [vmem:[%s55] sm:$0xf]
      %v9928 = vld [vmem:[%s55 + $0x4] sm:$0xf]
      %v9929 = vld [vmem:[%s55 + $0x8] sm:$0xf]
      %v9930 = vld [vmem:[%s55 + $0xc] sm:$0xf]
      %v9931 = vld [vmem:[%s55 + $0x10] sm:$0xf]
      %v9932 = vld [vmem:[%s55 + $0x14] sm:$0xf]
      %v9933 = vld [vmem:[%s55 + $0x18] sm:$0xf]
      %v9934 = vld [vmem:[%s55 + $0x1c] sm:$0xf]
      %s9935 = scalar_lea.vmem %s55, 32
      %v9936 = vld [vmem:[%s9935] sm:$0xf]
      %v9937 = vld [vmem:[%s9935 + $0x4] sm:$0xf]
      %v9938 = vld [vmem:[%s9935 + $0x8] sm:$0xf]
      %v9939 = vld [vmem:[%s9935 + $0xc] sm:$0xf]
      %v9940 = vld [vmem:[%s9935 + $0x10] sm:$0xf]
      %v9941 = vld [vmem:[%s9935 + $0x14] sm:$0xf]
      %v9942 = vld [vmem:[%s9935 + $0x18] sm:$0xf]
      %v9943 = vld [vmem:[%s9935 + $0x1c] sm:$0xf]
      %v9952 = vunpack.c.l.b16 %v9936
      %v9953 = vunpack.c.l.b16 %v9937
      %v9954 = vunpack.c.l.b16 %v9938
      %v9955 = vunpack.c.l.b16 %v9939
      %v9956 = vunpack.c.l.b16 %v9940
      %v9957 = vunpack.c.l.b16 %v9941
      %v9958 = vunpack.c.l.b16 %v9942
      %v9959 = vunpack.c.l.b16 %v9943
      %v9960 = vpack.c.b16 %v9953, %v9952
      %v9961 = vpack.c.b16 %v9955, %v9954
      %v9962 = vpack.c.b16 %v9957, %v9956
      %v9963 = vpack.c.b16 %v9959, %v9958
      %9965 = vrot.lane.b32.xlu0 %v9925, 64
      %v9966 = vpop.permute.xlu0 %9965
      %v9969 = vsel %vm3459, %v9960, 0
      %v9972 = vsel %vm3459, %v9961, 0
      %v9975 = vsel %vm3459, %v9962, 0
      %v9978 = vsel %vm3459, %v9963, 0
      %9980 = vmatprep.subr.bf16.mxu0 0
      %9981 = vmatpush1.bf16.msra.mxu0 %v9966
      %9982 = vmatprep.subr.bf16.mxu0 0
      %9983 = vmatpush1.bf16.msra.mxu0 0
      %9984 = vmatprep.subr.bf16.mxu0 0
      %9985 = vmatpush1.bf16.msra.mxu0 0
      %9986 = vmatprep.subr.bf16.mxu0 0
      %9987 = vmatpush1.bf16.msra.mxu0 0
      %9988 = vmatprep.subr.bf16.mxu0 0
      %9989 = vmatpush1.bf16.msra.mxu0 0
      %9990 = vmatprep.subr.bf16.mxu0 0
      %9991 = vmatpush1.bf16.msra.mxu0 0
      %9992 = vmatprep.subr.bf16.mxu0 0
      %9993 = vmatpush1.bf16.msra.mxu0 0
      %9994 = vmatprep.subr.bf16.mxu0 0
      %9995 = vmatpush1.bf16.msra.mxu0 0
      %9996 = vmatprep.subr.bf16.mxu0 0
      %9997 = vmatpush1.bf16.msra.mxu0 0
      %9998 = vmatprep.subr.bf16.mxu0 0
      %9999 = vmatpush1.bf16.msra.mxu0 0
      %10000 = vmatprep.subr.bf16.mxu0 0
      %10001 = vmatpush1.bf16.msra.mxu0 0
      %10002 = vmatprep.subr.bf16.mxu0 0
      %10003 = vmatpush1.bf16.msra.mxu0 0
      %10004 = vmatprep.subr.bf16.mxu0 0
      %10005 = vmatpush1.bf16.msra.mxu0 0
      %10006 = vmatprep.subr.bf16.mxu0 0
      %10007 = vmatpush1.bf16.msra.mxu0 0
      %10008 = vmatprep.subr.bf16.mxu0 0
      %10009 = vmatpush1.bf16.msra.mxu0 0
      %10010 = vmatprep.subr.bf16.mxu0 0
      %10011 = vmatpush1.bf16.msra.mxu0 0
      %10012 = vmatprep.mubr.bf16.mxu0 0
      %10013 = vmatmul.mubr.bf16.gmra.mrb[0].mxu0 %v9969
      %v10014 = vpop.f32.mrb[0].mxu0
      %v10015 = vadd.f32 0.0, %v10014
      %v10016 = vpop.f32.mrb[0].mxu0
      %v10017 = vpop.f32.mrb[0].mxu0
      %v10018 = vadd.f32 0.0, %v10017
      %v10019 = vpop.f32.mrb[0].mxu0
      %10020 = vmatprep.mubr.bf16.mxu0 0
      %10021 = vmatmul.mubr.bf16.gmra.mrb[0].mxu0 %v9972
      %v10022 = vpop.f32.mrb[0].mxu0
      %v10023 = vadd.f32 0.0, %v10022
      %v10024 = vpop.f32.mrb[0].mxu0
      %v10025 = vpop.f32.mrb[0].mxu0
      %v10026 = vadd.f32 0.0, %v10025
      %v10027 = vpop.f32.mrb[0].mxu0
      %10028 = vmatprep.mubr.bf16.mxu0 0
      %10029 = vmatmul.mubr.bf16.gmra.mrb[0].mxu0 %v9975
      %v10030 = vpop.f32.mrb[0].mxu0
      %v10031 = vadd.f32 0.0, %v10030
      %v10032 = vpop.f32.mrb[0].mxu0
      %v10033 = vpop.f32.mrb[0].mxu0
      %v10034 = vadd.f32 0.0, %v10033
      %v10035 = vpop.f32.mrb[0].mxu0
      %10036 = vmatprep.mubr.bf16.mxu0 0
      %10037 = vmatmul.mubr.bf16.gmra.mrb[0].mxu0 %v9978
      %v10038 = vpop.f32.mrb[0].mxu0
      %v10039 = vadd.f32 0.0, %v10038
      %v10040 = vpop.f32.mrb[0].mxu0
      %v10041 = vpop.f32.mrb[0].mxu0
      %v10042 = vadd.f32 0.0, %v10041
      %v10043 = vpop.f32.mrb[0].mxu0
      %10044 = vdwg.mxu0
      %v10053 = vunpack.c.l.b16 %v9927
      %v10054 = vunpack.c.l.b16 %v9928
      %v10055 = vunpack.c.l.b16 %v9929
      %v10056 = vunpack.c.l.b16 %v9930
      %v10057 = vunpack.c.l.b16 %v9931
      %v10058 = vunpack.c.l.b16 %v9932
      %v10059 = vunpack.c.l.b16 %v9933
      %v10060 = vunpack.c.l.b16 %v9934
      %v10061 = vpack.c.b16 %v10054, %v10053
      %v10062 = vpack.c.b16 %v10056, %v10055
      %v10063 = vpack.c.b16 %v10058, %v10057
      %v10064 = vpack.c.b16 %v10060, %v10059
      %v10066 = vsel %vm3459, %v10061, 0
      %v10069 = vsel %vm3459, %v10062, 0
      %v10072 = vsel %vm3459, %v10063, 0
      %v10075 = vsel %vm3459, %v10064, 0
      %10077 = vmatprep.subr.bf16.mxu0 0
      %10078 = vmatpush1.bf16.msra.mxu0 %v9925
      %10079 = vmatprep.subr.bf16.mxu0 0
      %10080 = vmatpush1.bf16.msra.mxu0 0
      %10081 = vmatprep.subr.bf16.mxu0 0
      %10082 = vmatpush1.bf16.msra.mxu0 0
      %10083 = vmatprep.subr.bf16.mxu0 0
      %10084 = vmatpush1.bf16.msra.mxu0 0
      %10085 = vmatprep.subr.bf16.mxu0 0
      %10086 = vmatpush1.bf16.msra.mxu0 0
      %10087 = vmatprep.subr.bf16.mxu0 0
      %10088 = vmatpush1.bf16.msra.mxu0 0
      %10089 = vmatprep.subr.bf16.mxu0 0
      %10090 = vmatpush1.bf16.msra.mxu0 0
      %10091 = vmatprep.subr.bf16.mxu0 0
      %10092 = vmatpush1.bf16.msra.mxu0 0
      %10093 = vmatprep.subr.bf16.mxu0 0
      %10094 = vmatpush1.bf16.msra.mxu0 0
      %10095 = vmatprep.subr.bf16.mxu0 0
      %10096 = vmatpush1.bf16.msra.mxu0 0
      %10097 = vmatprep.subr.bf16.mxu0 0
      %10098 = vmatpush1.bf16.msra.mxu0 0
      %10099 = vmatprep.subr.bf16.mxu0 0
      %10100 = vmatpush1.bf16.msra.mxu0 0
      %10101 = vmatprep.subr.bf16.mxu0 0
      %10102 = vmatpush1.bf16.msra.mxu0 0
      %10103 = vmatprep.subr.bf16.mxu0 0
      %10104 = vmatpush1.bf16.msra.mxu0 0
      %10105 = vmatprep.subr.bf16.mxu0 0
      %10106 = vmatpush1.bf16.msra.mxu0 0
      %10107 = vmatprep.subr.bf16.mxu0 0
      %10108 = vmatpush1.bf16.msra.mxu0 0
      %10109 = vmatprep.mubr.bf16.mxu0 0
      %10110 = vmatmul.mubr.bf16.gmra.mrb[0].mxu0 %v10066
      %v10111 = vpop.f32.mrb[0].mxu0
      %v10112 = vadd.f32 %v10015, %v10111
      %v10113 = vpop.f32.mrb[0].mxu0
      %v10114 = vpop.f32.mrb[0].mxu0
      %v10115 = vadd.f32 %v10018, %v10114
      %v10116 = vpop.f32.mrb[0].mxu0
      %10117 = vmatprep.mubr.bf16.mxu0 0
      %10118 = vmatmul.mubr.bf16.gmra.mrb[0].mxu0 %v10069
      %v10119 = vpop.f32.mrb[0].mxu0
      %v10120 = vadd.f32 %v10023, %v10119
      %v10121 = vpop.f32.mrb[0].mxu0
      %v10122 = vpop.f32.mrb[0].mxu0
      %v10123 = vadd.f32 %v10026, %v10122
      %v10124 = vpop.f32.mrb[0].mxu0
      %10125 = vmatprep.mubr.bf16.mxu0 0
      %10126 = vmatmul.mubr.bf16.gmra.mrb[0].mxu0 %v10072
      %v10127 = vpop.f32.mrb[0].mxu0
      %v10128 = vadd.f32 %v10031, %v10127
      %v10129 = vpop.f32.mrb[0].mxu0
      %v10130 = vpop.f32.mrb[0].mxu0
      %v10131 = vadd.f32 %v10034, %v10130
      %v10132 = vpop.f32.mrb[0].mxu0
      %10133 = vmatprep.mubr.bf16.mxu0 0
      %10134 = vmatmul.mubr.bf16.gmra.mrb[0].mxu0 %v10075
      %v10135 = vpop.f32.mrb[0].mxu0
      %v10136 = vadd.f32 %v10039, %v10135
      %v10137 = vpop.f32.mrb[0].mxu0
      %v10138 = vpop.f32.mrb[0].mxu0
      %v10139 = vadd.f32 %v10042, %v10138
      %v10140 = vpop.f32.mrb[0].mxu0
      %10141 = vdwg.mxu0
      %s10142 = scalar_lea.vmem %s55, 64
      %v10143 = vld [vmem:[%s10142] sm:$0xf]
      %v10144 = vld [vmem:[%s10142 + $0x4] sm:$0xf]
      %v10145 = vld [vmem:[%s10142 + $0x8] sm:$0xf]
      %v10146 = vld [vmem:[%s10142 + $0xc] sm:$0xf]
      %v10147 = vld [vmem:[%s10142 + $0x10] sm:$0xf]
      %v10148 = vld [vmem:[%s10142 + $0x14] sm:$0xf]
      %v10149 = vld [vmem:[%s10142 + $0x18] sm:$0xf]
      %v10150 = vld [vmem:[%s10142 + $0x1c] sm:$0xf]
      %v10159 = vunpack.c.l.b16 %v10143
      %v10160 = vunpack.c.l.b16 %v10144
      %v10161 = vunpack.c.l.b16 %v10145
      %v10162 = vunpack.c.l.b16 %v10146
      %v10163 = vunpack.c.l.b16 %v10147
      %v10164 = vunpack.c.l.b16 %v10148
      %v10165 = vunpack.c.l.b16 %v10149
      %v10166 = vunpack.c.l.b16 %v10150
      %v10167 = vpack.c.b16 %v10160, %v10159
      %v10168 = vpack.c.b16 %v10162, %v10161
      %v10169 = vpack.c.b16 %v10164, %v10163
      %v10170 = vpack.c.b16 %v10166, %v10165
      %v10172 = vsel %vm3459, %v10167, 0
      %v10175 = vsel %vm3459, %v10168, 0
      %v10178 = vsel %vm3459, %v10169, 0
      %v10181 = vsel %vm3459, %v10170, 0
      %10183 = vmatprep.subr.bf16.mxu0 0
      %10184 = vmatpush1.bf16.msra.mxu0 %v9926
      %10185 = vmatprep.subr.bf16.mxu0 0
      %10186 = vmatpush1.bf16.msra.mxu0 0
      %10187 = vmatprep.subr.bf16.mxu0 0
      %10188 = vmatpush1.bf16.msra.mxu0 0
      %10189 = vmatprep.subr.bf16.mxu0 0
      %10190 = vmatpush1.bf16.msra.mxu0 0
      %10191 = vmatprep.subr.bf16.mxu0 0
      %10192 = vmatpush1.bf16.msra.mxu0 0
      %10193 = vmatprep.subr.bf16.mxu0 0
      %10194 = vmatpush1.bf16.msra.mxu0 0
      %10195 = vmatprep.subr.bf16.mxu0 0
      %10196 = vmatpush1.bf16.msra.mxu0 0
      %10197 = vmatprep.subr.bf16.mxu0 0
      %10198 = vmatpush1.bf16.msra.mxu0 0
      %10199 = vmatprep.subr.bf16.mxu0 0
      %10200 = vmatpush1.bf16.msra.mxu0 0
      %10201 = vmatprep.subr.bf16.mxu0 0
      %10202 = vmatpush1.bf16.msra.mxu0 0
      %10203 = vmatprep.subr.bf16.mxu0 0
      %10204 = vmatpush1.bf16.msra.mxu0 0
      %10205 = vmatprep.subr.bf16.mxu0 0
      %10206 = vmatpush1.bf16.msra.mxu0 0
      %10207 = vmatprep.subr.bf16.mxu0 0
      %10208 = vmatpush1.bf16.msra.mxu0 0
      %10209 = vmatprep.subr.bf16.mxu0 0
      %10210 = vmatpush1.bf16.msra.mxu0 0
      %10211 = vmatprep.subr.bf16.mxu0 0
      %10212 = vmatpush1.bf16.msra.mxu0 0
      %10213 = vmatprep.subr.bf16.mxu0 0
      %10214 = vmatpush1.bf16.msra.mxu0 0
      %10215 = vmatprep.mubr.bf16.mxu0 0
      %10216 = vmatmul.mubr.bf16.gmra.mrb[0].mxu0 %v10172
      %v10217 = vpop.f32.mrb[0].mxu0
      %v10218 = vadd.f32 0.0, %v10217
      %v10219 = vpop.f32.mrb[0].mxu0
      %v10220 = vpop.f32.mrb[0].mxu0
      %v10221 = vadd.f32 0.0, %v10220
      %v10222 = vpop.f32.mrb[0].mxu0
      %10223 = vmatprep.mubr.bf16.mxu0 0
      %10224 = vmatmul.mubr.bf16.gmra.mrb[0].mxu0 %v10175
      %v10225 = vpop.f32.mrb[0].mxu0
      %v10226 = vadd.f32 0.0, %v10225
      %v10227 = vpop.f32.mrb[0].mxu0
      %v10228 = vpop.f32.mrb[0].mxu0
      %v10229 = vadd.f32 0.0, %v10228
      %v10230 = vpop.f32.mrb[0].mxu0
      %10231 = vmatprep.mubr.bf16.mxu0 0
      %10232 = vmatmul.mubr.bf16.gmra.mrb[0].mxu0 %v10178
      %v10233 = vpop.f32.mrb[0].mxu0
      %v10234 = vadd.f32 0.0, %v10233
      %v10235 = vpop.f32.mrb[0].mxu0
      %v10236 = vpop.f32.mrb[0].mxu0
      %v10237 = vadd.f32 0.0, %v10236
      %v10238 = vpop.f32.mrb[0].mxu0
      %10239 = vmatprep.mubr.bf16.mxu0 0
      %10240 = vmatmul.mubr.bf16.gmra.mrb[0].mxu0 %v10181
      %v10241 = vpop.f32.mrb[0].mxu0
      %v10242 = vadd.f32 0.0, %v10241
      %v10243 = vpop.f32.mrb[0].mxu0
      %v10244 = vpop.f32.mrb[0].mxu0
      %v10245 = vadd.f32 0.0, %v10244
      %v10246 = vpop.f32.mrb[0].mxu0
      %10247 = vdwg.mxu0
      %v10248 = vadd.f32 %v10112, %v10218
      %v10249 = vadd.f32 %v10115, %v10221
      %v10250 = vadd.f32 %v10120, %v10226
      %v10251 = vadd.f32 %v10123, %v10229
      %v10252 = vadd.f32 %v10128, %v10234
      %v10253 = vadd.f32 %v10131, %v10237
      %v10254 = vadd.f32 %v10136, %v10242
      %v10255 = vadd.f32 %v10139, %v10245
      %s10256 = scalar_lea.vmem %s55, 96
      %v10257 = vld [vmem:[%s10256] sm:$0xf]
      %v10258 = vld [vmem:[%s10256 + $0x4] sm:$0xf]
      %v10259 = vld [vmem:[%s10256 + $0x8] sm:$0xf]
      %v10260 = vld [vmem:[%s10256 + $0xc] sm:$0xf]
      %v10261 = vld [vmem:[%s10256 + $0x10] sm:$0xf]
      %v10262 = vld [vmem:[%s10256 + $0x14] sm:$0xf]
      %v10263 = vld [vmem:[%s10256 + $0x18] sm:$0xf]
      %v10264 = vld [vmem:[%s10256 + $0x1c] sm:$0xf]
      %v10273 = vunpack.c.l.b16 %v10257
      %v10274 = vunpack.c.l.b16 %v10258
      %v10275 = vunpack.c.l.b16 %v10259
      %v10276 = vunpack.c.l.b16 %v10260
      %v10277 = vunpack.c.l.b16 %v10261
      %v10278 = vunpack.c.l.b16 %v10262
      %v10279 = vunpack.c.l.b16 %v10263
      %v10280 = vunpack.c.l.b16 %v10264
      %v10281 = vpack.c.b16 %v10274, %v10273
      %v10282 = vpack.c.b16 %v10276, %v10275
      %v10283 = vpack.c.b16 %v10278, %v10277
      %v10284 = vpack.c.b16 %v10280, %v10279
      %10286 = vrot.lane.b32.xlu0 %v9926, 64
      %v10287 = vpop.permute.xlu0 %10286
      %v10290 = vsel %vm3459, %v10281, 0
      %v10293 = vsel %vm3459, %v10282, 0
      %v10296 = vsel %vm3459, %v10283, 0
      %v10299 = vsel %vm3459, %v10284, 0
      %10301 = vmatprep.subr.bf16.mxu0 0
      %10302 = vmatpush1.bf16.msra.mxu0 %v10287
      %10303 = vmatprep.subr.bf16.mxu0 0
      %10304 = vmatpush1.bf16.msra.mxu0 0
      %10305 = vmatprep.subr.bf16.mxu0 0
      %10306 = vmatpush1.bf16.msra.mxu0 0
      %10307 = vmatprep.subr.bf16.mxu0 0
      %10308 = vmatpush1.bf16.msra.mxu0 0
      %10309 = vmatprep.subr.bf16.mxu0 0
      %10310 = vmatpush1.bf16.msra.mxu0 0
      %10311 = vmatprep.subr.bf16.mxu0 0
      %10312 = vmatpush1.bf16.msra.mxu0 0
      %10313 = vmatprep.subr.bf16.mxu0 0
      %10314 = vmatpush1.bf16.msra.mxu0 0
      %10315 = vmatprep.subr.bf16.mxu0 0
      %10316 = vmatpush1.bf16.msra.mxu0 0
      %10317 = vmatprep.subr.bf16.mxu0 0
      %10318 = vmatpush1.bf16.msra.mxu0 0
      %10319 = vmatprep.subr.bf16.mxu0 0
      %10320 = vmatpush1.bf16.msra.mxu0 0
      %10321 = vmatprep.subr.bf16.mxu0 0
      %10322 = vmatpush1.bf16.msra.mxu0 0
      %10323 = vmatprep.subr.bf16.mxu0 0
      %10324 = vmatpush1.bf16.msra.mxu0 0
      %10325 = vmatprep.subr.bf16.mxu0 0
      %10326 = vmatpush1.bf16.msra.mxu0 0
      %10327 = vmatprep.subr.bf16.mxu0 0
      %10328 = vmatpush1.bf16.msra.mxu0 0
      %10329 = vmatprep.subr.bf16.mxu0 0
      %10330 = vmatpush1.bf16.msra.mxu0 0
      %10331 = vmatprep.subr.bf16.mxu0 0
      %10332 = vmatpush1.bf16.msra.mxu0 0
      %10333 = vmatprep.mubr.bf16.mxu0 0
      %10334 = vmatmul.mubr.bf16.gmra.mrb[0].mxu0 %v10290
      %v10335 = vpop.f32.mrb[0].mxu0
      %v10336 = vadd.f32 0.0, %v10335
      %v10337 = vpop.f32.mrb[0].mxu0
      %v10338 = vpop.f32.mrb[0].mxu0
      %v10339 = vadd.f32 0.0, %v10338
      %v10340 = vpop.f32.mrb[0].mxu0
      %10341 = vmatprep.mubr.bf16.mxu0 0
      %10342 = vmatmul.mubr.bf16.gmra.mrb[0].mxu0 %v10293
      %v10343 = vpop.f32.mrb[0].mxu0
      %v10344 = vadd.f32 0.0, %v10343
      %v10345 = vpop.f32.mrb[0].mxu0
      %v10346 = vpop.f32.mrb[0].mxu0
      %v10347 = vadd.f32 0.0, %v10346
      %v10348 = vpop.f32.mrb[0].mxu0
      %10349 = vmatprep.mubr.bf16.mxu0 0
      %10350 = vmatmul.mubr.bf16.gmra.mrb[0].mxu0 %v10296
      %v10351 = vpop.f32.mrb[0].mxu0
      %v10352 = vadd.f32 0.0, %v10351
      %v10353 = vpop.f32.mrb[0].mxu0
      %v10354 = vpop.f32.mrb[0].mxu0
      %v10355 = vadd.f32 0.0, %v10354
      %v10356 = vpop.f32.mrb[0].mxu0
      %10357 = vmatprep.mubr.bf16.mxu0 0
      %10358 = vmatmul.mubr.bf16.gmra.mrb[0].mxu0 %v10299
      %v10359 = vpop.f32.mrb[0].mxu0
      %v10360 = vadd.f32 0.0, %v10359
      %v10361 = vpop.f32.mrb[0].mxu0
      %v10362 = vpop.f32.mrb[0].mxu0
      %v10363 = vadd.f32 0.0, %v10362
      %v10364 = vpop.f32.mrb[0].mxu0
      %10365 = vdwg.mxu0
      %v10366 = vadd.f32 %v10248, %v10336
      %v10367 = vadd.f32 %v10249, %v10339
      %v10368 = vadd.f32 %v10250, %v10344
      %v10369 = vadd.f32 %v10251, %v10347
      %v10370 = vadd.f32 %v10252, %v10352
      %v10371 = vadd.f32 %v10253, %v10355
      %v10372 = vadd.f32 %v10254, %v10360
      %v10373 = vadd.f32 %v10255, %v10363
      %v10374 = vpack.c.bf16 %v10367, %v10366
      %v10375 = vpack.c.bf16 %v10369, %v10368
      %v10376 = vpack.c.bf16 %v10371, %v10370
      %v10377 = vpack.c.bf16 %v10373, %v10372
      %v10378 = vld [vmem:[%s57] sm:$0xf]
      %v10379 = vld [vmem:[%s57 + $0x4] sm:$0xf]
      %v10380 = vld [vmem:[%s57 + $0x8] sm:$0xf]
      %v10381 = vld [vmem:[%s57 + $0xc] sm:$0xf]
      %v10382 = vld [vmem:[%s57 + $0x10] sm:$0xf]
      %v10383 = vld [vmem:[%s57 + $0x14] sm:$0xf]
      %v10384 = vld [vmem:[%s57 + $0x18] sm:$0xf]
      %v10385 = vld [vmem:[%s57 + $0x1c] sm:$0xf]
      %v10386 = vld [vmem:[%s57 + $0x20] sm:$0xf]
      %v10387 = vld [vmem:[%s57 + $0x24] sm:$0xf]
      %v10388 = vld [vmem:[%s57 + $0x28] sm:$0xf]
      %v10389 = vld [vmem:[%s57 + $0x2c] sm:$0xf]
      %v10390 = vld [vmem:[%s57 + $0x30] sm:$0xf]
      %v10391 = vld [vmem:[%s57 + $0x34] sm:$0xf]
      %v10392 = vld [vmem:[%s57 + $0x38] sm:$0xf]
      %v10393 = vld [vmem:[%s57 + $0x3c] sm:$0xf]
      %v10394 = vld [vmem:[%s57 + $0x40] sm:$0xf]
      %v10395 = vld [vmem:[%s57 + $0x44] sm:$0xf]
      %v10396 = vld [vmem:[%s57 + $0x48] sm:$0xf]
      %v10397 = vld [vmem:[%s57 + $0x4c] sm:$0xf]
      %v10398 = vld [vmem:[%s57 + $0x50] sm:$0xf]
      %v10399 = vld [vmem:[%s57 + $0x54] sm:$0xf]
      %v10400 = vld [vmem:[%s57 + $0x58] sm:$0xf]
      %v10401 = vld [vmem:[%s57 + $0x5c] sm:$0xf]
      %v10402 = vld [vmem:[%s57 + $0x60] sm:$0xf]
      %v10403 = vld [vmem:[%s57 + $0x64] sm:$0xf]
      %v10404 = vld [vmem:[%s57 + $0x68] sm:$0xf]
      %v10405 = vld [vmem:[%s57 + $0x6c] sm:$0xf]
      %v10406 = vld [vmem:[%s57 + $0x70] sm:$0xf]
      %v10407 = vld [vmem:[%s57 + $0x74] sm:$0xf]
      %v10408 = vld [vmem:[%s57 + $0x78] sm:$0xf]
      %v10409 = vld [vmem:[%s57 + $0x7c] sm:$0xf]
      %v10442 = vunpack.c.l.b16 %v10378
      %v10443 = vunpack.c.l.b16 %v10379
      %v10444 = vunpack.c.l.b16 %v10380
      %v10445 = vunpack.c.l.b16 %v10381
      %v10446 = vunpack.c.l.b16 %v10382
      %v10447 = vunpack.c.l.b16 %v10383
      %v10448 = vunpack.c.l.b16 %v10384
      %v10449 = vunpack.c.l.b16 %v10385
      %v10450 = vunpack.c.l.b16 %v10386
      %v10451 = vunpack.c.l.b16 %v10387
      %v10452 = vunpack.c.l.b16 %v10388
      %v10453 = vunpack.c.l.b16 %v10389
      %v10454 = vunpack.c.l.b16 %v10390
      %v10455 = vunpack.c.l.b16 %v10391
      %v10456 = vunpack.c.l.b16 %v10392
      %v10457 = vunpack.c.l.b16 %v10393
      %v10458 = vunpack.c.l.b16 %v10394
      %v10459 = vunpack.c.l.b16 %v10395
      %v10460 = vunpack.c.l.b16 %v10396
      %v10461 = vunpack.c.l.b16 %v10397
      %v10462 = vunpack.c.l.b16 %v10398
      %v10463 = vunpack.c.l.b16 %v10399
      %v10464 = vunpack.c.l.b16 %v10400
      %v10465 = vunpack.c.l.b16 %v10401
      %v10466 = vunpack.c.l.b16 %v10402
      %v10467 = vunpack.c.l.b16 %v10403
      %v10468 = vunpack.c.l.b16 %v10404
      %v10469 = vunpack.c.l.b16 %v10405
      %v10470 = vunpack.c.l.b16 %v10406
      %v10471 = vunpack.c.l.b16 %v10407
      %v10472 = vunpack.c.l.b16 %v10408
      %v10473 = vunpack.c.l.b16 %v10409
      %v10474 = vpack.c.b16 %v10443, %v10442
      %v10475 = vpack.c.b16 %v10445, %v10444
      %v10476 = vpack.c.b16 %v10447, %v10446
      %v10477 = vpack.c.b16 %v10449, %v10448
      %v10478 = vpack.c.b16 %v10451, %v10450
      %v10479 = vpack.c.b16 %v10453, %v10452
      %v10480 = vpack.c.b16 %v10455, %v10454
      %v10481 = vpack.c.b16 %v10457, %v10456
      %v10482 = vpack.c.b16 %v10459, %v10458
      %v10483 = vpack.c.b16 %v10461, %v10460
      %v10484 = vpack.c.b16 %v10463, %v10462
      %v10485 = vpack.c.b16 %v10465, %v10464
      %v10486 = vpack.c.b16 %v10467, %v10466
      %v10487 = vpack.c.b16 %v10469, %v10468
      %v10488 = vpack.c.b16 %v10471, %v10470
      %v10489 = vpack.c.b16 %v10473, %v10472
      %v10491 = vsel %vm2169, %v10474, 0
      %v10494 = vsel %vm2169, %v10475, 0
      %v10497 = vsel %vm2169, %v10476, 0
      %v10500 = vsel %vm2169, %v10477, 0
      %v10503 = vsel %vm2169, %v10478, 0
      %v10506 = vsel %vm2169, %v10479, 0
      %v10509 = vsel %vm2169, %v10480, 0
      %v10512 = vsel %vm2169, %v10481, 0
      %v10515 = vsel %vm2169, %v10482, 0
      %v10518 = vsel %vm2169, %v10483, 0
      %v10521 = vsel %vm2169, %v10484, 0
      %v10524 = vsel %vm2169, %v10485, 0
      %v10527 = vsel %vm2169, %v10486, 0
      %v10530 = vsel %vm2169, %v10487, 0
      %v10533 = vsel %vm2169, %v10488, 0
      %v10536 = vsel %vm2169, %v10489, 0
      %10538 = vmatprep.subr.bf16.mxu0 0
      %10539 = vmatpush1.bf16.msra.mxu0 %v10374
      %10540 = vmatprep.subr.bf16.mxu0 0
      %10541 = vmatpush1.bf16.msra.mxu0 %v10375
      %10542 = vmatprep.subr.bf16.mxu0 0
      %10543 = vmatpush1.bf16.msra.mxu0 %v10376
      %10544 = vmatprep.subr.bf16.mxu0 0
      %10545 = vmatpush1.bf16.msra.mxu0 %v10377
      %10546 = vmatprep.subr.bf16.mxu0 0
      %10547 = vmatpush1.bf16.msra.mxu0 0
      %10548 = vmatprep.subr.bf16.mxu0 0
      %10549 = vmatpush1.bf16.msra.mxu0 0
      %10550 = vmatprep.subr.bf16.mxu0 0
      %10551 = vmatpush1.bf16.msra.mxu0 0
      %10552 = vmatprep.subr.bf16.mxu0 0
      %10553 = vmatpush1.bf16.msra.mxu0 0
      %10554 = vmatprep.subr.bf16.mxu0 0
      %10555 = vmatpush1.bf16.msra.mxu0 0
      %10556 = vmatprep.subr.bf16.mxu0 0
      %10557 = vmatpush1.bf16.msra.mxu0 0
      %10558 = vmatprep.subr.bf16.mxu0 0
      %10559 = vmatpush1.bf16.msra.mxu0 0
      %10560 = vmatprep.subr.bf16.mxu0 0
      %10561 = vmatpush1.bf16.msra.mxu0 0
      %10562 = vmatprep.subr.bf16.mxu0 0
      %10563 = vmatpush1.bf16.msra.mxu0 0
      %10564 = vmatprep.subr.bf16.mxu0 0
      %10565 = vmatpush1.bf16.msra.mxu0 0
      %10566 = vmatprep.subr.bf16.mxu0 0
      %10567 = vmatpush1.bf16.msra.mxu0 0
      %10568 = vmatprep.subr.bf16.mxu0 0
      %10569 = vmatpush1.bf16.msra.mxu0 0
      %10570 = vmatprep.mubr.bf16.mxu0 0
      %10571 = vmatmul.mubr.bf16.gmra.mrb[0].mxu0 %v10491
      %v10572 = vpop.f32.mrb[0].mxu0
      %v10573 = vadd.f32 0.0, %v10572
      %v10574 = vpop.f32.mrb[0].mxu0
      %v10575 = vpop.f32.mrb[0].mxu0
      %v10576 = vadd.f32 0.0, %v10575
      %v10577 = vpop.f32.mrb[0].mxu0
      %10578 = vmatprep.mubr.bf16.mxu0 0
      %10579 = vmatmul.mubr.bf16.gmra.mrb[0].mxu0 %v10494
      %v10580 = vpop.f32.mrb[0].mxu0
      %v10581 = vadd.f32 0.0, %v10580
      %v10582 = vpop.f32.mrb[0].mxu0
      %v10583 = vpop.f32.mrb[0].mxu0
      %v10584 = vadd.f32 0.0, %v10583
      %v10585 = vpop.f32.mrb[0].mxu0
      %10586 = vmatprep.mubr.bf16.mxu0 0
      %10587 = vmatmul.mubr.bf16.gmra.mrb[0].mxu0 %v10497
      %v10588 = vpop.f32.mrb[0].mxu0
      %v10589 = vadd.f32 0.0, %v10588
      %v10590 = vpop.f32.mrb[0].mxu0
      %v10591 = vpop.f32.mrb[0].mxu0
      %v10592 = vadd.f32 0.0, %v10591
      %v10593 = vpop.f32.mrb[0].mxu0
      %10594 = vmatprep.mubr.bf16.mxu0 0
      %10595 = vmatmul.mubr.bf16.gmra.mrb[0].mxu0 %v10500
      %v10596 = vpop.f32.mrb[0].mxu0
      %v10597 = vadd.f32 0.0, %v10596
      %v10598 = vpop.f32.mrb[0].mxu0
      %v10599 = vpop.f32.mrb[0].mxu0
      %v10600 = vadd.f32 0.0, %v10599
      %v10601 = vpop.f32.mrb[0].mxu0
      %10602 = vmatprep.mubr.bf16.mxu0 0
      %10603 = vmatmul.mubr.bf16.gmra.mrb[0].mxu0 %v10503
      %v10604 = vpop.f32.mrb[0].mxu0
      %v10605 = vadd.f32 0.0, %v10604
      %v10606 = vpop.f32.mrb[0].mxu0
      %v10607 = vpop.f32.mrb[0].mxu0
      %v10608 = vadd.f32 0.0, %v10607
      %v10609 = vpop.f32.mrb[0].mxu0
      %10610 = vmatprep.mubr.bf16.mxu0 0
      %10611 = vmatmul.mubr.bf16.gmra.mrb[0].mxu0 %v10506
      %v10612 = vpop.f32.mrb[0].mxu0
      %v10613 = vadd.f32 0.0, %v10612
      %v10614 = vpop.f32.mrb[0].mxu0
      %v10615 = vpop.f32.mrb[0].mxu0
      %v10616 = vadd.f32 0.0, %v10615
      %v10617 = vpop.f32.mrb[0].mxu0
      %10618 = vmatprep.mubr.bf16.mxu0 0
      %10619 = vmatmul.mubr.bf16.gmra.mrb[0].mxu0 %v10509
      %v10620 = vpop.f32.mrb[0].mxu0
      %v10621 = vadd.f32 0.0, %v10620
      %v10622 = vpop.f32.mrb[0].mxu0
      %v10623 = vpop.f32.mrb[0].mxu0
      %v10624 = vadd.f32 0.0, %v10623
      %v10625 = vpop.f32.mrb[0].mxu0
      %10626 = vmatprep.mubr.bf16.mxu0 0
      %10627 = vmatmul.mubr.bf16.gmra.mrb[0].mxu0 %v10512
      %v10628 = vpop.f32.mrb[0].mxu0
      %v10629 = vadd.f32 0.0, %v10628
      %v10630 = vpop.f32.mrb[0].mxu0
      %v10631 = vpop.f32.mrb[0].mxu0
      %v10632 = vadd.f32 0.0, %v10631
      %v10633 = vpop.f32.mrb[0].mxu0
      %10634 = vmatprep.mubr.bf16.mxu0 0
      %10635 = vmatmul.mubr.bf16.gmra.mrb[0].mxu0 %v10515
      %v10636 = vpop.f32.mrb[0].mxu0
      %v10637 = vadd.f32 0.0, %v10636
      %v10638 = vpop.f32.mrb[0].mxu0
      %v10639 = vpop.f32.mrb[0].mxu0
      %v10640 = vadd.f32 0.0, %v10639
      %v10641 = vpop.f32.mrb[0].mxu0
      %10642 = vmatprep.mubr.bf16.mxu0 0
      %10643 = vmatmul.mubr.bf16.gmra.mrb[0].mxu0 %v10518
      %v10644 = vpop.f32.mrb[0].mxu0
      %v10645 = vadd.f32 0.0, %v10644
      %v10646 = vpop.f32.mrb[0].mxu0
      %v10647 = vpop.f32.mrb[0].mxu0
      %v10648 = vadd.f32 0.0, %v10647
      %v10649 = vpop.f32.mrb[0].mxu0
      %10650 = vmatprep.mubr.bf16.mxu0 0
      %10651 = vmatmul.mubr.bf16.gmra.mrb[0].mxu0 %v10521
      %v10652 = vpop.f32.mrb[0].mxu0
      %v10653 = vadd.f32 0.0, %v10652
      %v10654 = vpop.f32.mrb[0].mxu0
      %v10655 = vpop.f32.mrb[0].mxu0
      %v10656 = vadd.f32 0.0, %v10655
      %v10657 = vpop.f32.mrb[0].mxu0
      %10658 = vmatprep.mubr.bf16.mxu0 0
      %10659 = vmatmul.mubr.bf16.gmra.mrb[0].mxu0 %v10524
      %v10660 = vpop.f32.mrb[0].mxu0
      %v10661 = vadd.f32 0.0, %v10660
      %v10662 = vpop.f32.mrb[0].mxu0
      %v10663 = vpop.f32.mrb[0].mxu0
      %v10664 = vadd.f32 0.0, %v10663
      %v10665 = vpop.f32.mrb[0].mxu0
      %10666 = vmatprep.mubr.bf16.mxu0 0
      %10667 = vmatmul.mubr.bf16.gmra.mrb[0].mxu0 %v10527
      %v10668 = vpop.f32.mrb[0].mxu0
      %v10669 = vadd.f32 0.0, %v10668
      %v10670 = vpop.f32.mrb[0].mxu0
      %v10671 = vpop.f32.mrb[0].mxu0
      %v10672 = vadd.f32 0.0, %v10671
      %v10673 = vpop.f32.mrb[0].mxu0
      %10674 = vmatprep.mubr.bf16.mxu0 0
      %10675 = vmatmul.mubr.bf16.gmra.mrb[0].mxu0 %v10530
      %v10676 = vpop.f32.mrb[0].mxu0
      %v10677 = vadd.f32 0.0, %v10676
      %v10678 = vpop.f32.mrb[0].mxu0
      %v10679 = vpop.f32.mrb[0].mxu0
      %v10680 = vadd.f32 0.0, %v10679
      %v10681 = vpop.f32.mrb[0].mxu0
      %10682 = vmatprep.mubr.bf16.mxu0 0
      %10683 = vmatmul.mubr.bf16.gmra.mrb[0].mxu0 %v10533
      %v10684 = vpop.f32.mrb[0].mxu0
      %v10685 = vadd.f32 0.0, %v10684
      %v10686 = vpop.f32.mrb[0].mxu0
      %v10687 = vpop.f32.mrb[0].mxu0
      %v10688 = vadd.f32 0.0, %v10687
      %v10689 = vpop.f32.mrb[0].mxu0
      %10690 = vmatprep.mubr.bf16.mxu0 0
      %10691 = vmatmul.mubr.bf16.gmra.mrb[0].mxu0 %v10536
      %v10692 = vpop.f32.mrb[0].mxu0
      %v10693 = vadd.f32 0.0, %v10692
      %v10694 = vpop.f32.mrb[0].mxu0
      %v10695 = vpop.f32.mrb[0].mxu0
      %v10696 = vadd.f32 0.0, %v10695
      %v10697 = vpop.f32.mrb[0].mxu0
      %10698 = vdwg.mxu0
      %v10699 = vpack.c.bf16 %v10576, %v10573
      %v10700 = vpack.c.bf16 %v10584, %v10581
      %v10701 = vpack.c.bf16 %v10592, %v10589
      %v10702 = vpack.c.bf16 %v10600, %v10597
      %v10703 = vpack.c.bf16 %v10608, %v10605
      %v10704 = vpack.c.bf16 %v10616, %v10613
      %v10705 = vpack.c.bf16 %v10624, %v10621
      %v10706 = vpack.c.bf16 %v10632, %v10629
      %v10707 = vpack.c.bf16 %v10640, %v10637
      %v10708 = vpack.c.bf16 %v10648, %v10645
      %v10709 = vpack.c.bf16 %v10656, %v10653
      %v10710 = vpack.c.bf16 %v10664, %v10661
      %v10711 = vpack.c.bf16 %v10672, %v10669
      %v10712 = vpack.c.bf16 %v10680, %v10677
      %v10713 = vpack.c.bf16 %v10688, %v10685
      %v10714 = vpack.c.bf16 %v10696, %v10693
      %10719 = vrot.lane.b32.xlu0 %v10703, 64
      %v10720 = vpop.permute.xlu0 %10719
      %10721 = vrot.lane.b32.xlu0 %v10704, 64
      %v10722 = vpop.permute.xlu0 %10721
      %10723 = vrot.lane.b32.xlu0 %v10705, 64
      %v10724 = vpop.permute.xlu0 %10723
      %10725 = vrot.lane.b32.xlu0 %v10706, 64
      %v10726 = vpop.permute.xlu0 %10725
      %10731 = vrot.lane.b32.xlu0 %v10711, 64
      %v10732 = vpop.permute.xlu0 %10731
      %10733 = vrot.lane.b32.xlu0 %v10712, 64
      %v10734 = vpop.permute.xlu0 %10733
      %10735 = vrot.lane.b32.xlu0 %v10713, 64
      %v10736 = vpop.permute.xlu0 %10735
      %10737 = vrot.lane.b32.xlu0 %v10714, 64
      %v10738 = vpop.permute.xlu0 %10737
      %v10741 = vsel %vm2169, %v10699, %v10720
      %v10745 = vsel %vm2169, %v10700, %v10722
      %v10749 = vsel %vm2169, %v10701, %v10724
      %v10753 = vsel %vm2169, %v10702, %v10726
      %v10757 = vsel %vm2169, %v10707, %v10732
      %v10761 = vsel %vm2169, %v10708, %v10734
      %v10765 = vsel %vm2169, %v10709, %v10736
      %v10769 = vsel %vm2169, %v10710, %v10738
      %v10771 = vld [vmem:[%s59] sm:$0xf]
      %v10772 = vld [vmem:[%s59 + $0x4] sm:$0xf]
      %v10773 = vld [vmem:[%s59 + $0x8] sm:$0xf]
      %v10774 = vld [vmem:[%s59 + $0xc] sm:$0xf]
      %v10775 = vld [vmem:[%s59 + $0x10] sm:$0xf]
      %v10776 = vld [vmem:[%s59 + $0x14] sm:$0xf]
      %v10777 = vld [vmem:[%s59 + $0x18] sm:$0xf]
      %v10778 = vld [vmem:[%s59 + $0x1c] sm:$0xf]
      %v10779 = vld [vmem:[%s59 + $0x20] sm:$0xf]
      %v10780 = vld [vmem:[%s59 + $0x24] sm:$0xf]
      %v10781 = vld [vmem:[%s59 + $0x28] sm:$0xf]
      %v10782 = vld [vmem:[%s59 + $0x2c] sm:$0xf]
      %v10783 = vld [vmem:[%s59 + $0x30] sm:$0xf]
      %v10784 = vld [vmem:[%s59 + $0x34] sm:$0xf]
      %v10785 = vld [vmem:[%s59 + $0x38] sm:$0xf]
      %v10786 = vld [vmem:[%s59 + $0x3c] sm:$0xf]
      %v10787 = vld [vmem:[%s59 + $0x40] sm:$0xf]
      %v10788 = vld [vmem:[%s59 + $0x44] sm:$0xf]
      %v10789 = vld [vmem:[%s59 + $0x48] sm:$0xf]
      %v10790 = vld [vmem:[%s59 + $0x4c] sm:$0xf]
      %v10791 = vld [vmem:[%s59 + $0x50] sm:$0xf]
      %v10792 = vld [vmem:[%s59 + $0x54] sm:$0xf]
      %v10793 = vld [vmem:[%s59 + $0x58] sm:$0xf]
      %v10794 = vld [vmem:[%s59 + $0x5c] sm:$0xf]
      %v10795 = vld [vmem:[%s59 + $0x60] sm:$0xf]
      %v10796 = vld [vmem:[%s59 + $0x64] sm:$0xf]
      %v10797 = vld [vmem:[%s59 + $0x68] sm:$0xf]
      %v10798 = vld [vmem:[%s59 + $0x6c] sm:$0xf]
      %v10799 = vld [vmem:[%s59 + $0x70] sm:$0xf]
      %v10800 = vld [vmem:[%s59 + $0x74] sm:$0xf]
      %v10801 = vld [vmem:[%s59 + $0x78] sm:$0xf]
      %v10802 = vld [vmem:[%s59 + $0x7c] sm:$0xf]
      %v10835 = vunpack.c.l.b16 %v10771
      %v10836 = vunpack.c.l.b16 %v10772
      %v10837 = vunpack.c.l.b16 %v10773
      %v10838 = vunpack.c.l.b16 %v10774
      %v10839 = vunpack.c.l.b16 %v10775
      %v10840 = vunpack.c.l.b16 %v10776
      %v10841 = vunpack.c.l.b16 %v10777
      %v10842 = vunpack.c.l.b16 %v10778
      %v10843 = vunpack.c.l.b16 %v10779
      %v10844 = vunpack.c.l.b16 %v10780
      %v10845 = vunpack.c.l.b16 %v10781
      %v10846 = vunpack.c.l.b16 %v10782
      %v10847 = vunpack.c.l.b16 %v10783
      %v10848 = vunpack.c.l.b16 %v10784
      %v10849 = vunpack.c.l.b16 %v10785
      %v10850 = vunpack.c.l.b16 %v10786
      %v10851 = vunpack.c.l.b16 %v10787
      %v10852 = vunpack.c.l.b16 %v10788
      %v10853 = vunpack.c.l.b16 %v10789
      %v10854 = vunpack.c.l.b16 %v10790
      %v10855 = vunpack.c.l.b16 %v10791
      %v10856 = vunpack.c.l.b16 %v10792
      %v10857 = vunpack.c.l.b16 %v10793
      %v10858 = vunpack.c.l.b16 %v10794
      %v10859 = vunpack.c.l.b16 %v10795
      %v10860 = vunpack.c.l.b16 %v10796
      %v10861 = vunpack.c.l.b16 %v10797
      %v10862 = vunpack.c.l.b16 %v10798
      %v10863 = vunpack.c.l.b16 %v10799
      %v10864 = vunpack.c.l.b16 %v10800
      %v10865 = vunpack.c.l.b16 %v10801
      %v10866 = vunpack.c.l.b16 %v10802
      %v10867 = vpack.c.b16 %v10836, %v10835
      %v10868 = vpack.c.b16 %v10838, %v10837
      %v10869 = vpack.c.b16 %v10840, %v10839
      %v10870 = vpack.c.b16 %v10842, %v10841
      %v10871 = vpack.c.b16 %v10844, %v10843
      %v10872 = vpack.c.b16 %v10846, %v10845
      %v10873 = vpack.c.b16 %v10848, %v10847
      %v10874 = vpack.c.b16 %v10850, %v10849
      %v10875 = vpack.c.b16 %v10852, %v10851
      %v10876 = vpack.c.b16 %v10854, %v10853
      %v10877 = vpack.c.b16 %v10856, %v10855
      %v10878 = vpack.c.b16 %v10858, %v10857
      %v10879 = vpack.c.b16 %v10860, %v10859
      %v10880 = vpack.c.b16 %v10862, %v10861
      %v10881 = vpack.c.b16 %v10864, %v10863
      %v10882 = vpack.c.b16 %v10866, %v10865
      %10899 = vmatprep.subr.bf16.mxu0 0
      %10900 = vmatpush1.bf16.msra.mxu0 %v10867
      %10901 = vmatprep.subr.bf16.mxu0 0
      %10902 = vmatpush1.bf16.msra.mxu0 %v10868
      %10903 = vmatprep.subr.bf16.mxu0 0
      %10904 = vmatpush1.bf16.msra.mxu0 %v10869
      %10905 = vmatprep.subr.bf16.mxu0 0
      %10906 = vmatpush1.bf16.msra.mxu0 %v10870
      %10907 = vmatprep.subr.bf16.mxu0 0
      %10908 = vmatpush1.bf16.msra.mxu0 %v10871
      %10909 = vmatprep.subr.bf16.mxu0 0
      %10910 = vmatpush1.bf16.msra.mxu0 %v10872
      %10911 = vmatprep.subr.bf16.mxu0 0
      %10912 = vmatpush1.bf16.msra.mxu0 %v10873
      %10913 = vmatprep.subr.bf16.mxu0 0
      %10914 = vmatpush1.bf16.msra.mxu0 %v10874
      %10915 = vmatprep.subr.bf16.mxu0 0
      %10916 = vmatpush1.bf16.msra.mxu0 %v10875
      %10917 = vmatprep.subr.bf16.mxu0 0
      %10918 = vmatpush1.bf16.msra.mxu0 %v10876
      %10919 = vmatprep.subr.bf16.mxu0 0
      %10920 = vmatpush1.bf16.msra.mxu0 %v10877
      %10921 = vmatprep.subr.bf16.mxu0 0
      %10922 = vmatpush1.bf16.msra.mxu0 %v10878
      %10923 = vmatprep.subr.bf16.mxu0 0
      %10924 = vmatpush1.bf16.msra.mxu0 %v10879
      %10925 = vmatprep.subr.bf16.mxu0 0
      %10926 = vmatpush1.bf16.msra.mxu0 %v10880
      %10927 = vmatprep.subr.bf16.mxu0 0
      %10928 = vmatpush1.bf16.msra.mxu0 %v10881
      %10929 = vmatprep.subr.bf16.mxu0 0
      %10930 = vmatpush1.bf16.msra.mxu0 %v10882
      %10931 = vmatprep.mubr.bf16.mxu0 %v10757
      %10932 = vmatmul.mubr.bf16.gmra.mrb[0].mxu0 %v10741
      %v10933 = vpop.f32.mrb[0].mxu0
      %v10934 = vadd.f32 0.0, %v10933
      %v10935 = vpop.f32.mrb[0].mxu0
      %v10936 = vpop.f32.mrb[0].mxu0
      %v10937 = vadd.f32 0.0, %v10936
      %v10938 = vpop.f32.mrb[0].mxu0
      %10939 = vmatprep.mubr.bf16.mxu0 %v10761
      %10940 = vmatmul.mubr.bf16.gmra.mrb[0].mxu0 %v10745
      %v10941 = vpop.f32.mrb[0].mxu0
      %v10942 = vadd.f32 0.0, %v10941
      %v10943 = vpop.f32.mrb[0].mxu0
      %v10944 = vpop.f32.mrb[0].mxu0
      %v10945 = vadd.f32 0.0, %v10944
      %v10946 = vpop.f32.mrb[0].mxu0
      %10947 = vmatprep.mubr.bf16.mxu0 %v10765
      %10948 = vmatmul.mubr.bf16.gmra.mrb[0].mxu0 %v10749
      %v10949 = vpop.f32.mrb[0].mxu0
      %v10950 = vadd.f32 0.0, %v10949
      %v10951 = vpop.f32.mrb[0].mxu0
      %v10952 = vpop.f32.mrb[0].mxu0
      %v10953 = vadd.f32 0.0, %v10952
      %v10954 = vpop.f32.mrb[0].mxu0
      %10955 = vmatprep.mubr.bf16.mxu0 %v10769
      %10956 = vmatmul.mubr.bf16.gmra.mrb[0].mxu0 %v10753
      %v10957 = vpop.f32.mrb[0].mxu0
      %v10958 = vadd.f32 0.0, %v10957
      %v10959 = vpop.f32.mrb[0].mxu0
      %v10960 = vpop.f32.mrb[0].mxu0
      %v10961 = vadd.f32 0.0, %v10960
      %v10962 = vpop.f32.mrb[0].mxu0
      %10963 = vdwg.mxu0
      %v10964 = vld [vmem:[%s61] sm:$0x1]
      %v10966 = vlaneseq
      %v10967 = vshrl.u32 %v10966, 7
      %v10968 = vsub.s32 0, %v10967
      %v10969 = vrot.slane %v10964, %v10968
      %v10971 = vmul.f32 %v10934, %v10969
      %v10972 = vmul.f32 %v10937, %v10969
      %v10973 = vmul.f32 %v10942, %v10969
      %v10974 = vmul.f32 %v10945, %v10969
      %v10975 = vmul.f32 %v10950, %v10969
      %v10976 = vmul.f32 %v10953, %v10969
      %v10977 = vmul.f32 %v10958, %v10969
      %v10978 = vmul.f32 %v10961, %v10969
      %v10979 = vld [vmem:[%s63] sm:$0x1]
      %v10981 = vlaneseq
      %v10982 = vshrl.u32 %v10981, 7
      %v10983 = vsub.s32 0, %v10982
      %v10984 = vrot.slane %v10979, %v10983
      %v10986 = vadd.f32 %v10971, %v10984
      %v10987 = vadd.f32 %v10972, %v10984
      %v10988 = vadd.f32 %v10973, %v10984
      %v10989 = vadd.f32 %v10974, %v10984
      %v10990 = vadd.f32 %v10975, %v10984
      %v10991 = vadd.f32 %v10976, %v10984
      %v10992 = vadd.f32 %v10977, %v10984
      %v10993 = vadd.f32 %v10978, %v10984
      %v10994 = vmax.f32 %v10986, 0.0
      %v10995 = vmax.f32 %v10987, 0.0
      %v10996 = vmax.f32 %v10988, 0.0
      %v10997 = vmax.f32 %v10989, 0.0
      %v10998 = vmax.f32 %v10990, 0.0
      %v10999 = vmax.f32 %v10991, 0.0
      %v11000 = vmax.f32 %v10992, 0.0
      %v11001 = vmax.f32 %v10993, 0.0
      %v11002 = vpack.c.bf16 %v10995, %v10994
      %v11003 = vpack.c.bf16 %v10997, %v10996
      %v11004 = vpack.c.bf16 %v10999, %v10998
      %v11005 = vpack.c.bf16 %v11001, %v11000
      %v11006 = vld [vmem:[%s65] sm:$0xf]
      %v11007 = vld [vmem:[%s65 + $0x4] sm:$0xf]
      %v11008 = vld [vmem:[%s65 + $0x8] sm:$0xf]
      %v11009 = vld [vmem:[%s65 + $0xc] sm:$0xf]
      %v11010 = vld [vmem:[%s65 + $0x10] sm:$0xf]
      %v11011 = vld [vmem:[%s65 + $0x14] sm:$0xf]
      %v11012 = vld [vmem:[%s65 + $0x18] sm:$0xf]
      %v11013 = vld [vmem:[%s65 + $0x1c] sm:$0xf]
      %v11014 = vld [vmem:[%s65 + $0x20] sm:$0xf]
      %v11015 = vld [vmem:[%s65 + $0x24] sm:$0xf]
      %v11016 = vld [vmem:[%s65 + $0x28] sm:$0xf]
      %v11017 = vld [vmem:[%s65 + $0x2c] sm:$0xf]
      %v11018 = vld [vmem:[%s65 + $0x30] sm:$0xf]
      %v11019 = vld [vmem:[%s65 + $0x34] sm:$0xf]
      %v11020 = vld [vmem:[%s65 + $0x38] sm:$0xf]
      %v11021 = vld [vmem:[%s65 + $0x3c] sm:$0xf]
      %v11022 = vld [vmem:[%s65 + $0x40] sm:$0xf]
      %v11023 = vld [vmem:[%s65 + $0x44] sm:$0xf]
      %v11024 = vld [vmem:[%s65 + $0x48] sm:$0xf]
      %v11025 = vld [vmem:[%s65 + $0x4c] sm:$0xf]
      %v11026 = vld [vmem:[%s65 + $0x50] sm:$0xf]
      %v11027 = vld [vmem:[%s65 + $0x54] sm:$0xf]
      %v11028 = vld [vmem:[%s65 + $0x58] sm:$0xf]
      %v11029 = vld [vmem:[%s65 + $0x5c] sm:$0xf]
      %v11030 = vld [vmem:[%s65 + $0x60] sm:$0xf]
      %v11031 = vld [vmem:[%s65 + $0x64] sm:$0xf]
      %v11032 = vld [vmem:[%s65 + $0x68] sm:$0xf]
      %v11033 = vld [vmem:[%s65 + $0x6c] sm:$0xf]
      %v11034 = vld [vmem:[%s65 + $0x70] sm:$0xf]
      %v11035 = vld [vmem:[%s65 + $0x74] sm:$0xf]
      %v11036 = vld [vmem:[%s65 + $0x78] sm:$0xf]
      %v11037 = vld [vmem:[%s65 + $0x7c] sm:$0xf]
      %s11038 = scalar_lea.vmem %s65, 128
      %v11039 = vld [vmem:[%s11038] sm:$0xf]
      %v11040 = vld [vmem:[%s11038 + $0x4] sm:$0xf]
      %v11041 = vld [vmem:[%s11038 + $0x8] sm:$0xf]
      %v11042 = vld [vmem:[%s11038 + $0xc] sm:$0xf]
      %v11043 = vld [vmem:[%s11038 + $0x10] sm:$0xf]
      %v11044 = vld [vmem:[%s11038 + $0x14] sm:$0xf]
      %v11045 = vld [vmem:[%s11038 + $0x18] sm:$0xf]
      %v11046 = vld [vmem:[%s11038 + $0x1c] sm:$0xf]
      %v11047 = vld [vmem:[%s11038 + $0x20] sm:$0xf]
      %v11048 = vld [vmem:[%s11038 + $0x24] sm:$0xf]
      %v11049 = vld [vmem:[%s11038 + $0x28] sm:$0xf]
      %v11050 = vld [vmem:[%s11038 + $0x2c] sm:$0xf]
      %v11051 = vld [vmem:[%s11038 + $0x30] sm:$0xf]
      %v11052 = vld [vmem:[%s11038 + $0x34] sm:$0xf]
      %v11053 = vld [vmem:[%s11038 + $0x38] sm:$0xf]
      %v11054 = vld [vmem:[%s11038 + $0x3c] sm:$0xf]
      %v11055 = vld [vmem:[%s11038 + $0x40] sm:$0xf]
      %v11056 = vld [vmem:[%s11038 + $0x44] sm:$0xf]
      %v11057 = vld [vmem:[%s11038 + $0x48] sm:$0xf]
      %v11058 = vld [vmem:[%s11038 + $0x4c] sm:$0xf]
      %v11059 = vld [vmem:[%s11038 + $0x50] sm:$0xf]
      %v11060 = vld [vmem:[%s11038 + $0x54] sm:$0xf]
      %v11061 = vld [vmem:[%s11038 + $0x58] sm:$0xf]
      %v11062 = vld [vmem:[%s11038 + $0x5c] sm:$0xf]
      %v11063 = vld [vmem:[%s11038 + $0x60] sm:$0xf]
      %v11064 = vld [vmem:[%s11038 + $0x64] sm:$0xf]
      %v11065 = vld [vmem:[%s11038 + $0x68] sm:$0xf]
      %v11066 = vld [vmem:[%s11038 + $0x6c] sm:$0xf]
      %v11067 = vld [vmem:[%s11038 + $0x70] sm:$0xf]
      %v11068 = vld [vmem:[%s11038 + $0x74] sm:$0xf]
      %v11069 = vld [vmem:[%s11038 + $0x78] sm:$0xf]
      %v11070 = vld [vmem:[%s11038 + $0x7c] sm:$0xf]
      %v11103 = vunpack.c.l.b16 %v11039
      %v11104 = vunpack.c.l.b16 %v11040
      %v11105 = vunpack.c.l.b16 %v11041
      %v11106 = vunpack.c.l.b16 %v11042
      %v11107 = vunpack.c.l.b16 %v11043
      %v11108 = vunpack.c.l.b16 %v11044
      %v11109 = vunpack.c.l.b16 %v11045
      %v11110 = vunpack.c.l.b16 %v11046
      %v11111 = vunpack.c.l.b16 %v11047
      %v11112 = vunpack.c.l.b16 %v11048
      %v11113 = vunpack.c.l.b16 %v11049
      %v11114 = vunpack.c.l.b16 %v11050
      %v11115 = vunpack.c.l.b16 %v11051
      %v11116 = vunpack.c.l.b16 %v11052
      %v11117 = vunpack.c.l.b16 %v11053
      %v11118 = vunpack.c.l.b16 %v11054
      %v11119 = vunpack.c.l.b16 %v11055
      %v11120 = vunpack.c.l.b16 %v11056
      %v11121 = vunpack.c.l.b16 %v11057
      %v11122 = vunpack.c.l.b16 %v11058
      %v11123 = vunpack.c.l.b16 %v11059
      %v11124 = vunpack.c.l.b16 %v11060
      %v11125 = vunpack.c.l.b16 %v11061
      %v11126 = vunpack.c.l.b16 %v11062
      %v11127 = vunpack.c.l.b16 %v11063
      %v11128 = vunpack.c.l.b16 %v11064
      %v11129 = vunpack.c.l.b16 %v11065
      %v11130 = vunpack.c.l.b16 %v11066
      %v11131 = vunpack.c.l.b16 %v11067
      %v11132 = vunpack.c.l.b16 %v11068
      %v11133 = vunpack.c.l.b16 %v11069
      %v11134 = vunpack.c.l.b16 %v11070
      %v11135 = vpack.c.b16 %v11104, %v11103
      %v11136 = vpack.c.b16 %v11106, %v11105
      %v11137 = vpack.c.b16 %v11108, %v11107
      %v11138 = vpack.c.b16 %v11110, %v11109
      %v11139 = vpack.c.b16 %v11112, %v11111
      %v11140 = vpack.c.b16 %v11114, %v11113
      %v11141 = vpack.c.b16 %v11116, %v11115
      %v11142 = vpack.c.b16 %v11118, %v11117
      %v11143 = vpack.c.b16 %v11120, %v11119
      %v11144 = vpack.c.b16 %v11122, %v11121
      %v11145 = vpack.c.b16 %v11124, %v11123
      %v11146 = vpack.c.b16 %v11126, %v11125
      %v11147 = vpack.c.b16 %v11128, %v11127
      %v11148 = vpack.c.b16 %v11130, %v11129
      %v11149 = vpack.c.b16 %v11132, %v11131
      %v11150 = vpack.c.b16 %v11134, %v11133
      %11155 = vrot.lane.b32.xlu0 %v11002, 96
      %v11156 = vpop.permute.xlu0 %11155
      %11157 = vrot.lane.b32.xlu0 %v11003, 96
      %v11158 = vpop.permute.xlu0 %11157
      %11159 = vrot.lane.b32.xlu0 %v11004, 96
      %v11160 = vpop.permute.xlu0 %11159
      %11161 = vrot.lane.b32.xlu0 %v11005, 96
      %v11162 = vpop.permute.xlu0 %11161
      %v11168 = vsel %vm2169, %v11135, 0
      %v11171 = vsel %vm2169, %v11136, 0
      %v11174 = vsel %vm2169, %v11137, 0
      %v11177 = vsel %vm2169, %v11138, 0
      %v11180 = vsel %vm2169, %v11139, 0
      %v11183 = vsel %vm2169, %v11140, 0
      %v11186 = vsel %vm2169, %v11141, 0
      %v11189 = vsel %vm2169, %v11142, 0
      %v11192 = vsel %vm2169, %v11143, 0
      %v11195 = vsel %vm2169, %v11144, 0
      %v11198 = vsel %vm2169, %v11145, 0
      %v11201 = vsel %vm2169, %v11146, 0
      %v11204 = vsel %vm2169, %v11147, 0
      %v11207 = vsel %vm2169, %v11148, 0
      %v11210 = vsel %vm2169, %v11149, 0
      %v11213 = vsel %vm2169, %v11150, 0
      %11215 = vmatprep.subr.bf16.mxu0 0
      %11216 = vmatpush1.bf16.msra.mxu0 %v11156
      %11217 = vmatprep.subr.bf16.mxu0 0
      %11218 = vmatpush1.bf16.msra.mxu0 %v11158
      %11219 = vmatprep.subr.bf16.mxu0 0
      %11220 = vmatpush1.bf16.msra.mxu0 %v11160
      %11221 = vmatprep.subr.bf16.mxu0 0
      %11222 = vmatpush1.bf16.msra.mxu0 %v11162
      %11223 = vmatprep.subr.bf16.mxu0 0
      %11224 = vmatpush1.bf16.msra.mxu0 0
      %11225 = vmatprep.subr.bf16.mxu0 0
      %11226 = vmatpush1.bf16.msra.mxu0 0
      %11227 = vmatprep.subr.bf16.mxu0 0
      %11228 = vmatpush1.bf16.msra.mxu0 0
      %11229 = vmatprep.subr.bf16.mxu0 0
      %11230 = vmatpush1.bf16.msra.mxu0 0
      %11231 = vmatprep.subr.bf16.mxu0 0
      %11232 = vmatpush1.bf16.msra.mxu0 0
      %11233 = vmatprep.subr.bf16.mxu0 0
      %11234 = vmatpush1.bf16.msra.mxu0 0
      %11235 = vmatprep.subr.bf16.mxu0 0
      %11236 = vmatpush1.bf16.msra.mxu0 0
      %11237 = vmatprep.subr.bf16.mxu0 0
      %11238 = vmatpush1.bf16.msra.mxu0 0
      %11239 = vmatprep.subr.bf16.mxu0 0
      %11240 = vmatpush1.bf16.msra.mxu0 0
      %11241 = vmatprep.subr.bf16.mxu0 0
      %11242 = vmatpush1.bf16.msra.mxu0 0
      %11243 = vmatprep.subr.bf16.mxu0 0
      %11244 = vmatpush1.bf16.msra.mxu0 0
      %11245 = vmatprep.subr.bf16.mxu0 0
      %11246 = vmatpush1.bf16.msra.mxu0 0
      %11247 = vmatprep.mubr.bf16.mxu0 0
      %11248 = vmatmul.mubr.bf16.gmra.mrb[0].mxu0 %v11168
      %v11249 = vpop.f32.mrb[0].mxu0
      %v11250 = vadd.f32 0.0, %v11249
      %v11251 = vpop.f32.mrb[0].mxu0
      %v11252 = vpop.f32.mrb[0].mxu0
      %v11253 = vadd.f32 0.0, %v11252
      %v11254 = vpop.f32.mrb[0].mxu0
      %11255 = vmatprep.mubr.bf16.mxu0 0
      %11256 = vmatmul.mubr.bf16.gmra.mrb[0].mxu0 %v11171
      %v11257 = vpop.f32.mrb[0].mxu0
      %v11258 = vadd.f32 0.0, %v11257
      %v11259 = vpop.f32.mrb[0].mxu0
      %v11260 = vpop.f32.mrb[0].mxu0
      %v11261 = vadd.f32 0.0, %v11260
      %v11262 = vpop.f32.mrb[0].mxu0
      %11263 = vmatprep.mubr.bf16.mxu0 0
      %11264 = vmatmul.mubr.bf16.gmra.mrb[0].mxu0 %v11174
      %v11265 = vpop.f32.mrb[0].mxu0
      %v11266 = vadd.f32 0.0, %v11265
      %v11267 = vpop.f32.mrb[0].mxu0
      %v11268 = vpop.f32.mrb[0].mxu0
      %v11269 = vadd.f32 0.0, %v11268
      %v11270 = vpop.f32.mrb[0].mxu0
      %11271 = vmatprep.mubr.bf16.mxu0 0
      %11272 = vmatmul.mubr.bf16.gmra.mrb[0].mxu0 %v11177
      %v11273 = vpop.f32.mrb[0].mxu0
      %v11274 = vadd.f32 0.0, %v11273
      %v11275 = vpop.f32.mrb[0].mxu0
      %v11276 = vpop.f32.mrb[0].mxu0
      %v11277 = vadd.f32 0.0, %v11276
      %v11278 = vpop.f32.mrb[0].mxu0
      %11279 = vmatprep.mubr.bf16.mxu0 0
      %11280 = vmatmul.mubr.bf16.gmra.mrb[0].mxu0 %v11180
      %v11281 = vpop.f32.mrb[0].mxu0
      %v11282 = vadd.f32 0.0, %v11281
      %v11283 = vpop.f32.mrb[0].mxu0
      %v11284 = vpop.f32.mrb[0].mxu0
      %v11285 = vadd.f32 0.0, %v11284
      %v11286 = vpop.f32.mrb[0].mxu0
      %11287 = vmatprep.mubr.bf16.mxu0 0
      %11288 = vmatmul.mubr.bf16.gmra.mrb[0].mxu0 %v11183
      %v11289 = vpop.f32.mrb[0].mxu0
      %v11290 = vadd.f32 0.0, %v11289
      %v11291 = vpop.f32.mrb[0].mxu0
      %v11292 = vpop.f32.mrb[0].mxu0
      %v11293 = vadd.f32 0.0, %v11292
      %v11294 = vpop.f32.mrb[0].mxu0
      %11295 = vmatprep.mubr.bf16.mxu0 0
      %11296 = vmatmul.mubr.bf16.gmra.mrb[0].mxu0 %v11186
      %v11297 = vpop.f32.mrb[0].mxu0
      %v11298 = vadd.f32 0.0, %v11297
      %v11299 = vpop.f32.mrb[0].mxu0
      %v11300 = vpop.f32.mrb[0].mxu0
      %v11301 = vadd.f32 0.0, %v11300
      %v11302 = vpop.f32.mrb[0].mxu0
      %11303 = vmatprep.mubr.bf16.mxu0 0
      %11304 = vmatmul.mubr.bf16.gmra.mrb[0].mxu0 %v11189
      %v11305 = vpop.f32.mrb[0].mxu0
      %v11306 = vadd.f32 0.0, %v11305
      %v11307 = vpop.f32.mrb[0].mxu0
      %v11308 = vpop.f32.mrb[0].mxu0
      %v11309 = vadd.f32 0.0, %v11308
      %v11310 = vpop.f32.mrb[0].mxu0
      %11311 = vmatprep.mubr.bf16.mxu0 0
      %11312 = vmatmul.mubr.bf16.gmra.mrb[0].mxu0 %v11192
      %v11313 = vpop.f32.mrb[0].mxu0
      %v11314 = vadd.f32 0.0, %v11313
      %v11315 = vpop.f32.mrb[0].mxu0
      %v11316 = vpop.f32.mrb[0].mxu0
      %v11317 = vadd.f32 0.0, %v11316
      %v11318 = vpop.f32.mrb[0].mxu0
      %11319 = vmatprep.mubr.bf16.mxu0 0
      %11320 = vmatmul.mubr.bf16.gmra.mrb[0].mxu0 %v11195
      %v11321 = vpop.f32.mrb[0].mxu0
      %v11322 = vadd.f32 0.0, %v11321
      %v11323 = vpop.f32.mrb[0].mxu0
      %v11324 = vpop.f32.mrb[0].mxu0
      %v11325 = vadd.f32 0.0, %v11324
      %v11326 = vpop.f32.mrb[0].mxu0
      %11327 = vmatprep.mubr.bf16.mxu0 0
      %11328 = vmatmul.mubr.bf16.gmra.mrb[0].mxu0 %v11198
      %v11329 = vpop.f32.mrb[0].mxu0
      %v11330 = vadd.f32 0.0, %v11329
      %v11331 = vpop.f32.mrb[0].mxu0
      %v11332 = vpop.f32.mrb[0].mxu0
      %v11333 = vadd.f32 0.0, %v11332
      %v11334 = vpop.f32.mrb[0].mxu0
      %11335 = vmatprep.mubr.bf16.mxu0 0
      %11336 = vmatmul.mubr.bf16.gmra.mrb[0].mxu0 %v11201
      %v11337 = vpop.f32.mrb[0].mxu0
      %v11338 = vadd.f32 0.0, %v11337
      %v11339 = vpop.f32.mrb[0].mxu0
      %v11340 = vpop.f32.mrb[0].mxu0
      %v11341 = vadd.f32 0.0, %v11340
      %v11342 = vpop.f32.mrb[0].mxu0
      %11343 = vmatprep.mubr.bf16.mxu0 0
      %11344 = vmatmul.mubr.bf16.gmra.mrb[0].mxu0 %v11204
      %v11345 = vpop.f32.mrb[0].mxu0
      %v11346 = vadd.f32 0.0, %v11345
      %v11347 = vpop.f32.mrb[0].mxu0
      %v11348 = vpop.f32.mrb[0].mxu0
      %v11349 = vadd.f32 0.0, %v11348
      %v11350 = vpop.f32.mrb[0].mxu0
      %11351 = vmatprep.mubr.bf16.mxu0 0
      %11352 = vmatmul.mubr.bf16.gmra.mrb[0].mxu0 %v11207
      %v11353 = vpop.f32.mrb[0].mxu0
      %v11354 = vadd.f32 0.0, %v11353
      %v11355 = vpop.f32.mrb[0].mxu0
      %v11356 = vpop.f32.mrb[0].mxu0
      %v11357 = vadd.f32 0.0, %v11356
      %v11358 = vpop.f32.mrb[0].mxu0
      %11359 = vmatprep.mubr.bf16.mxu0 0
      %11360 = vmatmul.mubr.bf16.gmra.mrb[0].mxu0 %v11210
      %v11361 = vpop.f32.mrb[0].mxu0
      %v11362 = vadd.f32 0.0, %v11361
      %v11363 = vpop.f32.mrb[0].mxu0
      %v11364 = vpop.f32.mrb[0].mxu0
      %v11365 = vadd.f32 0.0, %v11364
      %v11366 = vpop.f32.mrb[0].mxu0
      %11367 = vmatprep.mubr.bf16.mxu0 0
      %11368 = vmatmul.mubr.bf16.gmra.mrb[0].mxu0 %v11213
      %v11369 = vpop.f32.mrb[0].mxu0
      %v11370 = vadd.f32 0.0, %v11369
      %v11371 = vpop.f32.mrb[0].mxu0
      %v11372 = vpop.f32.mrb[0].mxu0
      %v11373 = vadd.f32 0.0, %v11372
      %v11374 = vpop.f32.mrb[0].mxu0
      %11375 = vdwg.mxu0
      %v11408 = vunpack.c.l.b16 %v11006
      %v11409 = vunpack.c.l.b16 %v11007
      %v11410 = vunpack.c.l.b16 %v11008
      %v11411 = vunpack.c.l.b16 %v11009
      %v11412 = vunpack.c.l.b16 %v11010
      %v11413 = vunpack.c.l.b16 %v11011
      %v11414 = vunpack.c.l.b16 %v11012
      %v11415 = vunpack.c.l.b16 %v11013
      %v11416 = vunpack.c.l.b16 %v11014
      %v11417 = vunpack.c.l.b16 %v11015
      %v11418 = vunpack.c.l.b16 %v11016
      %v11419 = vunpack.c.l.b16 %v11017
      %v11420 = vunpack.c.l.b16 %v11018
      %v11421 = vunpack.c.l.b16 %v11019
      %v11422 = vunpack.c.l.b16 %v11020
      %v11423 = vunpack.c.l.b16 %v11021
      %v11424 = vunpack.c.l.b16 %v11022
      %v11425 = vunpack.c.l.b16 %v11023
      %v11426 = vunpack.c.l.b16 %v11024
      %v11427 = vunpack.c.l.b16 %v11025
      %v11428 = vunpack.c.l.b16 %v11026
      %v11429 = vunpack.c.l.b16 %v11027
      %v11430 = vunpack.c.l.b16 %v11028
      %v11431 = vunpack.c.l.b16 %v11029
      %v11432 = vunpack.c.l.b16 %v11030
      %v11433 = vunpack.c.l.b16 %v11031
      %v11434 = vunpack.c.l.b16 %v11032
      %v11435 = vunpack.c.l.b16 %v11033
      %v11436 = vunpack.c.l.b16 %v11034
      %v11437 = vunpack.c.l.b16 %v11035
      %v11438 = vunpack.c.l.b16 %v11036
      %v11439 = vunpack.c.l.b16 %v11037
      %v11440 = vpack.c.b16 %v11409, %v11408
      %v11441 = vpack.c.b16 %v11411, %v11410
      %v11442 = vpack.c.b16 %v11413, %v11412
      %v11443 = vpack.c.b16 %v11415, %v11414
      %v11444 = vpack.c.b16 %v11417, %v11416
      %v11445 = vpack.c.b16 %v11419, %v11418
      %v11446 = vpack.c.b16 %v11421, %v11420
      %v11447 = vpack.c.b16 %v11423, %v11422
      %v11448 = vpack.c.b16 %v11425, %v11424
      %v11449 = vpack.c.b16 %v11427, %v11426
      %v11450 = vpack.c.b16 %v11429, %v11428
      %v11451 = vpack.c.b16 %v11431, %v11430
      %v11452 = vpack.c.b16 %v11433, %v11432
      %v11453 = vpack.c.b16 %v11435, %v11434
      %v11454 = vpack.c.b16 %v11437, %v11436
      %v11455 = vpack.c.b16 %v11439, %v11438
      %v11457 = vsel %vm2169, %v11440, 0
      %v11460 = vsel %vm2169, %v11441, 0
      %v11463 = vsel %vm2169, %v11442, 0
      %v11466 = vsel %vm2169, %v11443, 0
      %v11469 = vsel %vm2169, %v11444, 0
      %v11472 = vsel %vm2169, %v11445, 0
      %v11475 = vsel %vm2169, %v11446, 0
      %v11478 = vsel %vm2169, %v11447, 0
      %v11481 = vsel %vm2169, %v11448, 0
      %v11484 = vsel %vm2169, %v11449, 0
      %v11487 = vsel %vm2169, %v11450, 0
      %v11490 = vsel %vm2169, %v11451, 0
      %v11493 = vsel %vm2169, %v11452, 0
      %v11496 = vsel %vm2169, %v11453, 0
      %v11499 = vsel %vm2169, %v11454, 0
      %v11502 = vsel %vm2169, %v11455, 0
      %11504 = vmatprep.subr.bf16.mxu0 0
      %11505 = vmatpush1.bf16.msra.mxu0 %v11002
      %11506 = vmatprep.subr.bf16.mxu0 0
      %11507 = vmatpush1.bf16.msra.mxu0 %v11003
      %11508 = vmatprep.subr.bf16.mxu0 0
      %11509 = vmatpush1.bf16.msra.mxu0 %v11004
      %11510 = vmatprep.subr.bf16.mxu0 0
      %11511 = vmatpush1.bf16.msra.mxu0 %v11005
      %11512 = vmatprep.subr.bf16.mxu0 0
      %11513 = vmatpush1.bf16.msra.mxu0 0
      %11514 = vmatprep.subr.bf16.mxu0 0
      %11515 = vmatpush1.bf16.msra.mxu0 0
      %11516 = vmatprep.subr.bf16.mxu0 0
      %11517 = vmatpush1.bf16.msra.mxu0 0
      %11518 = vmatprep.subr.bf16.mxu0 0
      %11519 = vmatpush1.bf16.msra.mxu0 0
      %11520 = vmatprep.subr.bf16.mxu0 0
      %11521 = vmatpush1.bf16.msra.mxu0 0
      %11522 = vmatprep.subr.bf16.mxu0 0
      %11523 = vmatpush1.bf16.msra.mxu0 0
      %11524 = vmatprep.subr.bf16.mxu0 0
      %11525 = vmatpush1.bf16.msra.mxu0 0
      %11526 = vmatprep.subr.bf16.mxu0 0
      %11527 = vmatpush1.bf16.msra.mxu0 0
      %11528 = vmatprep.subr.bf16.mxu0 0
      %11529 = vmatpush1.bf16.msra.mxu0 0
      %11530 = vmatprep.subr.bf16.mxu0 0
      %11531 = vmatpush1.bf16.msra.mxu0 0
      %11532 = vmatprep.subr.bf16.mxu0 0
      %11533 = vmatpush1.bf16.msra.mxu0 0
      %11534 = vmatprep.subr.bf16.mxu0 0
      %11535 = vmatpush1.bf16.msra.mxu0 0
      %11536 = vmatprep.mubr.bf16.mxu0 0
      %11537 = vmatmul.mubr.bf16.gmra.mrb[0].mxu0 %v11457
      %v11538 = vpop.f32.mrb[0].mxu0
      %v11539 = vadd.f32 %v11250, %v11538
      %v11540 = vpop.f32.mrb[0].mxu0
      %v11541 = vpop.f32.mrb[0].mxu0
      %v11542 = vadd.f32 %v11253, %v11541
      %v11543 = vpop.f32.mrb[0].mxu0
      %11544 = vmatprep.mubr.bf16.mxu0 0
      %11545 = vmatmul.mubr.bf16.gmra.mrb[0].mxu0 %v11460
      %v11546 = vpop.f32.mrb[0].mxu0
      %v11547 = vadd.f32 %v11258, %v11546
      %v11548 = vpop.f32.mrb[0].mxu0
      %v11549 = vpop.f32.mrb[0].mxu0
      %v11550 = vadd.f32 %v11261, %v11549
      %v11551 = vpop.f32.mrb[0].mxu0
      %11552 = vmatprep.mubr.bf16.mxu0 0
      %11553 = vmatmul.mubr.bf16.gmra.mrb[0].mxu0 %v11463
      %v11554 = vpop.f32.mrb[0].mxu0
      %v11555 = vadd.f32 %v11266, %v11554
      %v11556 = vpop.f32.mrb[0].mxu0
      %v11557 = vpop.f32.mrb[0].mxu0
      %v11558 = vadd.f32 %v11269, %v11557
      %v11559 = vpop.f32.mrb[0].mxu0
      %11560 = vmatprep.mubr.bf16.mxu0 0
      %11561 = vmatmul.mubr.bf16.gmra.mrb[0].mxu0 %v11466
      %v11562 = vpop.f32.mrb[0].mxu0
      %v11563 = vadd.f32 %v11274, %v11562
      %v11564 = vpop.f32.mrb[0].mxu0
      %v11565 = vpop.f32.mrb[0].mxu0
      %v11566 = vadd.f32 %v11277, %v11565
      %v11567 = vpop.f32.mrb[0].mxu0
      %11568 = vmatprep.mubr.bf16.mxu0 0
      %11569 = vmatmul.mubr.bf16.gmra.mrb[0].mxu0 %v11469
      %v11570 = vpop.f32.mrb[0].mxu0
      %v11571 = vadd.f32 %v11282, %v11570
      %v11572 = vpop.f32.mrb[0].mxu0
      %v11573 = vpop.f32.mrb[0].mxu0
      %v11574 = vadd.f32 %v11285, %v11573
      %v11575 = vpop.f32.mrb[0].mxu0
      %11576 = vmatprep.mubr.bf16.mxu0 0
      %11577 = vmatmul.mubr.bf16.gmra.mrb[0].mxu0 %v11472
      %v11578 = vpop.f32.mrb[0].mxu0
      %v11579 = vadd.f32 %v11290, %v11578
      %v11580 = vpop.f32.mrb[0].mxu0
      %v11581 = vpop.f32.mrb[0].mxu0
      %v11582 = vadd.f32 %v11293, %v11581
      %v11583 = vpop.f32.mrb[0].mxu0
      %11584 = vmatprep.mubr.bf16.mxu0 0
      %11585 = vmatmul.mubr.bf16.gmra.mrb[0].mxu0 %v11475
      %v11586 = vpop.f32.mrb[0].mxu0
      %v11587 = vadd.f32 %v11298, %v11586
      %v11588 = vpop.f32.mrb[0].mxu0
      %v11589 = vpop.f32.mrb[0].mxu0
      %v11590 = vadd.f32 %v11301, %v11589
      %v11591 = vpop.f32.mrb[0].mxu0
      %11592 = vmatprep.mubr.bf16.mxu0 0
      %11593 = vmatmul.mubr.bf16.gmra.mrb[0].mxu0 %v11478
      %v11594 = vpop.f32.mrb[0].mxu0
      %v11595 = vadd.f32 %v11306, %v11594
      %v11596 = vpop.f32.mrb[0].mxu0
      %v11597 = vpop.f32.mrb[0].mxu0
      %v11598 = vadd.f32 %v11309, %v11597
      %v11599 = vpop.f32.mrb[0].mxu0
      %11600 = vmatprep.mubr.bf16.mxu0 0
      %11601 = vmatmul.mubr.bf16.gmra.mrb[0].mxu0 %v11481
      %v11602 = vpop.f32.mrb[0].mxu0
      %v11603 = vadd.f32 %v11314, %v11602
      %v11604 = vpop.f32.mrb[0].mxu0
      %v11605 = vpop.f32.mrb[0].mxu0
      %v11606 = vadd.f32 %v11317, %v11605
      %v11607 = vpop.f32.mrb[0].mxu0
      %11608 = vmatprep.mubr.bf16.mxu0 0
      %11609 = vmatmul.mubr.bf16.gmra.mrb[0].mxu0 %v11484
      %v11610 = vpop.f32.mrb[0].mxu0
      %v11611 = vadd.f32 %v11322, %v11610
      %v11612 = vpop.f32.mrb[0].mxu0
      %v11613 = vpop.f32.mrb[0].mxu0
      %v11614 = vadd.f32 %v11325, %v11613
      %v11615 = vpop.f32.mrb[0].mxu0
      %11616 = vmatprep.mubr.bf16.mxu0 0
      %11617 = vmatmul.mubr.bf16.gmra.mrb[0].mxu0 %v11487
      %v11618 = vpop.f32.mrb[0].mxu0
      %v11619 = vadd.f32 %v11330, %v11618
      %v11620 = vpop.f32.mrb[0].mxu0
      %v11621 = vpop.f32.mrb[0].mxu0
      %v11622 = vadd.f32 %v11333, %v11621
      %v11623 = vpop.f32.mrb[0].mxu0
      %11624 = vmatprep.mubr.bf16.mxu0 0
      %11625 = vmatmul.mubr.bf16.gmra.mrb[0].mxu0 %v11490
      %v11626 = vpop.f32.mrb[0].mxu0
      %v11627 = vadd.f32 %v11338, %v11626
      %v11628 = vpop.f32.mrb[0].mxu0
      %v11629 = vpop.f32.mrb[0].mxu0
      %v11630 = vadd.f32 %v11341, %v11629
      %v11631 = vpop.f32.mrb[0].mxu0
      %11632 = vmatprep.mubr.bf16.mxu0 0
      %11633 = vmatmul.mubr.bf16.gmra.mrb[0].mxu0 %v11493
      %v11634 = vpop.f32.mrb[0].mxu0
      %v11635 = vadd.f32 %v11346, %v11634
      %v11636 = vpop.f32.mrb[0].mxu0
      %v11637 = vpop.f32.mrb[0].mxu0
      %v11638 = vadd.f32 %v11349, %v11637
      %v11639 = vpop.f32.mrb[0].mxu0
      %11640 = vmatprep.mubr.bf16.mxu0 0
      %11641 = vmatmul.mubr.bf16.gmra.mrb[0].mxu0 %v11496
      %v11642 = vpop.f32.mrb[0].mxu0
      %v11643 = vadd.f32 %v11354, %v11642
      %v11644 = vpop.f32.mrb[0].mxu0
      %v11645 = vpop.f32.mrb[0].mxu0
      %v11646 = vadd.f32 %v11357, %v11645
      %v11647 = vpop.f32.mrb[0].mxu0
      %11648 = vmatprep.mubr.bf16.mxu0 0
      %11649 = vmatmul.mubr.bf16.gmra.mrb[0].mxu0 %v11499
      %v11650 = vpop.f32.mrb[0].mxu0
      %v11651 = vadd.f32 %v11362, %v11650
      %v11652 = vpop.f32.mrb[0].mxu0
      %v11653 = vpop.f32.mrb[0].mxu0
      %v11654 = vadd.f32 %v11365, %v11653
      %v11655 = vpop.f32.mrb[0].mxu0
      %11656 = vmatprep.mubr.bf16.mxu0 0
      %11657 = vmatmul.mubr.bf16.gmra.mrb[0].mxu0 %v11502
      %v11658 = vpop.f32.mrb[0].mxu0
      %v11659 = vadd.f32 %v11370, %v11658
      %v11660 = vpop.f32.mrb[0].mxu0
      %v11661 = vpop.f32.mrb[0].mxu0
      %v11662 = vadd.f32 %v11373, %v11661
      %v11663 = vpop.f32.mrb[0].mxu0
      %11664 = vdwg.mxu0
      %s11665 = scalar_lea.vmem %s65, 256
      %v11666 = vld [vmem:[%s11665] sm:$0xf]
      %v11667 = vld [vmem:[%s11665 + $0x4] sm:$0xf]
      %v11668 = vld [vmem:[%s11665 + $0x8] sm:$0xf]
      %v11669 = vld [vmem:[%s11665 + $0xc] sm:$0xf]
      %v11670 = vld [vmem:[%s11665 + $0x10] sm:$0xf]
      %v11671 = vld [vmem:[%s11665 + $0x14] sm:$0xf]
      %v11672 = vld [vmem:[%s11665 + $0x18] sm:$0xf]
      %v11673 = vld [vmem:[%s11665 + $0x1c] sm:$0xf]
      %v11674 = vld [vmem:[%s11665 + $0x20] sm:$0xf]
      %v11675 = vld [vmem:[%s11665 + $0x24] sm:$0xf]
      %v11676 = vld [vmem:[%s11665 + $0x28] sm:$0xf]
      %v11677 = vld [vmem:[%s11665 + $0x2c] sm:$0xf]
      %v11678 = vld [vmem:[%s11665 + $0x30] sm:$0xf]
      %v11679 = vld [vmem:[%s11665 + $0x34] sm:$0xf]
      %v11680 = vld [vmem:[%s11665 + $0x38] sm:$0xf]
      %v11681 = vld [vmem:[%s11665 + $0x3c] sm:$0xf]
      %v11682 = vld [vmem:[%s11665 + $0x40] sm:$0xf]
      %v11683 = vld [vmem:[%s11665 + $0x44] sm:$0xf]
      %v11684 = vld [vmem:[%s11665 + $0x48] sm:$0xf]
      %v11685 = vld [vmem:[%s11665 + $0x4c] sm:$0xf]
      %v11686 = vld [vmem:[%s11665 + $0x50] sm:$0xf]
      %v11687 = vld [vmem:[%s11665 + $0x54] sm:$0xf]
      %v11688 = vld [vmem:[%s11665 + $0x58] sm:$0xf]
      %v11689 = vld [vmem:[%s11665 + $0x5c] sm:$0xf]
      %v11690 = vld [vmem:[%s11665 + $0x60] sm:$0xf]
      %v11691 = vld [vmem:[%s11665 + $0x64] sm:$0xf]
      %v11692 = vld [vmem:[%s11665 + $0x68] sm:$0xf]
      %v11693 = vld [vmem:[%s11665 + $0x6c] sm:$0xf]
      %v11694 = vld [vmem:[%s11665 + $0x70] sm:$0xf]
      %v11695 = vld [vmem:[%s11665 + $0x74] sm:$0xf]
      %v11696 = vld [vmem:[%s11665 + $0x78] sm:$0xf]
      %v11697 = vld [vmem:[%s11665 + $0x7c] sm:$0xf]
      %v11730 = vunpack.c.l.b16 %v11666
      %v11731 = vunpack.c.l.b16 %v11667
      %v11732 = vunpack.c.l.b16 %v11668
      %v11733 = vunpack.c.l.b16 %v11669
      %v11734 = vunpack.c.l.b16 %v11670
      %v11735 = vunpack.c.l.b16 %v11671
      %v11736 = vunpack.c.l.b16 %v11672
      %v11737 = vunpack.c.l.b16 %v11673
      %v11738 = vunpack.c.l.b16 %v11674
      %v11739 = vunpack.c.l.b16 %v11675
      %v11740 = vunpack.c.l.b16 %v11676
      %v11741 = vunpack.c.l.b16 %v11677
      %v11742 = vunpack.c.l.b16 %v11678
      %v11743 = vunpack.c.l.b16 %v11679
      %v11744 = vunpack.c.l.b16 %v11680
      %v11745 = vunpack.c.l.b16 %v11681
      %v11746 = vunpack.c.l.b16 %v11682
      %v11747 = vunpack.c.l.b16 %v11683
      %v11748 = vunpack.c.l.b16 %v11684
      %v11749 = vunpack.c.l.b16 %v11685
      %v11750 = vunpack.c.l.b16 %v11686
      %v11751 = vunpack.c.l.b16 %v11687
      %v11752 = vunpack.c.l.b16 %v11688
      %v11753 = vunpack.c.l.b16 %v11689
      %v11754 = vunpack.c.l.b16 %v11690
      %v11755 = vunpack.c.l.b16 %v11691
      %v11756 = vunpack.c.l.b16 %v11692
      %v11757 = vunpack.c.l.b16 %v11693
      %v11758 = vunpack.c.l.b16 %v11694
      %v11759 = vunpack.c.l.b16 %v11695
      %v11760 = vunpack.c.l.b16 %v11696
      %v11761 = vunpack.c.l.b16 %v11697
      %v11762 = vpack.c.b16 %v11731, %v11730
      %v11763 = vpack.c.b16 %v11733, %v11732
      %v11764 = vpack.c.b16 %v11735, %v11734
      %v11765 = vpack.c.b16 %v11737, %v11736
      %v11766 = vpack.c.b16 %v11739, %v11738
      %v11767 = vpack.c.b16 %v11741, %v11740
      %v11768 = vpack.c.b16 %v11743, %v11742
      %v11769 = vpack.c.b16 %v11745, %v11744
      %v11770 = vpack.c.b16 %v11747, %v11746
      %v11771 = vpack.c.b16 %v11749, %v11748
      %v11772 = vpack.c.b16 %v11751, %v11750
      %v11773 = vpack.c.b16 %v11753, %v11752
      %v11774 = vpack.c.b16 %v11755, %v11754
      %v11775 = vpack.c.b16 %v11757, %v11756
      %v11776 = vpack.c.b16 %v11759, %v11758
      %v11777 = vpack.c.b16 %v11761, %v11760
      %11778 = vrot.lane.b32.xlu0 %v11002, 64
      %v11779 = vpop.permute.xlu0 %11778
      %11780 = vrot.lane.b32.xlu0 %v11003, 64
      %v11781 = vpop.permute.xlu0 %11780
      %11782 = vrot.lane.b32.xlu0 %v11004, 64
      %v11783 = vpop.permute.xlu0 %11782
      %11784 = vrot.lane.b32.xlu0 %v11005, 64
      %v11785 = vpop.permute.xlu0 %11784
      %v11791 = vsel %vm2169, %v11762, 0
      %v11794 = vsel %vm2169, %v11763, 0
      %v11797 = vsel %vm2169, %v11764, 0
      %v11800 = vsel %vm2169, %v11765, 0
      %v11803 = vsel %vm2169, %v11766, 0
      %v11806 = vsel %vm2169, %v11767, 0
      %v11809 = vsel %vm2169, %v11768, 0
      %v11812 = vsel %vm2169, %v11769, 0
      %v11815 = vsel %vm2169, %v11770, 0
      %v11818 = vsel %vm2169, %v11771, 0
      %v11821 = vsel %vm2169, %v11772, 0
      %v11824 = vsel %vm2169, %v11773, 0
      %v11827 = vsel %vm2169, %v11774, 0
      %v11830 = vsel %vm2169, %v11775, 0
      %v11833 = vsel %vm2169, %v11776, 0
      %v11836 = vsel %vm2169, %v11777, 0
      %11838 = vmatprep.subr.bf16.mxu0 0
      %11839 = vmatpush1.bf16.msra.mxu0 %v11779
      %11840 = vmatprep.subr.bf16.mxu0 0
      %11841 = vmatpush1.bf16.msra.mxu0 %v11781
      %11842 = vmatprep.subr.bf16.mxu0 0
      %11843 = vmatpush1.bf16.msra.mxu0 %v11783
      %11844 = vmatprep.subr.bf16.mxu0 0
      %11845 = vmatpush1.bf16.msra.mxu0 %v11785
      %11846 = vmatprep.subr.bf16.mxu0 0
      %11847 = vmatpush1.bf16.msra.mxu0 0
      %11848 = vmatprep.subr.bf16.mxu0 0
      %11849 = vmatpush1.bf16.msra.mxu0 0
      %11850 = vmatprep.subr.bf16.mxu0 0
      %11851 = vmatpush1.bf16.msra.mxu0 0
      %11852 = vmatprep.subr.bf16.mxu0 0
      %11853 = vmatpush1.bf16.msra.mxu0 0
      %11854 = vmatprep.subr.bf16.mxu0 0
      %11855 = vmatpush1.bf16.msra.mxu0 0
      %11856 = vmatprep.subr.bf16.mxu0 0
      %11857 = vmatpush1.bf16.msra.mxu0 0
      %11858 = vmatprep.subr.bf16.mxu0 0
      %11859 = vmatpush1.bf16.msra.mxu0 0
      %11860 = vmatprep.subr.bf16.mxu0 0
      %11861 = vmatpush1.bf16.msra.mxu0 0
      %11862 = vmatprep.subr.bf16.mxu0 0
      %11863 = vmatpush1.bf16.msra.mxu0 0
      %11864 = vmatprep.subr.bf16.mxu0 0
      %11865 = vmatpush1.bf16.msra.mxu0 0
      %11866 = vmatprep.subr.bf16.mxu0 0
      %11867 = vmatpush1.bf16.msra.mxu0 0
      %11868 = vmatprep.subr.bf16.mxu0 0
      %11869 = vmatpush1.bf16.msra.mxu0 0
      %11870 = vmatprep.mubr.bf16.mxu0 0
      %11871 = vmatmul.mubr.bf16.gmra.mrb[0].mxu0 %v11791
      %v11872 = vpop.f32.mrb[0].mxu0
      %v11873 = vadd.f32 0.0, %v11872
      %v11874 = vpop.f32.mrb[0].mxu0
      %v11875 = vpop.f32.mrb[0].mxu0
      %v11876 = vadd.f32 0.0, %v11875
      %v11877 = vpop.f32.mrb[0].mxu0
      %11878 = vmatprep.mubr.bf16.mxu0 0
      %11879 = vmatmul.mubr.bf16.gmra.mrb[0].mxu0 %v11794
      %v11880 = vpop.f32.mrb[0].mxu0
      %v11881 = vadd.f32 0.0, %v11880
      %v11882 = vpop.f32.mrb[0].mxu0
      %v11883 = vpop.f32.mrb[0].mxu0
      %v11884 = vadd.f32 0.0, %v11883
      %v11885 = vpop.f32.mrb[0].mxu0
      %11886 = vmatprep.mubr.bf16.mxu0 0
      %11887 = vmatmul.mubr.bf16.gmra.mrb[0].mxu0 %v11797
      %v11888 = vpop.f32.mrb[0].mxu0
      %v11889 = vadd.f32 0.0, %v11888
      %v11890 = vpop.f32.mrb[0].mxu0
      %v11891 = vpop.f32.mrb[0].mxu0
      %v11892 = vadd.f32 0.0, %v11891
      %v11893 = vpop.f32.mrb[0].mxu0
      %11894 = vmatprep.mubr.bf16.mxu0 0
      %11895 = vmatmul.mubr.bf16.gmra.mrb[0].mxu0 %v11800
      %v11896 = vpop.f32.mrb[0].mxu0
      %v11897 = vadd.f32 0.0, %v11896
      %v11898 = vpop.f32.mrb[0].mxu0
      %v11899 = vpop.f32.mrb[0].mxu0
      %v11900 = vadd.f32 0.0, %v11899
      %v11901 = vpop.f32.mrb[0].mxu0
      %11902 = vmatprep.mubr.bf16.mxu0 0
      %11903 = vmatmul.mubr.bf16.gmra.mrb[0].mxu0 %v11803
      %v11904 = vpop.f32.mrb[0].mxu0
      %v11905 = vadd.f32 0.0, %v11904
      %v11906 = vpop.f32.mrb[0].mxu0
      %v11907 = vpop.f32.mrb[0].mxu0
      %v11908 = vadd.f32 0.0, %v11907
      %v11909 = vpop.f32.mrb[0].mxu0
      %11910 = vmatprep.mubr.bf16.mxu0 0
      %11911 = vmatmul.mubr.bf16.gmra.mrb[0].mxu0 %v11806
      %v11912 = vpop.f32.mrb[0].mxu0
      %v11913 = vadd.f32 0.0, %v11912
      %v11914 = vpop.f32.mrb[0].mxu0
      %v11915 = vpop.f32.mrb[0].mxu0
      %v11916 = vadd.f32 0.0, %v11915
      %v11917 = vpop.f32.mrb[0].mxu0
      %11918 = vmatprep.mubr.bf16.mxu0 0
      %11919 = vmatmul.mubr.bf16.gmra.mrb[0].mxu0 %v11809
      %v11920 = vpop.f32.mrb[0].mxu0
      %v11921 = vadd.f32 0.0, %v11920
      %v11922 = vpop.f32.mrb[0].mxu0
      %v11923 = vpop.f32.mrb[0].mxu0
      %v11924 = vadd.f32 0.0, %v11923
      %v11925 = vpop.f32.mrb[0].mxu0
      %11926 = vmatprep.mubr.bf16.mxu0 0
      %11927 = vmatmul.mubr.bf16.gmra.mrb[0].mxu0 %v11812
      %v11928 = vpop.f32.mrb[0].mxu0
      %v11929 = vadd.f32 0.0, %v11928
      %v11930 = vpop.f32.mrb[0].mxu0
      %v11931 = vpop.f32.mrb[0].mxu0
      %v11932 = vadd.f32 0.0, %v11931
      %v11933 = vpop.f32.mrb[0].mxu0
      %11934 = vmatprep.mubr.bf16.mxu0 0
      %11935 = vmatmul.mubr.bf16.gmra.mrb[0].mxu0 %v11815
      %v11936 = vpop.f32.mrb[0].mxu0
      %v11937 = vadd.f32 0.0, %v11936
      %v11938 = vpop.f32.mrb[0].mxu0
      %v11939 = vpop.f32.mrb[0].mxu0
      %v11940 = vadd.f32 0.0, %v11939
      %v11941 = vpop.f32.mrb[0].mxu0
      %11942 = vmatprep.mubr.bf16.mxu0 0
      %11943 = vmatmul.mubr.bf16.gmra.mrb[0].mxu0 %v11818
      %v11944 = vpop.f32.mrb[0].mxu0
      %v11945 = vadd.f32 0.0, %v11944
      %v11946 = vpop.f32.mrb[0].mxu0
      %v11947 = vpop.f32.mrb[0].mxu0
      %v11948 = vadd.f32 0.0, %v11947
      %v11949 = vpop.f32.mrb[0].mxu0
      %11950 = vmatprep.mubr.bf16.mxu0 0
      %11951 = vmatmul.mubr.bf16.gmra.mrb[0].mxu0 %v11821
      %v11952 = vpop.f32.mrb[0].mxu0
      %v11953 = vadd.f32 0.0, %v11952
      %v11954 = vpop.f32.mrb[0].mxu0
      %v11955 = vpop.f32.mrb[0].mxu0
      %v11956 = vadd.f32 0.0, %v11955
      %v11957 = vpop.f32.mrb[0].mxu0
      %11958 = vmatprep.mubr.bf16.mxu0 0
      %11959 = vmatmul.mubr.bf16.gmra.mrb[0].mxu0 %v11824
      %v11960 = vpop.f32.mrb[0].mxu0
      %v11961 = vadd.f32 0.0, %v11960
      %v11962 = vpop.f32.mrb[0].mxu0
      %v11963 = vpop.f32.mrb[0].mxu0
      %v11964 = vadd.f32 0.0, %v11963
      %v11965 = vpop.f32.mrb[0].mxu0
      %11966 = vmatprep.mubr.bf16.mxu0 0
      %11967 = vmatmul.mubr.bf16.gmra.mrb[0].mxu0 %v11827
      %v11968 = vpop.f32.mrb[0].mxu0
      %v11969 = vadd.f32 0.0, %v11968
      %v11970 = vpop.f32.mrb[0].mxu0
      %v11971 = vpop.f32.mrb[0].mxu0
      %v11972 = vadd.f32 0.0, %v11971
      %v11973 = vpop.f32.mrb[0].mxu0
      %11974 = vmatprep.mubr.bf16.mxu0 0
      %11975 = vmatmul.mubr.bf16.gmra.mrb[0].mxu0 %v11830
      %v11976 = vpop.f32.mrb[0].mxu0
      %v11977 = vadd.f32 0.0, %v11976
      %v11978 = vpop.f32.mrb[0].mxu0
      %v11979 = vpop.f32.mrb[0].mxu0
      %v11980 = vadd.f32 0.0, %v11979
      %v11981 = vpop.f32.mrb[0].mxu0
      %11982 = vmatprep.mubr.bf16.mxu0 0
      %11983 = vmatmul.mubr.bf16.gmra.mrb[0].mxu0 %v11833
      %v11984 = vpop.f32.mrb[0].mxu0
      %v11985 = vadd.f32 0.0, %v11984
      %v11986 = vpop.f32.mrb[0].mxu0
      %v11987 = vpop.f32.mrb[0].mxu0
      %v11988 = vadd.f32 0.0, %v11987
      %v11989 = vpop.f32.mrb[0].mxu0
      %11990 = vmatprep.mubr.bf16.mxu0 0
      %11991 = vmatmul.mubr.bf16.gmra.mrb[0].mxu0 %v11836
      %v11992 = vpop.f32.mrb[0].mxu0
      %v11993 = vadd.f32 0.0, %v11992
      %v11994 = vpop.f32.mrb[0].mxu0
      %v11995 = vpop.f32.mrb[0].mxu0
      %v11996 = vadd.f32 0.0, %v11995
      %v11997 = vpop.f32.mrb[0].mxu0
      %11998 = vdwg.mxu0
      %v11999 = vadd.f32 %v11539, %v11873
      %v12000 = vadd.f32 %v11542, %v11876
      %v12001 = vadd.f32 %v11547, %v11881
      %v12002 = vadd.f32 %v11550, %v11884
      %v12003 = vadd.f32 %v11555, %v11889
      %v12004 = vadd.f32 %v11558, %v11892
      %v12005 = vadd.f32 %v11563, %v11897
      %v12006 = vadd.f32 %v11566, %v11900
      %v12007 = vadd.f32 %v11571, %v11905
      %v12008 = vadd.f32 %v11574, %v11908
      %v12009 = vadd.f32 %v11579, %v11913
      %v12010 = vadd.f32 %v11582, %v11916
      %v12011 = vadd.f32 %v11587, %v11921
      %v12012 = vadd.f32 %v11590, %v11924
      %v12013 = vadd.f32 %v11595, %v11929
      %v12014 = vadd.f32 %v11598, %v11932
      %v12015 = vadd.f32 %v11603, %v11937
      %v12016 = vadd.f32 %v11606, %v11940
      %v12017 = vadd.f32 %v11611, %v11945
      %v12018 = vadd.f32 %v11614, %v11948
      %v12019 = vadd.f32 %v11619, %v11953
      %v12020 = vadd.f32 %v11622, %v11956
      %v12021 = vadd.f32 %v11627, %v11961
      %v12022 = vadd.f32 %v11630, %v11964
      %v12023 = vadd.f32 %v11635, %v11969
      %v12024 = vadd.f32 %v11638, %v11972
      %v12025 = vadd.f32 %v11643, %v11977
      %v12026 = vadd.f32 %v11646, %v11980
      %v12027 = vadd.f32 %v11651, %v11985
      %v12028 = vadd.f32 %v11654, %v11988
      %v12029 = vadd.f32 %v11659, %v11993
      %v12030 = vadd.f32 %v11662, %v11996
      %s12031 = scalar_lea.vmem %s65, 384
      %v12032 = vld [vmem:[%s12031] sm:$0xf]
      %v12033 = vld [vmem:[%s12031 + $0x4] sm:$0xf]
      %v12034 = vld [vmem:[%s12031 + $0x8] sm:$0xf]
      %v12035 = vld [vmem:[%s12031 + $0xc] sm:$0xf]
      %v12036 = vld [vmem:[%s12031 + $0x10] sm:$0xf]
      %v12037 = vld [vmem:[%s12031 + $0x14] sm:$0xf]
      %v12038 = vld [vmem:[%s12031 + $0x18] sm:$0xf]
      %v12039 = vld [vmem:[%s12031 + $0x1c] sm:$0xf]
      %v12040 = vld [vmem:[%s12031 + $0x20] sm:$0xf]
      %v12041 = vld [vmem:[%s12031 + $0x24] sm:$0xf]
      %v12042 = vld [vmem:[%s12031 + $0x28] sm:$0xf]
      %v12043 = vld [vmem:[%s12031 + $0x2c] sm:$0xf]
      %v12044 = vld [vmem:[%s12031 + $0x30] sm:$0xf]
      %v12045 = vld [vmem:[%s12031 + $0x34] sm:$0xf]
      %v12046 = vld [vmem:[%s12031 + $0x38] sm:$0xf]
      %v12047 = vld [vmem:[%s12031 + $0x3c] sm:$0xf]
      %v12048 = vld [vmem:[%s12031 + $0x40] sm:$0xf]
      %v12049 = vld [vmem:[%s12031 + $0x44] sm:$0xf]
      %v12050 = vld [vmem:[%s12031 + $0x48] sm:$0xf]
      %v12051 = vld [vmem:[%s12031 + $0x4c] sm:$0xf]
      %v12052 = vld [vmem:[%s12031 + $0x50] sm:$0xf]
      %v12053 = vld [vmem:[%s12031 + $0x54] sm:$0xf]
      %v12054 = vld [vmem:[%s12031 + $0x58] sm:$0xf]
      %v12055 = vld [vmem:[%s12031 + $0x5c] sm:$0xf]
      %v12056 = vld [vmem:[%s12031 + $0x60] sm:$0xf]
      %v12057 = vld [vmem:[%s12031 + $0x64] sm:$0xf]
      %v12058 = vld [vmem:[%s12031 + $0x68] sm:$0xf]
      %v12059 = vld [vmem:[%s12031 + $0x6c] sm:$0xf]
      %v12060 = vld [vmem:[%s12031 + $0x70] sm:$0xf]
      %v12061 = vld [vmem:[%s12031 + $0x74] sm:$0xf]
      %v12062 = vld [vmem:[%s12031 + $0x78] sm:$0xf]
      %v12063 = vld [vmem:[%s12031 + $0x7c] sm:$0xf]
      %v12096 = vunpack.c.l.b16 %v12032
      %v12097 = vunpack.c.l.b16 %v12033
      %v12098 = vunpack.c.l.b16 %v12034
      %v12099 = vunpack.c.l.b16 %v12035
      %v12100 = vunpack.c.l.b16 %v12036
      %v12101 = vunpack.c.l.b16 %v12037
      %v12102 = vunpack.c.l.b16 %v12038
      %v12103 = vunpack.c.l.b16 %v12039
      %v12104 = vunpack.c.l.b16 %v12040
      %v12105 = vunpack.c.l.b16 %v12041
      %v12106 = vunpack.c.l.b16 %v12042
      %v12107 = vunpack.c.l.b16 %v12043
      %v12108 = vunpack.c.l.b16 %v12044
      %v12109 = vunpack.c.l.b16 %v12045
      %v12110 = vunpack.c.l.b16 %v12046
      %v12111 = vunpack.c.l.b16 %v12047
      %v12112 = vunpack.c.l.b16 %v12048
      %v12113 = vunpack.c.l.b16 %v12049
      %v12114 = vunpack.c.l.b16 %v12050
      %v12115 = vunpack.c.l.b16 %v12051
      %v12116 = vunpack.c.l.b16 %v12052
      %v12117 = vunpack.c.l.b16 %v12053
      %v12118 = vunpack.c.l.b16 %v12054
      %v12119 = vunpack.c.l.b16 %v12055
      %v12120 = vunpack.c.l.b16 %v12056
      %v12121 = vunpack.c.l.b16 %v12057
      %v12122 = vunpack.c.l.b16 %v12058
      %v12123 = vunpack.c.l.b16 %v12059
      %v12124 = vunpack.c.l.b16 %v12060
      %v12125 = vunpack.c.l.b16 %v12061
      %v12126 = vunpack.c.l.b16 %v12062
      %v12127 = vunpack.c.l.b16 %v12063
      %v12128 = vpack.c.b16 %v12097, %v12096
      %v12129 = vpack.c.b16 %v12099, %v12098
      %v12130 = vpack.c.b16 %v12101, %v12100
      %v12131 = vpack.c.b16 %v12103, %v12102
      %v12132 = vpack.c.b16 %v12105, %v12104
      %v12133 = vpack.c.b16 %v12107, %v12106
      %v12134 = vpack.c.b16 %v12109, %v12108
      %v12135 = vpack.c.b16 %v12111, %v12110
      %v12136 = vpack.c.b16 %v12113, %v12112
      %v12137 = vpack.c.b16 %v12115, %v12114
      %v12138 = vpack.c.b16 %v12117, %v12116
      %v12139 = vpack.c.b16 %v12119, %v12118
      %v12140 = vpack.c.b16 %v12121, %v12120
      %v12141 = vpack.c.b16 %v12123, %v12122
      %v12142 = vpack.c.b16 %v12125, %v12124
      %v12143 = vpack.c.b16 %v12127, %v12126
      %12144 = vrot.lane.b32.xlu0 %v11002, 32
      %v12145 = vpop.permute.xlu0 %12144
      %12146 = vrot.lane.b32.xlu0 %v11003, 32
      %v12147 = vpop.permute.xlu0 %12146
      %12148 = vrot.lane.b32.xlu0 %v11004, 32
      %v12149 = vpop.permute.xlu0 %12148
      %12150 = vrot.lane.b32.xlu0 %v11005, 32
      %v12151 = vpop.permute.xlu0 %12150
      %v12157 = vsel %vm2169, %v12128, 0
      %v12160 = vsel %vm2169, %v12129, 0
      %v12163 = vsel %vm2169, %v12130, 0
      %v12166 = vsel %vm2169, %v12131, 0
      %v12169 = vsel %vm2169, %v12132, 0
      %v12172 = vsel %vm2169, %v12133, 0
      %v12175 = vsel %vm2169, %v12134, 0
      %v12178 = vsel %vm2169, %v12135, 0
      %v12181 = vsel %vm2169, %v12136, 0
      %v12184 = vsel %vm2169, %v12137, 0
      %v12187 = vsel %vm2169, %v12138, 0
      %v12190 = vsel %vm2169, %v12139, 0
      %v12193 = vsel %vm2169, %v12140, 0
      %v12196 = vsel %vm2169, %v12141, 0
      %v12199 = vsel %vm2169, %v12142, 0
      %v12202 = vsel %vm2169, %v12143, 0
      %12204 = vmatprep.subr.bf16.mxu0 0
      %12205 = vmatpush1.bf16.msra.mxu0 %v12145
      %12206 = vmatprep.subr.bf16.mxu0 0
      %12207 = vmatpush1.bf16.msra.mxu0 %v12147
      %12208 = vmatprep.subr.bf16.mxu0 0
      %12209 = vmatpush1.bf16.msra.mxu0 %v12149
      %12210 = vmatprep.subr.bf16.mxu0 0
      %12211 = vmatpush1.bf16.msra.mxu0 %v12151
      %12212 = vmatprep.subr.bf16.mxu0 0
      %12213 = vmatpush1.bf16.msra.mxu0 0
      %12214 = vmatprep.subr.bf16.mxu0 0
      %12215 = vmatpush1.bf16.msra.mxu0 0
      %12216 = vmatprep.subr.bf16.mxu0 0
      %12217 = vmatpush1.bf16.msra.mxu0 0
      %12218 = vmatprep.subr.bf16.mxu0 0
      %12219 = vmatpush1.bf16.msra.mxu0 0
      %12220 = vmatprep.subr.bf16.mxu0 0
      %12221 = vmatpush1.bf16.msra.mxu0 0
      %12222 = vmatprep.subr.bf16.mxu0 0
      %12223 = vmatpush1.bf16.msra.mxu0 0
      %12224 = vmatprep.subr.bf16.mxu0 0
      %12225 = vmatpush1.bf16.msra.mxu0 0
      %12226 = vmatprep.subr.bf16.mxu0 0
      %12227 = vmatpush1.bf16.msra.mxu0 0
      %12228 = vmatprep.subr.bf16.mxu0 0
      %12229 = vmatpush1.bf16.msra.mxu0 0
      %12230 = vmatprep.subr.bf16.mxu0 0
      %12231 = vmatpush1.bf16.msra.mxu0 0
      %12232 = vmatprep.subr.bf16.mxu0 0
      %12233 = vmatpush1.bf16.msra.mxu0 0
      %12234 = vmatprep.subr.bf16.mxu0 0
      %12235 = vmatpush1.bf16.msra.mxu0 0
      %12236 = vmatprep.mubr.bf16.mxu0 0
      %12237 = vmatmul.mubr.bf16.gmra.mrb[0].mxu0 %v12157
      %v12238 = vpop.f32.mrb[0].mxu0
      %v12239 = vadd.f32 0.0, %v12238
      %v12240 = vpop.f32.mrb[0].mxu0
      %v12241 = vpop.f32.mrb[0].mxu0
      %v12242 = vadd.f32 0.0, %v12241
      %v12243 = vpop.f32.mrb[0].mxu0
      %12244 = vmatprep.mubr.bf16.mxu0 0
      %12245 = vmatmul.mubr.bf16.gmra.mrb[0].mxu0 %v12160
      %v12246 = vpop.f32.mrb[0].mxu0
      %v12247 = vadd.f32 0.0, %v12246
      %v12248 = vpop.f32.mrb[0].mxu0
      %v12249 = vpop.f32.mrb[0].mxu0
      %v12250 = vadd.f32 0.0, %v12249
      %v12251 = vpop.f32.mrb[0].mxu0
      %12252 = vmatprep.mubr.bf16.mxu0 0
      %12253 = vmatmul.mubr.bf16.gmra.mrb[0].mxu0 %v12163
      %v12254 = vpop.f32.mrb[0].mxu0
      %v12255 = vadd.f32 0.0, %v12254
      %v12256 = vpop.f32.mrb[0].mxu0
      %v12257 = vpop.f32.mrb[0].mxu0
      %v12258 = vadd.f32 0.0, %v12257
      %v12259 = vpop.f32.mrb[0].mxu0
      %12260 = vmatprep.mubr.bf16.mxu0 0
      %12261 = vmatmul.mubr.bf16.gmra.mrb[0].mxu0 %v12166
      %v12262 = vpop.f32.mrb[0].mxu0
      %v12263 = vadd.f32 0.0, %v12262
      %v12264 = vpop.f32.mrb[0].mxu0
      %v12265 = vpop.f32.mrb[0].mxu0
      %v12266 = vadd.f32 0.0, %v12265
      %v12267 = vpop.f32.mrb[0].mxu0
      %12268 = vmatprep.mubr.bf16.mxu0 0
      %12269 = vmatmul.mubr.bf16.gmra.mrb[0].mxu0 %v12169
      %v12270 = vpop.f32.mrb[0].mxu0
      %v12271 = vadd.f32 0.0, %v12270
      %v12272 = vpop.f32.mrb[0].mxu0
      %v12273 = vpop.f32.mrb[0].mxu0
      %v12274 = vadd.f32 0.0, %v12273
      %v12275 = vpop.f32.mrb[0].mxu0
      %12276 = vmatprep.mubr.bf16.mxu0 0
      %12277 = vmatmul.mubr.bf16.gmra.mrb[0].mxu0 %v12172
      %v12278 = vpop.f32.mrb[0].mxu0
      %v12279 = vadd.f32 0.0, %v12278
      %v12280 = vpop.f32.mrb[0].mxu0
      %v12281 = vpop.f32.mrb[0].mxu0
      %v12282 = vadd.f32 0.0, %v12281
      %v12283 = vpop.f32.mrb[0].mxu0
      %12284 = vmatprep.mubr.bf16.mxu0 0
      %12285 = vmatmul.mubr.bf16.gmra.mrb[0].mxu0 %v12175
      %v12286 = vpop.f32.mrb[0].mxu0
      %v12287 = vadd.f32 0.0, %v12286
      %v12288 = vpop.f32.mrb[0].mxu0
      %v12289 = vpop.f32.mrb[0].mxu0
      %v12290 = vadd.f32 0.0, %v12289
      %v12291 = vpop.f32.mrb[0].mxu0
      %12292 = vmatprep.mubr.bf16.mxu0 0
      %12293 = vmatmul.mubr.bf16.gmra.mrb[0].mxu0 %v12178
      %v12294 = vpop.f32.mrb[0].mxu0
      %v12295 = vadd.f32 0.0, %v12294
      %v12296 = vpop.f32.mrb[0].mxu0
      %v12297 = vpop.f32.mrb[0].mxu0
      %v12298 = vadd.f32 0.0, %v12297
      %v12299 = vpop.f32.mrb[0].mxu0
      %12300 = vmatprep.mubr.bf16.mxu0 0
      %12301 = vmatmul.mubr.bf16.gmra.mrb[0].mxu0 %v12181
      %v12302 = vpop.f32.mrb[0].mxu0
      %v12303 = vadd.f32 0.0, %v12302
      %v12304 = vpop.f32.mrb[0].mxu0
      %v12305 = vpop.f32.mrb[0].mxu0
      %v12306 = vadd.f32 0.0, %v12305
      %v12307 = vpop.f32.mrb[0].mxu0
      %12308 = vmatprep.mubr.bf16.mxu0 0
      %12309 = vmatmul.mubr.bf16.gmra.mrb[0].mxu0 %v12184
      %v12310 = vpop.f32.mrb[0].mxu0
      %v12311 = vadd.f32 0.0, %v12310
      %v12312 = vpop.f32.mrb[0].mxu0
      %v12313 = vpop.f32.mrb[0].mxu0
      %v12314 = vadd.f32 0.0, %v12313
      %v12315 = vpop.f32.mrb[0].mxu0
      %12316 = vmatprep.mubr.bf16.mxu0 0
      %12317 = vmatmul.mubr.bf16.gmra.mrb[0].mxu0 %v12187
      %v12318 = vpop.f32.mrb[0].mxu0
      %v12319 = vadd.f32 0.0, %v12318
      %v12320 = vpop.f32.mrb[0].mxu0
      %v12321 = vpop.f32.mrb[0].mxu0
      %v12322 = vadd.f32 0.0, %v12321
      %v12323 = vpop.f32.mrb[0].mxu0
      %12324 = vmatprep.mubr.bf16.mxu0 0
      %12325 = vmatmul.mubr.bf16.gmra.mrb[0].mxu0 %v12190
      %v12326 = vpop.f32.mrb[0].mxu0
      %v12327 = vadd.f32 0.0, %v12326
      %v12328 = vpop.f32.mrb[0].mxu0
      %v12329 = vpop.f32.mrb[0].mxu0
      %v12330 = vadd.f32 0.0, %v12329
      %v12331 = vpop.f32.mrb[0].mxu0
      %12332 = vmatprep.mubr.bf16.mxu0 0
      %12333 = vmatmul.mubr.bf16.gmra.mrb[0].mxu0 %v12193
      %v12334 = vpop.f32.mrb[0].mxu0
      %v12335 = vadd.f32 0.0, %v12334
      %v12336 = vpop.f32.mrb[0].mxu0
      %v12337 = vpop.f32.mrb[0].mxu0
      %v12338 = vadd.f32 0.0, %v12337
      %v12339 = vpop.f32.mrb[0].mxu0
      %12340 = vmatprep.mubr.bf16.mxu0 0
      %12341 = vmatmul.mubr.bf16.gmra.mrb[0].mxu0 %v12196
      %v12342 = vpop.f32.mrb[0].mxu0
      %v12343 = vadd.f32 0.0, %v12342
      %v12344 = vpop.f32.mrb[0].mxu0
      %v12345 = vpop.f32.mrb[0].mxu0
      %v12346 = vadd.f32 0.0, %v12345
      %v12347 = vpop.f32.mrb[0].mxu0
      %12348 = vmatprep.mubr.bf16.mxu0 0
      %12349 = vmatmul.mubr.bf16.gmra.mrb[0].mxu0 %v12199
      %v12350 = vpop.f32.mrb[0].mxu0
      %v12351 = vadd.f32 0.0, %v12350
      %v12352 = vpop.f32.mrb[0].mxu0
      %v12353 = vpop.f32.mrb[0].mxu0
      %v12354 = vadd.f32 0.0, %v12353
      %v12355 = vpop.f32.mrb[0].mxu0
      %12356 = vmatprep.mubr.bf16.mxu0 0
      %12357 = vmatmul.mubr.bf16.gmra.mrb[0].mxu0 %v12202
      %v12358 = vpop.f32.mrb[0].mxu0
      %v12359 = vadd.f32 0.0, %v12358
      %v12360 = vpop.f32.mrb[0].mxu0
      %v12361 = vpop.f32.mrb[0].mxu0
      %v12362 = vadd.f32 0.0, %v12361
      %v12363 = vpop.f32.mrb[0].mxu0
      %12364 = vdwg.mxu0
      %v12365 = vadd.f32 %v11999, %v12239
      %v12366 = vadd.f32 %v12000, %v12242
      %v12367 = vadd.f32 %v12001, %v12247
      %v12368 = vadd.f32 %v12002, %v12250
      %v12369 = vadd.f32 %v12003, %v12255
      %v12370 = vadd.f32 %v12004, %v12258
      %v12371 = vadd.f32 %v12005, %v12263
      %v12372 = vadd.f32 %v12006, %v12266
      %v12373 = vadd.f32 %v12007, %v12271
      %v12374 = vadd.f32 %v12008, %v12274
      %v12375 = vadd.f32 %v12009, %v12279
      %v12376 = vadd.f32 %v12010, %v12282
      %v12377 = vadd.f32 %v12011, %v12287
      %v12378 = vadd.f32 %v12012, %v12290
      %v12379 = vadd.f32 %v12013, %v12295
      %v12380 = vadd.f32 %v12014, %v12298
      %v12381 = vadd.f32 %v12015, %v12303
      %v12382 = vadd.f32 %v12016, %v12306
      %v12383 = vadd.f32 %v12017, %v12311
      %v12384 = vadd.f32 %v12018, %v12314
      %v12385 = vadd.f32 %v12019, %v12319
      %v12386 = vadd.f32 %v12020, %v12322
      %v12387 = vadd.f32 %v12021, %v12327
      %v12388 = vadd.f32 %v12022, %v12330
      %v12389 = vadd.f32 %v12023, %v12335
      %v12390 = vadd.f32 %v12024, %v12338
      %v12391 = vadd.f32 %v12025, %v12343
      %v12392 = vadd.f32 %v12026, %v12346
      %v12393 = vadd.f32 %v12027, %v12351
      %v12394 = vadd.f32 %v12028, %v12354
      %v12395 = vadd.f32 %v12029, %v12359
      %v12396 = vadd.f32 %v12030, %v12362
      %v12397 = vpack.c.bf16 %v12366, %v12365
      %v12398 = vpack.c.bf16 %v12368, %v12367
      %v12399 = vpack.c.bf16 %v12370, %v12369
      %v12400 = vpack.c.bf16 %v12372, %v12371
      %v12401 = vpack.c.bf16 %v12374, %v12373
      %v12402 = vpack.c.bf16 %v12376, %v12375
      %v12403 = vpack.c.bf16 %v12378, %v12377
      %v12404 = vpack.c.bf16 %v12380, %v12379
      %v12405 = vpack.c.bf16 %v12382, %v12381
      %v12406 = vpack.c.bf16 %v12384, %v12383
      %v12407 = vpack.c.bf16 %v12386, %v12385
      %v12408 = vpack.c.bf16 %v12388, %v12387
      %v12409 = vpack.c.bf16 %v12390, %v12389
      %v12410 = vpack.c.bf16 %v12392, %v12391
      %v12411 = vpack.c.bf16 %v12394, %v12393
      %v12412 = vpack.c.bf16 %v12396, %v12395
      %v12413 = vld [vmem:[%s67] sm:$0xf]
      %v12414 = vld [vmem:[%s67 + $0x4] sm:$0xf]
      %v12415 = vld [vmem:[%s67 + $0x8] sm:$0xf]
      %v12416 = vld [vmem:[%s67 + $0xc] sm:$0xf]
      %v12417 = vld [vmem:[%s69] sm:$0x1]
      %v12419 = vlaneseq
      %v12420 = vshrl.u32 %v12419, 7
      %v12421 = vsub.s32 0, %v12420
      %v12422 = vrot.slane %v12417, %v12421
      %v12428 = vunpack.c.l.b16 %v12413
      %v12429 = vunpack.c.l.b16 %v12414
      %v12430 = vunpack.c.l.b16 %v12415
      %v12431 = vunpack.c.l.b16 %v12416
      %v12432 = vpack.c.b16 %v12429, %v12428
      %v12433 = vpack.c.b16 %v12431, %v12430
      %v12437 = vsel %vm1200, %v12397, 0
      %v12440 = vsel %vm1200, %v12398, 0
      %v12443 = vsel %vm1200, %v12399, 0
      %v12446 = vsel %vm1200, %v12400, 0
      %v12449 = vsel %vm1200, %v12401, 0
      %v12452 = vsel %vm1200, %v12402, 0
      %v12455 = vsel %vm1200, %v12403, 0
      %v12458 = vsel %vm1200, %v12404, 0
      %v12461 = vsel %vm1200, %v12405, 0
      %v12464 = vsel %vm1200, %v12406, 0
      %v12467 = vsel %vm1200, %v12407, 0
      %v12470 = vsel %vm1200, %v12408, 0
      %v12473 = vsel %vm1200, %v12409, 0
      %v12476 = vsel %vm1200, %v12410, 0
      %v12479 = vsel %vm1200, %v12411, 0
      %v12482 = vsel %vm1200, %v12412, 0
      %12484 = vmatprep.subr.bf16.mxu0 0
      %12485 = vmatpush1.bf16.msra.mxu0 %v12432
      %12486 = vmatprep.subr.bf16.mxu0 0
      %12487 = vmatpush1.bf16.msra.mxu0 %v12433
      %12488 = vmatprep.subr.bf16.mxu0 0
      %12489 = vmatpush1.bf16.msra.mxu0 0
      %12490 = vmatprep.subr.bf16.mxu0 0
      %12491 = vmatpush1.bf16.msra.mxu0 0
      %12492 = vmatprep.subr.bf16.mxu0 0
      %12493 = vmatpush1.bf16.msra.mxu0 0
      %12494 = vmatprep.subr.bf16.mxu0 0
      %12495 = vmatpush1.bf16.msra.mxu0 0
      %12496 = vmatprep.subr.bf16.mxu0 0
      %12497 = vmatpush1.bf16.msra.mxu0 0
      %12498 = vmatprep.subr.bf16.mxu0 0
      %12499 = vmatpush1.bf16.msra.mxu0 0
      %12500 = vmatprep.subr.bf16.mxu0 0
      %12501 = vmatpush1.bf16.msra.mxu0 0
      %12502 = vmatprep.subr.bf16.mxu0 0
      %12503 = vmatpush1.bf16.msra.mxu0 0
      %12504 = vmatprep.subr.bf16.mxu0 0
      %12505 = vmatpush1.bf16.msra.mxu0 0
      %12506 = vmatprep.subr.bf16.mxu0 0
      %12507 = vmatpush1.bf16.msra.mxu0 0
      %12508 = vmatprep.subr.bf16.mxu0 0
      %12509 = vmatpush1.bf16.msra.mxu0 0
      %12510 = vmatprep.subr.bf16.mxu0 0
      %12511 = vmatpush1.bf16.msra.mxu0 0
      %12512 = vmatprep.subr.bf16.mxu0 0
      %12513 = vmatpush1.bf16.msra.mxu0 0
      %12514 = vmatprep.subr.bf16.mxu0 0
      %12515 = vmatpush1.bf16.msra.mxu0 0
      %12516 = vmatprep.mubr.bf16.mxu0 0
      %12517 = vmatmul.mubr.bf16.gmra.mrb[0].mxu0 %v12437
      %v12518 = vpop.f32.mrb[0].mxu0
      %v12519 = vadd.f32 %v12422, %v12518
      %v12520 = vpop.f32.mrb[0].mxu0
      %v12521 = vpop.f32.mrb[0].mxu0
      %v12522 = vadd.f32 %v12422, %v12521
      %v12523 = vpop.f32.mrb[0].mxu0
      %12524 = vmatprep.mubr.bf16.mxu0 0
      %12525 = vmatmul.mubr.bf16.gmra.mrb[0].mxu0 %v12440
      %v12526 = vpop.f32.mrb[0].mxu0
      %v12527 = vadd.f32 %v12422, %v12526
      %v12528 = vpop.f32.mrb[0].mxu0
      %v12529 = vpop.f32.mrb[0].mxu0
      %v12530 = vadd.f32 %v12422, %v12529
      %v12531 = vpop.f32.mrb[0].mxu0
      %12532 = vmatprep.mubr.bf16.mxu0 0
      %12533 = vmatmul.mubr.bf16.gmra.mrb[0].mxu0 %v12443
      %v12534 = vpop.f32.mrb[0].mxu0
      %v12535 = vadd.f32 %v12422, %v12534
      %v12536 = vpop.f32.mrb[0].mxu0
      %v12537 = vpop.f32.mrb[0].mxu0
      %v12538 = vadd.f32 %v12422, %v12537
      %v12539 = vpop.f32.mrb[0].mxu0
      %12540 = vmatprep.mubr.bf16.mxu0 0
      %12541 = vmatmul.mubr.bf16.gmra.mrb[0].mxu0 %v12446
      %v12542 = vpop.f32.mrb[0].mxu0
      %v12543 = vadd.f32 %v12422, %v12542
      %v12544 = vpop.f32.mrb[0].mxu0
      %v12545 = vpop.f32.mrb[0].mxu0
      %v12546 = vadd.f32 %v12422, %v12545
      %v12547 = vpop.f32.mrb[0].mxu0
      %12548 = vmatprep.mubr.bf16.mxu0 0
      %12549 = vmatmul.mubr.bf16.gmra.mrb[0].mxu0 %v12449
      %v12550 = vpop.f32.mrb[0].mxu0
      %v12551 = vadd.f32 %v12422, %v12550
      %v12552 = vpop.f32.mrb[0].mxu0
      %v12553 = vpop.f32.mrb[0].mxu0
      %v12554 = vadd.f32 %v12422, %v12553
      %v12555 = vpop.f32.mrb[0].mxu0
      %12556 = vmatprep.mubr.bf16.mxu0 0
      %12557 = vmatmul.mubr.bf16.gmra.mrb[0].mxu0 %v12452
      %v12558 = vpop.f32.mrb[0].mxu0
      %v12559 = vadd.f32 %v12422, %v12558
      %v12560 = vpop.f32.mrb[0].mxu0
      %v12561 = vpop.f32.mrb[0].mxu0
      %v12562 = vadd.f32 %v12422, %v12561
      %v12563 = vpop.f32.mrb[0].mxu0
      %12564 = vmatprep.mubr.bf16.mxu0 0
      %12565 = vmatmul.mubr.bf16.gmra.mrb[0].mxu0 %v12455
      %v12566 = vpop.f32.mrb[0].mxu0
      %v12567 = vadd.f32 %v12422, %v12566
      %v12568 = vpop.f32.mrb[0].mxu0
      %v12569 = vpop.f32.mrb[0].mxu0
      %v12570 = vadd.f32 %v12422, %v12569
      %v12571 = vpop.f32.mrb[0].mxu0
      %12572 = vmatprep.mubr.bf16.mxu0 0
      %12573 = vmatmul.mubr.bf16.gmra.mrb[0].mxu0 %v12458
      %v12574 = vpop.f32.mrb[0].mxu0
      %v12575 = vadd.f32 %v12422, %v12574
      %v12576 = vpop.f32.mrb[0].mxu0
      %v12577 = vpop.f32.mrb[0].mxu0
      %v12578 = vadd.f32 %v12422, %v12577
      %v12579 = vpop.f32.mrb[0].mxu0
      %12580 = vmatprep.mubr.bf16.mxu0 0
      %12581 = vmatmul.mubr.bf16.gmra.mrb[0].mxu0 %v12461
      %v12582 = vpop.f32.mrb[0].mxu0
      %v12583 = vadd.f32 %v12422, %v12582
      %v12584 = vpop.f32.mrb[0].mxu0
      %v12585 = vpop.f32.mrb[0].mxu0
      %v12586 = vadd.f32 %v12422, %v12585
      %v12587 = vpop.f32.mrb[0].mxu0
      %12588 = vmatprep.mubr.bf16.mxu0 0
      %12589 = vmatmul.mubr.bf16.gmra.mrb[0].mxu0 %v12464
      %v12590 = vpop.f32.mrb[0].mxu0
      %v12591 = vadd.f32 %v12422, %v12590
      %v12592 = vpop.f32.mrb[0].mxu0
      %v12593 = vpop.f32.mrb[0].mxu0
      %v12594 = vadd.f32 %v12422, %v12593
      %v12595 = vpop.f32.mrb[0].mxu0
      %12596 = vmatprep.mubr.bf16.mxu0 0
      %12597 = vmatmul.mubr.bf16.gmra.mrb[0].mxu0 %v12467
      %v12598 = vpop.f32.mrb[0].mxu0
      %v12599 = vadd.f32 %v12422, %v12598
      %v12600 = vpop.f32.mrb[0].mxu0
      %v12601 = vpop.f32.mrb[0].mxu0
      %v12602 = vadd.f32 %v12422, %v12601
      %v12603 = vpop.f32.mrb[0].mxu0
      %12604 = vmatprep.mubr.bf16.mxu0 0
      %12605 = vmatmul.mubr.bf16.gmra.mrb[0].mxu0 %v12470
      %v12606 = vpop.f32.mrb[0].mxu0
      %v12607 = vadd.f32 %v12422, %v12606
      %v12608 = vpop.f32.mrb[0].mxu0
      %v12609 = vpop.f32.mrb[0].mxu0
      %v12610 = vadd.f32 %v12422, %v12609
      %v12611 = vpop.f32.mrb[0].mxu0
      %12612 = vmatprep.mubr.bf16.mxu0 0
      %12613 = vmatmul.mubr.bf16.gmra.mrb[0].mxu0 %v12473
      %v12614 = vpop.f32.mrb[0].mxu0
      %v12615 = vadd.f32 %v12422, %v12614
      %v12616 = vpop.f32.mrb[0].mxu0
      %v12617 = vpop.f32.mrb[0].mxu0
      %v12618 = vadd.f32 %v12422, %v12617
      %v12619 = vpop.f32.mrb[0].mxu0
      %12620 = vmatprep.mubr.bf16.mxu0 0
      %12621 = vmatmul.mubr.bf16.gmra.mrb[0].mxu0 %v12476
      %v12622 = vpop.f32.mrb[0].mxu0
      %v12623 = vadd.f32 %v12422, %v12622
      %v12624 = vpop.f32.mrb[0].mxu0
      %v12625 = vpop.f32.mrb[0].mxu0
      %v12626 = vadd.f32 %v12422, %v12625
      %v12627 = vpop.f32.mrb[0].mxu0
      %12628 = vmatprep.mubr.bf16.mxu0 0
      %12629 = vmatmul.mubr.bf16.gmra.mrb[0].mxu0 %v12479
      %v12630 = vpop.f32.mrb[0].mxu0
      %v12631 = vadd.f32 %v12422, %v12630
      %v12632 = vpop.f32.mrb[0].mxu0
      %v12633 = vpop.f32.mrb[0].mxu0
      %v12634 = vadd.f32 %v12422, %v12633
      %v12635 = vpop.f32.mrb[0].mxu0
      %12636 = vmatprep.mubr.bf16.mxu0 0
      %12637 = vmatmul.mubr.bf16.gmra.mrb[0].mxu0 %v12482
      %v12638 = vpop.f32.mrb[0].mxu0
      %v12639 = vadd.f32 %v12422, %v12638
      %v12640 = vpop.f32.mrb[0].mxu0
      %v12641 = vpop.f32.mrb[0].mxu0
      %v12642 = vadd.f32 %v12422, %v12641
      %v12643 = vpop.f32.mrb[0].mxu0
      %12644 = vdwg.mxu0
      %12645 = vst [vmem:[%s1070] sm:$0xff] %v12519
      %12646 = vst [vmem:[%s1070 + $0x8] sm:$0xff] %v12522
      %12647 = vst [vmem:[%s1070 + $0x10] sm:$0xff] %v12527
      %12648 = vst [vmem:[%s1070 + $0x18] sm:$0xff] %v12530
      %12649 = vst [vmem:[%s1070 + $0x20] sm:$0xff] %v12535
      %12650 = vst [vmem:[%s1070 + $0x28] sm:$0xff] %v12538
      %12651 = vst [vmem:[%s1070 + $0x30] sm:$0xff] %v12543
      %12652 = vst [vmem:[%s1070 + $0x38] sm:$0xff] %v12546
      %12653 = vst [vmem:[%s1070 + $0x40] sm:$0xff] %v12551
      %12654 = vst [vmem:[%s1070 + $0x48] sm:$0xff] %v12554
      %12655 = vst [vmem:[%s1070 + $0x50] sm:$0xff] %v12559
      %12656 = vst [vmem:[%s1070 + $0x58] sm:$0xff] %v12562
      %12657 = vst [vmem:[%s1070 + $0x60] sm:$0xff] %v12567
      %12658 = vst [vmem:[%s1070 + $0x68] sm:$0xff] %v12570
      %12659 = vst [vmem:[%s1070 + $0x70] sm:$0xff] %v12575
      %12660 = vst [vmem:[%s1070 + $0x78] sm:$0xff] %v12578
      %12661 = vst [vmem:[%s1070 + $0x80] sm:$0xff] %v12583
      %12662 = vst [vmem:[%s1070 + $0x88] sm:$0xff] %v12586
      %12663 = vst [vmem:[%s1070 + $0x90] sm:$0xff] %v12591
      %12664 = vst [vmem:[%s1070 + $0x98] sm:$0xff] %v12594
      %12665 = vst [vmem:[%s1070 + $0xa0] sm:$0xff] %v12599
      %12666 = vst [vmem:[%s1070 + $0xa8] sm:$0xff] %v12602
      %12667 = vst [vmem:[%s1070 + $0xb0] sm:$0xff] %v12607
      %12668 = vst [vmem:[%s1070 + $0xb8] sm:$0xff] %v12610
      %12669 = vst [vmem:[%s1070 + $0xc0] sm:$0xff] %v12615
      %12670 = vst [vmem:[%s1070 + $0xc8] sm:$0xff] %v12618
      %12671 = vst [vmem:[%s1070 + $0xd0] sm:$0xff] %v12623
      %12672 = vst [vmem:[%s1070 + $0xd8] sm:$0xff] %v12626
      %12673 = vst [vmem:[%s1070 + $0xe0] sm:$0xff] %v12631
      %12674 = vst [vmem:[%s1070 + $0xe8] sm:$0xff] %v12634
      %12675 = vst [vmem:[%s1070 + $0xf0] sm:$0xff] %v12639
      %12676 = vst [vmem:[%s1070 + $0xf8] sm:$0xff] %v12642
      %p12677 = scmp.lt.s32.totalorder %s82, 1
      %s12678 = scalar_select %p12677, %s82, 1
      %s12679 = smul.addr %s12678, 32
      %s12680 = smul.addr %s12679, 8
      %s12681 = scalar_lea.vmem %s71, %s12680
      // Predicated region
      $region161: #{_lambda_.1} parent=159 // pred_check
        %p12682 = pneg %p840
      $region162: #{_lambda_.1} parent=159 // pred_check_branch
        %12684 = sbr.rel (%p12682) target = $region164
      $region163: #{_lambda_.1} parent=159 // pred_region
        _
      $region164: #{_lambda_.1} parent=159 // pred_fallthru
        _
    $region160: #{_lambda_.1} parent=5 // pred_fallthru
      _
    %p12685 = scmp.le.s32.totalorder 2, %s77
    // Predicated region
    $region165: #{_lambda_.1} parent=5 // pred_check
      %p12686 = pneg %p12685
    $region166: #{_lambda_.1} parent=5 // pred_check_branch
      %12688 = sbr.rel (%p12686) target = $region168
    $region167: #{_lambda_.1} parent=5 // pred_region
      %s12689 = ssub.s32 %s77, 2
      // Predicated region
      $region169: #{_lambda_.1} parent=167 // pred_check
        %p12690 = pneg %p846
      $region170: #{_lambda_.1} parent=167 // pred_check_branch
        %12692 = sbr.rel (%p12690) target = $region172
      $region171: #{_lambda_.1} parent=167 // pred_region
        %p12693 = scmp.lt.s32.totalorder %s83, 1
        %s12694 = scalar_select %p12693, %s83, 1
        %s12695 = smul.addr %s12694, 32
        %s12696 = smul.addr %s12695, 8
        %s12697 = scalar_lea.vmem %s71, %s12696
      $region172: #{_lambda_.1} parent=167 // pred_fallthru
        _
    $region168: #{_lambda_.1} parent=5 // pred_fallthru
      _
  $region6: #{_lambda_.1} parent=0 // loop_footer
    %s81 = sadd.s32 1, %s77
  $region7: #{_lambda_.1} parent=0 // loop_footer_branch
    %76 = sbr.rel target = $region3
  $region8: #{_lambda_.1} parent=0 // loop_exit
    _

</llo_original>
